<compile_context>
chip_gen: v7x
topology: tpu7x:2x2x1
jax: 0.10.0
libtpu: 0.0.40
codegen_flags: <defaults>
</compile_context>

<pallas_src>
import functools

import jax
import jax.numpy as jnp
from jax import lax
from jax.experimental import pallas as pl
from jax.experimental.pallas import tpu as pltpu


# ----------------------------------------------------------------------------
# Single fused kernel: UNet stand-in + boundary + segmentation + RAG + EGNN
# ----------------------------------------------------------------------------
def _fused_kernel(x_ref, fg_ref,
                  w1_ref, b1_ref, w2_ref, b2_ref, w3_ref, b3_ref, wh_ref, bh_ref,
                  w0s_nf_ref, w0s_bf_ref, w0n_nf_ref, w0n_bf_ref, b0_ref, we0_ref,
                  ws_ref, wn_ref, bl_ref, wel_ref,
                  heads_ref, seg_ref, adj_ref, edges_ref, nodes_ref,
                  taps_ref,
                  *, H, W, gy, gx, n_layers):
    f32, bf16 = jnp.float32, jnp.bfloat16
    hw = H * W
    C = x_ref.shape[0]
    nf = taps_ref.shape[0] // 9
    n_seg = adj_ref.shape[0]

    # ---- pixel coordinates / border masks from iota (power-of-two H, W -> shifts) ----
    pix = lax.broadcasted_iota(jnp.int32, (1, hw), 1)
    yy = pix >> (W.bit_length() - 1)
    xx = pix & (W - 1)
    offs = tuple((dy, dx) for dy in (-1, 0, 1) for dx in (-1, 0, 1))

    def border_mask(dy, dx):
        ok = ((yy + dy >= 0) & (yy + dy < H) & (xx + dx >= 0) & (xx + dx < W))
        return ok.astype(f32)

    def tap(h, dy, dx):
        s = dy * W + dx
        if s == 0:
            return h                                        # centre tap, always valid
        return pltpu.roll(h, shift=(-s) % hw, axis=1) * border_mask(dy, dx)

    # ---- conv1 (3x3, C -> nf): 9*C VPU broadcast-FMAs (K would be tiny on the MXU) ----
    x = x_ref[...]
    acc = jnp.zeros((nf, hw), f32)
    for k, (dy, dx) in enumerate(offs):
        for c in range(C):
            col = w1_ref[:, c * 9 + k:c * 9 + k + 1]
            acc = acc + col * tap(x[c:c + 1, :], dy, dx)
    h1 = jnp.maximum(acc + b1_ref[...], 0.0)

    # ---- conv2/conv3 (3x3, nf -> nf): taps -> bf16 scratch, ONE K=9*nf MXU matmul ----
    def conv3x3(h, w_ref, b_ref):
        for k, (dy, dx) in enumerate(offs):
            taps_ref[k * nf:(k + 1) * nf, :] = tap(h, dy, dx).astype(bf16)
        return jnp.dot(w_ref[...], taps_ref[...], preferred_element_type=f32) + b_ref[...]

    h2 = jnp.maximum(conv3x3(h1, w2_ref, b2_ref), 0.0)
    h3 = conv3x3(h2, w3_ref, b3_ref)
    h = jnp.maximum(h3 + h1, 0.0)                           # fused residual + relu

    # ---- all four 1x1 heads: one (56, nf) @ (nf, HW) bf16 matmul, f32 accumulate ----
    heads = jnp.dot(wh_ref[...], h.astype(bf16), preferred_element_type=f32) + bh_ref[...]
    heads_ref[...] = heads

    # boundary map is consumed in-kernel only (logits are returned via `heads`)
    bnd = 1.0 - 0.5 * (jax.nn.sigmoid(heads[0:1, :]) + jax.nn.sigmoid(heads[1:2, :]))

    # ---- regular-grid segmentation stand-in, masked by fg ----
    # TODO(synk): gen_fragment / remove_small_ids / enforce_connectivity / np.unique
    # relabelling are data-dependent CPU watershed & connected-component algorithms
    # with no Pallas equivalent; replaced by a deterministic regular-grid labelling
    # (masked-out pixels fall into segment 0, a known approximation).
    sh_ch = (H // gy).bit_length() - 1
    sh_cw = (W // gx).bit_length() - 1
    sh_gx = gx.bit_length() - 1
    fg = fg_ref[...]
    label = ((yy >> sh_ch) << sh_gx) + (xx >> sh_cw)
    seg = jnp.where(fg > 0.5, label, 0)
    seg_ref[...] = seg

    # right / down neighbour labels & values (row/col-wrap pairs are masked below)
    fg_r = pltpu.roll(fg, shift=hw - 1, axis=1)
    fg_d = pltpu.roll(fg, shift=hw - W, axis=1)
    bnd_r = pltpu.roll(bnd, shift=hw - 1, axis=1)
    bnd_d = pltpu.roll(bnd, shift=hw - W, axis=1)
    label_r = ((yy >> sh_ch) << sh_gx) + ((xx + 1) >> sh_cw)   # junk at x==W-1 (masked)
    label_d = (((yy + 1) >> sh_ch) << sh_gx) + (xx >> sh_cw)   # junk at y==H-1 (masked)
    seg_r = jnp.where(fg_r > 0.5, label_r, 0)
    seg_d = jnp.where(fg_d > 0.5, label_d, 0)

    mask_h = (xx < W - 1).astype(f32)
    mask_v = (yy < H - 1).astype(f32)
    wgt_h = (0.5 * (bnd + bnd_r) * mask_h).astype(bf16)        # horizontal pair weights
    wgt_v = (0.5 * (bnd + bnd_d) * mask_v).astype(bf16)        # vertical pair weights

    # ---- segment one-hots (bf16 MXU operands, exact 0/1) + pooling / adjacency ----
    # TODO(synk): cython_utils.get_adj is an external cython routine; its semantics are
    # approximated with one-hot pair-counting contractions (boundary already in [0,1]).
    ids = lax.broadcasted_iota(jnp.int32, (n_seg, hw), 0)
    O32 = (ids == seg).astype(f32)
    Ob = O32.astype(bf16)
    Orb = (ids == seg_r).astype(f32).astype(bf16)
    Odb = (ids == seg_d).astype(f32).astype(bf16)
    counts = jnp.sum(O32, axis=1, keepdims=True)

    nt = (((1,), (1,)), ((), ()))            # contract last dims: A @ B.T (MXU trans_b)

    def pair(lhs, rhs):
        return lax.dot_general(lhs, rhs, nt, preferred_element_type=f32)

    c_feat = w0s_nf_ref.shape[0]             # emb + spix pixel features (48 rows)
    feat_bf = heads[4:4 + c_feat, :].astype(bf16)
    node_feat = pair(Ob, feat_bf) / jnp.maximum(counts, 1.0)

    # NOTE: the review suggested halving these contractions via `half + half.T`; at
    # n_seg=16 the 4 extra K=1024 matmuls cost <1us and we deliberately avoid an
    # in-kernel (16,16) transpose (small-shape transpose lowering risk).  Revisit once
    # n_seg is large enough to matter (and then reorient with n_seg on the lane dim).
    mh_b = mask_h.astype(bf16)
    mv_b = mask_v.astype(bf16)
    cnt = (pair(Ob * mh_b, Orb) + pair(Orb * mh_b, Ob) +
           pair(Ob * mv_b, Odb) + pair(Odb * mv_b, Ob))
    wsum = (pair(Ob * wgt_h, Orb) + pair(Orb * wgt_h, Ob) +
            pair(Ob * wgt_v, Odb) + pair(Odb * wgt_v, Ob))

    r = lax.broadcasted_iota(jnp.int32, (n_seg, n_seg), 0)
    c = lax.broadcasted_iota(jnp.int32, (n_seg, n_seg), 1)
    off_diag = (r != c).astype(f32)
    cnt = cnt * off_diag
    wsum = wsum * off_diag

    cmax = jnp.max(jnp.max(cnt, axis=1, keepdims=True), axis=0, keepdims=True)
    adj = (cnt > 0.0).astype(f32)
    adj_num = cnt / jnp.maximum(cmax, 1.0)
    adj_int = wsum / jnp.maximum(cnt, 1.0)
    adj_ref[...] = adj

    # ---- EGNN stand-in: all graph layers, everything stays in VMEM ----
    # TODO(synk): GraphNetwork (EGNN) definition is not provided in the source file;
    # stand-in message passing with matching I/O dims; dropout(0.5) is a no-op in eval.
    deg = jnp.maximum(jnp.sum(adj, axis=1, keepdims=True), 1.0)
    bfe0 = jnp.sum(adj_int, axis=1, keepdims=True) / deg       # boundary-intensity feature
    bfe1 = jnp.sum(adj_num, axis=1, keepdims=True) / deg       # normalized-count feature
    a_agg = (adj * (1.0 - adj_int) / deg).astype(bf16)         # row-normalized positive edges

    nfeat_b = node_feat.astype(bf16)
    w0s_bf = w0s_bf_ref[...]
    w0n_bf = w0n_bf_ref[...]
    xs = (jnp.dot(nfeat_b, w0s_nf_ref[...], preferred_element_type=f32)
          + bfe0 * w0s_bf[0:1, :] + bfe1 * w0s_bf[1:2, :])
    xn = (jnp.dot(nfeat_b, w0n_nf_ref[...], preferred_element_type=f32)
          + bfe0 * w0n_bf[0:1, :] + bfe1 * w0n_bf[1:2, :])
    xcur = jnp.maximum(
        xs + jnp.dot(a_agg, xn.astype(bf16), preferred_element_type=f32) + b0_ref[...], 0.0)
    z = jnp.dot(xcur.astype(bf16), we0_ref[...], preferred_element_type=f32)
    e = jax.nn.sigmoid(pair(z, z)) * adj
    edges_ref[0] = e
    nodes_ref[0] = xcur

    for l in range(1, n_layers):
        xb = xcur.astype(bf16)
        msg = jnp.dot(a_agg, xb, preferred_element_type=f32)
        xcur = jnp.maximum(
            jnp.dot(xb, ws_ref[l - 1], preferred_element_type=f32)
            + jnp.dot(msg.astype(bf16), wn_ref[l - 1], preferred_element_type=f32)
            + bl_ref[l - 1], 0.0)
        z = jnp.dot(xcur.astype(bf16), wel_ref[l - 1], preferred_element_type=f32)
        e = jax.nn.sigmoid(pair(z, z)) * adj
        edges_ref[l] = e
        nodes_ref[l] = xcur


# ----------------------------------------------------------------------------
# Parameters (deterministic synthetic init — no checkpoint loading)
# ----------------------------------------------------------------------------
def init_params(key, in_ch, nf, graph_layers, n_emb=16, n_spix=32):
    ks = list(jax.random.split(key, 8 + 3 * graph_layers))

    def w(k, shape, scale):
        return jax.random.normal(k, shape, jnp.float32) * scale

    p = {}
    # TODO(synk): ResidualUNet2D is not defined in the source file; this is a compact
    # residual conv stand-in with the same head shapes (boundary=2, emb=16, seg=2, spix=32).
    p["conv1_w"] = w(ks[0], (nf, 9 * in_ch), 0.2)
    p["conv1_b"] = jnp.zeros((nf, 1), jnp.float32)
    p["conv2_w"] = w(ks[1], (9, nf, nf), 0.1)
    p["conv2_b"] = jnp.zeros((nf, 1), jnp.float32)
    p["conv3_w"] = w(ks[2], (9, nf, nf), 0.1)
    p["conv3_b"] = jnp.zeros((nf, 1), jnp.float32)
    # fused 1x1 heads, row order: [boundary(2) | binary_seg(2) | emb(16) | spix(32)]
    hb = w(ks[3], (2, nf), 0.1)
    hs = w(ks[4], (2, nf), 0.1)
    he = w(ks[5], (n_emb, nf), 0.1)
    hx = w(ks[6], (n_spix, nf), 0.1)
    p["heads_w"] = jnp.concatenate([hb, hs, he, hx], axis=0)
    p["heads_b"] = jnp.zeros((2 + 2 + n_emb + n_spix, 1), jnp.float32)

    hidden = 32 + 2
    node_in = n_emb + n_spix + 2
    Ws, bs, Wes = [], [], []
    for l in range(graph_layers):
        d_in = 2 * (node_in if l == 0 else hidden)
        Ws.append(w(ks[7 + 3 * l], (d_in, hidden), 0.1))
        bs.append(jnp.zeros((hidden,), jnp.float32))
        Wes.append(w(ks[8 + 3 * l], (hidden, 16), 0.1))
    p["egnn_W"], p["egnn_b"], p["egnn_We"] = Ws, bs, Wes
    return p


def prepare_params(p, graph_layers, n_heads_pad=56):
    """One-time host-side weight prep: flatten conv taps to (nf, 9*nf), pad heads to
    a sublane multiple, split/stack EGNN weights, pre-cast all MXU operands to bf16."""
    f32, bf16 = jnp.float32, jnp.bfloat16
    nf = p["conv2_w"].shape[1]
    n_heads = p["heads_w"].shape[0]
    hidden = p["egnn_W"][0].shape[1]
    node_in = p["egnn_W"][0].shape[0] // 2
    c_feat = n_heads - 4                                     # emb + spix pixel feature rows

    def flat_conv(wk):                                       # (9, nf, nf) -> (nf, 9*nf)
        return jnp.transpose(wk, (1, 0, 2)).reshape(nf, 9 * nf).astype(bf16)

    q = {
        "conv1_w": p["conv1_w"].astype(f32),                 # conv1 runs on the VPU in f32
        "conv1_b": p["conv1_b"].astype(f32),
        "conv2_w": flat_conv(p["conv2_w"]),
        "conv2_b": p["conv2_b"].astype(f32),
        "conv3_w": flat_conv(p["conv3_w"]),
        "conv3_b": p["conv3_b"].astype(f32),
        "heads_w": jnp.pad(p["heads_w"], ((0, n_heads_pad - n_heads), (0, 0))).astype(bf16),
        "heads_b": jnp.pad(p["heads_b"], ((0, n_heads_pad - n_heads), (0, 0))).astype(f32),
    }

    W0 = p["egnn_W"][0]
    w0_self, w0_nbr = W0[:node_in], W0[node_in:]
    q["w0s_nf"] = w0_self[:c_feat].astype(bf16)
    q["w0s_bf"] = w0_self[c_feat:].astype(f32)
    q["w0n_nf"] = w0_nbr[:c_feat].astype(bf16)
    q["w0n_bf"] = w0_nbr[c_feat:].astype(f32)
    q["b0"] = p["egnn_b"][0].reshape(1, hidden).astype(f32)
    q["we0"] = p["egnn_We"][0].astype(bf16)
    if graph_layers > 1:
        q["ws"] = jnp.stack([p["egnn_W"][l][:hidden] for l in range(1, graph_layers)]).astype(bf16)
        q["wn"] = jnp.stack([p["egnn_W"][l][hidden:] for l in range(1, graph_layers)]).astype(bf16)
        q["bl"] = jnp.stack([p["egnn_b"][l].reshape(1, hidden)
                             for l in range(1, graph_layers)]).astype(f32)
        q["wel"] = jnp.stack([p["egnn_We"][l] for l in range(1, graph_layers)]).astype(bf16)
    else:  # dummies, never read (static layer loop inside the kernel)
        q["ws"] = jnp.zeros((1, hidden, hidden), bf16)
        q["wn"] = jnp.zeros((1, hidden, hidden), bf16)
        q["bl"] = jnp.zeros((1, 1, hidden), f32)
        q["wel"] = jnp.zeros((1, hidden, 16), bf16)
    return q


# ----------------------------------------------------------------------------
# Full forward (one pallas_call + pure layout plumbing at the API boundary)
# ----------------------------------------------------------------------------
def unet_egnn_forward(prep, x, fg, graph_layers, seg_grid=(4, 4)):
    _, C, H, W = x.shape
    hw = H * W
    gy, gx = seg_grid
    n_seg = gy * gx
    nf = prep["conv2_w"].shape[0]
    hidden = prep["b0"].shape[1]
    n_heads_pad = prep["heads_w"].shape[0]

    # stand-in grid segmentation & in-kernel coordinate math use shift/and arithmetic
    for v in (H, W, H // gy, W // gx, gx):
        assert v > 0 and (v & (v - 1)) == 0, "power-of-two H/W/cell sizes required"
    assert hw % 128 == 0, "H*W must be lane-aligned"

    # Whole image resident in VMEM (no spatial grid); budget well under v7x's 32 MiB
    # scoped default.  TODO(synk): for production resolutions add a halo-tiled
    # 'parallel' HW grid (BlockSpec row-tiles) so v7x's second TensorCore is used and
    # the residents stay bounded; at 32x32 everything is ~1.3 MB.
    vmem_estimate = (
        4 * hw * (C + 1 + 4 * nf + 2 * n_heads_pad + 8)      # f32 activations / heads / misc
        + 2 * hw * (9 * nf + 3 * n_seg)                      # bf16 taps scratch + one-hots
        + 4 * hw * (n_seg + 2)                               # f32 one-hot temp + boundary
    )
    assert vmem_estimate < 16 * 1024 * 1024, "fused kernel assumes the full image fits VMEM"

    x_flat = x[0].reshape(C, hw).astype(jnp.float32)
    fg_flat = fg[0, 0].reshape(1, hw).astype(jnp.float32)

    kernel = functools.partial(_fused_kernel, H=H, W=W, gy=gy, gx=gx,
                               n_layers=graph_layers)
    heads, seg_flat, adj, edge_feat_list, node_feat_list = pl.pallas_call(
        kernel,
        out_shape=(jax.ShapeDtypeStruct((n_heads_pad, hw), jnp.float32),
                   jax.ShapeDtypeStruct((1, hw), jnp.int32),
                   jax.ShapeDtypeStruct((n_seg, n_seg), jnp.float32),
                   jax.ShapeDtypeStruct((graph_layers, n_seg, n_seg), jnp.float32),
                   jax.ShapeDtypeStruct((graph_layers, n_seg, hidden), jnp.float32)),
        scratch_shapes=[pltpu.VMEM((9 * nf, hw), jnp.bfloat16)],
        compiler_params=pltpu.CompilerParams(vmem_limit_bytes=32 * 1024 * 1024),
    )(x_flat, fg_flat,
      prep["conv1_w"], prep["conv1_b"], prep["conv2_w"], prep["conv2_b"],
      prep["conv3_w"], prep["conv3_b"], prep["heads_w"], prep["heads_b"],
      prep["w0s_nf"], prep["w0s_bf"], prep["w0n_nf"], prep["w0n_bf"],
      prep["b0"], prep["we0"], prep["ws"], prep["wn"], prep["bl"], prep["wel"])

    # unpack the lane-dense head slab back to NCHW at the API boundary (layout plumbing)
    out_boundary = heads[0:2].reshape(1, 2, H, W)
    out_binary_seg = heads[2:4].reshape(1, 2, H, W)
    out_emb = heads[4:20].reshape(1, 16, H, W)
    spix4 = heads[20:52].reshape(1, 32, H, W)
    segments = seg_flat.reshape(H, W)

    return (out_boundary, out_emb, out_binary_seg,
            edge_feat_list, node_feat_list, segments, adj, spix4)


# ----------------------------------------------------------------------------
if __name__ == "__main__":
    n_channels = 1
    nfeatures = 16
    graph_layers = 2
    H = W = 32

    key = jax.random.PRNGKey(0)
    k_param, k_x = jax.random.split(key)
    params = init_params(k_param, n_channels, nfeatures, graph_layers)
    prep = prepare_params(params, graph_layers)           # one-time weight prep

    x = jax.random.normal(k_x, (1, n_channels, H, W), jnp.float32)
    fg = jnp.ones((1, 1, H, W), jnp.float32)

    fwd = jax.jit(functools.partial(unet_egnn_forward, graph_layers=graph_layers))
    outs = fwd(prep, x, fg)
    outs = jax.block_until_ready(outs)

    print("KERNEL_OK")
</pallas_src>

<mosaic_0001>
module attributes {stable_mosaic.version = 11 : i64} {
  func.func @_fused_kernel(%arg0: memref<1x1024xf32, #tpu.memory_space<vmem>>, %arg1: memref<1x1024xf32, #tpu.memory_space<vmem>>, %arg2: memref<16x9xf32, #tpu.memory_space<vmem>>, %arg3: memref<16x1xf32, #tpu.memory_space<vmem>>, %arg4: memref<16x144xbf16, #tpu.memory_space<vmem>>, %arg5: memref<16x1xf32, #tpu.memory_space<vmem>>, %arg6: memref<16x144xbf16, #tpu.memory_space<vmem>>, %arg7: memref<16x1xf32, #tpu.memory_space<vmem>>, %arg8: memref<56x16xbf16, #tpu.memory_space<vmem>>, %arg9: memref<56x1xf32, #tpu.memory_space<vmem>>, %arg10: memref<48x34xbf16, #tpu.memory_space<vmem>>, %arg11: memref<2x34xf32, #tpu.memory_space<vmem>>, %arg12: memref<48x34xbf16, #tpu.memory_space<vmem>>, %arg13: memref<2x34xf32, #tpu.memory_space<vmem>>, %arg14: memref<1x34xf32, #tpu.memory_space<vmem>>, %arg15: memref<34x16xbf16, #tpu.memory_space<vmem>>, %arg16: memref<1x34x34xbf16, #tpu.memory_space<vmem>>, %arg17: memref<1x34x34xbf16, #tpu.memory_space<vmem>>, %arg18: memref<1x1x34xf32, #tpu.memory_space<vmem>>, %arg19: memref<1x34x16xbf16, #tpu.memory_space<vmem>>, %arg20: memref<56x1024xf32, #tpu.memory_space<vmem>>, %arg21: memref<1x1024xi32, #tpu.memory_space<vmem>>, %arg22: memref<16x16xf32, #tpu.memory_space<vmem>>, %arg23: memref<2x16x16xf32, #tpu.memory_space<vmem>>, %arg24: memref<2x16x34xf32, #tpu.memory_space<vmem>>, %arg25: memref<144x1024xbf16, #tpu.memory_space<vmem>>) attributes {dimension_semantics = [], scalar_prefetch = 0 : i64, scratch_operands = 1 : i64, tpu.core_type = #tpu.core_type<tc>} {
    %0 = tpu.iota {dimensions = array<i32: 1>} : vector<1x1024xi32>
    %c5_i32 = arith.constant 5 : i32
    %1 = vector.broadcast %c5_i32 : i32 to vector<1x1024xi32>
    %2 = arith.shrsi %0, %1 : vector<1x1024xi32>
    %c31_i32 = arith.constant 31 : i32
    %3 = vector.broadcast %c31_i32 : i32 to vector<1x1024xi32>
    %4 = arith.andi %0, %3 : vector<1x1024xi32>
    %c0 = arith.constant 0 : index
    %c0_0 = arith.constant 0 : index
    %5 = vector.load %arg0[%c0, %c0_0] : memref<1x1024xf32, #tpu.memory_space<vmem>>, vector<1x1024xf32>
    %cst = arith.constant 0.000000e+00 : f32
    %6 = vector.broadcast %cst : f32 to vector<16x1024xf32>
    %c0_1 = arith.constant 0 : index
    %c0_2 = arith.constant 0 : index
    %7 = vector.load %arg2[%c0_1, %c0_2] : memref<16x9xf32, #tpu.memory_space<vmem>>, vector<16x1xf32>
    %c33_i32 = arith.constant 33 : i32
    %8 = tpu.dynamic_rotate %5 by %c33_i32 dim 1 : vector<1x1024xf32>, i32 -> vector<1x1024xf32>
    %c-1_i32 = arith.constant -1 : i32
    %9 = vector.broadcast %c-1_i32 : i32 to vector<1x1024xi32>
    %10 = arith.addi %2, %9 : vector<1x1024xi32>
    %c0_i32 = arith.constant 0 : i32
    %11 = vector.broadcast %c0_i32 : i32 to vector<1x1024xi32>
    %12 = arith.cmpi sge, %10, %11 : vector<1x1024xi32>
    %c-1_i32_3 = arith.constant -1 : i32
    %13 = vector.broadcast %c-1_i32_3 : i32 to vector<1x1024xi32>
    %14 = arith.addi %2, %13 : vector<1x1024xi32>
    %c32_i32 = arith.constant 32 : i32
    %15 = vector.broadcast %c32_i32 : i32 to vector<1x1024xi32>
    %16 = arith.cmpi slt, %14, %15 : vector<1x1024xi32>
    %17 = arith.andi %12, %16 : vector<1x1024xi1>
    %c-1_i32_4 = arith.constant -1 : i32
    %18 = vector.broadcast %c-1_i32_4 : i32 to vector<1x1024xi32>
    %19 = arith.addi %4, %18 : vector<1x1024xi32>
    %c0_i32_5 = arith.constant 0 : i32
    %20 = vector.broadcast %c0_i32_5 : i32 to vector<1x1024xi32>
    %21 = arith.cmpi sge, %19, %20 : vector<1x1024xi32>
    %22 = arith.andi %17, %21 : vector<1x1024xi1>
    %c-1_i32_6 = arith.constant -1 : i32
    %23 = vector.broadcast %c-1_i32_6 : i32 to vector<1x1024xi32>
    %24 = arith.addi %4, %23 : vector<1x1024xi32>
    %c32_i32_7 = arith.constant 32 : i32
    %25 = vector.broadcast %c32_i32_7 : i32 to vector<1x1024xi32>
    %26 = arith.cmpi slt, %24, %25 : vector<1x1024xi32>
    %27 = arith.andi %22, %26 : vector<1x1024xi1>
    %28 = arith.extui %27 : vector<1x1024xi1> to vector<1x1024xi32>
    %29 = arith.sitofp %28 : vector<1x1024xi32> to vector<1x1024xf32>
    %30 = arith.mulf %8, %29 : vector<1x1024xf32>
    %31 = vector.broadcast %7 : vector<16x1xf32> to vector<16x1024xf32>
    %32 = vector.broadcast %30 : vector<1x1024xf32> to vector<16x1024xf32>
    %33 = arith.mulf %31, %32 : vector<16x1024xf32>
    %34 = arith.addf %6, %33 : vector<16x1024xf32>
    %c0_8 = arith.constant 0 : index
    %c1 = arith.constant 1 : index
    %35 = vector.load %arg2[%c0_8, %c1] : memref<16x9xf32, #tpu.memory_space<vmem>>, vector<16x1xf32>
    %c32_i32_9 = arith.constant 32 : i32
    %36 = tpu.dynamic_rotate %5 by %c32_i32_9 dim 1 : vector<1x1024xf32>, i32 -> vector<1x1024xf32>
    %c-1_i32_10 = arith.constant -1 : i32
    %37 = vector.broadcast %c-1_i32_10 : i32 to vector<1x1024xi32>
    %38 = arith.addi %2, %37 : vector<1x1024xi32>
    %c0_i32_11 = arith.constant 0 : i32
    %39 = vector.broadcast %c0_i32_11 : i32 to vector<1x1024xi32>
    %40 = arith.cmpi sge, %38, %39 : vector<1x1024xi32>
    %c-1_i32_12 = arith.constant -1 : i32
    %41 = vector.broadcast %c-1_i32_12 : i32 to vector<1x1024xi32>
    %42 = arith.addi %2, %41 : vector<1x1024xi32>
    %c32_i32_13 = arith.constant 32 : i32
    %43 = vector.broadcast %c32_i32_13 : i32 to vector<1x1024xi32>
    %44 = arith.cmpi slt, %42, %43 : vector<1x1024xi32>
    %45 = arith.andi %40, %44 : vector<1x1024xi1>
    %c0_i32_14 = arith.constant 0 : i32
    %46 = vector.broadcast %c0_i32_14 : i32 to vector<1x1024xi32>
    %47 = arith.addi %4, %46 : vector<1x1024xi32>
    %c0_i32_15 = arith.constant 0 : i32
    %48 = vector.broadcast %c0_i32_15 : i32 to vector<1x1024xi32>
    %49 = arith.cmpi sge, %47, %48 : vector<1x1024xi32>
    %50 = arith.andi %45, %49 : vector<1x1024xi1>
    %c0_i32_16 = arith.constant 0 : i32
    %51 = vector.broadcast %c0_i32_16 : i32 to vector<1x1024xi32>
    %52 = arith.addi %4, %51 : vector<1x1024xi32>
    %c32_i32_17 = arith.constant 32 : i32
    %53 = vector.broadcast %c32_i32_17 : i32 to vector<1x1024xi32>
    %54 = arith.cmpi slt, %52, %53 : vector<1x1024xi32>
    %55 = arith.andi %50, %54 : vector<1x1024xi1>
    %56 = arith.extui %55 : vector<1x1024xi1> to vector<1x1024xi32>
    %57 = arith.sitofp %56 : vector<1x1024xi32> to vector<1x1024xf32>
    %58 = arith.mulf %36, %57 : vector<1x1024xf32>
    %59 = vector.broadcast %35 : vector<16x1xf32> to vector<16x1024xf32>
    %60 = vector.broadcast %58 : vector<1x1024xf32> to vector<16x1024xf32>
    %61 = arith.mulf %59, %60 : vector<16x1024xf32>
    %62 = arith.addf %34, %61 : vector<16x1024xf32>
    %c0_18 = arith.constant 0 : index
    %c2 = arith.constant 2 : index
    %63 = vector.load %arg2[%c0_18, %c2] : memref<16x9xf32, #tpu.memory_space<vmem>>, vector<16x1xf32>
    %c31_i32_19 = arith.constant 31 : i32
    %64 = tpu.dynamic_rotate %5 by %c31_i32_19 dim 1 : vector<1x1024xf32>, i32 -> vector<1x1024xf32>
    %c-1_i32_20 = arith.constant -1 : i32
    %65 = vector.broadcast %c-1_i32_20 : i32 to vector<1x1024xi32>
    %66 = arith.addi %2, %65 : vector<1x1024xi32>
    %c0_i32_21 = arith.constant 0 : i32
    %67 = vector.broadcast %c0_i32_21 : i32 to vector<1x1024xi32>
    %68 = arith.cmpi sge, %66, %67 : vector<1x1024xi32>
    %c-1_i32_22 = arith.constant -1 : i32
    %69 = vector.broadcast %c-1_i32_22 : i32 to vector<1x1024xi32>
    %70 = arith.addi %2, %69 : vector<1x1024xi32>
    %c32_i32_23 = arith.constant 32 : i32
    %71 = vector.broadcast %c32_i32_23 : i32 to vector<1x1024xi32>
    %72 = arith.cmpi slt, %70, %71 : vector<1x1024xi32>
    %73 = arith.andi %68, %72 : vector<1x1024xi1>
    %c1_i32 = arith.constant 1 : i32
    %74 = vector.broadcast %c1_i32 : i32 to vector<1x1024xi32>
    %75 = arith.addi %4, %74 : vector<1x1024xi32>
    %c0_i32_24 = arith.constant 0 : i32
    %76 = vector.broadcast %c0_i32_24 : i32 to vector<1x1024xi32>
    %77 = arith.cmpi sge, %75, %76 : vector<1x1024xi32>
    %78 = arith.andi %73, %77 : vector<1x1024xi1>
    %c1_i32_25 = arith.constant 1 : i32
    %79 = vector.broadcast %c1_i32_25 : i32 to vector<1x1024xi32>
    %80 = arith.addi %4, %79 : vector<1x1024xi32>
    %c32_i32_26 = arith.constant 32 : i32
    %81 = vector.broadcast %c32_i32_26 : i32 to vector<1x1024xi32>
    %82 = arith.cmpi slt, %80, %81 : vector<1x1024xi32>
    %83 = arith.andi %78, %82 : vector<1x1024xi1>
    %84 = arith.extui %83 : vector<1x1024xi1> to vector<1x1024xi32>
    %85 = arith.sitofp %84 : vector<1x1024xi32> to vector<1x1024xf32>
    %86 = arith.mulf %64, %85 : vector<1x1024xf32>
    %87 = vector.broadcast %63 : vector<16x1xf32> to vector<16x1024xf32>
    %88 = vector.broadcast %86 : vector<1x1024xf32> to vector<16x1024xf32>
    %89 = arith.mulf %87, %88 : vector<16x1024xf32>
    %90 = arith.addf %62, %89 : vector<16x1024xf32>
    %c0_27 = arith.constant 0 : index
    %c3 = arith.constant 3 : index
    %91 = vector.load %arg2[%c0_27, %c3] : memref<16x9xf32, #tpu.memory_space<vmem>>, vector<16x1xf32>
    %c1_i32_28 = arith.constant 1 : i32
    %92 = tpu.dynamic_rotate %5 by %c1_i32_28 dim 1 : vector<1x1024xf32>, i32 -> vector<1x1024xf32>
    %c0_i32_29 = arith.constant 0 : i32
    %93 = vector.broadcast %c0_i32_29 : i32 to vector<1x1024xi32>
    %94 = arith.addi %2, %93 : vector<1x1024xi32>
    %c0_i32_30 = arith.constant 0 : i32
    %95 = vector.broadcast %c0_i32_30 : i32 to vector<1x1024xi32>
    %96 = arith.cmpi sge, %94, %95 : vector<1x1024xi32>
    %c0_i32_31 = arith.constant 0 : i32
    %97 = vector.broadcast %c0_i32_31 : i32 to vector<1x1024xi32>
    %98 = arith.addi %2, %97 : vector<1x1024xi32>
    %c32_i32_32 = arith.constant 32 : i32
    %99 = vector.broadcast %c32_i32_32 : i32 to vector<1x1024xi32>
    %100 = arith.cmpi slt, %98, %99 : vector<1x1024xi32>
    %101 = arith.andi %96, %100 : vector<1x1024xi1>
    %c-1_i32_33 = arith.constant -1 : i32
    %102 = vector.broadcast %c-1_i32_33 : i32 to vector<1x1024xi32>
    %103 = arith.addi %4, %102 : vector<1x1024xi32>
    %c0_i32_34 = arith.constant 0 : i32
    %104 = vector.broadcast %c0_i32_34 : i32 to vector<1x1024xi32>
    %105 = arith.cmpi sge, %103, %104 : vector<1x1024xi32>
    %106 = arith.andi %101, %105 : vector<1x1024xi1>
    %c-1_i32_35 = arith.constant -1 : i32
    %107 = vector.broadcast %c-1_i32_35 : i32 to vector<1x1024xi32>
    %108 = arith.addi %4, %107 : vector<1x1024xi32>
    %c32_i32_36 = arith.constant 32 : i32
    %109 = vector.broadcast %c32_i32_36 : i32 to vector<1x1024xi32>
    %110 = arith.cmpi slt, %108, %109 : vector<1x1024xi32>
    %111 = arith.andi %106, %110 : vector<1x1024xi1>
    %112 = arith.extui %111 : vector<1x1024xi1> to vector<1x1024xi32>
    %113 = arith.sitofp %112 : vector<1x1024xi32> to vector<1x1024xf32>
    %114 = arith.mulf %92, %113 : vector<1x1024xf32>
    %115 = vector.broadcast %91 : vector<16x1xf32> to vector<16x1024xf32>
    %116 = vector.broadcast %114 : vector<1x1024xf32> to vector<16x1024xf32>
    %117 = arith.mulf %115, %116 : vector<16x1024xf32>
    %118 = arith.addf %90, %117 : vector<16x1024xf32>
    %c0_37 = arith.constant 0 : index
    %c4 = arith.constant 4 : index
    %119 = vector.load %arg2[%c0_37, %c4] : memref<16x9xf32, #tpu.memory_space<vmem>>, vector<16x1xf32>
    %120 = vector.broadcast %119 : vector<16x1xf32> to vector<16x1024xf32>
    %121 = vector.broadcast %5 : vector<1x1024xf32> to vector<16x1024xf32>
    %122 = arith.mulf %120, %121 : vector<16x1024xf32>
    %123 = arith.addf %118, %122 : vector<16x1024xf32>
    %c0_38 = arith.constant 0 : index
    %c5 = arith.constant 5 : index
    %124 = vector.load %arg2[%c0_38, %c5] : memref<16x9xf32, #tpu.memory_space<vmem>>, vector<16x1xf32>
    %c1023_i32 = arith.constant 1023 : i32
    %125 = tpu.dynamic_rotate %5 by %c1023_i32 dim 1 : vector<1x1024xf32>, i32 -> vector<1x1024xf32>
    %c0_i32_39 = arith.constant 0 : i32
    %126 = vector.broadcast %c0_i32_39 : i32 to vector<1x1024xi32>
    %127 = arith.addi %2, %126 : vector<1x1024xi32>
    %c0_i32_40 = arith.constant 0 : i32
    %128 = vector.broadcast %c0_i32_40 : i32 to vector<1x1024xi32>
    %129 = arith.cmpi sge, %127, %128 : vector<1x1024xi32>
    %c0_i32_41 = arith.constant 0 : i32
    %130 = vector.broadcast %c0_i32_41 : i32 to vector<1x1024xi32>
    %131 = arith.addi %2, %130 : vector<1x1024xi32>
    %c32_i32_42 = arith.constant 32 : i32
    %132 = vector.broadcast %c32_i32_42 : i32 to vector<1x1024xi32>
    %133 = arith.cmpi slt, %131, %132 : vector<1x1024xi32>
    %134 = arith.andi %129, %133 : vector<1x1024xi1>
    %c1_i32_43 = arith.constant 1 : i32
    %135 = vector.broadcast %c1_i32_43 : i32 to vector<1x1024xi32>
    %136 = arith.addi %4, %135 : vector<1x1024xi32>
    %c0_i32_44 = arith.constant 0 : i32
    %137 = vector.broadcast %c0_i32_44 : i32 to vector<1x1024xi32>
    %138 = arith.cmpi sge, %136, %137 : vector<1x1024xi32>
    %139 = arith.andi %134, %138 : vector<1x1024xi1>
    %c1_i32_45 = arith.constant 1 : i32
    %140 = vector.broadcast %c1_i32_45 : i32 to vector<1x1024xi32>
    %141 = arith.addi %4, %140 : vector<1x1024xi32>
    %c32_i32_46 = arith.constant 32 : i32
    %142 = vector.broadcast %c32_i32_46 : i32 to vector<1x1024xi32>
    %143 = arith.cmpi slt, %141, %142 : vector<1x1024xi32>
    %144 = arith.andi %139, %143 : vector<1x1024xi1>
    %145 = arith.extui %144 : vector<1x1024xi1> to vector<1x1024xi32>
    %146 = arith.sitofp %145 : vector<1x1024xi32> to vector<1x1024xf32>
    %147 = arith.mulf %125, %146 : vector<1x1024xf32>
    %148 = vector.broadcast %124 : vector<16x1xf32> to vector<16x1024xf32>
    %149 = vector.broadcast %147 : vector<1x1024xf32> to vector<16x1024xf32>
    %150 = arith.mulf %148, %149 : vector<16x1024xf32>
    %151 = arith.addf %123, %150 : vector<16x1024xf32>
    %c0_47 = arith.constant 0 : index
    %c6 = arith.constant 6 : index
    %152 = vector.load %arg2[%c0_47, %c6] : memref<16x9xf32, #tpu.memory_space<vmem>>, vector<16x1xf32>
    %c993_i32 = arith.constant 993 : i32
    %153 = tpu.dynamic_rotate %5 by %c993_i32 dim 1 : vector<1x1024xf32>, i32 -> vector<1x1024xf32>
    %c1_i32_48 = arith.constant 1 : i32
    %154 = vector.broadcast %c1_i32_48 : i32 to vector<1x1024xi32>
    %155 = arith.addi %2, %154 : vector<1x1024xi32>
    %c0_i32_49 = arith.constant 0 : i32
    %156 = vector.broadcast %c0_i32_49 : i32 to vector<1x1024xi32>
    %157 = arith.cmpi sge, %155, %156 : vector<1x1024xi32>
    %c1_i32_50 = arith.constant 1 : i32
    %158 = vector.broadcast %c1_i32_50 : i32 to vector<1x1024xi32>
    %159 = arith.addi %2, %158 : vector<1x1024xi32>
    %c32_i32_51 = arith.constant 32 : i32
    %160 = vector.broadcast %c32_i32_51 : i32 to vector<1x1024xi32>
    %161 = arith.cmpi slt, %159, %160 : vector<1x1024xi32>
    %162 = arith.andi %157, %161 : vector<1x1024xi1>
    %c-1_i32_52 = arith.constant -1 : i32
    %163 = vector.broadcast %c-1_i32_52 : i32 to vector<1x1024xi32>
    %164 = arith.addi %4, %163 : vector<1x1024xi32>
    %c0_i32_53 = arith.constant 0 : i32
    %165 = vector.broadcast %c0_i32_53 : i32 to vector<1x1024xi32>
    %166 = arith.cmpi sge, %164, %165 : vector<1x1024xi32>
    %167 = arith.andi %162, %166 : vector<1x1024xi1>
    %c-1_i32_54 = arith.constant -1 : i32
    %168 = vector.broadcast %c-1_i32_54 : i32 to vector<1x1024xi32>
    %169 = arith.addi %4, %168 : vector<1x1024xi32>
    %c32_i32_55 = arith.constant 32 : i32
    %170 = vector.broadcast %c32_i32_55 : i32 to vector<1x1024xi32>
    %171 = arith.cmpi slt, %169, %170 : vector<1x1024xi32>
    %172 = arith.andi %167, %171 : vector<1x1024xi1>
    %173 = arith.extui %172 : vector<1x1024xi1> to vector<1x1024xi32>
    %174 = arith.sitofp %173 : vector<1x1024xi32> to vector<1x1024xf32>
    %175 = arith.mulf %153, %174 : vector<1x1024xf32>
    %176 = vector.broadcast %152 : vector<16x1xf32> to vector<16x1024xf32>
    %177 = vector.broadcast %175 : vector<1x1024xf32> to vector<16x1024xf32>
    %178 = arith.mulf %176, %177 : vector<16x1024xf32>
    %179 = arith.addf %151, %178 : vector<16x1024xf32>
    %c0_56 = arith.constant 0 : index
    %c7 = arith.constant 7 : index
    %180 = vector.load %arg2[%c0_56, %c7] : memref<16x9xf32, #tpu.memory_space<vmem>>, vector<16x1xf32>
    %c992_i32 = arith.constant 992 : i32
    %181 = tpu.dynamic_rotate %5 by %c992_i32 dim 1 : vector<1x1024xf32>, i32 -> vector<1x1024xf32>
    %c1_i32_57 = arith.constant 1 : i32
    %182 = vector.broadcast %c1_i32_57 : i32 to vector<1x1024xi32>
    %183 = arith.addi %2, %182 : vector<1x1024xi32>
    %c0_i32_58 = arith.constant 0 : i32
    %184 = vector.broadcast %c0_i32_58 : i32 to vector<1x1024xi32>
    %185 = arith.cmpi sge, %183, %184 : vector<1x1024xi32>
    %c1_i32_59 = arith.constant 1 : i32
    %186 = vector.broadcast %c1_i32_59 : i32 to vector<1x1024xi32>
    %187 = arith.addi %2, %186 : vector<1x1024xi32>
    %c32_i32_60 = arith.constant 32 : i32
    %188 = vector.broadcast %c32_i32_60 : i32 to vector<1x1024xi32>
    %189 = arith.cmpi slt, %187, %188 : vector<1x1024xi32>
    %190 = arith.andi %185, %189 : vector<1x1024xi1>
    %c0_i32_61 = arith.constant 0 : i32
    %191 = vector.broadcast %c0_i32_61 : i32 to vector<1x1024xi32>
    %192 = arith.addi %4, %191 : vector<1x1024xi32>
    %c0_i32_62 = arith.constant 0 : i32
    %193 = vector.broadcast %c0_i32_62 : i32 to vector<1x1024xi32>
    %194 = arith.cmpi sge, %192, %193 : vector<1x1024xi32>
    %195 = arith.andi %190, %194 : vector<1x1024xi1>
    %c0_i32_63 = arith.constant 0 : i32
    %196 = vector.broadcast %c0_i32_63 : i32 to vector<1x1024xi32>
    %197 = arith.addi %4, %196 : vector<1x1024xi32>
    %c32_i32_64 = arith.constant 32 : i32
    %198 = vector.broadcast %c32_i32_64 : i32 to vector<1x1024xi32>
    %199 = arith.cmpi slt, %197, %198 : vector<1x1024xi32>
    %200 = arith.andi %195, %199 : vector<1x1024xi1>
    %201 = arith.extui %200 : vector<1x1024xi1> to vector<1x1024xi32>
    %202 = arith.sitofp %201 : vector<1x1024xi32> to vector<1x1024xf32>
    %203 = arith.mulf %181, %202 : vector<1x1024xf32>
    %204 = vector.broadcast %180 : vector<16x1xf32> to vector<16x1024xf32>
    %205 = vector.broadcast %203 : vector<1x1024xf32> to vector<16x1024xf32>
    %206 = arith.mulf %204, %205 : vector<16x1024xf32>
    %207 = arith.addf %179, %206 : vector<16x1024xf32>
    %c0_65 = arith.constant 0 : index
    %c8 = arith.constant 8 : index
    %208 = vector.load %arg2[%c0_65, %c8] : memref<16x9xf32, #tpu.memory_space<vmem>>, vector<16x1xf32>
    %c991_i32 = arith.constant 991 : i32
    %209 = tpu.dynamic_rotate %5 by %c991_i32 dim 1 : vector<1x1024xf32>, i32 -> vector<1x1024xf32>
    %c1_i32_66 = arith.constant 1 : i32
    %210 = vector.broadcast %c1_i32_66 : i32 to vector<1x1024xi32>
    %211 = arith.addi %2, %210 : vector<1x1024xi32>
    %c0_i32_67 = arith.constant 0 : i32
    %212 = vector.broadcast %c0_i32_67 : i32 to vector<1x1024xi32>
    %213 = arith.cmpi sge, %211, %212 : vector<1x1024xi32>
    %c1_i32_68 = arith.constant 1 : i32
    %214 = vector.broadcast %c1_i32_68 : i32 to vector<1x1024xi32>
    %215 = arith.addi %2, %214 : vector<1x1024xi32>
    %c32_i32_69 = arith.constant 32 : i32
    %216 = vector.broadcast %c32_i32_69 : i32 to vector<1x1024xi32>
    %217 = arith.cmpi slt, %215, %216 : vector<1x1024xi32>
    %218 = arith.andi %213, %217 : vector<1x1024xi1>
    %c1_i32_70 = arith.constant 1 : i32
    %219 = vector.broadcast %c1_i32_70 : i32 to vector<1x1024xi32>
    %220 = arith.addi %4, %219 : vector<1x1024xi32>
    %c0_i32_71 = arith.constant 0 : i32
    %221 = vector.broadcast %c0_i32_71 : i32 to vector<1x1024xi32>
    %222 = arith.cmpi sge, %220, %221 : vector<1x1024xi32>
    %223 = arith.andi %218, %222 : vector<1x1024xi1>
    %c1_i32_72 = arith.constant 1 : i32
    %224 = vector.broadcast %c1_i32_72 : i32 to vector<1x1024xi32>
    %225 = arith.addi %4, %224 : vector<1x1024xi32>
    %c32_i32_73 = arith.constant 32 : i32
    %226 = vector.broadcast %c32_i32_73 : i32 to vector<1x1024xi32>
    %227 = arith.cmpi slt, %225, %226 : vector<1x1024xi32>
    %228 = arith.andi %223, %227 : vector<1x1024xi1>
    %229 = arith.extui %228 : vector<1x1024xi1> to vector<1x1024xi32>
    %230 = arith.sitofp %229 : vector<1x1024xi32> to vector<1x1024xf32>
    %231 = arith.mulf %209, %230 : vector<1x1024xf32>
    %232 = vector.broadcast %208 : vector<16x1xf32> to vector<16x1024xf32>
    %233 = vector.broadcast %231 : vector<1x1024xf32> to vector<16x1024xf32>
    %234 = arith.mulf %232, %233 : vector<16x1024xf32>
    %235 = arith.addf %207, %234 : vector<16x1024xf32>
    %c0_74 = arith.constant 0 : index
    %c0_75 = arith.constant 0 : index
    %236 = vector.load %arg3[%c0_74, %c0_75] : memref<16x1xf32, #tpu.memory_space<vmem>>, vector<16x1xf32>
    %237 = vector.broadcast %236 : vector<16x1xf32> to vector<16x1024xf32>
    %238 = arith.addf %235, %237 : vector<16x1024xf32>
    %cst_76 = arith.constant 0.000000e+00 : f32
    %239 = vector.broadcast %cst_76 : f32 to vector<16x1024xf32>
    %240 = arith.maximumf %238, %239 : vector<16x1024xf32>
    %c33_i32_77 = arith.constant 33 : i32
    %241 = tpu.dynamic_rotate %240 by %c33_i32_77 dim 1 : vector<16x1024xf32>, i32 -> vector<16x1024xf32>
    %c-1_i32_78 = arith.constant -1 : i32
    %242 = vector.broadcast %c-1_i32_78 : i32 to vector<1x1024xi32>
    %243 = arith.addi %2, %242 : vector<1x1024xi32>
    %c0_i32_79 = arith.constant 0 : i32
    %244 = vector.broadcast %c0_i32_79 : i32 to vector<1x1024xi32>
    %245 = arith.cmpi sge, %243, %244 : vector<1x1024xi32>
    %c-1_i32_80 = arith.constant -1 : i32
    %246 = vector.broadcast %c-1_i32_80 : i32 to vector<1x1024xi32>
    %247 = arith.addi %2, %246 : vector<1x1024xi32>
    %c32_i32_81 = arith.constant 32 : i32
    %248 = vector.broadcast %c32_i32_81 : i32 to vector<1x1024xi32>
    %249 = arith.cmpi slt, %247, %248 : vector<1x1024xi32>
    %250 = arith.andi %245, %249 : vector<1x1024xi1>
    %c-1_i32_82 = arith.constant -1 : i32
    %251 = vector.broadcast %c-1_i32_82 : i32 to vector<1x1024xi32>
    %252 = arith.addi %4, %251 : vector<1x1024xi32>
    %c0_i32_83 = arith.constant 0 : i32
    %253 = vector.broadcast %c0_i32_83 : i32 to vector<1x1024xi32>
    %254 = arith.cmpi sge, %252, %253 : vector<1x1024xi32>
    %255 = arith.andi %250, %254 : vector<1x1024xi1>
    %c-1_i32_84 = arith.constant -1 : i32
    %256 = vector.broadcast %c-1_i32_84 : i32 to vector<1x1024xi32>
    %257 = arith.addi %4, %256 : vector<1x1024xi32>
    %c32_i32_85 = arith.constant 32 : i32
    %258 = vector.broadcast %c32_i32_85 : i32 to vector<1x1024xi32>
    %259 = arith.cmpi slt, %257, %258 : vector<1x1024xi32>
    %260 = arith.andi %255, %259 : vector<1x1024xi1>
    %261 = arith.extui %260 : vector<1x1024xi1> to vector<1x1024xi32>
    %262 = arith.sitofp %261 : vector<1x1024xi32> to vector<1x1024xf32>
    %263 = vector.broadcast %262 : vector<1x1024xf32> to vector<16x1024xf32>
    %264 = arith.mulf %241, %263 : vector<16x1024xf32>
    %265 = arith.truncf %264 : vector<16x1024xf32> to vector<16x1024xbf16>
    %c0_86 = arith.constant 0 : index
    %c0_87 = arith.constant 0 : index
    %266 = vector.load %arg25[%c0_86, %c0_87] : memref<144x1024xbf16, #tpu.memory_space<vmem>>, vector<16x1024xbf16>
    tpu.vector_store %arg25[%c0_86, %c0_87], %265 {strides = array<i32>} : memref<144x1024xbf16, #tpu.memory_space<vmem>>, vector<16x1024xbf16>,
    %c32_i32_88 = arith.constant 32 : i32
    %267 = tpu.dynamic_rotate %240 by %c32_i32_88 dim 1 : vector<16x1024xf32>, i32 -> vector<16x1024xf32>
    %c-1_i32_89 = arith.constant -1 : i32
    %268 = vector.broadcast %c-1_i32_89 : i32 to vector<1x1024xi32>
    %269 = arith.addi %2, %268 : vector<1x1024xi32>
    %c0_i32_90 = arith.constant 0 : i32
    %270 = vector.broadcast %c0_i32_90 : i32 to vector<1x1024xi32>
    %271 = arith.cmpi sge, %269, %270 : vector<1x1024xi32>
    %c-1_i32_91 = arith.constant -1 : i32
    %272 = vector.broadcast %c-1_i32_91 : i32 to vector<1x1024xi32>
    %273 = arith.addi %2, %272 : vector<1x1024xi32>
    %c32_i32_92 = arith.constant 32 : i32
    %274 = vector.broadcast %c32_i32_92 : i32 to vector<1x1024xi32>
    %275 = arith.cmpi slt, %273, %274 : vector<1x1024xi32>
    %276 = arith.andi %271, %275 : vector<1x1024xi1>
    %c0_i32_93 = arith.constant 0 : i32
    %277 = vector.broadcast %c0_i32_93 : i32 to vector<1x1024xi32>
    %278 = arith.addi %4, %277 : vector<1x1024xi32>
    %c0_i32_94 = arith.constant 0 : i32
    %279 = vector.broadcast %c0_i32_94 : i32 to vector<1x1024xi32>
    %280 = arith.cmpi sge, %278, %279 : vector<1x1024xi32>
    %281 = arith.andi %276, %280 : vector<1x1024xi1>
    %c0_i32_95 = arith.constant 0 : i32
    %282 = vector.broadcast %c0_i32_95 : i32 to vector<1x1024xi32>
    %283 = arith.addi %4, %282 : vector<1x1024xi32>
    %c32_i32_96 = arith.constant 32 : i32
    %284 = vector.broadcast %c32_i32_96 : i32 to vector<1x1024xi32>
    %285 = arith.cmpi slt, %283, %284 : vector<1x1024xi32>
    %286 = arith.andi %281, %285 : vector<1x1024xi1>
    %287 = arith.extui %286 : vector<1x1024xi1> to vector<1x1024xi32>
    %288 = arith.sitofp %287 : vector<1x1024xi32> to vector<1x1024xf32>
    %289 = vector.broadcast %288 : vector<1x1024xf32> to vector<16x1024xf32>
    %290 = arith.mulf %267, %289 : vector<16x1024xf32>
    %291 = arith.truncf %290 : vector<16x1024xf32> to vector<16x1024xbf16>
    %c16 = arith.constant 16 : index
    %c0_97 = arith.constant 0 : index
    %292 = vector.load %arg25[%c16, %c0_97] : memref<144x1024xbf16, #tpu.memory_space<vmem>>, vector<16x1024xbf16>
    tpu.vector_store %arg25[%c16, %c0_97], %291 {strides = array<i32>} : memref<144x1024xbf16, #tpu.memory_space<vmem>>, vector<16x1024xbf16>,
    %c31_i32_98 = arith.constant 31 : i32
    %293 = tpu.dynamic_rotate %240 by %c31_i32_98 dim 1 : vector<16x1024xf32>, i32 -> vector<16x1024xf32>
    %c-1_i32_99 = arith.constant -1 : i32
    %294 = vector.broadcast %c-1_i32_99 : i32 to vector<1x1024xi32>
    %295 = arith.addi %2, %294 : vector<1x1024xi32>
    %c0_i32_100 = arith.constant 0 : i32
    %296 = vector.broadcast %c0_i32_100 : i32 to vector<1x1024xi32>
    %297 = arith.cmpi sge, %295, %296 : vector<1x1024xi32>
    %c-1_i32_101 = arith.constant -1 : i32
    %298 = vector.broadcast %c-1_i32_101 : i32 to vector<1x1024xi32>
    %299 = arith.addi %2, %298 : vector<1x1024xi32>
    %c32_i32_102 = arith.constant 32 : i32
    %300 = vector.broadcast %c32_i32_102 : i32 to vector<1x1024xi32>
    %301 = arith.cmpi slt, %299, %300 : vector<1x1024xi32>
    %302 = arith.andi %297, %301 : vector<1x1024xi1>
    %c1_i32_103 = arith.constant 1 : i32
    %303 = vector.broadcast %c1_i32_103 : i32 to vector<1x1024xi32>
    %304 = arith.addi %4, %303 : vector<1x1024xi32>
    %c0_i32_104 = arith.constant 0 : i32
    %305 = vector.broadcast %c0_i32_104 : i32 to vector<1x1024xi32>
    %306 = arith.cmpi sge, %304, %305 : vector<1x1024xi32>
    %307 = arith.andi %302, %306 : vector<1x1024xi1>
    %c1_i32_105 = arith.constant 1 : i32
    %308 = vector.broadcast %c1_i32_105 : i32 to vector<1x1024xi32>
    %309 = arith.addi %4, %308 : vector<1x1024xi32>
    %c32_i32_106 = arith.constant 32 : i32
    %310 = vector.broadcast %c32_i32_106 : i32 to vector<1x1024xi32>
    %311 = arith.cmpi slt, %309, %310 : vector<1x1024xi32>
    %312 = arith.andi %307, %311 : vector<1x1024xi1>
    %313 = arith.extui %312 : vector<1x1024xi1> to vector<1x1024xi32>
    %314 = arith.sitofp %313 : vector<1x1024xi32> to vector<1x1024xf32>
    %315 = vector.broadcast %314 : vector<1x1024xf32> to vector<16x1024xf32>
    %316 = arith.mulf %293, %315 : vector<16x1024xf32>
    %317 = arith.truncf %316 : vector<16x1024xf32> to vector<16x1024xbf16>
    %c32 = arith.constant 32 : index
    %c0_107 = arith.constant 0 : index
    %318 = vector.load %arg25[%c32, %c0_107] : memref<144x1024xbf16, #tpu.memory_space<vmem>>, vector<16x1024xbf16>
    tpu.vector_store %arg25[%c32, %c0_107], %317 {strides = array<i32>} : memref<144x1024xbf16, #tpu.memory_space<vmem>>, vector<16x1024xbf16>,
    %c1_i32_108 = arith.constant 1 : i32
    %319 = tpu.dynamic_rotate %240 by %c1_i32_108 dim 1 : vector<16x1024xf32>, i32 -> vector<16x1024xf32>
    %c0_i32_109 = arith.constant 0 : i32
    %320 = vector.broadcast %c0_i32_109 : i32 to vector<1x1024xi32>
    %321 = arith.addi %2, %320 : vector<1x1024xi32>
    %c0_i32_110 = arith.constant 0 : i32
    %322 = vector.broadcast %c0_i32_110 : i32 to vector<1x1024xi32>
    %323 = arith.cmpi sge, %321, %322 : vector<1x1024xi32>
    %c0_i32_111 = arith.constant 0 : i32
    %324 = vector.broadcast %c0_i32_111 : i32 to vector<1x1024xi32>
    %325 = arith.addi %2, %324 : vector<1x1024xi32>
    %c32_i32_112 = arith.constant 32 : i32
    %326 = vector.broadcast %c32_i32_112 : i32 to vector<1x1024xi32>
    %327 = arith.cmpi slt, %325, %326 : vector<1x1024xi32>
    %328 = arith.andi %323, %327 : vector<1x1024xi1>
    %c-1_i32_113 = arith.constant -1 : i32
    %329 = vector.broadcast %c-1_i32_113 : i32 to vector<1x1024xi32>
    %330 = arith.addi %4, %329 : vector<1x1024xi32>
    %c0_i32_114 = arith.constant 0 : i32
    %331 = vector.broadcast %c0_i32_114 : i32 to vector<1x1024xi32>
    %332 = arith.cmpi sge, %330, %331 : vector<1x1024xi32>
    %333 = arith.andi %328, %332 : vector<1x1024xi1>
    %c-1_i32_115 = arith.constant -1 : i32
    %334 = vector.broadcast %c-1_i32_115 : i32 to vector<1x1024xi32>
    %335 = arith.addi %4, %334 : vector<1x1024xi32>
    %c32_i32_116 = arith.constant 32 : i32
    %336 = vector.broadcast %c32_i32_116 : i32 to vector<1x1024xi32>
    %337 = arith.cmpi slt, %335, %336 : vector<1x1024xi32>
    %338 = arith.andi %333, %337 : vector<1x1024xi1>
    %339 = arith.extui %338 : vector<1x1024xi1> to vector<1x1024xi32>
    %340 = arith.sitofp %339 : vector<1x1024xi32> to vector<1x1024xf32>
    %341 = vector.broadcast %340 : vector<1x1024xf32> to vector<16x1024xf32>
    %342 = arith.mulf %319, %341 : vector<16x1024xf32>
    %343 = arith.truncf %342 : vector<16x1024xf32> to vector<16x1024xbf16>
    %c48 = arith.constant 48 : index
    %c0_117 = arith.constant 0 : index
    %344 = vector.load %arg25[%c48, %c0_117] : memref<144x1024xbf16, #tpu.memory_space<vmem>>, vector<16x1024xbf16>
    tpu.vector_store %arg25[%c48, %c0_117], %343 {strides = array<i32>} : memref<144x1024xbf16, #tpu.memory_space<vmem>>, vector<16x1024xbf16>,
    %345 = arith.truncf %240 : vector<16x1024xf32> to vector<16x1024xbf16>
    %c64 = arith.constant 64 : index
    %c0_118 = arith.constant 0 : index
    %346 = vector.load %arg25[%c64, %c0_118] : memref<144x1024xbf16, #tpu.memory_space<vmem>>, vector<16x1024xbf16>
    tpu.vector_store %arg25[%c64, %c0_118], %345 {strides = array<i32>} : memref<144x1024xbf16, #tpu.memory_space<vmem>>, vector<16x1024xbf16>,
    %c1023_i32_119 = arith.constant 1023 : i32
    %347 = tpu.dynamic_rotate %240 by %c1023_i32_119 dim 1 : vector<16x1024xf32>, i32 -> vector<16x1024xf32>
    %c0_i32_120 = arith.constant 0 : i32
    %348 = vector.broadcast %c0_i32_120 : i32 to vector<1x1024xi32>
    %349 = arith.addi %2, %348 : vector<1x1024xi32>
    %c0_i32_121 = arith.constant 0 : i32
    %350 = vector.broadcast %c0_i32_121 : i32 to vector<1x1024xi32>
    %351 = arith.cmpi sge, %349, %350 : vector<1x1024xi32>
    %c0_i32_122 = arith.constant 0 : i32
    %352 = vector.broadcast %c0_i32_122 : i32 to vector<1x1024xi32>
    %353 = arith.addi %2, %352 : vector<1x1024xi32>
    %c32_i32_123 = arith.constant 32 : i32
    %354 = vector.broadcast %c32_i32_123 : i32 to vector<1x1024xi32>
    %355 = arith.cmpi slt, %353, %354 : vector<1x1024xi32>
    %356 = arith.andi %351, %355 : vector<1x1024xi1>
    %c1_i32_124 = arith.constant 1 : i32
    %357 = vector.broadcast %c1_i32_124 : i32 to vector<1x1024xi32>
    %358 = arith.addi %4, %357 : vector<1x1024xi32>
    %c0_i32_125 = arith.constant 0 : i32
    %359 = vector.broadcast %c0_i32_125 : i32 to vector<1x1024xi32>
    %360 = arith.cmpi sge, %358, %359 : vector<1x1024xi32>
    %361 = arith.andi %356, %360 : vector<1x1024xi1>
    %c1_i32_126 = arith.constant 1 : i32
    %362 = vector.broadcast %c1_i32_126 : i32 to vector<1x1024xi32>
    %363 = arith.addi %4, %362 : vector<1x1024xi32>
    %c32_i32_127 = arith.constant 32 : i32
    %364 = vector.broadcast %c32_i32_127 : i32 to vector<1x1024xi32>
    %365 = arith.cmpi slt, %363, %364 : vector<1x1024xi32>
    %366 = arith.andi %361, %365 : vector<1x1024xi1>
    %367 = arith.extui %366 : vector<1x1024xi1> to vector<1x1024xi32>
    %368 = arith.sitofp %367 : vector<1x1024xi32> to vector<1x1024xf32>
    %369 = vector.broadcast %368 : vector<1x1024xf32> to vector<16x1024xf32>
    %370 = arith.mulf %347, %369 : vector<16x1024xf32>
    %371 = arith.truncf %370 : vector<16x1024xf32> to vector<16x1024xbf16>
    %c80 = arith.constant 80 : index
    %c0_128 = arith.constant 0 : index
    %372 = vector.load %arg25[%c80, %c0_128] : memref<144x1024xbf16, #tpu.memory_space<vmem>>, vector<16x1024xbf16>
    tpu.vector_store %arg25[%c80, %c0_128], %371 {strides = array<i32>} : memref<144x1024xbf16, #tpu.memory_space<vmem>>, vector<16x1024xbf16>,
    %c993_i32_129 = arith.constant 993 : i32
    %373 = tpu.dynamic_rotate %240 by %c993_i32_129 dim 1 : vector<16x1024xf32>, i32 -> vector<16x1024xf32>
    %c1_i32_130 = arith.constant 1 : i32
    %374 = vector.broadcast %c1_i32_130 : i32 to vector<1x1024xi32>
    %375 = arith.addi %2, %374 : vector<1x1024xi32>
    %c0_i32_131 = arith.constant 0 : i32
    %376 = vector.broadcast %c0_i32_131 : i32 to vector<1x1024xi32>
    %377 = arith.cmpi sge, %375, %376 : vector<1x1024xi32>
    %c1_i32_132 = arith.constant 1 : i32
    %378 = vector.broadcast %c1_i32_132 : i32 to vector<1x1024xi32>
    %379 = arith.addi %2, %378 : vector<1x1024xi32>
    %c32_i32_133 = arith.constant 32 : i32
    %380 = vector.broadcast %c32_i32_133 : i32 to vector<1x1024xi32>
    %381 = arith.cmpi slt, %379, %380 : vector<1x1024xi32>
    %382 = arith.andi %377, %381 : vector<1x1024xi1>
    %c-1_i32_134 = arith.constant -1 : i32
    %383 = vector.broadcast %c-1_i32_134 : i32 to vector<1x1024xi32>
    %384 = arith.addi %4, %383 : vector<1x1024xi32>
    %c0_i32_135 = arith.constant 0 : i32
    %385 = vector.broadcast %c0_i32_135 : i32 to vector<1x1024xi32>
    %386 = arith.cmpi sge, %384, %385 : vector<1x1024xi32>
    %387 = arith.andi %382, %386 : vector<1x1024xi1>
    %c-1_i32_136 = arith.constant -1 : i32
    %388 = vector.broadcast %c-1_i32_136 : i32 to vector<1x1024xi32>
    %389 = arith.addi %4, %388 : vector<1x1024xi32>
    %c32_i32_137 = arith.constant 32 : i32
    %390 = vector.broadcast %c32_i32_137 : i32 to vector<1x1024xi32>
    %391 = arith.cmpi slt, %389, %390 : vector<1x1024xi32>
    %392 = arith.andi %387, %391 : vector<1x1024xi1>
    %393 = arith.extui %392 : vector<1x1024xi1> to vector<1x1024xi32>
    %394 = arith.sitofp %393 : vector<1x1024xi32> to vector<1x1024xf32>
    %395 = vector.broadcast %394 : vector<1x1024xf32> to vector<16x1024xf32>
    %396 = arith.mulf %373, %395 : vector<16x1024xf32>
    %397 = arith.truncf %396 : vector<16x1024xf32> to vector<16x1024xbf16>
    %c96 = arith.constant 96 : index
    %c0_138 = arith.constant 0 : index
    %398 = vector.load %arg25[%c96, %c0_138] : memref<144x1024xbf16, #tpu.memory_space<vmem>>, vector<16x1024xbf16>
    tpu.vector_store %arg25[%c96, %c0_138], %397 {strides = array<i32>} : memref<144x1024xbf16, #tpu.memory_space<vmem>>, vector<16x1024xbf16>,
    %c992_i32_139 = arith.constant 992 : i32
    %399 = tpu.dynamic_rotate %240 by %c992_i32_139 dim 1 : vector<16x1024xf32>, i32 -> vector<16x1024xf32>
    %c1_i32_140 = arith.constant 1 : i32
    %400 = vector.broadcast %c1_i32_140 : i32 to vector<1x1024xi32>
    %401 = arith.addi %2, %400 : vector<1x1024xi32>
    %c0_i32_141 = arith.constant 0 : i32
    %402 = vector.broadcast %c0_i32_141 : i32 to vector<1x1024xi32>
    %403 = arith.cmpi sge, %401, %402 : vector<1x1024xi32>
    %c1_i32_142 = arith.constant 1 : i32
    %404 = vector.broadcast %c1_i32_142 : i32 to vector<1x1024xi32>
    %405 = arith.addi %2, %404 : vector<1x1024xi32>
    %c32_i32_143 = arith.constant 32 : i32
    %406 = vector.broadcast %c32_i32_143 : i32 to vector<1x1024xi32>
    %407 = arith.cmpi slt, %405, %406 : vector<1x1024xi32>
    %408 = arith.andi %403, %407 : vector<1x1024xi1>
    %c0_i32_144 = arith.constant 0 : i32
    %409 = vector.broadcast %c0_i32_144 : i32 to vector<1x1024xi32>
    %410 = arith.addi %4, %409 : vector<1x1024xi32>
    %c0_i32_145 = arith.constant 0 : i32
    %411 = vector.broadcast %c0_i32_145 : i32 to vector<1x1024xi32>
    %412 = arith.cmpi sge, %410, %411 : vector<1x1024xi32>
    %413 = arith.andi %408, %412 : vector<1x1024xi1>
    %c0_i32_146 = arith.constant 0 : i32
    %414 = vector.broadcast %c0_i32_146 : i32 to vector<1x1024xi32>
    %415 = arith.addi %4, %414 : vector<1x1024xi32>
    %c32_i32_147 = arith.constant 32 : i32
    %416 = vector.broadcast %c32_i32_147 : i32 to vector<1x1024xi32>
    %417 = arith.cmpi slt, %415, %416 : vector<1x1024xi32>
    %418 = arith.andi %413, %417 : vector<1x1024xi1>
    %419 = arith.extui %418 : vector<1x1024xi1> to vector<1x1024xi32>
    %420 = arith.sitofp %419 : vector<1x1024xi32> to vector<1x1024xf32>
    %421 = vector.broadcast %420 : vector<1x1024xf32> to vector<16x1024xf32>
    %422 = arith.mulf %399, %421 : vector<16x1024xf32>
    %423 = arith.truncf %422 : vector<16x1024xf32> to vector<16x1024xbf16>
    %c112 = arith.constant 112 : index
    %c0_148 = arith.constant 0 : index
    %424 = vector.load %arg25[%c112, %c0_148] : memref<144x1024xbf16, #tpu.memory_space<vmem>>, vector<16x1024xbf16>
    tpu.vector_store %arg25[%c112, %c0_148], %423 {strides = array<i32>} : memref<144x1024xbf16, #tpu.memory_space<vmem>>, vector<16x1024xbf16>,
    %c991_i32_149 = arith.constant 991 : i32
    %425 = tpu.dynamic_rotate %240 by %c991_i32_149 dim 1 : vector<16x1024xf32>, i32 -> vector<16x1024xf32>
    %c1_i32_150 = arith.constant 1 : i32
    %426 = vector.broadcast %c1_i32_150 : i32 to vector<1x1024xi32>
    %427 = arith.addi %2, %426 : vector<1x1024xi32>
    %c0_i32_151 = arith.constant 0 : i32
    %428 = vector.broadcast %c0_i32_151 : i32 to vector<1x1024xi32>
    %429 = arith.cmpi sge, %427, %428 : vector<1x1024xi32>
    %c1_i32_152 = arith.constant 1 : i32
    %430 = vector.broadcast %c1_i32_152 : i32 to vector<1x1024xi32>
    %431 = arith.addi %2, %430 : vector<1x1024xi32>
    %c32_i32_153 = arith.constant 32 : i32
    %432 = vector.broadcast %c32_i32_153 : i32 to vector<1x1024xi32>
    %433 = arith.cmpi slt, %431, %432 : vector<1x1024xi32>
    %434 = arith.andi %429, %433 : vector<1x1024xi1>
    %c1_i32_154 = arith.constant 1 : i32
    %435 = vector.broadcast %c1_i32_154 : i32 to vector<1x1024xi32>
    %436 = arith.addi %4, %435 : vector<1x1024xi32>
    %c0_i32_155 = arith.constant 0 : i32
    %437 = vector.broadcast %c0_i32_155 : i32 to vector<1x1024xi32>
    %438 = arith.cmpi sge, %436, %437 : vector<1x1024xi32>
    %439 = arith.andi %434, %438 : vector<1x1024xi1>
    %c1_i32_156 = arith.constant 1 : i32
    %440 = vector.broadcast %c1_i32_156 : i32 to vector<1x1024xi32>
    %441 = arith.addi %4, %440 : vector<1x1024xi32>
    %c32_i32_157 = arith.constant 32 : i32
    %442 = vector.broadcast %c32_i32_157 : i32 to vector<1x1024xi32>
    %443 = arith.cmpi slt, %441, %442 : vector<1x1024xi32>
    %444 = arith.andi %439, %443 : vector<1x1024xi1>
    %445 = arith.extui %444 : vector<1x1024xi1> to vector<1x1024xi32>
    %446 = arith.sitofp %445 : vector<1x1024xi32> to vector<1x1024xf32>
    %447 = vector.broadcast %446 : vector<1x1024xf32> to vector<16x1024xf32>
    %448 = arith.mulf %425, %447 : vector<16x1024xf32>
    %449 = arith.truncf %448 : vector<16x1024xf32> to vector<16x1024xbf16>
    %c128 = arith.constant 128 : index
    %c0_158 = arith.constant 0 : index
    %450 = vector.load %arg25[%c128, %c0_158] : memref<144x1024xbf16, #tpu.memory_space<vmem>>, vector<16x1024xbf16>
    tpu.vector_store %arg25[%c128, %c0_158], %449 {strides = array<i32>} : memref<144x1024xbf16, #tpu.memory_space<vmem>>, vector<16x1024xbf16>,
    %c0_159 = arith.constant 0 : index
    %c0_160 = arith.constant 0 : index
    %451 = vector.load %arg4[%c0_159, %c0_160] : memref<16x144xbf16, #tpu.memory_space<vmem>>, vector<16x144xbf16>
    %c0_161 = arith.constant 0 : index
    %c0_162 = arith.constant 0 : index
    %452 = vector.load %arg25[%c0_161, %c0_162] : memref<144x1024xbf16, #tpu.memory_space<vmem>>, vector<144x1024xbf16>
    %cst_163 = arith.constant dense<0.000000e+00> : vector<16x1024xf32>
    %453 = tpu.matmul %451, %452, %cst_163 {dimension_numbers = #tpu.dot_dimension_numbers<[1], [0], [0], [1], [0, 0, 1, 1], [], []>} : vector<16x144xbf16>, vector<144x1024xbf16>, vector<16x1024xf32> -> vector<16x1024xf32>
    %c0_164 = arith.constant 0 : index
    %c0_165 = arith.constant 0 : index
    %454 = vector.load %arg5[%c0_164, %c0_165] : memref<16x1xf32, #tpu.memory_space<vmem>>, vector<16x1xf32>
    %455 = vector.broadcast %454 : vector<16x1xf32> to vector<16x1024xf32>
    %456 = arith.addf %453, %455 : vector<16x1024xf32>
    %cst_166 = arith.constant 0.000000e+00 : f32
    %457 = vector.broadcast %cst_166 : f32 to vector<16x1024xf32>
    %458 = arith.maximumf %456, %457 : vector<16x1024xf32>
    %c33_i32_167 = arith.constant 33 : i32
    %459 = tpu.dynamic_rotate %458 by %c33_i32_167 dim 1 : vector<16x1024xf32>, i32 -> vector<16x1024xf32>
    %c-1_i32_168 = arith.constant -1 : i32
    %460 = vector.broadcast %c-1_i32_168 : i32 to vector<1x1024xi32>
    %461 = arith.addi %2, %460 : vector<1x1024xi32>
    %c0_i32_169 = arith.constant 0 : i32
    %462 = vector.broadcast %c0_i32_169 : i32 to vector<1x1024xi32>
    %463 = arith.cmpi sge, %461, %462 : vector<1x1024xi32>
    %c-1_i32_170 = arith.constant -1 : i32
    %464 = vector.broadcast %c-1_i32_170 : i32 to vector<1x1024xi32>
    %465 = arith.addi %2, %464 : vector<1x1024xi32>
    %c32_i32_171 = arith.constant 32 : i32
    %466 = vector.broadcast %c32_i32_171 : i32 to vector<1x1024xi32>
    %467 = arith.cmpi slt, %465, %466 : vector<1x1024xi32>
    %468 = arith.andi %463, %467 : vector<1x1024xi1>
    %c-1_i32_172 = arith.constant -1 : i32
    %469 = vector.broadcast %c-1_i32_172 : i32 to vector<1x1024xi32>
    %470 = arith.addi %4, %469 : vector<1x1024xi32>
    %c0_i32_173 = arith.constant 0 : i32
    %471 = vector.broadcast %c0_i32_173 : i32 to vector<1x1024xi32>
    %472 = arith.cmpi sge, %470, %471 : vector<1x1024xi32>
    %473 = arith.andi %468, %472 : vector<1x1024xi1>
    %c-1_i32_174 = arith.constant -1 : i32
    %474 = vector.broadcast %c-1_i32_174 : i32 to vector<1x1024xi32>
    %475 = arith.addi %4, %474 : vector<1x1024xi32>
    %c32_i32_175 = arith.constant 32 : i32
    %476 = vector.broadcast %c32_i32_175 : i32 to vector<1x1024xi32>
    %477 = arith.cmpi slt, %475, %476 : vector<1x1024xi32>
    %478 = arith.andi %473, %477 : vector<1x1024xi1>
    %479 = arith.extui %478 : vector<1x1024xi1> to vector<1x1024xi32>
    %480 = arith.sitofp %479 : vector<1x1024xi32> to vector<1x1024xf32>
    %481 = vector.broadcast %480 : vector<1x1024xf32> to vector<16x1024xf32>
    %482 = arith.mulf %459, %481 : vector<16x1024xf32>
    %483 = arith.truncf %482 : vector<16x1024xf32> to vector<16x1024xbf16>
    %c0_176 = arith.constant 0 : index
    %c0_177 = arith.constant 0 : index
    %484 = vector.load %arg25[%c0_176, %c0_177] : memref<144x1024xbf16, #tpu.memory_space<vmem>>, vector<16x1024xbf16>
    tpu.vector_store %arg25[%c0_176, %c0_177], %483 {strides = array<i32>} : memref<144x1024xbf16, #tpu.memory_space<vmem>>, vector<16x1024xbf16>,
    %c32_i32_178 = arith.constant 32 : i32
    %485 = tpu.dynamic_rotate %458 by %c32_i32_178 dim 1 : vector<16x1024xf32>, i32 -> vector<16x1024xf32>
    %c-1_i32_179 = arith.constant -1 : i32
    %486 = vector.broadcast %c-1_i32_179 : i32 to vector<1x1024xi32>
    %487 = arith.addi %2, %486 : vector<1x1024xi32>
    %c0_i32_180 = arith.constant 0 : i32
    %488 = vector.broadcast %c0_i32_180 : i32 to vector<1x1024xi32>
    %489 = arith.cmpi sge, %487, %488 : vector<1x1024xi32>
    %c-1_i32_181 = arith.constant -1 : i32
    %490 = vector.broadcast %c-1_i32_181 : i32 to vector<1x1024xi32>
    %491 = arith.addi %2, %490 : vector<1x1024xi32>
    %c32_i32_182 = arith.constant 32 : i32
    %492 = vector.broadcast %c32_i32_182 : i32 to vector<1x1024xi32>
    %493 = arith.cmpi slt, %491, %492 : vector<1x1024xi32>
    %494 = arith.andi %489, %493 : vector<1x1024xi1>
    %c0_i32_183 = arith.constant 0 : i32
    %495 = vector.broadcast %c0_i32_183 : i32 to vector<1x1024xi32>
    %496 = arith.addi %4, %495 : vector<1x1024xi32>
    %c0_i32_184 = arith.constant 0 : i32
    %497 = vector.broadcast %c0_i32_184 : i32 to vector<1x1024xi32>
    %498 = arith.cmpi sge, %496, %497 : vector<1x1024xi32>
    %499 = arith.andi %494, %498 : vector<1x1024xi1>
    %c0_i32_185 = arith.constant 0 : i32
    %500 = vector.broadcast %c0_i32_185 : i32 to vector<1x1024xi32>
    %501 = arith.addi %4, %500 : vector<1x1024xi32>
    %c32_i32_186 = arith.constant 32 : i32
    %502 = vector.broadcast %c32_i32_186 : i32 to vector<1x1024xi32>
    %503 = arith.cmpi slt, %501, %502 : vector<1x1024xi32>
    %504 = arith.andi %499, %503 : vector<1x1024xi1>
    %505 = arith.extui %504 : vector<1x1024xi1> to vector<1x1024xi32>
    %506 = arith.sitofp %505 : vector<1x1024xi32> to vector<1x1024xf32>
    %507 = vector.broadcast %506 : vector<1x1024xf32> to vector<16x1024xf32>
    %508 = arith.mulf %485, %507 : vector<16x1024xf32>
    %509 = arith.truncf %508 : vector<16x1024xf32> to vector<16x1024xbf16>
    %c16_187 = arith.constant 16 : index
    %c0_188 = arith.constant 0 : index
    %510 = vector.load %arg25[%c16_187, %c0_188] : memref<144x1024xbf16, #tpu.memory_space<vmem>>, vector<16x1024xbf16>
    tpu.vector_store %arg25[%c16_187, %c0_188], %509 {strides = array<i32>} : memref<144x1024xbf16, #tpu.memory_space<vmem>>, vector<16x1024xbf16>,
    %c31_i32_189 = arith.constant 31 : i32
    %511 = tpu.dynamic_rotate %458 by %c31_i32_189 dim 1 : vector<16x1024xf32>, i32 -> vector<16x1024xf32>
    %c-1_i32_190 = arith.constant -1 : i32
    %512 = vector.broadcast %c-1_i32_190 : i32 to vector<1x1024xi32>
    %513 = arith.addi %2, %512 : vector<1x1024xi32>
    %c0_i32_191 = arith.constant 0 : i32
    %514 = vector.broadcast %c0_i32_191 : i32 to vector<1x1024xi32>
    %515 = arith.cmpi sge, %513, %514 : vector<1x1024xi32>
    %c-1_i32_192 = arith.constant -1 : i32
    %516 = vector.broadcast %c-1_i32_192 : i32 to vector<1x1024xi32>
    %517 = arith.addi %2, %516 : vector<1x1024xi32>
    %c32_i32_193 = arith.constant 32 : i32
    %518 = vector.broadcast %c32_i32_193 : i32 to vector<1x1024xi32>
    %519 = arith.cmpi slt, %517, %518 : vector<1x1024xi32>
    %520 = arith.andi %515, %519 : vector<1x1024xi1>
    %c1_i32_194 = arith.constant 1 : i32
    %521 = vector.broadcast %c1_i32_194 : i32 to vector<1x1024xi32>
    %522 = arith.addi %4, %521 : vector<1x1024xi32>
    %c0_i32_195 = arith.constant 0 : i32
    %523 = vector.broadcast %c0_i32_195 : i32 to vector<1x1024xi32>
    %524 = arith.cmpi sge, %522, %523 : vector<1x1024xi32>
    %525 = arith.andi %520, %524 : vector<1x1024xi1>
    %c1_i32_196 = arith.constant 1 : i32
    %526 = vector.broadcast %c1_i32_196 : i32 to vector<1x1024xi32>
    %527 = arith.addi %4, %526 : vector<1x1024xi32>
    %c32_i32_197 = arith.constant 32 : i32
    %528 = vector.broadcast %c32_i32_197 : i32 to vector<1x1024xi32>
    %529 = arith.cmpi slt, %527, %528 : vector<1x1024xi32>
    %530 = arith.andi %525, %529 : vector<1x1024xi1>
    %531 = arith.extui %530 : vector<1x1024xi1> to vector<1x1024xi32>
    %532 = arith.sitofp %531 : vector<1x1024xi32> to vector<1x1024xf32>
    %533 = vector.broadcast %532 : vector<1x1024xf32> to vector<16x1024xf32>
    %534 = arith.mulf %511, %533 : vector<16x1024xf32>
    %535 = arith.truncf %534 : vector<16x1024xf32> to vector<16x1024xbf16>
    %c32_198 = arith.constant 32 : index
    %c0_199 = arith.constant 0 : index
    %536 = vector.load %arg25[%c32_198, %c0_199] : memref<144x1024xbf16, #tpu.memory_space<vmem>>, vector<16x1024xbf16>
    tpu.vector_store %arg25[%c32_198, %c0_199], %535 {strides = array<i32>} : memref<144x1024xbf16, #tpu.memory_space<vmem>>, vector<16x1024xbf16>,
    %c1_i32_200 = arith.constant 1 : i32
    %537 = tpu.dynamic_rotate %458 by %c1_i32_200 dim 1 : vector<16x1024xf32>, i32 -> vector<16x1024xf32>
    %c0_i32_201 = arith.constant 0 : i32
    %538 = vector.broadcast %c0_i32_201 : i32 to vector<1x1024xi32>
    %539 = arith.addi %2, %538 : vector<1x1024xi32>
    %c0_i32_202 = arith.constant 0 : i32
    %540 = vector.broadcast %c0_i32_202 : i32 to vector<1x1024xi32>
    %541 = arith.cmpi sge, %539, %540 : vector<1x1024xi32>
    %c0_i32_203 = arith.constant 0 : i32
    %542 = vector.broadcast %c0_i32_203 : i32 to vector<1x1024xi32>
    %543 = arith.addi %2, %542 : vector<1x1024xi32>
    %c32_i32_204 = arith.constant 32 : i32
    %544 = vector.broadcast %c32_i32_204 : i32 to vector<1x1024xi32>
    %545 = arith.cmpi slt, %543, %544 : vector<1x1024xi32>
    %546 = arith.andi %541, %545 : vector<1x1024xi1>
    %c-1_i32_205 = arith.constant -1 : i32
    %547 = vector.broadcast %c-1_i32_205 : i32 to vector<1x1024xi32>
    %548 = arith.addi %4, %547 : vector<1x1024xi32>
    %c0_i32_206 = arith.constant 0 : i32
    %549 = vector.broadcast %c0_i32_206 : i32 to vector<1x1024xi32>
    %550 = arith.cmpi sge, %548, %549 : vector<1x1024xi32>
    %551 = arith.andi %546, %550 : vector<1x1024xi1>
    %c-1_i32_207 = arith.constant -1 : i32
    %552 = vector.broadcast %c-1_i32_207 : i32 to vector<1x1024xi32>
    %553 = arith.addi %4, %552 : vector<1x1024xi32>
    %c32_i32_208 = arith.constant 32 : i32
    %554 = vector.broadcast %c32_i32_208 : i32 to vector<1x1024xi32>
    %555 = arith.cmpi slt, %553, %554 : vector<1x1024xi32>
    %556 = arith.andi %551, %555 : vector<1x1024xi1>
    %557 = arith.extui %556 : vector<1x1024xi1> to vector<1x1024xi32>
    %558 = arith.sitofp %557 : vector<1x1024xi32> to vector<1x1024xf32>
    %559 = vector.broadcast %558 : vector<1x1024xf32> to vector<16x1024xf32>
    %560 = arith.mulf %537, %559 : vector<16x1024xf32>
    %561 = arith.truncf %560 : vector<16x1024xf32> to vector<16x1024xbf16>
    %c48_209 = arith.constant 48 : index
    %c0_210 = arith.constant 0 : index
    %562 = vector.load %arg25[%c48_209, %c0_210] : memref<144x1024xbf16, #tpu.memory_space<vmem>>, vector<16x1024xbf16>
    tpu.vector_store %arg25[%c48_209, %c0_210], %561 {strides = array<i32>} : memref<144x1024xbf16, #tpu.memory_space<vmem>>, vector<16x1024xbf16>,
    %563 = arith.truncf %458 : vector<16x1024xf32> to vector<16x1024xbf16>
    %c64_211 = arith.constant 64 : index
    %c0_212 = arith.constant 0 : index
    %564 = vector.load %arg25[%c64_211, %c0_212] : memref<144x1024xbf16, #tpu.memory_space<vmem>>, vector<16x1024xbf16>
    tpu.vector_store %arg25[%c64_211, %c0_212], %563 {strides = array<i32>} : memref<144x1024xbf16, #tpu.memory_space<vmem>>, vector<16x1024xbf16>,
    %c1023_i32_213 = arith.constant 1023 : i32
    %565 = tpu.dynamic_rotate %458 by %c1023_i32_213 dim 1 : vector<16x1024xf32>, i32 -> vector<16x1024xf32>
    %c0_i32_214 = arith.constant 0 : i32
    %566 = vector.broadcast %c0_i32_214 : i32 to vector<1x1024xi32>
    %567 = arith.addi %2, %566 : vector<1x1024xi32>
    %c0_i32_215 = arith.constant 0 : i32
    %568 = vector.broadcast %c0_i32_215 : i32 to vector<1x1024xi32>
    %569 = arith.cmpi sge, %567, %568 : vector<1x1024xi32>
    %c0_i32_216 = arith.constant 0 : i32
    %570 = vector.broadcast %c0_i32_216 : i32 to vector<1x1024xi32>
    %571 = arith.addi %2, %570 : vector<1x1024xi32>
    %c32_i32_217 = arith.constant 32 : i32
    %572 = vector.broadcast %c32_i32_217 : i32 to vector<1x1024xi32>
    %573 = arith.cmpi slt, %571, %572 : vector<1x1024xi32>
    %574 = arith.andi %569, %573 : vector<1x1024xi1>
    %c1_i32_218 = arith.constant 1 : i32
    %575 = vector.broadcast %c1_i32_218 : i32 to vector<1x1024xi32>
    %576 = arith.addi %4, %575 : vector<1x1024xi32>
    %c0_i32_219 = arith.constant 0 : i32
    %577 = vector.broadcast %c0_i32_219 : i32 to vector<1x1024xi32>
    %578 = arith.cmpi sge, %576, %577 : vector<1x1024xi32>
    %579 = arith.andi %574, %578 : vector<1x1024xi1>
    %c1_i32_220 = arith.constant 1 : i32
    %580 = vector.broadcast %c1_i32_220 : i32 to vector<1x1024xi32>
    %581 = arith.addi %4, %580 : vector<1x1024xi32>
    %c32_i32_221 = arith.constant 32 : i32
    %582 = vector.broadcast %c32_i32_221 : i32 to vector<1x1024xi32>
    %583 = arith.cmpi slt, %581, %582 : vector<1x1024xi32>
    %584 = arith.andi %579, %583 : vector<1x1024xi1>
    %585 = arith.extui %584 : vector<1x1024xi1> to vector<1x1024xi32>
    %586 = arith.sitofp %585 : vector<1x1024xi32> to vector<1x1024xf32>
    %587 = vector.broadcast %586 : vector<1x1024xf32> to vector<16x1024xf32>
    %588 = arith.mulf %565, %587 : vector<16x1024xf32>
    %589 = arith.truncf %588 : vector<16x1024xf32> to vector<16x1024xbf16>
    %c80_222 = arith.constant 80 : index
    %c0_223 = arith.constant 0 : index
    %590 = vector.load %arg25[%c80_222, %c0_223] : memref<144x1024xbf16, #tpu.memory_space<vmem>>, vector<16x1024xbf16>
    tpu.vector_store %arg25[%c80_222, %c0_223], %589 {strides = array<i32>} : memref<144x1024xbf16, #tpu.memory_space<vmem>>, vector<16x1024xbf16>,
    %c993_i32_224 = arith.constant 993 : i32
    %591 = tpu.dynamic_rotate %458 by %c993_i32_224 dim 1 : vector<16x1024xf32>, i32 -> vector<16x1024xf32>
    %c1_i32_225 = arith.constant 1 : i32
    %592 = vector.broadcast %c1_i32_225 : i32 to vector<1x1024xi32>
    %593 = arith.addi %2, %592 : vector<1x1024xi32>
    %c0_i32_226 = arith.constant 0 : i32
    %594 = vector.broadcast %c0_i32_226 : i32 to vector<1x1024xi32>
    %595 = arith.cmpi sge, %593, %594 : vector<1x1024xi32>
    %c1_i32_227 = arith.constant 1 : i32
    %596 = vector.broadcast %c1_i32_227 : i32 to vector<1x1024xi32>
    %597 = arith.addi %2, %596 : vector<1x1024xi32>
    %c32_i32_228 = arith.constant 32 : i32
    %598 = vector.broadcast %c32_i32_228 : i32 to vector<1x1024xi32>
    %599 = arith.cmpi slt, %597, %598 : vector<1x1024xi32>
    %600 = arith.andi %595, %599 : vector<1x1024xi1>
    %c-1_i32_229 = arith.constant -1 : i32
    %601 = vector.broadcast %c-1_i32_229 : i32 to vector<1x1024xi32>
    %602 = arith.addi %4, %601 : vector<1x1024xi32>
    %c0_i32_230 = arith.constant 0 : i32
    %603 = vector.broadcast %c0_i32_230 : i32 to vector<1x1024xi32>
    %604 = arith.cmpi sge, %602, %603 : vector<1x1024xi32>
    %605 = arith.andi %600, %604 : vector<1x1024xi1>
    %c-1_i32_231 = arith.constant -1 : i32
    %606 = vector.broadcast %c-1_i32_231 : i32 to vector<1x1024xi32>
    %607 = arith.addi %4, %606 : vector<1x1024xi32>
    %c32_i32_232 = arith.constant 32 : i32
    %608 = vector.broadcast %c32_i32_232 : i32 to vector<1x1024xi32>
    %609 = arith.cmpi slt, %607, %608 : vector<1x1024xi32>
    %610 = arith.andi %605, %609 : vector<1x1024xi1>
    %611 = arith.extui %610 : vector<1x1024xi1> to vector<1x1024xi32>
    %612 = arith.sitofp %611 : vector<1x1024xi32> to vector<1x1024xf32>
    %613 = vector.broadcast %612 : vector<1x1024xf32> to vector<16x1024xf32>
    %614 = arith.mulf %591, %613 : vector<16x1024xf32>
    %615 = arith.truncf %614 : vector<16x1024xf32> to vector<16x1024xbf16>
    %c96_233 = arith.constant 96 : index
    %c0_234 = arith.constant 0 : index
    %616 = vector.load %arg25[%c96_233, %c0_234] : memref<144x1024xbf16, #tpu.memory_space<vmem>>, vector<16x1024xbf16>
    tpu.vector_store %arg25[%c96_233, %c0_234], %615 {strides = array<i32>} : memref<144x1024xbf16, #tpu.memory_space<vmem>>, vector<16x1024xbf16>,
    %c992_i32_235 = arith.constant 992 : i32
    %617 = tpu.dynamic_rotate %458 by %c992_i32_235 dim 1 : vector<16x1024xf32>, i32 -> vector<16x1024xf32>
    %c1_i32_236 = arith.constant 1 : i32
    %618 = vector.broadcast %c1_i32_236 : i32 to vector<1x1024xi32>
    %619 = arith.addi %2, %618 : vector<1x1024xi32>
    %c0_i32_237 = arith.constant 0 : i32
    %620 = vector.broadcast %c0_i32_237 : i32 to vector<1x1024xi32>
    %621 = arith.cmpi sge, %619, %620 : vector<1x1024xi32>
    %c1_i32_238 = arith.constant 1 : i32
    %622 = vector.broadcast %c1_i32_238 : i32 to vector<1x1024xi32>
    %623 = arith.addi %2, %622 : vector<1x1024xi32>
    %c32_i32_239 = arith.constant 32 : i32
    %624 = vector.broadcast %c32_i32_239 : i32 to vector<1x1024xi32>
    %625 = arith.cmpi slt, %623, %624 : vector<1x1024xi32>
    %626 = arith.andi %621, %625 : vector<1x1024xi1>
    %c0_i32_240 = arith.constant 0 : i32
    %627 = vector.broadcast %c0_i32_240 : i32 to vector<1x1024xi32>
    %628 = arith.addi %4, %627 : vector<1x1024xi32>
    %c0_i32_241 = arith.constant 0 : i32
    %629 = vector.broadcast %c0_i32_241 : i32 to vector<1x1024xi32>
    %630 = arith.cmpi sge, %628, %629 : vector<1x1024xi32>
    %631 = arith.andi %626, %630 : vector<1x1024xi1>
    %c0_i32_242 = arith.constant 0 : i32
    %632 = vector.broadcast %c0_i32_242 : i32 to vector<1x1024xi32>
    %633 = arith.addi %4, %632 : vector<1x1024xi32>
    %c32_i32_243 = arith.constant 32 : i32
    %634 = vector.broadcast %c32_i32_243 : i32 to vector<1x1024xi32>
    %635 = arith.cmpi slt, %633, %634 : vector<1x1024xi32>
    %636 = arith.andi %631, %635 : vector<1x1024xi1>
    %637 = arith.extui %636 : vector<1x1024xi1> to vector<1x1024xi32>
    %638 = arith.sitofp %637 : vector<1x1024xi32> to vector<1x1024xf32>
    %639 = vector.broadcast %638 : vector<1x1024xf32> to vector<16x1024xf32>
    %640 = arith.mulf %617, %639 : vector<16x1024xf32>
    %641 = arith.truncf %640 : vector<16x1024xf32> to vector<16x1024xbf16>
    %c112_244 = arith.constant 112 : index
    %c0_245 = arith.constant 0 : index
    %642 = vector.load %arg25[%c112_244, %c0_245] : memref<144x1024xbf16, #tpu.memory_space<vmem>>, vector<16x1024xbf16>
    tpu.vector_store %arg25[%c112_244, %c0_245], %641 {strides = array<i32>} : memref<144x1024xbf16, #tpu.memory_space<vmem>>, vector<16x1024xbf16>,
    %c991_i32_246 = arith.constant 991 : i32
    %643 = tpu.dynamic_rotate %458 by %c991_i32_246 dim 1 : vector<16x1024xf32>, i32 -> vector<16x1024xf32>
    %c1_i32_247 = arith.constant 1 : i32
    %644 = vector.broadcast %c1_i32_247 : i32 to vector<1x1024xi32>
    %645 = arith.addi %2, %644 : vector<1x1024xi32>
    %c0_i32_248 = arith.constant 0 : i32
    %646 = vector.broadcast %c0_i32_248 : i32 to vector<1x1024xi32>
    %647 = arith.cmpi sge, %645, %646 : vector<1x1024xi32>
    %c1_i32_249 = arith.constant 1 : i32
    %648 = vector.broadcast %c1_i32_249 : i32 to vector<1x1024xi32>
    %649 = arith.addi %2, %648 : vector<1x1024xi32>
    %c32_i32_250 = arith.constant 32 : i32
    %650 = vector.broadcast %c32_i32_250 : i32 to vector<1x1024xi32>
    %651 = arith.cmpi slt, %649, %650 : vector<1x1024xi32>
    %652 = arith.andi %647, %651 : vector<1x1024xi1>
    %c1_i32_251 = arith.constant 1 : i32
    %653 = vector.broadcast %c1_i32_251 : i32 to vector<1x1024xi32>
    %654 = arith.addi %4, %653 : vector<1x1024xi32>
    %c0_i32_252 = arith.constant 0 : i32
    %655 = vector.broadcast %c0_i32_252 : i32 to vector<1x1024xi32>
    %656 = arith.cmpi sge, %654, %655 : vector<1x1024xi32>
    %657 = arith.andi %652, %656 : vector<1x1024xi1>
    %c1_i32_253 = arith.constant 1 : i32
    %658 = vector.broadcast %c1_i32_253 : i32 to vector<1x1024xi32>
    %659 = arith.addi %4, %658 : vector<1x1024xi32>
    %c32_i32_254 = arith.constant 32 : i32
    %660 = vector.broadcast %c32_i32_254 : i32 to vector<1x1024xi32>
    %661 = arith.cmpi slt, %659, %660 : vector<1x1024xi32>
    %662 = arith.andi %657, %661 : vector<1x1024xi1>
    %663 = arith.extui %662 : vector<1x1024xi1> to vector<1x1024xi32>
    %664 = arith.sitofp %663 : vector<1x1024xi32> to vector<1x1024xf32>
    %665 = vector.broadcast %664 : vector<1x1024xf32> to vector<16x1024xf32>
    %666 = arith.mulf %643, %665 : vector<16x1024xf32>
    %667 = arith.truncf %666 : vector<16x1024xf32> to vector<16x1024xbf16>
    %c128_255 = arith.constant 128 : index
    %c0_256 = arith.constant 0 : index
    %668 = vector.load %arg25[%c128_255, %c0_256] : memref<144x1024xbf16, #tpu.memory_space<vmem>>, vector<16x1024xbf16>
    tpu.vector_store %arg25[%c128_255, %c0_256], %667 {strides = array<i32>} : memref<144x1024xbf16, #tpu.memory_space<vmem>>, vector<16x1024xbf16>,
    %c0_257 = arith.constant 0 : index
    %c0_258 = arith.constant 0 : index
    %669 = vector.load %arg6[%c0_257, %c0_258] : memref<16x144xbf16, #tpu.memory_space<vmem>>, vector<16x144xbf16>
    %c0_259 = arith.constant 0 : index
    %c0_260 = arith.constant 0 : index
    %670 = vector.load %arg25[%c0_259, %c0_260] : memref<144x1024xbf16, #tpu.memory_space<vmem>>, vector<144x1024xbf16>
    %cst_261 = arith.constant dense<0.000000e+00> : vector<16x1024xf32>
    %671 = tpu.matmul %669, %670, %cst_261 {dimension_numbers = #tpu.dot_dimension_numbers<[1], [0], [0], [1], [0, 0, 1, 1], [], []>} : vector<16x144xbf16>, vector<144x1024xbf16>, vector<16x1024xf32> -> vector<16x1024xf32>
    %c0_262 = arith.constant 0 : index
    %c0_263 = arith.constant 0 : index
    %672 = vector.load %arg7[%c0_262, %c0_263] : memref<16x1xf32, #tpu.memory_space<vmem>>, vector<16x1xf32>
    %673 = vector.broadcast %672 : vector<16x1xf32> to vector<16x1024xf32>
    %674 = arith.addf %671, %673 : vector<16x1024xf32>
    %675 = arith.addf %674, %240 : vector<16x1024xf32>
    %cst_264 = arith.constant 0.000000e+00 : f32
    %676 = vector.broadcast %cst_264 : f32 to vector<16x1024xf32>
    %677 = arith.maximumf %675, %676 : vector<16x1024xf32>
    %c0_265 = arith.constant 0 : index
    %c0_266 = arith.constant 0 : index
    %678 = vector.load %arg8[%c0_265, %c0_266] : memref<56x16xbf16, #tpu.memory_space<vmem>>, vector<56x16xbf16>
    %679 = arith.truncf %677 : vector<16x1024xf32> to vector<16x1024xbf16>
    %cst_267 = arith.constant dense<0.000000e+00> : vector<56x1024xf32>
    %680 = tpu.matmul %678, %679, %cst_267 {dimension_numbers = #tpu.dot_dimension_numbers<[1], [0], [0], [1], [0, 0, 1, 1], [], []>} : vector<56x16xbf16>, vector<16x1024xbf16>, vector<56x1024xf32> -> vector<56x1024xf32>
    %c0_268 = arith.constant 0 : index
    %c0_269 = arith.constant 0 : index
    %681 = vector.load %arg9[%c0_268, %c0_269] : memref<56x1xf32, #tpu.memory_space<vmem>>, vector<56x1xf32>
    %682 = vector.broadcast %681 : vector<56x1xf32> to vector<56x1024xf32>
    %683 = arith.addf %680, %682 : vector<56x1024xf32>
    %c0_270 = arith.constant 0 : index
    %c0_271 = arith.constant 0 : index
    %684 = vector.load %arg20[%c0_270, %c0_271] : memref<56x1024xf32, #tpu.memory_space<vmem>>, vector<56x1024xf32>
    tpu.vector_store %arg20[%c0_270, %c0_271], %683 {strides = array<i32>} : memref<56x1024xf32, #tpu.memory_space<vmem>>, vector<56x1024xf32>,
    %685 = vector.extract_strided_slice %683 {offsets = [0, 0], sizes = [1, 1024], strides = [1, 1]} : vector<56x1024xf32> to vector<1x1024xf32>
    %686 = arith.negf %685 : vector<1x1024xf32>
    %687 = math.exp %686 : vector<1x1024xf32>
    %cst_272 = arith.constant 1.000000e+00 : f32
    %688 = vector.broadcast %cst_272 : f32 to vector<1x1024xf32>
    %689 = arith.addf %688, %687 : vector<1x1024xf32>
    %690 = arith.divf %688, %689 : vector<1x1024xf32>
    %691 = vector.extract_strided_slice %683 {offsets = [1, 0], sizes = [1, 1024], strides = [1, 1]} : vector<56x1024xf32> to vector<1x1024xf32>
    %692 = arith.negf %691 : vector<1x1024xf32>
    %693 = math.exp %692 : vector<1x1024xf32>
    %cst_273 = arith.constant 1.000000e+00 : f32
    %694 = vector.broadcast %cst_273 : f32 to vector<1x1024xf32>
    %695 = arith.addf %694, %693 : vector<1x1024xf32>
    %696 = arith.divf %694, %695 : vector<1x1024xf32>
    %697 = arith.addf %690, %696 : vector<1x1024xf32>
    %cst_274 = arith.constant 5.000000e-01 : f32
    %698 = vector.broadcast %cst_274 : f32 to vector<1x1024xf32>
    %699 = arith.mulf %698, %697 : vector<1x1024xf32>
    %cst_275 = arith.constant 1.000000e+00 : f32
    %700 = vector.broadcast %cst_275 : f32 to vector<1x1024xf32>
    %701 = arith.subf %700, %699 : vector<1x1024xf32>
    %c0_276 = arith.constant 0 : index
    %c0_277 = arith.constant 0 : index
    %702 = vector.load %arg1[%c0_276, %c0_277] : memref<1x1024xf32, #tpu.memory_space<vmem>>, vector<1x1024xf32>
    %c3_i32 = arith.constant 3 : i32
    %703 = vector.broadcast %c3_i32 : i32 to vector<1x1024xi32>
    %704 = arith.shrsi %2, %703 : vector<1x1024xi32>
    %c2_i32 = arith.constant 2 : i32
    %705 = vector.broadcast %c2_i32 : i32 to vector<1x1024xi32>
    %706 = arith.shli %704, %705 : vector<1x1024xi32>
    %c3_i32_278 = arith.constant 3 : i32
    %707 = vector.broadcast %c3_i32_278 : i32 to vector<1x1024xi32>
    %708 = arith.shrsi %4, %707 : vector<1x1024xi32>
    %709 = arith.addi %706, %708 : vector<1x1024xi32>
    %cst_279 = arith.constant 5.000000e-01 : f32
    %710 = vector.broadcast %cst_279 : f32 to vector<1x1024xf32>
    %711 = arith.cmpf ogt, %702, %710 : vector<1x1024xf32>
    %c0_i32_280 = arith.constant 0 : i32
    %712 = vector.broadcast %c0_i32_280 : i32 to vector<1x1024xi32>
    %713 = arith.select %711, %709, %712 : vector<1x1024xi1>, vector<1x1024xi32>
    %c0_281 = arith.constant 0 : index
    %c0_282 = arith.constant 0 : index
    %714 = vector.load %arg21[%c0_281, %c0_282] : memref<1x1024xi32, #tpu.memory_space<vmem>>, vector<1x1024xi32>
    tpu.vector_store %arg21[%c0_281, %c0_282], %713 {strides = array<i32>} : memref<1x1024xi32, #tpu.memory_space<vmem>>, vector<1x1024xi32>,
    %c1023_i32_283 = arith.constant 1023 : i32
    %715 = tpu.dynamic_rotate %702 by %c1023_i32_283 dim 1 : vector<1x1024xf32>, i32 -> vector<1x1024xf32>
    %c992_i32_284 = arith.constant 992 : i32
    %716 = tpu.dynamic_rotate %702 by %c992_i32_284 dim 1 : vector<1x1024xf32>, i32 -> vector<1x1024xf32>
    %c1023_i32_285 = arith.constant 1023 : i32
    %717 = tpu.dynamic_rotate %701 by %c1023_i32_285 dim 1 : vector<1x1024xf32>, i32 -> vector<1x1024xf32>
    %c992_i32_286 = arith.constant 992 : i32
    %718 = tpu.dynamic_rotate %701 by %c992_i32_286 dim 1 : vector<1x1024xf32>, i32 -> vector<1x1024xf32>
    %c3_i32_287 = arith.constant 3 : i32
    %719 = vector.broadcast %c3_i32_287 : i32 to vector<1x1024xi32>
    %720 = arith.shrsi %2, %719 : vector<1x1024xi32>
    %c2_i32_288 = arith.constant 2 : i32
    %721 = vector.broadcast %c2_i32_288 : i32 to vector<1x1024xi32>
    %722 = arith.shli %720, %721 : vector<1x1024xi32>
    %c1_i32_289 = arith.constant 1 : i32
    %723 = vector.broadcast %c1_i32_289 : i32 to vector<1x1024xi32>
    %724 = arith.addi %4, %723 : vector<1x1024xi32>
    %c3_i32_290 = arith.constant 3 : i32
    %725 = vector.broadcast %c3_i32_290 : i32 to vector<1x1024xi32>
    %726 = arith.shrsi %724, %725 : vector<1x1024xi32>
    %727 = arith.addi %722, %726 : vector<1x1024xi32>
    %c1_i32_291 = arith.constant 1 : i32
    %728 = vector.broadcast %c1_i32_291 : i32 to vector<1x1024xi32>
    %729 = arith.addi %2, %728 : vector<1x1024xi32>
    %c3_i32_292 = arith.constant 3 : i32
    %730 = vector.broadcast %c3_i32_292 : i32 to vector<1x1024xi32>
    %731 = arith.shrsi %729, %730 : vector<1x1024xi32>
    %c2_i32_293 = arith.constant 2 : i32
    %732 = vector.broadcast %c2_i32_293 : i32 to vector<1x1024xi32>
    %733 = arith.shli %731, %732 : vector<1x1024xi32>
    %c3_i32_294 = arith.constant 3 : i32
    %734 = vector.broadcast %c3_i32_294 : i32 to vector<1x1024xi32>
    %735 = arith.shrsi %4, %734 : vector<1x1024xi32>
    %736 = arith.addi %733, %735 : vector<1x1024xi32>
    %cst_295 = arith.constant 5.000000e-01 : f32
    %737 = vector.broadcast %cst_295 : f32 to vector<1x1024xf32>
    %738 = arith.cmpf ogt, %715, %737 : vector<1x1024xf32>
    %c0_i32_296 = arith.constant 0 : i32
    %739 = vector.broadcast %c0_i32_296 : i32 to vector<1x1024xi32>
    %740 = arith.select %738, %727, %739 : vector<1x1024xi1>, vector<1x1024xi32>
    %cst_297 = arith.constant 5.000000e-01 : f32
    %741 = vector.broadcast %cst_297 : f32 to vector<1x1024xf32>
    %742 = arith.cmpf ogt, %716, %741 : vector<1x1024xf32>
    %c0_i32_298 = arith.constant 0 : i32
    %743 = vector.broadcast %c0_i32_298 : i32 to vector<1x1024xi32>
    %744 = arith.select %742, %736, %743 : vector<1x1024xi1>, vector<1x1024xi32>
    %c31_i32_299 = arith.constant 31 : i32
    %745 = vector.broadcast %c31_i32_299 : i32 to vector<1x1024xi32>
    %746 = arith.cmpi slt, %4, %745 : vector<1x1024xi32>
    %747 = arith.extui %746 : vector<1x1024xi1> to vector<1x1024xi32>
    %748 = arith.sitofp %747 : vector<1x1024xi32> to vector<1x1024xf32>
    %c31_i32_300 = arith.constant 31 : i32
    %749 = vector.broadcast %c31_i32_300 : i32 to vector<1x1024xi32>
    %750 = arith.cmpi slt, %2, %749 : vector<1x1024xi32>
    %751 = arith.extui %750 : vector<1x1024xi1> to vector<1x1024xi32>
    %752 = arith.sitofp %751 : vector<1x1024xi32> to vector<1x1024xf32>
    %753 = arith.addf %701, %717 : vector<1x1024xf32>
    %cst_301 = arith.constant 5.000000e-01 : f32
    %754 = vector.broadcast %cst_301 : f32 to vector<1x1024xf32>
    %755 = arith.mulf %754, %753 : vector<1x1024xf32>
    %756 = arith.mulf %755, %748 : vector<1x1024xf32>
    %757 = arith.truncf %756 : vector<1x1024xf32> to vector<1x1024xbf16>
    %758 = arith.addf %701, %718 : vector<1x1024xf32>
    %cst_302 = arith.constant 5.000000e-01 : f32
    %759 = vector.broadcast %cst_302 : f32 to vector<1x1024xf32>
    %760 = arith.mulf %759, %758 : vector<1x1024xf32>
    %761 = arith.mulf %760, %752 : vector<1x1024xf32>
    %762 = arith.truncf %761 : vector<1x1024xf32> to vector<1x1024xbf16>
    %763 = tpu.iota {dimensions = array<i32: 0>} : vector<16x1024xi32>
    %764 = vector.broadcast %713 : vector<1x1024xi32> to vector<16x1024xi32>
    %765 = arith.cmpi eq, %763, %764 : vector<16x1024xi32>
    %766 = arith.extui %765 : vector<16x1024xi1> to vector<16x1024xi32>
    %767 = arith.sitofp %766 : vector<16x1024xi32> to vector<16x1024xf32>
    %768 = arith.truncf %767 : vector<16x1024xf32> to vector<16x1024xbf16>
    %769 = vector.broadcast %740 : vector<1x1024xi32> to vector<16x1024xi32>
    %770 = arith.cmpi eq, %763, %769 : vector<16x1024xi32>
    %771 = arith.extui %770 : vector<16x1024xi1> to vector<16x1024xi32>
    %772 = arith.sitofp %771 : vector<16x1024xi32> to vector<16x1024xf32>
    %773 = arith.truncf %772 : vector<16x1024xf32> to vector<16x1024xbf16>
    %774 = vector.broadcast %744 : vector<1x1024xi32> to vector<16x1024xi32>
    %775 = arith.cmpi eq, %763, %774 : vector<16x1024xi32>
    %776 = arith.extui %775 : vector<16x1024xi1> to vector<16x1024xi32>
    %777 = arith.sitofp %776 : vector<16x1024xi32> to vector<16x1024xf32>
    %778 = arith.truncf %777 : vector<16x1024xf32> to vector<16x1024xbf16>
    %cst_303 = arith.constant dense<0.000000e+00> : vector<16xf32>
    %779 = vector.multi_reduction <add>, %767, %cst_303 [1] : vector<16x1024xf32> to vector<16xf32>
    %780 = vector.shape_cast %779 : vector<16xf32> to vector<16x1xf32>
    %781 = vector.extract_strided_slice %683 {offsets = [4, 0], sizes = [48, 1024], strides = [1, 1]} : vector<56x1024xf32> to vector<48x1024xf32>
    %782 = arith.truncf %781 : vector<48x1024xf32> to vector<48x1024xbf16>
    %cst_304 = arith.constant dense<0.000000e+00> : vector<16x48xf32>
    %783 = tpu.matmul %768, %782, %cst_304 {dimension_numbers = #tpu.dot_dimension_numbers<[1], [1], [0], [0], [0, 0, 1, 0], [], []>} : vector<16x1024xbf16>, vector<48x1024xbf16>, vector<16x48xf32> -> vector<16x48xf32>
    %cst_305 = arith.constant 1.000000e+00 : f32
    %784 = vector.broadcast %cst_305 : f32 to vector<16x1xf32>
    %785 = arith.maximumf %780, %784 : vector<16x1xf32>
    %786 = vector.broadcast %785 : vector<16x1xf32> to vector<16x48xf32>
    %787 = arith.divf %783, %786 : vector<16x48xf32>
    %788 = arith.truncf %748 : vector<1x1024xf32> to vector<1x1024xbf16>
    %789 = arith.truncf %752 : vector<1x1024xf32> to vector<1x1024xbf16>
    %790 = vector.broadcast %788 : vector<1x1024xbf16> to vector<16x1024xbf16>
    %791 = arith.mulf %768, %790 : vector<16x1024xbf16>
    %cst_306 = arith.constant dense<0.000000e+00> : vector<16x16xf32>
    %792 = tpu.matmul %791, %773, %cst_306 {dimension_numbers = #tpu.dot_dimension_numbers<[1], [1], [0], [0], [0, 0, 1, 0], [], []>} : vector<16x1024xbf16>, vector<16x1024xbf16>, vector<16x16xf32> -> vector<16x16xf32>
    %793 = vector.broadcast %788 : vector<1x1024xbf16> to vector<16x1024xbf16>
    %794 = arith.mulf %773, %793 : vector<16x1024xbf16>
    %cst_307 = arith.constant dense<0.000000e+00> : vector<16x16xf32>
    %795 = tpu.matmul %794, %768, %cst_307 {dimension_numbers = #tpu.dot_dimension_numbers<[1], [1], [0], [0], [0, 0, 1, 0], [], []>} : vector<16x1024xbf16>, vector<16x1024xbf16>, vector<16x16xf32> -> vector<16x16xf32>
    %796 = arith.addf %792, %795 : vector<16x16xf32>
    %797 = vector.broadcast %789 : vector<1x1024xbf16> to vector<16x1024xbf16>
    %798 = arith.mulf %768, %797 : vector<16x1024xbf16>
    %cst_308 = arith.constant dense<0.000000e+00> : vector<16x16xf32>
    %799 = tpu.matmul %798, %778, %cst_308 {dimension_numbers = #tpu.dot_dimension_numbers<[1], [1], [0], [0], [0, 0, 1, 0], [], []>} : vector<16x1024xbf16>, vector<16x1024xbf16>, vector<16x16xf32> -> vector<16x16xf32>
    %800 = arith.addf %796, %799 : vector<16x16xf32>
    %801 = vector.broadcast %789 : vector<1x1024xbf16> to vector<16x1024xbf16>
    %802 = arith.mulf %778, %801 : vector<16x1024xbf16>
    %cst_309 = arith.constant dense<0.000000e+00> : vector<16x16xf32>
    %803 = tpu.matmul %802, %768, %cst_309 {dimension_numbers = #tpu.dot_dimension_numbers<[1], [1], [0], [0], [0, 0, 1, 0], [], []>} : vector<16x1024xbf16>, vector<16x1024xbf16>, vector<16x16xf32> -> vector<16x16xf32>
    %804 = arith.addf %800, %803 : vector<16x16xf32>
    %805 = vector.broadcast %757 : vector<1x1024xbf16> to vector<16x1024xbf16>
    %806 = arith.mulf %768, %805 : vector<16x1024xbf16>
    %cst_310 = arith.constant dense<0.000000e+00> : vector<16x16xf32>
    %807 = tpu.matmul %806, %773, %cst_310 {dimension_numbers = #tpu.dot_dimension_numbers<[1], [1], [0], [0], [0, 0, 1, 0], [], []>} : vector<16x1024xbf16>, vector<16x1024xbf16>, vector<16x16xf32> -> vector<16x16xf32>
    %808 = vector.broadcast %757 : vector<1x1024xbf16> to vector<16x1024xbf16>
    %809 = arith.mulf %773, %808 : vector<16x1024xbf16>
    %cst_311 = arith.constant dense<0.000000e+00> : vector<16x16xf32>
    %810 = tpu.matmul %809, %768, %cst_311 {dimension_numbers = #tpu.dot_dimension_numbers<[1], [1], [0], [0], [0, 0, 1, 0], [], []>} : vector<16x1024xbf16>, vector<16x1024xbf16>, vector<16x16xf32> -> vector<16x16xf32>
    %811 = arith.addf %807, %810 : vector<16x16xf32>
    %812 = vector.broadcast %762 : vector<1x1024xbf16> to vector<16x1024xbf16>
    %813 = arith.mulf %768, %812 : vector<16x1024xbf16>
    %cst_312 = arith.constant dense<0.000000e+00> : vector<16x16xf32>
    %814 = tpu.matmul %813, %778, %cst_312 {dimension_numbers = #tpu.dot_dimension_numbers<[1], [1], [0], [0], [0, 0, 1, 0], [], []>} : vector<16x1024xbf16>, vector<16x1024xbf16>, vector<16x16xf32> -> vector<16x16xf32>
    %815 = arith.addf %811, %814 : vector<16x16xf32>
    %816 = vector.broadcast %762 : vector<1x1024xbf16> to vector<16x1024xbf16>
    %817 = arith.mulf %778, %816 : vector<16x1024xbf16>
    %cst_313 = arith.constant dense<0.000000e+00> : vector<16x16xf32>
    %818 = tpu.matmul %817, %768, %cst_313 {dimension_numbers = #tpu.dot_dimension_numbers<[1], [1], [0], [0], [0, 0, 1, 0], [], []>} : vector<16x1024xbf16>, vector<16x1024xbf16>, vector<16x16xf32> -> vector<16x16xf32>
    %819 = arith.addf %815, %818 : vector<16x16xf32>
    %820 = tpu.iota {dimensions = array<i32: 0>} : vector<16x16xi32>
    %821 = tpu.iota {dimensions = array<i32: 1>} : vector<16x16xi32>
    %822 = arith.cmpi ne, %820, %821 : vector<16x16xi32>
    %823 = arith.extui %822 : vector<16x16xi1> to vector<16x16xi32>
    %824 = arith.sitofp %823 : vector<16x16xi32> to vector<16x16xf32>
    %825 = arith.mulf %804, %824 : vector<16x16xf32>
    %826 = arith.mulf %819, %824 : vector<16x16xf32>
    %cst_314 = arith.constant dense<0xFF800000> : vector<16xf32>
    %827 = vector.multi_reduction <maximumf>, %825, %cst_314 [1] : vector<16x16xf32> to vector<16xf32>
    %828 = vector.shape_cast %827 : vector<16xf32> to vector<16x1xf32>
    %cst_315 = arith.constant dense<0xFF800000> : vector<1xf32>
    %829 = vector.multi_reduction <maximumf>, %828, %cst_315 [0] : vector<16x1xf32> to vector<1xf32>
    %830 = vector.shape_cast %829 : vector<1xf32> to vector<1x1xf32>
    %cst_316 = arith.constant 0.000000e+00 : f32
    %831 = vector.broadcast %cst_316 : f32 to vector<16x16xf32>
    %832 = arith.cmpf ogt, %825, %831 : vector<16x16xf32>
    %833 = arith.extui %832 : vector<16x16xi1> to vector<16x16xi32>
    %834 = arith.sitofp %833 : vector<16x16xi32> to vector<16x16xf32>
    %cst_317 = arith.constant 1.000000e+00 : f32
    %835 = vector.broadcast %cst_317 : f32 to vector<1x1xf32>
    %836 = arith.maximumf %830, %835 : vector<1x1xf32>
    %837 = vector.broadcast %836 : vector<1x1xf32> to vector<16x16xf32>
    %838 = arith.divf %825, %837 : vector<16x16xf32>
    %cst_318 = arith.constant 1.000000e+00 : f32
    %839 = vector.broadcast %cst_318 : f32 to vector<16x16xf32>
    %840 = arith.maximumf %825, %839 : vector<16x16xf32>
    %841 = arith.divf %826, %840 : vector<16x16xf32>
    %c0_319 = arith.constant 0 : index
    %c0_320 = arith.constant 0 : index
    %842 = vector.load %arg22[%c0_319, %c0_320] : memref<16x16xf32, #tpu.memory_space<vmem>>, vector<16x16xf32>
    tpu.vector_store %arg22[%c0_319, %c0_320], %834 {strides = array<i32>} : memref<16x16xf32, #tpu.memory_space<vmem>>, vector<16x16xf32>,
    %cst_321 = arith.constant dense<0.000000e+00> : vector<16xf32>
    %843 = vector.multi_reduction <add>, %834, %cst_321 [1] : vector<16x16xf32> to vector<16xf32>
    %844 = vector.shape_cast %843 : vector<16xf32> to vector<16x1xf32>
    %cst_322 = arith.constant 1.000000e+00 : f32
    %845 = vector.broadcast %cst_322 : f32 to vector<16x1xf32>
    %846 = arith.maximumf %844, %845 : vector<16x1xf32>
    %cst_323 = arith.constant dense<0.000000e+00> : vector<16xf32>
    %847 = vector.multi_reduction <add>, %841, %cst_323 [1] : vector<16x16xf32> to vector<16xf32>
    %848 = vector.shape_cast %847 : vector<16xf32> to vector<16x1xf32>
    %849 = arith.divf %848, %846 : vector<16x1xf32>
    %cst_324 = arith.constant dense<0.000000e+00> : vector<16xf32>
    %850 = vector.multi_reduction <add>, %838, %cst_324 [1] : vector<16x16xf32> to vector<16xf32>
    %851 = vector.shape_cast %850 : vector<16xf32> to vector<16x1xf32>
    %852 = arith.divf %851, %846 : vector<16x1xf32>
    %cst_325 = arith.constant 1.000000e+00 : f32
    %853 = vector.broadcast %cst_325 : f32 to vector<16x16xf32>
    %854 = arith.subf %853, %841 : vector<16x16xf32>
    %855 = arith.mulf %834, %854 : vector<16x16xf32>
    %856 = vector.broadcast %846 : vector<16x1xf32> to vector<16x16xf32>
    %857 = arith.divf %855, %856 : vector<16x16xf32>
    %858 = arith.truncf %857 : vector<16x16xf32> to vector<16x16xbf16>
    %859 = arith.truncf %787 : vector<16x48xf32> to vector<16x48xbf16>
    %c0_326 = arith.constant 0 : index
    %c0_327 = arith.constant 0 : index
    %860 = vector.load %arg11[%c0_326, %c0_327] : memref<2x34xf32, #tpu.memory_space<vmem>>, vector<2x34xf32>
    %c0_328 = arith.constant 0 : index
    %c0_329 = arith.constant 0 : index
    %861 = vector.load %arg13[%c0_328, %c0_329] : memref<2x34xf32, #tpu.memory_space<vmem>>, vector<2x34xf32>
    %c0_330 = arith.constant 0 : index
    %c0_331 = arith.constant 0 : index
    %862 = vector.load %arg10[%c0_330, %c0_331] : memref<48x34xbf16, #tpu.memory_space<vmem>>, vector<48x34xbf16>
    %cst_332 = arith.constant dense<0.000000e+00> : vector<16x34xf32>
    %863 = tpu.matmul %859, %862, %cst_332 {dimension_numbers = #tpu.dot_dimension_numbers<[1], [0], [0], [1], [0, 0, 1, 1], [], []>} : vector<16x48xbf16>, vector<48x34xbf16>, vector<16x34xf32> -> vector<16x34xf32>
    %864 = vector.extract_strided_slice %860 {offsets = [0, 0], sizes = [1, 34], strides = [1, 1]} : vector<2x34xf32> to vector<1x34xf32>
    %865 = vector.broadcast %849 : vector<16x1xf32> to vector<16x34xf32>
    %866 = vector.broadcast %864 : vector<1x34xf32> to vector<16x34xf32>
    %867 = arith.mulf %865, %866 : vector<16x34xf32>
    %868 = arith.addf %863, %867 : vector<16x34xf32>
    %869 = vector.extract_strided_slice %860 {offsets = [1, 0], sizes = [1, 34], strides = [1, 1]} : vector<2x34xf32> to vector<1x34xf32>
    %870 = vector.broadcast %852 : vector<16x1xf32> to vector<16x34xf32>
    %871 = vector.broadcast %869 : vector<1x34xf32> to vector<16x34xf32>
    %872 = arith.mulf %870, %871 : vector<16x34xf32>
    %873 = arith.addf %868, %872 : vector<16x34xf32>
    %c0_333 = arith.constant 0 : index
    %c0_334 = arith.constant 0 : index
    %874 = vector.load %arg12[%c0_333, %c0_334] : memref<48x34xbf16, #tpu.memory_space<vmem>>, vector<48x34xbf16>
    %cst_335 = arith.constant dense<0.000000e+00> : vector<16x34xf32>
    %875 = tpu.matmul %859, %874, %cst_335 {dimension_numbers = #tpu.dot_dimension_numbers<[1], [0], [0], [1], [0, 0, 1, 1], [], []>} : vector<16x48xbf16>, vector<48x34xbf16>, vector<16x34xf32> -> vector<16x34xf32>
    %876 = vector.extract_strided_slice %861 {offsets = [0, 0], sizes = [1, 34], strides = [1, 1]} : vector<2x34xf32> to vector<1x34xf32>
    %877 = vector.broadcast %849 : vector<16x1xf32> to vector<16x34xf32>
    %878 = vector.broadcast %876 : vector<1x34xf32> to vector<16x34xf32>
    %879 = arith.mulf %877, %878 : vector<16x34xf32>
    %880 = arith.addf %875, %879 : vector<16x34xf32>
    %881 = vector.extract_strided_slice %861 {offsets = [1, 0], sizes = [1, 34], strides = [1, 1]} : vector<2x34xf32> to vector<1x34xf32>
    %882 = vector.broadcast %852 : vector<16x1xf32> to vector<16x34xf32>
    %883 = vector.broadcast %881 : vector<1x34xf32> to vector<16x34xf32>
    %884 = arith.mulf %882, %883 : vector<16x34xf32>
    %885 = arith.addf %880, %884 : vector<16x34xf32>
    %886 = arith.truncf %885 : vector<16x34xf32> to vector<16x34xbf16>
    %cst_336 = arith.constant dense<0.000000e+00> : vector<16x34xf32>
    %887 = tpu.matmul %858, %886, %cst_336 {dimension_numbers = #tpu.dot_dimension_numbers<[1], [0], [0], [1], [0, 0, 1, 1], [], []>} : vector<16x16xbf16>, vector<16x34xbf16>, vector<16x34xf32> -> vector<16x34xf32>
    %888 = arith.addf %873, %887 : vector<16x34xf32>
    %c0_337 = arith.constant 0 : index
    %c0_338 = arith.constant 0 : index
    %889 = vector.load %arg14[%c0_337, %c0_338] : memref<1x34xf32, #tpu.memory_space<vmem>>, vector<1x34xf32>
    %890 = vector.broadcast %889 : vector<1x34xf32> to vector<16x34xf32>
    %891 = arith.addf %888, %890 : vector<16x34xf32>
    %cst_339 = arith.constant 0.000000e+00 : f32
    %892 = vector.broadcast %cst_339 : f32 to vector<16x34xf32>
    %893 = arith.maximumf %891, %892 : vector<16x34xf32>
    %894 = arith.truncf %893 : vector<16x34xf32> to vector<16x34xbf16>
    %c0_340 = arith.constant 0 : index
    %c0_341 = arith.constant 0 : index
    %895 = vector.load %arg15[%c0_340, %c0_341] : memref<34x16xbf16, #tpu.memory_space<vmem>>, vector<34x16xbf16>
    %cst_342 = arith.constant dense<0.000000e+00> : vector<16x16xf32>
    %896 = tpu.matmul %894, %895, %cst_342 {dimension_numbers = #tpu.dot_dimension_numbers<[1], [0], [0], [1], [0, 0, 1, 1], [], []>} : vector<16x34xbf16>, vector<34x16xbf16>, vector<16x16xf32> -> vector<16x16xf32>
    %cst_343 = arith.constant dense<0.000000e+00> : vector<16x16xf32>
    %897 = tpu.matmul %896, %896, %cst_343 {dimension_numbers = #tpu.dot_dimension_numbers<[1], [1], [0], [0], [0, 0, 1, 0], [], []>} : vector<16x16xf32>, vector<16x16xf32>, vector<16x16xf32> -> vector<16x16xf32>
    %898 = arith.negf %897 : vector<16x16xf32>
    %899 = math.exp %898 : vector<16x16xf32>
    %cst_344 = arith.constant 1.000000e+00 : f32
    %900 = vector.broadcast %cst_344 : f32 to vector<16x16xf32>
    %901 = arith.addf %900, %899 : vector<16x16xf32>
    %902 = arith.divf %900, %901 : vector<16x16xf32>
    %903 = arith.mulf %902, %834 : vector<16x16xf32>
    %c0_345 = arith.constant 0 : index
    %c0_346 = arith.constant 0 : index
    %c0_347 = arith.constant 0 : index
    %904 = vector.load %arg23[%c0_345, %c0_346, %c0_347] : memref<2x16x16xf32, #tpu.memory_space<vmem>>, vector<1x16x16xf32>
    %905 = vector.shape_cast %904 : vector<1x16x16xf32> to vector<16x16xf32>
    %906 = vector.shape_cast %903 : vector<16x16xf32> to vector<1x16x16xf32>
    tpu.vector_store %arg23[%c0_345, %c0_346, %c0_347], %906 {strides = array<i32>} : memref<2x16x16xf32, #tpu.memory_space<vmem>>, vector<1x16x16xf32>,
    %c0_348 = arith.constant 0 : index
    %c0_349 = arith.constant 0 : index
    %c0_350 = arith.constant 0 : index
    %907 = vector.load %arg24[%c0_348, %c0_349, %c0_350] : memref<2x16x34xf32, #tpu.memory_space<vmem>>, vector<1x16x34xf32>
    %908 = vector.shape_cast %907 : vector<1x16x34xf32> to vector<16x34xf32>
    %909 = vector.shape_cast %893 : vector<16x34xf32> to vector<1x16x34xf32>
    tpu.vector_store %arg24[%c0_348, %c0_349, %c0_350], %909 {strides = array<i32>} : memref<2x16x34xf32, #tpu.memory_space<vmem>>, vector<1x16x34xf32>,
    %910 = arith.truncf %893 : vector<16x34xf32> to vector<16x34xbf16>
    %cst_351 = arith.constant dense<0.000000e+00> : vector<16x34xf32>
    %911 = tpu.matmul %858, %910, %cst_351 {dimension_numbers = #tpu.dot_dimension_numbers<[1], [0], [0], [1], [0, 0, 1, 1], [], []>} : vector<16x16xbf16>, vector<16x34xbf16>, vector<16x34xf32> -> vector<16x34xf32>
    %c0_352 = arith.constant 0 : index
    %c0_353 = arith.constant 0 : index
    %c0_354 = arith.constant 0 : index
    %912 = vector.load %arg16[%c0_352, %c0_353, %c0_354] : memref<1x34x34xbf16, #tpu.memory_space<vmem>>, vector<1x34x34xbf16>
    %913 = vector.shape_cast %912 : vector<1x34x34xbf16> to vector<34x34xbf16>
    %cst_355 = arith.constant dense<0.000000e+00> : vector<16x34xf32>
    %914 = tpu.matmul %910, %913, %cst_355 {dimension_numbers = #tpu.dot_dimension_numbers<[1], [0], [0], [1], [0, 0, 1, 1], [], []>} : vector<16x34xbf16>, vector<34x34xbf16>, vector<16x34xf32> -> vector<16x34xf32>
    %915 = arith.truncf %911 : vector<16x34xf32> to vector<16x34xbf16>
    %c0_356 = arith.constant 0 : index
    %c0_357 = arith.constant 0 : index
    %c0_358 = arith.constant 0 : index
    %916 = vector.load %arg17[%c0_356, %c0_357, %c0_358] : memref<1x34x34xbf16, #tpu.memory_space<vmem>>, vector<1x34x34xbf16>
    %917 = vector.shape_cast %916 : vector<1x34x34xbf16> to vector<34x34xbf16>
    %cst_359 = arith.constant dense<0.000000e+00> : vector<16x34xf32>
    %918 = tpu.matmul %915, %917, %cst_359 {dimension_numbers = #tpu.dot_dimension_numbers<[1], [0], [0], [1], [0, 0, 1, 1], [], []>} : vector<16x34xbf16>, vector<34x34xbf16>, vector<16x34xf32> -> vector<16x34xf32>
    %919 = arith.addf %914, %918 : vector<16x34xf32>
    %c0_360 = arith.constant 0 : index
    %c0_361 = arith.constant 0 : index
    %c0_362 = arith.constant 0 : index
    %920 = vector.load %arg18[%c0_360, %c0_361, %c0_362] : memref<1x1x34xf32, #tpu.memory_space<vmem>>, vector<1x1x34xf32>
    %921 = vector.shape_cast %920 : vector<1x1x34xf32> to vector<1x34xf32>
    %922 = vector.broadcast %921 : vector<1x34xf32> to vector<16x34xf32>
    %923 = arith.addf %919, %922 : vector<16x34xf32>
    %cst_363 = arith.constant 0.000000e+00 : f32
    %924 = vector.broadcast %cst_363 : f32 to vector<16x34xf32>
    %925 = arith.maximumf %923, %924 : vector<16x34xf32>
    %926 = arith.truncf %925 : vector<16x34xf32> to vector<16x34xbf16>
    %c0_364 = arith.constant 0 : index
    %c0_365 = arith.constant 0 : index
    %c0_366 = arith.constant 0 : index
    %927 = vector.load %arg19[%c0_364, %c0_365, %c0_366] : memref<1x34x16xbf16, #tpu.memory_space<vmem>>, vector<1x34x16xbf16>
    %928 = vector.shape_cast %927 : vector<1x34x16xbf16> to vector<34x16xbf16>
    %cst_367 = arith.constant dense<0.000000e+00> : vector<16x16xf32>
    %929 = tpu.matmul %926, %928, %cst_367 {dimension_numbers = #tpu.dot_dimension_numbers<[1], [0], [0], [1], [0, 0, 1, 1], [], []>} : vector<16x34xbf16>, vector<34x16xbf16>, vector<16x16xf32> -> vector<16x16xf32>
    %cst_368 = arith.constant dense<0.000000e+00> : vector<16x16xf32>
    %930 = tpu.matmul %929, %929, %cst_368 {dimension_numbers = #tpu.dot_dimension_numbers<[1], [1], [0], [0], [0, 0, 1, 0], [], []>} : vector<16x16xf32>, vector<16x16xf32>, vector<16x16xf32> -> vector<16x16xf32>
    %931 = arith.negf %930 : vector<16x16xf32>
    %932 = math.exp %931 : vector<16x16xf32>
    %cst_369 = arith.constant 1.000000e+00 : f32
    %933 = vector.broadcast %cst_369 : f32 to vector<16x16xf32>
    %934 = arith.addf %933, %932 : vector<16x16xf32>
    %935 = arith.divf %933, %934 : vector<16x16xf32>
    %936 = arith.mulf %935, %834 : vector<16x16xf32>
    %c1_370 = arith.constant 1 : index
    %c0_371 = arith.constant 0 : index
    %c0_372 = arith.constant 0 : index
    %937 = vector.load %arg23[%c1_370, %c0_371, %c0_372] : memref<2x16x16xf32, #tpu.memory_space<vmem>>, vector<1x16x16xf32>
    %938 = vector.shape_cast %937 : vector<1x16x16xf32> to vector<16x16xf32>
    %939 = vector.shape_cast %936 : vector<16x16xf32> to vector<1x16x16xf32>
    tpu.vector_store %arg23[%c1_370, %c0_371, %c0_372], %939 {strides = array<i32>} : memref<2x16x16xf32, #tpu.memory_space<vmem>>, vector<1x16x16xf32>,
    %c1_373 = arith.constant 1 : index
    %c0_374 = arith.constant 0 : index
    %c0_375 = arith.constant 0 : index
    %940 = vector.load %arg24[%c1_373, %c0_374, %c0_375] : memref<2x16x34xf32, #tpu.memory_space<vmem>>, vector<1x16x34xf32>
    %941 = vector.shape_cast %940 : vector<1x16x34xf32> to vector<16x34xf32>
    %942 = vector.shape_cast %925 : vector<16x34xf32> to vector<1x16x34xf32>
    tpu.vector_store %arg24[%c1_373, %c0_374, %c0_375], %942 {strides = array<i32>} : memref<2x16x34xf32, #tpu.memory_space<vmem>>, vector<1x16x34xf32>,
    return
  }
}

</mosaic_0001>

<llo_original>
// kernel: squeeze.2
$region0: #{squeeze.2}
  %s0 = inlined_call_operand.vmem [shape: f32[1,1,32,32], index: 0, kind: input, shape index: {}]
  %s1 = inlined_call_operand.vmem [shape: f32[1,1024], index: 1, kind: output, shape index: {}]
  $region1: #{squeeze.2} parent=0
    #allocation0 [shape = 'u8[32768]{0}', space=vmem, size = 0x8000, scoped, tag = 'scoped mem for output reshape']
    %v2 = vld [vmem:[%s0] ss:$4 sm:$0xff]
    %vm3 = vcmask 261120
    %4 = vst.msk [vmem:[#allocation0] ss:$8 sm:$0xf] %vm3, %v2
    %5 = vst.msk [vmem:[#allocation0] ss:$8 sm:$0xf0] %vm3, %v2
    %s6 = scalar_lea.vmem %s0, 3
    %v7 = vld [vmem:[%s6] ss:$4 sm:$0xff]
    %8 = vrot.lane.b32.xlu0 %v7, 96
    %v9 = vpop.permute.xlu0 %8
    %vm10 = vcmask 1048320
    %11 = vst.msk [vmem:[#allocation0] ss:$8 sm:$0xf] %vm10, %v9
    %12 = vst.msk [vmem:[#allocation0] ss:$8 sm:$0xf0] %vm10, %v9
    %s13 = scalar_lea.vmem %s0, 2
    %v14 = vld [vmem:[%s13] ss:$4 sm:$0xff]
    %15 = vrot.lane.b32.xlu0 %v14, 64
    %v16 = vpop.permute.xlu0 %15
    %vm17 = vcmask 785920
    %18 = vst.msk [vmem:[#allocation0] ss:$8 sm:$0xf] %vm17, %v16
    %19 = vst.msk [vmem:[#allocation0] ss:$8 sm:$0xf0] %vm17, %v16
    %s20 = scalar_lea.vmem %s0, 1
    %v21 = vld [vmem:[%s20] ss:$4 sm:$0xff]
    %22 = vrot.lane.b32.xlu0 %v21, 32
    %v23 = vpop.permute.xlu0 %22
    %vm24 = vcmask 523520
    %25 = vst.msk [vmem:[#allocation0] ss:$8 sm:$0xf] %vm24, %v23
    %26 = vst.msk [vmem:[#allocation0] ss:$8 sm:$0xf0] %vm24, %v23
    %s28 = sshllo.u32 0, 1
    %v30 = vld [vmem:[#allocation0] sm:%s28]
    %s31 = sshllo.u32 0, 1
    %32 = vst [vmem:[%s1] sm:%s31] %v30
    %s33 = scalar_lea.vmem [#allocation0], 8
    %v34 = vld [vmem:[%s33] sm:%s28]
    %s35 = sshllo.u32 0, 1
    %s36 = scalar_lea.vmem %s1, 1
    %37 = vst [vmem:[%s36] sm:%s35] %v34
    %s38 = scalar_lea.vmem [#allocation0], 16
    %v39 = vld [vmem:[%s38] sm:%s28]
    %s40 = sshllo.u32 0, 1
    %s41 = smul.addr 1, 2
    %s42 = scalar_lea.vmem %s1, %s41
    %43 = vst [vmem:[%s42] sm:%s40] %v39
    %s44 = scalar_lea.vmem [#allocation0], 24
    %v45 = vld [vmem:[%s44] sm:%s28]
    %s46 = sshllo.u32 0, 1
    %s47 = smul.addr 1, 3
    %s48 = scalar_lea.vmem %s1, %s47
    %49 = vst [vmem:[%s48] sm:%s46] %v45
    %s50 = scalar_lea.vmem [#allocation0], 32
    %v51 = vld [vmem:[%s50] sm:%s28]
    %s52 = sshllo.u32 0, 1
    %s53 = smul.addr 1, 4
    %s54 = scalar_lea.vmem %s1, %s53
    %55 = vst [vmem:[%s54] sm:%s52] %v51
    %s56 = scalar_lea.vmem [#allocation0], 40
    %v57 = vld [vmem:[%s56] sm:%s28]
    %s58 = sshllo.u32 0, 1
    %s59 = smul.addr 1, 5
    %s60 = scalar_lea.vmem %s1, %s59
    %61 = vst [vmem:[%s60] sm:%s58] %v57
    %s62 = scalar_lea.vmem [#allocation0], 48
    %v63 = vld [vmem:[%s62] sm:%s28]
    %s64 = sshllo.u32 0, 1
    %s65 = smul.addr 1, 6
    %s66 = scalar_lea.vmem %s1, %s65
    %67 = vst [vmem:[%s66] sm:%s64] %v63
    %s68 = scalar_lea.vmem [#allocation0], 56
    %v69 = vld [vmem:[%s68] sm:%s28]
    %s70 = sshllo.u32 0, 1
    %s71 = smul.addr 1, 7
    %s72 = scalar_lea.vmem %s1, %s71
    %73 = vst [vmem:[%s72] sm:%s70] %v69

// kernel: unet_egnn_forward.1
$region0: #{unet_egnn_forward.1}
  #allocation0 [shape = 'u32[]', space=smem, size = 0x4, offset = 0x4, fixed_abs, tag = 'smem constant byte address 0x4 - core index']
  #allocation1 [shape = 'u32[144,128]{1,0:T(1,128)}', space=vmem, size = 0x12000, scoped, tag = 'internal scratch']
  #allocation2 [shape = 'bf16[144,1024]{1,0:T(16,128)(2,1)}', space=vmem, size = 0x48000, scoped, tag = 'scratch operand']
  %s0 = inlined_call_operand.vmem [shape: f32[1,1024], index: 0, kind: input, shape index: {}]
  %s1 = inlined_call_operand.vmem [shape: f32[1,1024], index: 1, kind: input, shape index: {}]
  %s2 = inlined_call_operand.vmem [shape: f32[16,9], index: 2, kind: input, shape index: {}]
  %s3 = inlined_call_operand.vmem [shape: f32[16,1], index: 3, kind: input, shape index: {}]
  %s4 = inlined_call_operand.vmem [shape: bf16[16,144], index: 4, kind: input, shape index: {}]
  %s5 = inlined_call_operand.vmem [shape: f32[16,1], index: 5, kind: input, shape index: {}]
  %s6 = inlined_call_operand.vmem [shape: bf16[16,144], index: 6, kind: input, shape index: {}]
  %s7 = inlined_call_operand.vmem [shape: f32[16,1], index: 7, kind: input, shape index: {}]
  %s8 = inlined_call_operand.vmem [shape: bf16[56,16], index: 8, kind: input, shape index: {}]
  %s9 = inlined_call_operand.vmem [shape: f32[56,1], index: 9, kind: input, shape index: {}]
  %s10 = inlined_call_operand.vmem [shape: bf16[48,34], index: 10, kind: input, shape index: {}]
  %s11 = inlined_call_operand.vmem [shape: f32[2,34], index: 11, kind: input, shape index: {}]
  %s12 = inlined_call_operand.vmem [shape: bf16[48,34], index: 12, kind: input, shape index: {}]
  %s13 = inlined_call_operand.vmem [shape: f32[2,34], index: 13, kind: input, shape index: {}]
  %s14 = inlined_call_operand.vmem [shape: f32[1,34], index: 14, kind: input, shape index: {}]
  %s15 = inlined_call_operand.vmem [shape: bf16[34,16], index: 15, kind: input, shape index: {}]
  %s16 = inlined_call_operand.vmem [shape: bf16[1,34,34], index: 16, kind: input, shape index: {}]
  %s17 = inlined_call_operand.vmem [shape: bf16[1,34,34], index: 17, kind: input, shape index: {}]
  %s18 = inlined_call_operand.vmem [shape: f32[1,1,34], index: 18, kind: input, shape index: {}]
  %s19 = inlined_call_operand.vmem [shape: bf16[1,34,16], index: 19, kind: input, shape index: {}]
  %s20 = inlined_call_operand.vmem [shape: f32[56,1024], index: 20, kind: output, shape index: {0}]
  %s21 = inlined_call_operand.vmem [shape: s32[1,1024], index: 21, kind: output, shape index: {1}]
  %s22 = inlined_call_operand.hbm [shape: f32[16,16], index: 22, kind: output, shape index: {2}]
  %s23 = inlined_call_operand.hbm [shape: f32[2,16,16], index: 23, kind: output, shape index: {3}]
  %s24 = inlined_call_operand.hbm [shape: f32[2,16,34], index: 24, kind: output, shape index: {4}]
  %25 = xla_tuple %s20, %s21, %s22, %s23, %s24
  %s26 = sld [smem:[#allocation0]]
  $region122: #{unet_egnn_forward.1} parent=0
    _
  %s28 = ssub.s32 1, %s26
  %s29 = scalar_select 0, %s28, %s26
  $region1: #{unet_egnn_forward.1} parent=0
    #allocation3 [shape = 'u8[8192]{0}', space=vmem, size = 0x2000, scoped, tag = 'output window, operand 2, single buffered']
    #allocation4 [shape = 's32[1]{0}', space=sflag, size = 0x4, scoped, tag = 'scoped memory for unet_egnn_forward.1']
    #allocation5 [shape = 'u8[16384]{0}', space=vmem, size = 0x4000, scoped, tag = 'output window, operand 3, single buffered']
    #allocation6 [shape = 's32[1]{0}', space=sflag, size = 0x4, scoped, tag = 'scoped memory for unet_egnn_forward.1']
    #allocation7 [shape = 'u8[16384]{0}', space=vmem, size = 0x4000, scoped, tag = 'output window, operand 4, single buffered']
    %30 = vsyncpa [#allocation4], 0
    %31 = vsyncpa [#allocation6], 0
    // Predicated region
    $region2: #{unet_egnn_forward.1} parent=1 // pred_check
      _
    $region3: #{unet_egnn_forward.1} parent=1 // pred_check_branch
      %33 = sbr.rel (0) target = $region5
    $region4: #{unet_egnn_forward.1} parent=1 // pred_region
      _
    $region5: #{unet_egnn_forward.1} parent=1 // pred_fallthru
      _
    // Predicated region
    $region6: #{unet_egnn_forward.1} parent=1 // pred_check
      _
    $region7: #{unet_egnn_forward.1} parent=1 // pred_check_branch
      %35 = sbr.rel (0) target = $region9
    $region8: #{unet_egnn_forward.1} parent=1 // pred_region
      _
    $region9: #{unet_egnn_forward.1} parent=1 // pred_fallthru
      _
    // Predicated region
    $region10: #{unet_egnn_forward.1} parent=1 // pred_check
      _
    $region11: #{unet_egnn_forward.1} parent=1 // pred_check_branch
      %37 = sbr.rel (0) target = $region13
    $region12: #{unet_egnn_forward.1} parent=1 // pred_region
      _
    $region13: #{unet_egnn_forward.1} parent=1 // pred_fallthru
      _
    // Predicated region
    $region14: #{unet_egnn_forward.1} parent=1 // pred_check
      _
    $region15: #{unet_egnn_forward.1} parent=1 // pred_check_branch
      %39 = sbr.rel (0) target = $region17
    $region16: #{unet_egnn_forward.1} parent=1 // pred_region
      _
    $region17: #{unet_egnn_forward.1} parent=1 // pred_fallthru
      _
    // Predicated region
    $region18: #{unet_egnn_forward.1} parent=1 // pred_check
      _
    $region19: #{unet_egnn_forward.1} parent=1 // pred_check_branch
      %41 = sbr.rel (0) target = $region21
    $region20: #{unet_egnn_forward.1} parent=1 // pred_region
      _
    $region21: #{unet_egnn_forward.1} parent=1 // pred_fallthru
      _
    // Predicated region
    $region22: #{unet_egnn_forward.1} parent=1 // pred_check
      _
    $region23: #{unet_egnn_forward.1} parent=1 // pred_check_branch
      %43 = sbr.rel (0) target = $region25
    $region24: #{unet_egnn_forward.1} parent=1 // pred_region
      _
    $region25: #{unet_egnn_forward.1} parent=1 // pred_fallthru
      _
    // Predicated region
    $region26: #{unet_egnn_forward.1} parent=1 // pred_check
      _
    $region27: #{unet_egnn_forward.1} parent=1 // pred_check_branch
      %45 = sbr.rel (0) target = $region29
    $region28: #{unet_egnn_forward.1} parent=1 // pred_region
      _
    $region29: #{unet_egnn_forward.1} parent=1 // pred_fallthru
      _
    // Predicated region
    $region30: #{unet_egnn_forward.1} parent=1 // pred_check
      _
    $region31: #{unet_egnn_forward.1} parent=1 // pred_check_branch
      %47 = sbr.rel (0) target = $region33
    $region32: #{unet_egnn_forward.1} parent=1 // pred_region
      _
    $region33: #{unet_egnn_forward.1} parent=1 // pred_fallthru
      _
    // Predicated region
    $region34: #{unet_egnn_forward.1} parent=1 // pred_check
      _
    $region35: #{unet_egnn_forward.1} parent=1 // pred_check_branch
      %49 = sbr.rel (0) target = $region37
    $region36: #{unet_egnn_forward.1} parent=1 // pred_region
      _
    $region37: #{unet_egnn_forward.1} parent=1 // pred_fallthru
      _
    // Predicated region
    $region38: #{unet_egnn_forward.1} parent=1 // pred_check
      _
    $region39: #{unet_egnn_forward.1} parent=1 // pred_check_branch
      %51 = sbr.rel (0) target = $region41
    $region40: #{unet_egnn_forward.1} parent=1 // pred_region
      _
    $region41: #{unet_egnn_forward.1} parent=1 // pred_fallthru
      _
    // Predicated region
    $region42: #{unet_egnn_forward.1} parent=1 // pred_check
      _
    $region43: #{unet_egnn_forward.1} parent=1 // pred_check_branch
      %53 = sbr.rel (0) target = $region45
    $region44: #{unet_egnn_forward.1} parent=1 // pred_region
      _
    $region45: #{unet_egnn_forward.1} parent=1 // pred_fallthru
      _
    // Predicated region
    $region46: #{unet_egnn_forward.1} parent=1 // pred_check
      _
    $region47: #{unet_egnn_forward.1} parent=1 // pred_check_branch
      %55 = sbr.rel (0) target = $region49
    $region48: #{unet_egnn_forward.1} parent=1 // pred_region
      _
    $region49: #{unet_egnn_forward.1} parent=1 // pred_fallthru
      _
    // Predicated region
    $region50: #{unet_egnn_forward.1} parent=1 // pred_check
      _
    $region51: #{unet_egnn_forward.1} parent=1 // pred_check_branch
      %57 = sbr.rel (0) target = $region53
    $region52: #{unet_egnn_forward.1} parent=1 // pred_region
      _
    $region53: #{unet_egnn_forward.1} parent=1 // pred_fallthru
      _
    // Predicated region
    $region54: #{unet_egnn_forward.1} parent=1 // pred_check
      _
    $region55: #{unet_egnn_forward.1} parent=1 // pred_check_branch
      %59 = sbr.rel (0) target = $region57
    $region56: #{unet_egnn_forward.1} parent=1 // pred_region
      _
    $region57: #{unet_egnn_forward.1} parent=1 // pred_fallthru
      _
    // Predicated region
    $region58: #{unet_egnn_forward.1} parent=1 // pred_check
      _
    $region59: #{unet_egnn_forward.1} parent=1 // pred_check_branch
      %61 = sbr.rel (0) target = $region61
    $region60: #{unet_egnn_forward.1} parent=1 // pred_region
      _
    $region61: #{unet_egnn_forward.1} parent=1 // pred_fallthru
      _
    // Predicated region
    $region62: #{unet_egnn_forward.1} parent=1 // pred_check
      _
    $region63: #{unet_egnn_forward.1} parent=1 // pred_check_branch
      %63 = sbr.rel (0) target = $region65
    $region64: #{unet_egnn_forward.1} parent=1 // pred_region
      _
    $region65: #{unet_egnn_forward.1} parent=1 // pred_fallthru
      _
    // Predicated region
    $region66: #{unet_egnn_forward.1} parent=1 // pred_check
      _
    $region67: #{unet_egnn_forward.1} parent=1 // pred_check_branch
      %65 = sbr.rel (0) target = $region69
    $region68: #{unet_egnn_forward.1} parent=1 // pred_region
      _
    $region69: #{unet_egnn_forward.1} parent=1 // pred_fallthru
      _
    // Predicated region
    $region70: #{unet_egnn_forward.1} parent=1 // pred_check
      _
    $region71: #{unet_egnn_forward.1} parent=1 // pred_check_branch
      %67 = sbr.rel (0) target = $region73
    $region72: #{unet_egnn_forward.1} parent=1 // pred_region
      _
    $region73: #{unet_egnn_forward.1} parent=1 // pred_fallthru
      _
    // Predicated region
    $region74: #{unet_egnn_forward.1} parent=1 // pred_check
      _
    $region75: #{unet_egnn_forward.1} parent=1 // pred_check_branch
      %69 = sbr.rel (0) target = $region77
    $region76: #{unet_egnn_forward.1} parent=1 // pred_region
      _
    $region77: #{unet_egnn_forward.1} parent=1 // pred_fallthru
      _
    // Predicated region
    $region78: #{unet_egnn_forward.1} parent=1 // pred_check
      _
    $region79: #{unet_egnn_forward.1} parent=1 // pred_check_branch
      %71 = sbr.rel (0) target = $region81
    $region80: #{unet_egnn_forward.1} parent=1 // pred_region
      _
    $region81: #{unet_egnn_forward.1} parent=1 // pred_fallthru
      _
    %v73 = vlaneseq
    %v74 = vand.u32 %v73, 127
    %v75 = vadd.s32 %v74, 128
    %v76 = vadd.s32 %v74, 256
    %v77 = vadd.s32 %v74, 384
    %v78 = vadd.s32 %v74, 512
    %v79 = vadd.s32 %v74, 640
    %v80 = vadd.s32 %v74, 768
    %v81 = vadd.s32 %v74, 896
    %v82 = vshra.s32 %v74, 5
    %v83 = vshra.s32 %v75, 5
    %v84 = vshra.s32 %v76, 5
    %v85 = vshra.s32 %v77, 5
    %v86 = vshra.s32 %v78, 5
    %v87 = vshra.s32 %v79, 5
    %v88 = vshra.s32 %v80, 5
    %v89 = vshra.s32 %v81, 5
    %v90 = vand.u32 %v74, 31
    %v91 = vand.u32 %v75, 31
    %v92 = vand.u32 %v76, 31
    %v93 = vand.u32 %v77, 31
    %v94 = vand.u32 %v78, 31
    %v95 = vand.u32 %v79, 31
    %v96 = vand.u32 %v80, 31
    %v97 = vand.u32 %v81, 31
    %v98 = vld [vmem:[%s0] sm:$0xff]
    %v99 = vld [vmem:[%s2] sm:$0xff]
    %v100 = vld [vmem:[%s2 + $0x8] sm:$0xff]
    %v102 = vlaneseq
    %v103 = vshrl.u32 %v102, 7
    %v104 = vsub.s32 0, %v103
    %v105 = vrot.slane %v98, %v104
    %v106 = vlaneseq
    %v107 = vshrl.u32 %v106, 7
    %v108 = vsub.s32 1, %v107
    %v109 = vrot.slane %v98, %v108
    %v110 = vlaneseq
    %v111 = vshrl.u32 %v110, 7
    %v112 = vsub.s32 2, %v111
    %v113 = vrot.slane %v98, %v112
    %v114 = vlaneseq
    %v115 = vshrl.u32 %v114, 7
    %v116 = vsub.s32 3, %v115
    %v117 = vrot.slane %v98, %v116
    %v118 = vlaneseq
    %v119 = vshrl.u32 %v118, 7
    %v120 = vsub.s32 4, %v119
    %v121 = vrot.slane %v98, %v120
    %v122 = vlaneseq
    %v123 = vshrl.u32 %v122, 7
    %v124 = vsub.s32 5, %v123
    %v125 = vrot.slane %v98, %v124
    %v126 = vlaneseq
    %v127 = vshrl.u32 %v126, 7
    %v128 = vsub.s32 6, %v127
    %v129 = vrot.slane %v98, %v128
    %v130 = vlaneseq
    %v131 = vshrl.u32 %v130, 7
    %v132 = vsub.s32 7, %v131
    %v133 = vrot.slane %v98, %v132
    %142 = vrot.lane.b32.xlu0 %v105, 33
    %v143 = vpop.permute.xlu0 %142
    %144 = vrot.lane.b32.xlu0 %v109, 33
    %v145 = vpop.permute.xlu0 %144
    %146 = vrot.lane.b32.xlu0 %v113, 33
    %v147 = vpop.permute.xlu0 %146
    %148 = vrot.lane.b32.xlu0 %v117, 33
    %v149 = vpop.permute.xlu0 %148
    %150 = vrot.lane.b32.xlu0 %v121, 33
    %v151 = vpop.permute.xlu0 %150
    %152 = vrot.lane.b32.xlu0 %v125, 33
    %v153 = vpop.permute.xlu0 %152
    %154 = vrot.lane.b32.xlu0 %v129, 33
    %v155 = vpop.permute.xlu0 %154
    %156 = vrot.lane.b32.xlu0 %v133, 33
    %v157 = vpop.permute.xlu0 %156
    %vm158 = vcmp.lt.s32.totalorder %v74, 33
    %v159 = vsel %vm158, %v155, %v157
    %v160 = vsel %vm158, %v153, %v155
    %v161 = vsel %vm158, %v151, %v153
    %v162 = vsel %vm158, %v149, %v151
    %v163 = vsel %vm158, %v147, %v149
    %v164 = vsel %vm158, %v145, %v147
    %v165 = vsel %vm158, %v143, %v145
    %v166 = vsel %vm158, %v157, %v143
    %v167 = vadd.s32 %v82, 4294967295
    %v168 = vadd.s32 %v83, 4294967295
    %v169 = vadd.s32 %v84, 4294967295
    %v170 = vadd.s32 %v85, 4294967295
    %v171 = vadd.s32 %v86, 4294967295
    %v172 = vadd.s32 %v87, 4294967295
    %v173 = vadd.s32 %v88, 4294967295
    %v174 = vadd.s32 %v89, 4294967295
    %vm175 = vcmp.ge.s32.totalorder %v167, 0
    %vm176 = vcmp.ge.s32.totalorder %v168, 0
    %vm177 = vcmp.ge.s32.totalorder %v169, 0
    %vm178 = vcmp.ge.s32.totalorder %v170, 0
    %vm179 = vcmp.ge.s32.totalorder %v171, 0
    %vm180 = vcmp.ge.s32.totalorder %v172, 0
    %vm181 = vcmp.ge.s32.totalorder %v173, 0
    %vm182 = vcmp.ge.s32.totalorder %v174, 0
    %vm183 = vcmp.lt.s32.totalorder %v167, 32
    %vm184 = vcmp.lt.s32.totalorder %v168, 32
    %vm185 = vcmp.lt.s32.totalorder %v169, 32
    %vm186 = vcmp.lt.s32.totalorder %v170, 32
    %vm187 = vcmp.lt.s32.totalorder %v171, 32
    %vm188 = vcmp.lt.s32.totalorder %v172, 32
    %vm189 = vcmp.lt.s32.totalorder %v173, 32
    %vm190 = vcmp.lt.s32.totalorder %v174, 32
    %vm191 = vmand %vm175, %vm183
    %vm192 = vmand %vm176, %vm184
    %vm193 = vmand %vm177, %vm185
    %vm194 = vmand %vm178, %vm186
    %vm195 = vmand %vm179, %vm187
    %vm196 = vmand %vm180, %vm188
    %vm197 = vmand %vm181, %vm189
    %vm198 = vmand %vm182, %vm190
    %v199 = vadd.s32 %v90, 4294967295
    %v200 = vadd.s32 %v91, 4294967295
    %v201 = vadd.s32 %v92, 4294967295
    %v202 = vadd.s32 %v93, 4294967295
    %v203 = vadd.s32 %v94, 4294967295
    %v204 = vadd.s32 %v95, 4294967295
    %v205 = vadd.s32 %v96, 4294967295
    %v206 = vadd.s32 %v97, 4294967295
    %vm207 = vcmp.ge.s32.totalorder %v199, 0
    %vm208 = vcmp.ge.s32.totalorder %v200, 0
    %vm209 = vcmp.ge.s32.totalorder %v201, 0
    %vm210 = vcmp.ge.s32.totalorder %v202, 0
    %vm211 = vcmp.ge.s32.totalorder %v203, 0
    %vm212 = vcmp.ge.s32.totalorder %v204, 0
    %vm213 = vcmp.ge.s32.totalorder %v205, 0
    %vm214 = vcmp.ge.s32.totalorder %v206, 0
    %vm215 = vmand %vm191, %vm207
    %vm216 = vmand %vm192, %vm208
    %vm217 = vmand %vm193, %vm209
    %vm218 = vmand %vm194, %vm210
    %vm219 = vmand %vm195, %vm211
    %vm220 = vmand %vm196, %vm212
    %vm221 = vmand %vm197, %vm213
    %vm222 = vmand %vm198, %vm214
    %vm223 = vcmp.lt.s32.totalorder %v199, 32
    %vm224 = vcmp.lt.s32.totalorder %v200, 32
    %vm225 = vcmp.lt.s32.totalorder %v201, 32
    %vm226 = vcmp.lt.s32.totalorder %v202, 32
    %vm227 = vcmp.lt.s32.totalorder %v203, 32
    %vm228 = vcmp.lt.s32.totalorder %v204, 32
    %vm229 = vcmp.lt.s32.totalorder %v205, 32
    %vm230 = vcmp.lt.s32.totalorder %v206, 32
    %vm231 = vmand %vm215, %vm223
    %vm232 = vmand %vm216, %vm224
    %vm233 = vmand %vm217, %vm225
    %vm234 = vmand %vm218, %vm226
    %vm235 = vmand %vm219, %vm227
    %vm236 = vmand %vm220, %vm228
    %vm237 = vmand %vm221, %vm229
    %vm238 = vmand %vm222, %vm230
    %v239 = vsel %vm231, 1, 0
    %v240 = vsel %vm232, 1, 0
    %v241 = vsel %vm233, 1, 0
    %v242 = vsel %vm234, 1, 0
    %v243 = vsel %vm235, 1, 0
    %v244 = vsel %vm236, 1, 0
    %v245 = vsel %vm237, 1, 0
    %v246 = vsel %vm238, 1, 0
    %v247 = vcvt.s32.f32 %v239
    %v248 = vcvt.s32.f32 %v240
    %v249 = vcvt.s32.f32 %v241
    %v250 = vcvt.s32.f32 %v242
    %v251 = vcvt.s32.f32 %v243
    %v252 = vcvt.s32.f32 %v244
    %v253 = vcvt.s32.f32 %v245
    %v254 = vcvt.s32.f32 %v246
    %v255 = vmul.f32 %v166, %v247
    %v256 = vmul.f32 %v165, %v248
    %v257 = vmul.f32 %v164, %v249
    %v258 = vmul.f32 %v163, %v250
    %v259 = vmul.f32 %v162, %v251
    %v260 = vmul.f32 %v161, %v252
    %v261 = vmul.f32 %v160, %v253
    %v262 = vmul.f32 %v159, %v254
    %264 = vset.pattern.permute.xlu0 0
    %265 = vperm.xlu0 %264, %v99
    %v266 = vpop.permute.xlu0 %265
    %269 = vset.pattern.permute.xlu0 0
    %270 = vperm.xlu0 %269, %v100
    %v271 = vpop.permute.xlu0 %270
    %v273 = vlaneseq
    %v274 = vshrl.u32 %v273, 7
    %v275 = vsub.s32 0, %v274
    %v276 = vrot.slane %v255, %v275
    %v277 = vlaneseq
    %v278 = vshrl.u32 %v277, 7
    %v279 = vsub.s32 0, %v278
    %v280 = vrot.slane %v256, %v279
    %v281 = vlaneseq
    %v282 = vshrl.u32 %v281, 7
    %v283 = vsub.s32 0, %v282
    %v284 = vrot.slane %v257, %v283
    %v285 = vlaneseq
    %v286 = vshrl.u32 %v285, 7
    %v287 = vsub.s32 0, %v286
    %v288 = vrot.slane %v258, %v287
    %v289 = vlaneseq
    %v290 = vshrl.u32 %v289, 7
    %v291 = vsub.s32 0, %v290
    %v292 = vrot.slane %v259, %v291
    %v293 = vlaneseq
    %v294 = vshrl.u32 %v293, 7
    %v295 = vsub.s32 0, %v294
    %v296 = vrot.slane %v260, %v295
    %v297 = vlaneseq
    %v298 = vshrl.u32 %v297, 7
    %v299 = vsub.s32 0, %v298
    %v300 = vrot.slane %v261, %v299
    %v301 = vlaneseq
    %v302 = vshrl.u32 %v301, 7
    %v303 = vsub.s32 0, %v302
    %v304 = vrot.slane %v262, %v303
    %v305 = vmul.f32 %v266, %v276
    %v306 = vmul.f32 %v266, %v280
    %v307 = vmul.f32 %v266, %v284
    %v308 = vmul.f32 %v266, %v288
    %v309 = vmul.f32 %v266, %v292
    %v310 = vmul.f32 %v266, %v296
    %v311 = vmul.f32 %v266, %v300
    %v312 = vmul.f32 %v266, %v304
    %v313 = vmul.f32 %v271, %v276
    %v314 = vmul.f32 %v271, %v280
    %v315 = vmul.f32 %v271, %v284
    %v316 = vmul.f32 %v271, %v288
    %v317 = vmul.f32 %v271, %v292
    %v318 = vmul.f32 %v271, %v296
    %v319 = vmul.f32 %v271, %v300
    %v320 = vmul.f32 %v271, %v304
    %v321 = vadd.f32 %v305, 0.0
    %v322 = vadd.f32 %v306, 0.0
    %v323 = vadd.f32 %v307, 0.0
    %v324 = vadd.f32 %v308, 0.0
    %v325 = vadd.f32 %v309, 0.0
    %v326 = vadd.f32 %v310, 0.0
    %v327 = vadd.f32 %v311, 0.0
    %v328 = vadd.f32 %v312, 0.0
    %v329 = vadd.f32 %v313, 0.0
    %v330 = vadd.f32 %v314, 0.0
    %v331 = vadd.f32 %v315, 0.0
    %v332 = vadd.f32 %v316, 0.0
    %v333 = vadd.f32 %v317, 0.0
    %v334 = vadd.f32 %v318, 0.0
    %v335 = vadd.f32 %v319, 0.0
    %v336 = vadd.f32 %v320, 0.0
    %337 = vrot.lane.b32.xlu0 %v105, 32
    %v338 = vpop.permute.xlu0 %337
    %339 = vrot.lane.b32.xlu0 %v109, 32
    %v340 = vpop.permute.xlu0 %339
    %341 = vrot.lane.b32.xlu0 %v113, 32
    %v342 = vpop.permute.xlu0 %341
    %343 = vrot.lane.b32.xlu0 %v117, 32
    %v344 = vpop.permute.xlu0 %343
    %345 = vrot.lane.b32.xlu0 %v121, 32
    %v346 = vpop.permute.xlu0 %345
    %347 = vrot.lane.b32.xlu0 %v125, 32
    %v348 = vpop.permute.xlu0 %347
    %349 = vrot.lane.b32.xlu0 %v129, 32
    %v350 = vpop.permute.xlu0 %349
    %351 = vrot.lane.b32.xlu0 %v133, 32
    %v352 = vpop.permute.xlu0 %351
    %vm353 = vcmp.lt.s32.totalorder %v74, 32
    %v354 = vsel %vm353, %v350, %v352
    %v355 = vsel %vm353, %v348, %v350
    %v356 = vsel %vm353, %v346, %v348
    %v357 = vsel %vm353, %v344, %v346
    %v358 = vsel %vm353, %v342, %v344
    %v359 = vsel %vm353, %v340, %v342
    %v360 = vsel %vm353, %v338, %v340
    %v361 = vsel %vm353, %v352, %v338
    %vm362 = vcmp.ge.s32.totalorder %v90, 0
    %vm363 = vcmp.ge.s32.totalorder %v91, 0
    %vm364 = vcmp.ge.s32.totalorder %v92, 0
    %vm365 = vcmp.ge.s32.totalorder %v93, 0
    %vm366 = vcmp.ge.s32.totalorder %v94, 0
    %vm367 = vcmp.ge.s32.totalorder %v95, 0
    %vm368 = vcmp.ge.s32.totalorder %v96, 0
    %vm369 = vcmp.ge.s32.totalorder %v97, 0
    %vm370 = vmand %vm191, %vm362
    %vm371 = vmand %vm192, %vm363
    %vm372 = vmand %vm193, %vm364
    %vm373 = vmand %vm194, %vm365
    %vm374 = vmand %vm195, %vm366
    %vm375 = vmand %vm196, %vm367
    %vm376 = vmand %vm197, %vm368
    %vm377 = vmand %vm198, %vm369
    %vm378 = vcmp.lt.s32.totalorder %v90, 32
    %vm379 = vcmp.lt.s32.totalorder %v91, 32
    %vm380 = vcmp.lt.s32.totalorder %v92, 32
    %vm381 = vcmp.lt.s32.totalorder %v93, 32
    %vm382 = vcmp.lt.s32.totalorder %v94, 32
    %vm383 = vcmp.lt.s32.totalorder %v95, 32
    %vm384 = vcmp.lt.s32.totalorder %v96, 32
    %vm385 = vcmp.lt.s32.totalorder %v97, 32
    %vm386 = vmand %vm370, %vm378
    %vm387 = vmand %vm371, %vm379
    %vm388 = vmand %vm372, %vm380
    %vm389 = vmand %vm373, %vm381
    %vm390 = vmand %vm374, %vm382
    %vm391 = vmand %vm375, %vm383
    %vm392 = vmand %vm376, %vm384
    %vm393 = vmand %vm377, %vm385
    %v394 = vsel %vm386, 1, 0
    %v395 = vsel %vm387, 1, 0
    %v396 = vsel %vm388, 1, 0
    %v397 = vsel %vm389, 1, 0
    %v398 = vsel %vm390, 1, 0
    %v399 = vsel %vm391, 1, 0
    %v400 = vsel %vm392, 1, 0
    %v401 = vsel %vm393, 1, 0
    %v402 = vcvt.s32.f32 %v394
    %v403 = vcvt.s32.f32 %v395
    %v404 = vcvt.s32.f32 %v396
    %v405 = vcvt.s32.f32 %v397
    %v406 = vcvt.s32.f32 %v398
    %v407 = vcvt.s32.f32 %v399
    %v408 = vcvt.s32.f32 %v400
    %v409 = vcvt.s32.f32 %v401
    %v410 = vmul.f32 %v361, %v402
    %v411 = vmul.f32 %v360, %v403
    %v412 = vmul.f32 %v359, %v404
    %v413 = vmul.f32 %v358, %v405
    %v414 = vmul.f32 %v357, %v406
    %v415 = vmul.f32 %v356, %v407
    %v416 = vmul.f32 %v355, %v408
    %v417 = vmul.f32 %v354, %v409
    %418 = vset.pattern.permute.xlu0 1
    %419 = vperm.xlu0 %418, %v99
    %v420 = vpop.permute.xlu0 %419
    %422 = vset.pattern.permute.xlu0 1
    %423 = vperm.xlu0 %422, %v100
    %v424 = vpop.permute.xlu0 %423
    %v426 = vlaneseq
    %v427 = vshrl.u32 %v426, 7
    %v428 = vsub.s32 0, %v427
    %v429 = vrot.slane %v410, %v428
    %v430 = vlaneseq
    %v431 = vshrl.u32 %v430, 7
    %v432 = vsub.s32 0, %v431
    %v433 = vrot.slane %v411, %v432
    %v434 = vlaneseq
    %v435 = vshrl.u32 %v434, 7
    %v436 = vsub.s32 0, %v435
    %v437 = vrot.slane %v412, %v436
    %v438 = vlaneseq
    %v439 = vshrl.u32 %v438, 7
    %v440 = vsub.s32 0, %v439
    %v441 = vrot.slane %v413, %v440
    %v442 = vlaneseq
    %v443 = vshrl.u32 %v442, 7
    %v444 = vsub.s32 0, %v443
    %v445 = vrot.slane %v414, %v444
    %v446 = vlaneseq
    %v447 = vshrl.u32 %v446, 7
    %v448 = vsub.s32 0, %v447
    %v449 = vrot.slane %v415, %v448
    %v450 = vlaneseq
    %v451 = vshrl.u32 %v450, 7
    %v452 = vsub.s32 0, %v451
    %v453 = vrot.slane %v416, %v452
    %v454 = vlaneseq
    %v455 = vshrl.u32 %v454, 7
    %v456 = vsub.s32 0, %v455
    %v457 = vrot.slane %v417, %v456
    %v458 = vmul.f32 %v420, %v429
    %v459 = vmul.f32 %v420, %v433
    %v460 = vmul.f32 %v420, %v437
    %v461 = vmul.f32 %v420, %v441
    %v462 = vmul.f32 %v420, %v445
    %v463 = vmul.f32 %v420, %v449
    %v464 = vmul.f32 %v420, %v453
    %v465 = vmul.f32 %v420, %v457
    %v466 = vmul.f32 %v424, %v429
    %v467 = vmul.f32 %v424, %v433
    %v468 = vmul.f32 %v424, %v437
    %v469 = vmul.f32 %v424, %v441
    %v470 = vmul.f32 %v424, %v445
    %v471 = vmul.f32 %v424, %v449
    %v472 = vmul.f32 %v424, %v453
    %v473 = vmul.f32 %v424, %v457
    %v474 = vadd.f32 %v321, %v458
    %v475 = vadd.f32 %v322, %v459
    %v476 = vadd.f32 %v323, %v460
    %v477 = vadd.f32 %v324, %v461
    %v478 = vadd.f32 %v325, %v462
    %v479 = vadd.f32 %v326, %v463
    %v480 = vadd.f32 %v327, %v464
    %v481 = vadd.f32 %v328, %v465
    %v482 = vadd.f32 %v329, %v466
    %v483 = vadd.f32 %v330, %v467
    %v484 = vadd.f32 %v331, %v468
    %v485 = vadd.f32 %v332, %v469
    %v486 = vadd.f32 %v333, %v470
    %v487 = vadd.f32 %v334, %v471
    %v488 = vadd.f32 %v335, %v472
    %v489 = vadd.f32 %v336, %v473
    %490 = vrot.lane.b32.xlu0 %v105, 31
    %v491 = vpop.permute.xlu0 %490
    %492 = vrot.lane.b32.xlu0 %v109, 31
    %v493 = vpop.permute.xlu0 %492
    %494 = vrot.lane.b32.xlu0 %v113, 31
    %v495 = vpop.permute.xlu0 %494
    %496 = vrot.lane.b32.xlu0 %v117, 31
    %v497 = vpop.permute.xlu0 %496
    %498 = vrot.lane.b32.xlu0 %v121, 31
    %v499 = vpop.permute.xlu0 %498
    %500 = vrot.lane.b32.xlu0 %v125, 31
    %v501 = vpop.permute.xlu0 %500
    %502 = vrot.lane.b32.xlu0 %v129, 31
    %v503 = vpop.permute.xlu0 %502
    %504 = vrot.lane.b32.xlu0 %v133, 31
    %v505 = vpop.permute.xlu0 %504
    %vm506 = vcmp.lt.s32.totalorder %v74, 31
    %v507 = vsel %vm506, %v503, %v505
    %v508 = vsel %vm506, %v501, %v503
    %v509 = vsel %vm506, %v499, %v501
    %v510 = vsel %vm506, %v497, %v499
    %v511 = vsel %vm506, %v495, %v497
    %v512 = vsel %vm506, %v493, %v495
    %v513 = vsel %vm506, %v491, %v493
    %v514 = vsel %vm506, %v505, %v491
    %v515 = vadd.s32 %v90, 1
    %v516 = vadd.s32 %v91, 1
    %v517 = vadd.s32 %v92, 1
    %v518 = vadd.s32 %v93, 1
    %v519 = vadd.s32 %v94, 1
    %v520 = vadd.s32 %v95, 1
    %v521 = vadd.s32 %v96, 1
    %v522 = vadd.s32 %v97, 1
    %vm523 = vcmp.ge.s32.totalorder %v515, 0
    %vm524 = vcmp.ge.s32.totalorder %v516, 0
    %vm525 = vcmp.ge.s32.totalorder %v517, 0
    %vm526 = vcmp.ge.s32.totalorder %v518, 0
    %vm527 = vcmp.ge.s32.totalorder %v519, 0
    %vm528 = vcmp.ge.s32.totalorder %v520, 0
    %vm529 = vcmp.ge.s32.totalorder %v521, 0
    %vm530 = vcmp.ge.s32.totalorder %v522, 0
    %vm531 = vmand %vm191, %vm523
    %vm532 = vmand %vm192, %vm524
    %vm533 = vmand %vm193, %vm525
    %vm534 = vmand %vm194, %vm526
    %vm535 = vmand %vm195, %vm527
    %vm536 = vmand %vm196, %vm528
    %vm537 = vmand %vm197, %vm529
    %vm538 = vmand %vm198, %vm530
    %vm539 = vcmp.lt.s32.totalorder %v515, 32
    %vm540 = vcmp.lt.s32.totalorder %v516, 32
    %vm541 = vcmp.lt.s32.totalorder %v517, 32
    %vm542 = vcmp.lt.s32.totalorder %v518, 32
    %vm543 = vcmp.lt.s32.totalorder %v519, 32
    %vm544 = vcmp.lt.s32.totalorder %v520, 32
    %vm545 = vcmp.lt.s32.totalorder %v521, 32
    %vm546 = vcmp.lt.s32.totalorder %v522, 32
    %vm547 = vmand %vm531, %vm539
    %vm548 = vmand %vm532, %vm540
    %vm549 = vmand %vm533, %vm541
    %vm550 = vmand %vm534, %vm542
    %vm551 = vmand %vm535, %vm543
    %vm552 = vmand %vm536, %vm544
    %vm553 = vmand %vm537, %vm545
    %vm554 = vmand %vm538, %vm546
    %v555 = vsel %vm547, 1, 0
    %v556 = vsel %vm548, 1, 0
    %v557 = vsel %vm549, 1, 0
    %v558 = vsel %vm550, 1, 0
    %v559 = vsel %vm551, 1, 0
    %v560 = vsel %vm552, 1, 0
    %v561 = vsel %vm553, 1, 0
    %v562 = vsel %vm554, 1, 0
    %v563 = vcvt.s32.f32 %v555
    %v564 = vcvt.s32.f32 %v556
    %v565 = vcvt.s32.f32 %v557
    %v566 = vcvt.s32.f32 %v558
    %v567 = vcvt.s32.f32 %v559
    %v568 = vcvt.s32.f32 %v560
    %v569 = vcvt.s32.f32 %v561
    %v570 = vcvt.s32.f32 %v562
    %v571 = vmul.f32 %v514, %v563
    %v572 = vmul.f32 %v513, %v564
    %v573 = vmul.f32 %v512, %v565
    %v574 = vmul.f32 %v511, %v566
    %v575 = vmul.f32 %v510, %v567
    %v576 = vmul.f32 %v509, %v568
    %v577 = vmul.f32 %v508, %v569
    %v578 = vmul.f32 %v507, %v570
    %579 = vset.pattern.permute.xlu0 2
    %580 = vperm.xlu0 %579, %v99
    %v581 = vpop.permute.xlu0 %580
    %583 = vset.pattern.permute.xlu0 2
    %584 = vperm.xlu0 %583, %v100
    %v585 = vpop.permute.xlu0 %584
    %v587 = vlaneseq
    %v588 = vshrl.u32 %v587, 7
    %v589 = vsub.s32 0, %v588
    %v590 = vrot.slane %v571, %v589
    %v591 = vlaneseq
    %v592 = vshrl.u32 %v591, 7
    %v593 = vsub.s32 0, %v592
    %v594 = vrot.slane %v572, %v593
    %v595 = vlaneseq
    %v596 = vshrl.u32 %v595, 7
    %v597 = vsub.s32 0, %v596
    %v598 = vrot.slane %v573, %v597
    %v599 = vlaneseq
    %v600 = vshrl.u32 %v599, 7
    %v601 = vsub.s32 0, %v600
    %v602 = vrot.slane %v574, %v601
    %v603 = vlaneseq
    %v604 = vshrl.u32 %v603, 7
    %v605 = vsub.s32 0, %v604
    %v606 = vrot.slane %v575, %v605
    %v607 = vlaneseq
    %v608 = vshrl.u32 %v607, 7
    %v609 = vsub.s32 0, %v608
    %v610 = vrot.slane %v576, %v609
    %v611 = vlaneseq
    %v612 = vshrl.u32 %v611, 7
    %v613 = vsub.s32 0, %v612
    %v614 = vrot.slane %v577, %v613
    %v615 = vlaneseq
    %v616 = vshrl.u32 %v615, 7
    %v617 = vsub.s32 0, %v616
    %v618 = vrot.slane %v578, %v617
    %v619 = vmul.f32 %v581, %v590
    %v620 = vmul.f32 %v581, %v594
    %v621 = vmul.f32 %v581, %v598
    %v622 = vmul.f32 %v581, %v602
    %v623 = vmul.f32 %v581, %v606
    %v624 = vmul.f32 %v581, %v610
    %v625 = vmul.f32 %v581, %v614
    %v626 = vmul.f32 %v581, %v618
    %v627 = vmul.f32 %v585, %v590
    %v628 = vmul.f32 %v585, %v594
    %v629 = vmul.f32 %v585, %v598
    %v630 = vmul.f32 %v585, %v602
    %v631 = vmul.f32 %v585, %v606
    %v632 = vmul.f32 %v585, %v610
    %v633 = vmul.f32 %v585, %v614
    %v634 = vmul.f32 %v585, %v618
    %v635 = vadd.f32 %v474, %v619
    %v636 = vadd.f32 %v475, %v620
    %v637 = vadd.f32 %v476, %v621
    %v638 = vadd.f32 %v477, %v622
    %v639 = vadd.f32 %v478, %v623
    %v640 = vadd.f32 %v479, %v624
    %v641 = vadd.f32 %v480, %v625
    %v642 = vadd.f32 %v481, %v626
    %v643 = vadd.f32 %v482, %v627
    %v644 = vadd.f32 %v483, %v628
    %v645 = vadd.f32 %v484, %v629
    %v646 = vadd.f32 %v485, %v630
    %v647 = vadd.f32 %v486, %v631
    %v648 = vadd.f32 %v487, %v632
    %v649 = vadd.f32 %v488, %v633
    %v650 = vadd.f32 %v489, %v634
    %651 = vrot.lane.b32.xlu0 %v105, 1
    %v652 = vpop.permute.xlu0 %651
    %653 = vrot.lane.b32.xlu0 %v109, 1
    %v654 = vpop.permute.xlu0 %653
    %655 = vrot.lane.b32.xlu0 %v113, 1
    %v656 = vpop.permute.xlu0 %655
    %657 = vrot.lane.b32.xlu0 %v117, 1
    %v658 = vpop.permute.xlu0 %657
    %659 = vrot.lane.b32.xlu0 %v121, 1
    %v660 = vpop.permute.xlu0 %659
    %661 = vrot.lane.b32.xlu0 %v125, 1
    %v662 = vpop.permute.xlu0 %661
    %663 = vrot.lane.b32.xlu0 %v129, 1
    %v664 = vpop.permute.xlu0 %663
    %665 = vrot.lane.b32.xlu0 %v133, 1
    %v666 = vpop.permute.xlu0 %665
    %vm667 = vcmp.lt.s32.totalorder %v74, 1
    %v668 = vsel %vm667, %v664, %v666
    %v669 = vsel %vm667, %v662, %v664
    %v670 = vsel %vm667, %v660, %v662
    %v671 = vsel %vm667, %v658, %v660
    %v672 = vsel %vm667, %v656, %v658
    %v673 = vsel %vm667, %v654, %v656
    %v674 = vsel %vm667, %v652, %v654
    %v675 = vsel %vm667, %v666, %v652
    %vm676 = vcmp.ge.s32.totalorder %v82, 0
    %vm677 = vcmp.ge.s32.totalorder %v83, 0
    %vm678 = vcmp.ge.s32.totalorder %v84, 0
    %vm679 = vcmp.ge.s32.totalorder %v85, 0
    %vm680 = vcmp.ge.s32.totalorder %v86, 0
    %vm681 = vcmp.ge.s32.totalorder %v87, 0
    %vm682 = vcmp.ge.s32.totalorder %v88, 0
    %vm683 = vcmp.ge.s32.totalorder %v89, 0
    %vm684 = vcmp.lt.s32.totalorder %v82, 32
    %vm685 = vcmp.lt.s32.totalorder %v83, 32
    %vm686 = vcmp.lt.s32.totalorder %v84, 32
    %vm687 = vcmp.lt.s32.totalorder %v85, 32
    %vm688 = vcmp.lt.s32.totalorder %v86, 32
    %vm689 = vcmp.lt.s32.totalorder %v87, 32
    %vm690 = vcmp.lt.s32.totalorder %v88, 32
    %vm691 = vcmp.lt.s32.totalorder %v89, 32
    %vm692 = vmand %vm676, %vm684
    %vm693 = vmand %vm677, %vm685
    %vm694 = vmand %vm678, %vm686
    %vm695 = vmand %vm679, %vm687
    %vm696 = vmand %vm680, %vm688
    %vm697 = vmand %vm681, %vm689
    %vm698 = vmand %vm682, %vm690
    %vm699 = vmand %vm683, %vm691
    %vm700 = vmand %vm692, %vm207
    %vm701 = vmand %vm693, %vm208
    %vm702 = vmand %vm694, %vm209
    %vm703 = vmand %vm695, %vm210
    %vm704 = vmand %vm696, %vm211
    %vm705 = vmand %vm697, %vm212
    %vm706 = vmand %vm698, %vm213
    %vm707 = vmand %vm699, %vm214
    %vm708 = vmand %vm700, %vm223
    %vm709 = vmand %vm701, %vm224
    %vm710 = vmand %vm702, %vm225
    %vm711 = vmand %vm703, %vm226
    %vm712 = vmand %vm704, %vm227
    %vm713 = vmand %vm705, %vm228
    %vm714 = vmand %vm706, %vm229
    %vm715 = vmand %vm707, %vm230
    %v716 = vsel %vm708, 1, 0
    %v717 = vsel %vm709, 1, 0
    %v718 = vsel %vm710, 1, 0
    %v719 = vsel %vm711, 1, 0
    %v720 = vsel %vm712, 1, 0
    %v721 = vsel %vm713, 1, 0
    %v722 = vsel %vm714, 1, 0
    %v723 = vsel %vm715, 1, 0
    %v724 = vcvt.s32.f32 %v716
    %v725 = vcvt.s32.f32 %v717
    %v726 = vcvt.s32.f32 %v718
    %v727 = vcvt.s32.f32 %v719
    %v728 = vcvt.s32.f32 %v720
    %v729 = vcvt.s32.f32 %v721
    %v730 = vcvt.s32.f32 %v722
    %v731 = vcvt.s32.f32 %v723
    %v732 = vmul.f32 %v675, %v724
    %v733 = vmul.f32 %v674, %v725
    %v734 = vmul.f32 %v673, %v726
    %v735 = vmul.f32 %v672, %v727
    %v736 = vmul.f32 %v671, %v728
    %v737 = vmul.f32 %v670, %v729
    %v738 = vmul.f32 %v669, %v730
    %v739 = vmul.f32 %v668, %v731
    %740 = vset.pattern.permute.xlu0 3
    %741 = vperm.xlu0 %740, %v99
    %v742 = vpop.permute.xlu0 %741
    %744 = vset.pattern.permute.xlu0 3
    %745 = vperm.xlu0 %744, %v100
    %v746 = vpop.permute.xlu0 %745
    %v748 = vlaneseq
    %v749 = vshrl.u32 %v748, 7
    %v750 = vsub.s32 0, %v749
    %v751 = vrot.slane %v732, %v750
    %v752 = vlaneseq
    %v753 = vshrl.u32 %v752, 7
    %v754 = vsub.s32 0, %v753
    %v755 = vrot.slane %v733, %v754
    %v756 = vlaneseq
    %v757 = vshrl.u32 %v756, 7
    %v758 = vsub.s32 0, %v757
    %v759 = vrot.slane %v734, %v758
    %v760 = vlaneseq
    %v761 = vshrl.u32 %v760, 7
    %v762 = vsub.s32 0, %v761
    %v763 = vrot.slane %v735, %v762
    %v764 = vlaneseq
    %v765 = vshrl.u32 %v764, 7
    %v766 = vsub.s32 0, %v765
    %v767 = vrot.slane %v736, %v766
    %v768 = vlaneseq
    %v769 = vshrl.u32 %v768, 7
    %v770 = vsub.s32 0, %v769
    %v771 = vrot.slane %v737, %v770
    %v772 = vlaneseq
    %v773 = vshrl.u32 %v772, 7
    %v774 = vsub.s32 0, %v773
    %v775 = vrot.slane %v738, %v774
    %v776 = vlaneseq
    %v777 = vshrl.u32 %v776, 7
    %v778 = vsub.s32 0, %v777
    %v779 = vrot.slane %v739, %v778
    %v780 = vmul.f32 %v742, %v751
    %v781 = vmul.f32 %v742, %v755
    %v782 = vmul.f32 %v742, %v759
    %v783 = vmul.f32 %v742, %v763
    %v784 = vmul.f32 %v742, %v767
    %v785 = vmul.f32 %v742, %v771
    %v786 = vmul.f32 %v742, %v775
    %v787 = vmul.f32 %v742, %v779
    %v788 = vmul.f32 %v746, %v751
    %v789 = vmul.f32 %v746, %v755
    %v790 = vmul.f32 %v746, %v759
    %v791 = vmul.f32 %v746, %v763
    %v792 = vmul.f32 %v746, %v767
    %v793 = vmul.f32 %v746, %v771
    %v794 = vmul.f32 %v746, %v775
    %v795 = vmul.f32 %v746, %v779
    %v796 = vadd.f32 %v635, %v780
    %v797 = vadd.f32 %v636, %v781
    %v798 = vadd.f32 %v637, %v782
    %v799 = vadd.f32 %v638, %v783
    %v800 = vadd.f32 %v639, %v784
    %v801 = vadd.f32 %v640, %v785
    %v802 = vadd.f32 %v641, %v786
    %v803 = vadd.f32 %v642, %v787
    %v804 = vadd.f32 %v643, %v788
    %v805 = vadd.f32 %v644, %v789
    %v806 = vadd.f32 %v645, %v790
    %v807 = vadd.f32 %v646, %v791
    %v808 = vadd.f32 %v647, %v792
    %v809 = vadd.f32 %v648, %v793
    %v810 = vadd.f32 %v649, %v794
    %v811 = vadd.f32 %v650, %v795
    %812 = vset.pattern.permute.xlu0 4
    %813 = vperm.xlu0 %812, %v99
    %v814 = vpop.permute.xlu0 %813
    %816 = vset.pattern.permute.xlu0 4
    %817 = vperm.xlu0 %816, %v100
    %v818 = vpop.permute.xlu0 %817
    %v820 = vmul.f32 %v814, %v105
    %v821 = vmul.f32 %v814, %v109
    %v822 = vmul.f32 %v814, %v113
    %v823 = vmul.f32 %v814, %v117
    %v824 = vmul.f32 %v814, %v121
    %v825 = vmul.f32 %v814, %v125
    %v826 = vmul.f32 %v814, %v129
    %v827 = vmul.f32 %v814, %v133
    %v828 = vmul.f32 %v818, %v105
    %v829 = vmul.f32 %v818, %v109
    %v830 = vmul.f32 %v818, %v113
    %v831 = vmul.f32 %v818, %v117
    %v832 = vmul.f32 %v818, %v121
    %v833 = vmul.f32 %v818, %v125
    %v834 = vmul.f32 %v818, %v129
    %v835 = vmul.f32 %v818, %v133
    %v836 = vadd.f32 %v796, %v820
    %v837 = vadd.f32 %v797, %v821
    %v838 = vadd.f32 %v798, %v822
    %v839 = vadd.f32 %v799, %v823
    %v840 = vadd.f32 %v800, %v824
    %v841 = vadd.f32 %v801, %v825
    %v842 = vadd.f32 %v802, %v826
    %v843 = vadd.f32 %v803, %v827
    %v844 = vadd.f32 %v804, %v828
    %v845 = vadd.f32 %v805, %v829
    %v846 = vadd.f32 %v806, %v830
    %v847 = vadd.f32 %v807, %v831
    %v848 = vadd.f32 %v808, %v832
    %v849 = vadd.f32 %v809, %v833
    %v850 = vadd.f32 %v810, %v834
    %v851 = vadd.f32 %v811, %v835
    %852 = vrot.lane.b32.xlu0 %v105, 127
    %v853 = vpop.permute.xlu0 %852
    %854 = vrot.lane.b32.xlu0 %v109, 127
    %v855 = vpop.permute.xlu0 %854
    %856 = vrot.lane.b32.xlu0 %v113, 127
    %v857 = vpop.permute.xlu0 %856
    %858 = vrot.lane.b32.xlu0 %v117, 127
    %v859 = vpop.permute.xlu0 %858
    %860 = vrot.lane.b32.xlu0 %v121, 127
    %v861 = vpop.permute.xlu0 %860
    %862 = vrot.lane.b32.xlu0 %v125, 127
    %v863 = vpop.permute.xlu0 %862
    %864 = vrot.lane.b32.xlu0 %v129, 127
    %v865 = vpop.permute.xlu0 %864
    %866 = vrot.lane.b32.xlu0 %v133, 127
    %v867 = vpop.permute.xlu0 %866
    %vm868 = vcmp.lt.s32.totalorder %v74, 127
    %v869 = vsel %vm868, %v865, %v867
    %v870 = vsel %vm868, %v863, %v865
    %v871 = vsel %vm868, %v861, %v863
    %v872 = vsel %vm868, %v859, %v861
    %v873 = vsel %vm868, %v857, %v859
    %v874 = vsel %vm868, %v855, %v857
    %v875 = vsel %vm868, %v853, %v855
    %v876 = vsel %vm868, %v867, %v853
    %vm877 = vmand %vm692, %vm523
    %vm878 = vmand %vm693, %vm524
    %vm879 = vmand %vm694, %vm525
    %vm880 = vmand %vm695, %vm526
    %vm881 = vmand %vm696, %vm527
    %vm882 = vmand %vm697, %vm528
    %vm883 = vmand %vm698, %vm529
    %vm884 = vmand %vm699, %vm530
    %vm885 = vmand %vm877, %vm539
    %vm886 = vmand %vm878, %vm540
    %vm887 = vmand %vm879, %vm541
    %vm888 = vmand %vm880, %vm542
    %vm889 = vmand %vm881, %vm543
    %vm890 = vmand %vm882, %vm544
    %vm891 = vmand %vm883, %vm545
    %vm892 = vmand %vm884, %vm546
    %v893 = vsel %vm885, 1, 0
    %v894 = vsel %vm886, 1, 0
    %v895 = vsel %vm887, 1, 0
    %v896 = vsel %vm888, 1, 0
    %v897 = vsel %vm889, 1, 0
    %v898 = vsel %vm890, 1, 0
    %v899 = vsel %vm891, 1, 0
    %v900 = vsel %vm892, 1, 0
    %v901 = vcvt.s32.f32 %v893
    %v902 = vcvt.s32.f32 %v894
    %v903 = vcvt.s32.f32 %v895
    %v904 = vcvt.s32.f32 %v896
    %v905 = vcvt.s32.f32 %v897
    %v906 = vcvt.s32.f32 %v898
    %v907 = vcvt.s32.f32 %v899
    %v908 = vcvt.s32.f32 %v900
    %v909 = vmul.f32 %v875, %v901
    %v910 = vmul.f32 %v874, %v902
    %v911 = vmul.f32 %v873, %v903
    %v912 = vmul.f32 %v872, %v904
    %v913 = vmul.f32 %v871, %v905
    %v914 = vmul.f32 %v870, %v906
    %v915 = vmul.f32 %v869, %v907
    %v916 = vmul.f32 %v876, %v908
    %917 = vset.pattern.permute.xlu0 5
    %918 = vperm.xlu0 %917, %v99
    %v919 = vpop.permute.xlu0 %918
    %921 = vset.pattern.permute.xlu0 5
    %922 = vperm.xlu0 %921, %v100
    %v923 = vpop.permute.xlu0 %922
    %v925 = vlaneseq
    %v926 = vshrl.u32 %v925, 7
    %v927 = vsub.s32 0, %v926
    %v928 = vrot.slane %v909, %v927
    %v929 = vlaneseq
    %v930 = vshrl.u32 %v929, 7
    %v931 = vsub.s32 0, %v930
    %v932 = vrot.slane %v910, %v931
    %v933 = vlaneseq
    %v934 = vshrl.u32 %v933, 7
    %v935 = vsub.s32 0, %v934
    %v936 = vrot.slane %v911, %v935
    %v937 = vlaneseq
    %v938 = vshrl.u32 %v937, 7
    %v939 = vsub.s32 0, %v938
    %v940 = vrot.slane %v912, %v939
    %v941 = vlaneseq
    %v942 = vshrl.u32 %v941, 7
    %v943 = vsub.s32 0, %v942
    %v944 = vrot.slane %v913, %v943
    %v945 = vlaneseq
    %v946 = vshrl.u32 %v945, 7
    %v947 = vsub.s32 0, %v946
    %v948 = vrot.slane %v914, %v947
    %v949 = vlaneseq
    %v950 = vshrl.u32 %v949, 7
    %v951 = vsub.s32 0, %v950
    %v952 = vrot.slane %v915, %v951
    %v953 = vlaneseq
    %v954 = vshrl.u32 %v953, 7
    %v955 = vsub.s32 0, %v954
    %v956 = vrot.slane %v916, %v955
    %v957 = vmul.f32 %v919, %v928
    %v958 = vmul.f32 %v919, %v932
    %v959 = vmul.f32 %v919, %v936
    %v960 = vmul.f32 %v919, %v940
    %v961 = vmul.f32 %v919, %v944
    %v962 = vmul.f32 %v919, %v948
    %v963 = vmul.f32 %v919, %v952
    %v964 = vmul.f32 %v919, %v956
    %v965 = vmul.f32 %v923, %v928
    %v966 = vmul.f32 %v923, %v932
    %v967 = vmul.f32 %v923, %v936
    %v968 = vmul.f32 %v923, %v940
    %v969 = vmul.f32 %v923, %v944
    %v970 = vmul.f32 %v923, %v948
    %v971 = vmul.f32 %v923, %v952
    %v972 = vmul.f32 %v923, %v956
    %v973 = vadd.f32 %v836, %v957
    %v974 = vadd.f32 %v837, %v958
    %v975 = vadd.f32 %v838, %v959
    %v976 = vadd.f32 %v839, %v960
    %v977 = vadd.f32 %v840, %v961
    %v978 = vadd.f32 %v841, %v962
    %v979 = vadd.f32 %v842, %v963
    %v980 = vadd.f32 %v843, %v964
    %v981 = vadd.f32 %v844, %v965
    %v982 = vadd.f32 %v845, %v966
    %v983 = vadd.f32 %v846, %v967
    %v984 = vadd.f32 %v847, %v968
    %v985 = vadd.f32 %v848, %v969
    %v986 = vadd.f32 %v849, %v970
    %v987 = vadd.f32 %v850, %v971
    %v988 = vadd.f32 %v851, %v972
    %989 = vrot.lane.b32.xlu0 %v105, 97
    %v990 = vpop.permute.xlu0 %989
    %991 = vrot.lane.b32.xlu0 %v109, 97
    %v992 = vpop.permute.xlu0 %991
    %993 = vrot.lane.b32.xlu0 %v113, 97
    %v994 = vpop.permute.xlu0 %993
    %995 = vrot.lane.b32.xlu0 %v117, 97
    %v996 = vpop.permute.xlu0 %995
    %997 = vrot.lane.b32.xlu0 %v121, 97
    %v998 = vpop.permute.xlu0 %997
    %999 = vrot.lane.b32.xlu0 %v125, 97
    %v1000 = vpop.permute.xlu0 %999
    %1001 = vrot.lane.b32.xlu0 %v129, 97
    %v1002 = vpop.permute.xlu0 %1001
    %1003 = vrot.lane.b32.xlu0 %v133, 97
    %v1004 = vpop.permute.xlu0 %1003
    %vm1005 = vcmp.lt.s32.totalorder %v74, 97
    %v1006 = vsel %vm1005, %v1002, %v1004
    %v1007 = vsel %vm1005, %v1000, %v1002
    %v1008 = vsel %vm1005, %v998, %v1000
    %v1009 = vsel %vm1005, %v996, %v998
    %v1010 = vsel %vm1005, %v994, %v996
    %v1011 = vsel %vm1005, %v992, %v994
    %v1012 = vsel %vm1005, %v990, %v992
    %v1013 = vsel %vm1005, %v1004, %v990
    %v1014 = vadd.s32 %v82, 1
    %v1015 = vadd.s32 %v83, 1
    %v1016 = vadd.s32 %v84, 1
    %v1017 = vadd.s32 %v85, 1
    %v1018 = vadd.s32 %v86, 1
    %v1019 = vadd.s32 %v87, 1
    %v1020 = vadd.s32 %v88, 1
    %v1021 = vadd.s32 %v89, 1
    %vm1022 = vcmp.ge.s32.totalorder %v1014, 0
    %vm1023 = vcmp.ge.s32.totalorder %v1015, 0
    %vm1024 = vcmp.ge.s32.totalorder %v1016, 0
    %vm1025 = vcmp.ge.s32.totalorder %v1017, 0
    %vm1026 = vcmp.ge.s32.totalorder %v1018, 0
    %vm1027 = vcmp.ge.s32.totalorder %v1019, 0
    %vm1028 = vcmp.ge.s32.totalorder %v1020, 0
    %vm1029 = vcmp.ge.s32.totalorder %v1021, 0
    %vm1030 = vcmp.lt.s32.totalorder %v1014, 32
    %vm1031 = vcmp.lt.s32.totalorder %v1015, 32
    %vm1032 = vcmp.lt.s32.totalorder %v1016, 32
    %vm1033 = vcmp.lt.s32.totalorder %v1017, 32
    %vm1034 = vcmp.lt.s32.totalorder %v1018, 32
    %vm1035 = vcmp.lt.s32.totalorder %v1019, 32
    %vm1036 = vcmp.lt.s32.totalorder %v1020, 32
    %vm1037 = vcmp.lt.s32.totalorder %v1021, 32
    %vm1038 = vmand %vm1022, %vm1030
    %vm1039 = vmand %vm1023, %vm1031
    %vm1040 = vmand %vm1024, %vm1032
    %vm1041 = vmand %vm1025, %vm1033
    %vm1042 = vmand %vm1026, %vm1034
    %vm1043 = vmand %vm1027, %vm1035
    %vm1044 = vmand %vm1028, %vm1036
    %vm1045 = vmand %vm1029, %vm1037
    %vm1046 = vmand %vm1038, %vm207
    %vm1047 = vmand %vm1039, %vm208
    %vm1048 = vmand %vm1040, %vm209
    %vm1049 = vmand %vm1041, %vm210
    %vm1050 = vmand %vm1042, %vm211
    %vm1051 = vmand %vm1043, %vm212
    %vm1052 = vmand %vm1044, %vm213
    %vm1053 = vmand %vm1045, %vm214
    %vm1054 = vmand %vm1046, %vm223
    %vm1055 = vmand %vm1047, %vm224
    %vm1056 = vmand %vm1048, %vm225
    %vm1057 = vmand %vm1049, %vm226
    %vm1058 = vmand %vm1050, %vm227
    %vm1059 = vmand %vm1051, %vm228
    %vm1060 = vmand %vm1052, %vm229
    %vm1061 = vmand %vm1053, %vm230
    %v1062 = vsel %vm1054, 1, 0
    %v1063 = vsel %vm1055, 1, 0
    %v1064 = vsel %vm1056, 1, 0
    %v1065 = vsel %vm1057, 1, 0
    %v1066 = vsel %vm1058, 1, 0
    %v1067 = vsel %vm1059, 1, 0
    %v1068 = vsel %vm1060, 1, 0
    %v1069 = vsel %vm1061, 1, 0
    %v1070 = vcvt.s32.f32 %v1062
    %v1071 = vcvt.s32.f32 %v1063
    %v1072 = vcvt.s32.f32 %v1064
    %v1073 = vcvt.s32.f32 %v1065
    %v1074 = vcvt.s32.f32 %v1066
    %v1075 = vcvt.s32.f32 %v1067
    %v1076 = vcvt.s32.f32 %v1068
    %v1077 = vcvt.s32.f32 %v1069
    %v1078 = vmul.f32 %v1012, %v1070
    %v1079 = vmul.f32 %v1011, %v1071
    %v1080 = vmul.f32 %v1010, %v1072
    %v1081 = vmul.f32 %v1009, %v1073
    %v1082 = vmul.f32 %v1008, %v1074
    %v1083 = vmul.f32 %v1007, %v1075
    %v1084 = vmul.f32 %v1006, %v1076
    %v1085 = vmul.f32 %v1013, %v1077
    %1086 = vset.pattern.permute.xlu0 6
    %1087 = vperm.xlu0 %1086, %v99
    %v1088 = vpop.permute.xlu0 %1087
    %1090 = vset.pattern.permute.xlu0 6
    %1091 = vperm.xlu0 %1090, %v100
    %v1092 = vpop.permute.xlu0 %1091
    %v1094 = vlaneseq
    %v1095 = vshrl.u32 %v1094, 7
    %v1096 = vsub.s32 0, %v1095
    %v1097 = vrot.slane %v1078, %v1096
    %v1098 = vlaneseq
    %v1099 = vshrl.u32 %v1098, 7
    %v1100 = vsub.s32 0, %v1099
    %v1101 = vrot.slane %v1079, %v1100
    %v1102 = vlaneseq
    %v1103 = vshrl.u32 %v1102, 7
    %v1104 = vsub.s32 0, %v1103
    %v1105 = vrot.slane %v1080, %v1104
    %v1106 = vlaneseq
    %v1107 = vshrl.u32 %v1106, 7
    %v1108 = vsub.s32 0, %v1107
    %v1109 = vrot.slane %v1081, %v1108
    %v1110 = vlaneseq
    %v1111 = vshrl.u32 %v1110, 7
    %v1112 = vsub.s32 0, %v1111
    %v1113 = vrot.slane %v1082, %v1112
    %v1114 = vlaneseq
    %v1115 = vshrl.u32 %v1114, 7
    %v1116 = vsub.s32 0, %v1115
    %v1117 = vrot.slane %v1083, %v1116
    %v1118 = vlaneseq
    %v1119 = vshrl.u32 %v1118, 7
    %v1120 = vsub.s32 0, %v1119
    %v1121 = vrot.slane %v1084, %v1120
    %v1122 = vlaneseq
    %v1123 = vshrl.u32 %v1122, 7
    %v1124 = vsub.s32 0, %v1123
    %v1125 = vrot.slane %v1085, %v1124
    %v1126 = vmul.f32 %v1088, %v1097
    %v1127 = vmul.f32 %v1088, %v1101
    %v1128 = vmul.f32 %v1088, %v1105
    %v1129 = vmul.f32 %v1088, %v1109
    %v1130 = vmul.f32 %v1088, %v1113
    %v1131 = vmul.f32 %v1088, %v1117
    %v1132 = vmul.f32 %v1088, %v1121
    %v1133 = vmul.f32 %v1088, %v1125
    %v1134 = vmul.f32 %v1092, %v1097
    %v1135 = vmul.f32 %v1092, %v1101
    %v1136 = vmul.f32 %v1092, %v1105
    %v1137 = vmul.f32 %v1092, %v1109
    %v1138 = vmul.f32 %v1092, %v1113
    %v1139 = vmul.f32 %v1092, %v1117
    %v1140 = vmul.f32 %v1092, %v1121
    %v1141 = vmul.f32 %v1092, %v1125
    %v1142 = vadd.f32 %v973, %v1126
    %v1143 = vadd.f32 %v974, %v1127
    %v1144 = vadd.f32 %v975, %v1128
    %v1145 = vadd.f32 %v976, %v1129
    %v1146 = vadd.f32 %v977, %v1130
    %v1147 = vadd.f32 %v978, %v1131
    %v1148 = vadd.f32 %v979, %v1132
    %v1149 = vadd.f32 %v980, %v1133
    %v1150 = vadd.f32 %v981, %v1134
    %v1151 = vadd.f32 %v982, %v1135
    %v1152 = vadd.f32 %v983, %v1136
    %v1153 = vadd.f32 %v984, %v1137
    %v1154 = vadd.f32 %v985, %v1138
    %v1155 = vadd.f32 %v986, %v1139
    %v1156 = vadd.f32 %v987, %v1140
    %v1157 = vadd.f32 %v988, %v1141
    %1158 = vrot.lane.b32.xlu0 %v105, 96
    %v1159 = vpop.permute.xlu0 %1158
    %1160 = vrot.lane.b32.xlu0 %v109, 96
    %v1161 = vpop.permute.xlu0 %1160
    %1162 = vrot.lane.b32.xlu0 %v113, 96
    %v1163 = vpop.permute.xlu0 %1162
    %1164 = vrot.lane.b32.xlu0 %v117, 96
    %v1165 = vpop.permute.xlu0 %1164
    %1166 = vrot.lane.b32.xlu0 %v121, 96
    %v1167 = vpop.permute.xlu0 %1166
    %1168 = vrot.lane.b32.xlu0 %v125, 96
    %v1169 = vpop.permute.xlu0 %1168
    %1170 = vrot.lane.b32.xlu0 %v129, 96
    %v1171 = vpop.permute.xlu0 %1170
    %1172 = vrot.lane.b32.xlu0 %v133, 96
    %v1173 = vpop.permute.xlu0 %1172
    %vm1174 = vcmp.lt.s32.totalorder %v74, 96
    %v1175 = vsel %vm1174, %v1171, %v1173
    %v1176 = vsel %vm1174, %v1169, %v1171
    %v1177 = vsel %vm1174, %v1167, %v1169
    %v1178 = vsel %vm1174, %v1165, %v1167
    %v1179 = vsel %vm1174, %v1163, %v1165
    %v1180 = vsel %vm1174, %v1161, %v1163
    %v1181 = vsel %vm1174, %v1159, %v1161
    %v1182 = vsel %vm1174, %v1173, %v1159
    %vm1183 = vmand %vm1038, %vm362
    %vm1184 = vmand %vm1039, %vm363
    %vm1185 = vmand %vm1040, %vm364
    %vm1186 = vmand %vm1041, %vm365
    %vm1187 = vmand %vm1042, %vm366
    %vm1188 = vmand %vm1043, %vm367
    %vm1189 = vmand %vm1044, %vm368
    %vm1190 = vmand %vm1045, %vm369
    %vm1191 = vmand %vm1183, %vm378
    %vm1192 = vmand %vm1184, %vm379
    %vm1193 = vmand %vm1185, %vm380
    %vm1194 = vmand %vm1186, %vm381
    %vm1195 = vmand %vm1187, %vm382
    %vm1196 = vmand %vm1188, %vm383
    %vm1197 = vmand %vm1189, %vm384
    %vm1198 = vmand %vm1190, %vm385
    %v1199 = vsel %vm1191, 1, 0
    %v1200 = vsel %vm1192, 1, 0
    %v1201 = vsel %vm1193, 1, 0
    %v1202 = vsel %vm1194, 1, 0
    %v1203 = vsel %vm1195, 1, 0
    %v1204 = vsel %vm1196, 1, 0
    %v1205 = vsel %vm1197, 1, 0
    %v1206 = vsel %vm1198, 1, 0
    %v1207 = vcvt.s32.f32 %v1199
    %v1208 = vcvt.s32.f32 %v1200
    %v1209 = vcvt.s32.f32 %v1201
    %v1210 = vcvt.s32.f32 %v1202
    %v1211 = vcvt.s32.f32 %v1203
    %v1212 = vcvt.s32.f32 %v1204
    %v1213 = vcvt.s32.f32 %v1205
    %v1214 = vcvt.s32.f32 %v1206
    %v1215 = vmul.f32 %v1181, %v1207
    %v1216 = vmul.f32 %v1180, %v1208
    %v1217 = vmul.f32 %v1179, %v1209
    %v1218 = vmul.f32 %v1178, %v1210
    %v1219 = vmul.f32 %v1177, %v1211
    %v1220 = vmul.f32 %v1176, %v1212
    %v1221 = vmul.f32 %v1175, %v1213
    %v1222 = vmul.f32 %v1182, %v1214
    %1223 = vset.pattern.permute.xlu0 7
    %1224 = vperm.xlu0 %1223, %v99
    %v1225 = vpop.permute.xlu0 %1224
    %1227 = vset.pattern.permute.xlu0 7
    %1228 = vperm.xlu0 %1227, %v100
    %v1229 = vpop.permute.xlu0 %1228
    %v1231 = vlaneseq
    %v1232 = vshrl.u32 %v1231, 7
    %v1233 = vsub.s32 0, %v1232
    %v1234 = vrot.slane %v1215, %v1233
    %v1235 = vlaneseq
    %v1236 = vshrl.u32 %v1235, 7
    %v1237 = vsub.s32 0, %v1236
    %v1238 = vrot.slane %v1216, %v1237
    %v1239 = vlaneseq
    %v1240 = vshrl.u32 %v1239, 7
    %v1241 = vsub.s32 0, %v1240
    %v1242 = vrot.slane %v1217, %v1241
    %v1243 = vlaneseq
    %v1244 = vshrl.u32 %v1243, 7
    %v1245 = vsub.s32 0, %v1244
    %v1246 = vrot.slane %v1218, %v1245
    %v1247 = vlaneseq
    %v1248 = vshrl.u32 %v1247, 7
    %v1249 = vsub.s32 0, %v1248
    %v1250 = vrot.slane %v1219, %v1249
    %v1251 = vlaneseq
    %v1252 = vshrl.u32 %v1251, 7
    %v1253 = vsub.s32 0, %v1252
    %v1254 = vrot.slane %v1220, %v1253
    %v1255 = vlaneseq
    %v1256 = vshrl.u32 %v1255, 7
    %v1257 = vsub.s32 0, %v1256
    %v1258 = vrot.slane %v1221, %v1257
    %v1259 = vlaneseq
    %v1260 = vshrl.u32 %v1259, 7
    %v1261 = vsub.s32 0, %v1260
    %v1262 = vrot.slane %v1222, %v1261
    %v1263 = vmul.f32 %v1225, %v1234
    %v1264 = vmul.f32 %v1225, %v1238
    %v1265 = vmul.f32 %v1225, %v1242
    %v1266 = vmul.f32 %v1225, %v1246
    %v1267 = vmul.f32 %v1225, %v1250
    %v1268 = vmul.f32 %v1225, %v1254
    %v1269 = vmul.f32 %v1225, %v1258
    %v1270 = vmul.f32 %v1225, %v1262
    %v1271 = vmul.f32 %v1229, %v1234
    %v1272 = vmul.f32 %v1229, %v1238
    %v1273 = vmul.f32 %v1229, %v1242
    %v1274 = vmul.f32 %v1229, %v1246
    %v1275 = vmul.f32 %v1229, %v1250
    %v1276 = vmul.f32 %v1229, %v1254
    %v1277 = vmul.f32 %v1229, %v1258
    %v1278 = vmul.f32 %v1229, %v1262
    %v1279 = vadd.f32 %v1142, %v1263
    %v1280 = vadd.f32 %v1143, %v1264
    %v1281 = vadd.f32 %v1144, %v1265
    %v1282 = vadd.f32 %v1145, %v1266
    %v1283 = vadd.f32 %v1146, %v1267
    %v1284 = vadd.f32 %v1147, %v1268
    %v1285 = vadd.f32 %v1148, %v1269
    %v1286 = vadd.f32 %v1149, %v1270
    %v1287 = vadd.f32 %v1150, %v1271
    %v1288 = vadd.f32 %v1151, %v1272
    %v1289 = vadd.f32 %v1152, %v1273
    %v1290 = vadd.f32 %v1153, %v1274
    %v1291 = vadd.f32 %v1154, %v1275
    %v1292 = vadd.f32 %v1155, %v1276
    %v1293 = vadd.f32 %v1156, %v1277
    %v1294 = vadd.f32 %v1157, %v1278
    %1295 = vrot.lane.b32.xlu0 %v105, 95
    %v1296 = vpop.permute.xlu0 %1295
    %1297 = vrot.lane.b32.xlu0 %v109, 95
    %v1298 = vpop.permute.xlu0 %1297
    %1299 = vrot.lane.b32.xlu0 %v113, 95
    %v1300 = vpop.permute.xlu0 %1299
    %1301 = vrot.lane.b32.xlu0 %v117, 95
    %v1302 = vpop.permute.xlu0 %1301
    %1303 = vrot.lane.b32.xlu0 %v121, 95
    %v1304 = vpop.permute.xlu0 %1303
    %1305 = vrot.lane.b32.xlu0 %v125, 95
    %v1306 = vpop.permute.xlu0 %1305
    %1307 = vrot.lane.b32.xlu0 %v129, 95
    %v1308 = vpop.permute.xlu0 %1307
    %1309 = vrot.lane.b32.xlu0 %v133, 95
    %v1310 = vpop.permute.xlu0 %1309
    %vm1311 = vcmp.lt.s32.totalorder %v74, 95
    %v1312 = vsel %vm1311, %v1308, %v1310
    %v1313 = vsel %vm1311, %v1306, %v1308
    %v1314 = vsel %vm1311, %v1304, %v1306
    %v1315 = vsel %vm1311, %v1302, %v1304
    %v1316 = vsel %vm1311, %v1300, %v1302
    %v1317 = vsel %vm1311, %v1298, %v1300
    %v1318 = vsel %vm1311, %v1296, %v1298
    %v1319 = vsel %vm1311, %v1310, %v1296
    %vm1320 = vmand %vm1038, %vm523
    %vm1321 = vmand %vm1039, %vm524
    %vm1322 = vmand %vm1040, %vm525
    %vm1323 = vmand %vm1041, %vm526
    %vm1324 = vmand %vm1042, %vm527
    %vm1325 = vmand %vm1043, %vm528
    %vm1326 = vmand %vm1044, %vm529
    %vm1327 = vmand %vm1045, %vm530
    %vm1328 = vmand %vm1320, %vm539
    %vm1329 = vmand %vm1321, %vm540
    %vm1330 = vmand %vm1322, %vm541
    %vm1331 = vmand %vm1323, %vm542
    %vm1332 = vmand %vm1324, %vm543
    %vm1333 = vmand %vm1325, %vm544
    %vm1334 = vmand %vm1326, %vm545
    %vm1335 = vmand %vm1327, %vm546
    %v1336 = vsel %vm1328, 1, 0
    %v1337 = vsel %vm1329, 1, 0
    %v1338 = vsel %vm1330, 1, 0
    %v1339 = vsel %vm1331, 1, 0
    %v1340 = vsel %vm1332, 1, 0
    %v1341 = vsel %vm1333, 1, 0
    %v1342 = vsel %vm1334, 1, 0
    %v1343 = vsel %vm1335, 1, 0
    %v1344 = vcvt.s32.f32 %v1336
    %v1345 = vcvt.s32.f32 %v1337
    %v1346 = vcvt.s32.f32 %v1338
    %v1347 = vcvt.s32.f32 %v1339
    %v1348 = vcvt.s32.f32 %v1340
    %v1349 = vcvt.s32.f32 %v1341
    %v1350 = vcvt.s32.f32 %v1342
    %v1351 = vcvt.s32.f32 %v1343
    %v1352 = vmul.f32 %v1318, %v1344
    %v1353 = vmul.f32 %v1317, %v1345
    %v1354 = vmul.f32 %v1316, %v1346
    %v1355 = vmul.f32 %v1315, %v1347
    %v1356 = vmul.f32 %v1314, %v1348
    %v1357 = vmul.f32 %v1313, %v1349
    %v1358 = vmul.f32 %v1312, %v1350
    %v1359 = vmul.f32 %v1319, %v1351
    %1360 = vset.pattern.permute.xlu0 8
    %1361 = vperm.xlu0 %1360, %v99
    %v1362 = vpop.permute.xlu0 %1361
    %1364 = vset.pattern.permute.xlu0 8
    %1365 = vperm.xlu0 %1364, %v100
    %v1366 = vpop.permute.xlu0 %1365
    %v1368 = vlaneseq
    %v1369 = vshrl.u32 %v1368, 7
    %v1370 = vsub.s32 0, %v1369
    %v1371 = vrot.slane %v1352, %v1370
    %v1372 = vlaneseq
    %v1373 = vshrl.u32 %v1372, 7
    %v1374 = vsub.s32 0, %v1373
    %v1375 = vrot.slane %v1353, %v1374
    %v1376 = vlaneseq
    %v1377 = vshrl.u32 %v1376, 7
    %v1378 = vsub.s32 0, %v1377
    %v1379 = vrot.slane %v1354, %v1378
    %v1380 = vlaneseq
    %v1381 = vshrl.u32 %v1380, 7
    %v1382 = vsub.s32 0, %v1381
    %v1383 = vrot.slane %v1355, %v1382
    %v1384 = vlaneseq
    %v1385 = vshrl.u32 %v1384, 7
    %v1386 = vsub.s32 0, %v1385
    %v1387 = vrot.slane %v1356, %v1386
    %v1388 = vlaneseq
    %v1389 = vshrl.u32 %v1388, 7
    %v1390 = vsub.s32 0, %v1389
    %v1391 = vrot.slane %v1357, %v1390
    %v1392 = vlaneseq
    %v1393 = vshrl.u32 %v1392, 7
    %v1394 = vsub.s32 0, %v1393
    %v1395 = vrot.slane %v1358, %v1394
    %v1396 = vlaneseq
    %v1397 = vshrl.u32 %v1396, 7
    %v1398 = vsub.s32 0, %v1397
    %v1399 = vrot.slane %v1359, %v1398
    %v1400 = vmul.f32 %v1362, %v1371
    %v1401 = vmul.f32 %v1362, %v1375
    %v1402 = vmul.f32 %v1362, %v1379
    %v1403 = vmul.f32 %v1362, %v1383
    %v1404 = vmul.f32 %v1362, %v1387
    %v1405 = vmul.f32 %v1362, %v1391
    %v1406 = vmul.f32 %v1362, %v1395
    %v1407 = vmul.f32 %v1362, %v1399
    %v1408 = vmul.f32 %v1366, %v1371
    %v1409 = vmul.f32 %v1366, %v1375
    %v1410 = vmul.f32 %v1366, %v1379
    %v1411 = vmul.f32 %v1366, %v1383
    %v1412 = vmul.f32 %v1366, %v1387
    %v1413 = vmul.f32 %v1366, %v1391
    %v1414 = vmul.f32 %v1366, %v1395
    %v1415 = vmul.f32 %v1366, %v1399
    %v1416 = vadd.f32 %v1279, %v1400
    %v1417 = vadd.f32 %v1280, %v1401
    %v1418 = vadd.f32 %v1281, %v1402
    %v1419 = vadd.f32 %v1282, %v1403
    %v1420 = vadd.f32 %v1283, %v1404
    %v1421 = vadd.f32 %v1284, %v1405
    %v1422 = vadd.f32 %v1285, %v1406
    %v1423 = vadd.f32 %v1286, %v1407
    %v1424 = vadd.f32 %v1287, %v1408
    %v1425 = vadd.f32 %v1288, %v1409
    %v1426 = vadd.f32 %v1289, %v1410
    %v1427 = vadd.f32 %v1290, %v1411
    %v1428 = vadd.f32 %v1291, %v1412
    %v1429 = vadd.f32 %v1292, %v1413
    %v1430 = vadd.f32 %v1293, %v1414
    %v1431 = vadd.f32 %v1294, %v1415
    %v1432 = vld [vmem:[%s3] sm:$0xff]
    %v1433 = vld [vmem:[%s3 + $0x8] sm:$0xff]
    %1435 = vset.pattern.permute.xlu0 0
    %1436 = vperm.xlu0 %1435, %v1432
    %v1437 = vpop.permute.xlu0 %1436
    %1440 = vset.pattern.permute.xlu0 0
    %1441 = vperm.xlu0 %1440, %v1433
    %v1442 = vpop.permute.xlu0 %1441
    %v1444 = vadd.f32 %v1416, %v1437
    %v1445 = vadd.f32 %v1417, %v1437
    %v1446 = vadd.f32 %v1418, %v1437
    %v1447 = vadd.f32 %v1419, %v1437
    %v1448 = vadd.f32 %v1420, %v1437
    %v1449 = vadd.f32 %v1421, %v1437
    %v1450 = vadd.f32 %v1422, %v1437
    %v1451 = vadd.f32 %v1423, %v1437
    %v1452 = vadd.f32 %v1424, %v1442
    %v1453 = vadd.f32 %v1425, %v1442
    %v1454 = vadd.f32 %v1426, %v1442
    %v1455 = vadd.f32 %v1427, %v1442
    %v1456 = vadd.f32 %v1428, %v1442
    %v1457 = vadd.f32 %v1429, %v1442
    %v1458 = vadd.f32 %v1430, %v1442
    %v1459 = vadd.f32 %v1431, %v1442
    %v1460 = vmax.f32 %v1444, 0.0
    %v1461 = vmax.f32 %v1445, 0.0
    %v1462 = vmax.f32 %v1446, 0.0
    %v1463 = vmax.f32 %v1447, 0.0
    %v1464 = vmax.f32 %v1448, 0.0
    %v1465 = vmax.f32 %v1449, 0.0
    %v1466 = vmax.f32 %v1450, 0.0
    %v1467 = vmax.f32 %v1451, 0.0
    %v1468 = vmax.f32 %v1452, 0.0
    %v1469 = vmax.f32 %v1453, 0.0
    %v1470 = vmax.f32 %v1454, 0.0
    %v1471 = vmax.f32 %v1455, 0.0
    %v1472 = vmax.f32 %v1456, 0.0
    %v1473 = vmax.f32 %v1457, 0.0
    %v1474 = vmax.f32 %v1458, 0.0
    %v1475 = vmax.f32 %v1459, 0.0
    %1476 = vrot.lane.b32.xlu0 %v1460, 33
    %v1477 = vpop.permute.xlu0 %1476
    %1478 = vrot.lane.b32.xlu0 %v1468, 33
    %v1479 = vpop.permute.xlu0 %1478
    %1480 = vrot.lane.b32.xlu0 %v1461, 33
    %v1481 = vpop.permute.xlu0 %1480
    %1482 = vrot.lane.b32.xlu0 %v1469, 33
    %v1483 = vpop.permute.xlu0 %1482
    %1484 = vrot.lane.b32.xlu0 %v1462, 33
    %v1485 = vpop.permute.xlu0 %1484
    %1486 = vrot.lane.b32.xlu0 %v1470, 33
    %v1487 = vpop.permute.xlu0 %1486
    %1488 = vrot.lane.b32.xlu0 %v1463, 33
    %v1489 = vpop.permute.xlu0 %1488
    %1490 = vrot.lane.b32.xlu0 %v1471, 33
    %v1491 = vpop.permute.xlu0 %1490
    %1492 = vrot.lane.b32.xlu0 %v1464, 33
    %v1493 = vpop.permute.xlu0 %1492
    %1494 = vrot.lane.b32.xlu0 %v1472, 33
    %v1495 = vpop.permute.xlu0 %1494
    %1496 = vrot.lane.b32.xlu0 %v1465, 33
    %v1497 = vpop.permute.xlu0 %1496
    %1498 = vrot.lane.b32.xlu0 %v1473, 33
    %v1499 = vpop.permute.xlu0 %1498
    %1500 = vrot.lane.b32.xlu0 %v1466, 33
    %v1501 = vpop.permute.xlu0 %1500
    %1502 = vrot.lane.b32.xlu0 %v1474, 33
    %v1503 = vpop.permute.xlu0 %1502
    %1504 = vrot.lane.b32.xlu0 %v1467, 33
    %v1505 = vpop.permute.xlu0 %1504
    %1506 = vrot.lane.b32.xlu0 %v1475, 33
    %v1507 = vpop.permute.xlu0 %1506
    %v1508 = vsel %vm158, %v1501, %v1505
    %v1509 = vsel %vm158, %v1503, %v1507
    %v1510 = vsel %vm158, %v1497, %v1501
    %v1511 = vsel %vm158, %v1499, %v1503
    %v1512 = vsel %vm158, %v1493, %v1497
    %v1513 = vsel %vm158, %v1495, %v1499
    %v1514 = vsel %vm158, %v1489, %v1493
    %v1515 = vsel %vm158, %v1491, %v1495
    %v1516 = vsel %vm158, %v1485, %v1489
    %v1517 = vsel %vm158, %v1487, %v1491
    %v1518 = vsel %vm158, %v1481, %v1485
    %v1519 = vsel %vm158, %v1483, %v1487
    %v1520 = vsel %vm158, %v1477, %v1481
    %v1521 = vsel %vm158, %v1479, %v1483
    %v1522 = vsel %vm158, %v1505, %v1477
    %v1523 = vsel %vm158, %v1507, %v1479
    %v1524 = vmul.f32 %v1522, %v247
    %v1525 = vmul.f32 %v1520, %v248
    %v1526 = vmul.f32 %v1518, %v249
    %v1527 = vmul.f32 %v1516, %v250
    %v1528 = vmul.f32 %v1514, %v251
    %v1529 = vmul.f32 %v1512, %v252
    %v1530 = vmul.f32 %v1510, %v253
    %v1531 = vmul.f32 %v1508, %v254
    %v1532 = vmul.f32 %v1523, %v247
    %v1533 = vmul.f32 %v1521, %v248
    %v1534 = vmul.f32 %v1519, %v249
    %v1535 = vmul.f32 %v1517, %v250
    %v1536 = vmul.f32 %v1515, %v251
    %v1537 = vmul.f32 %v1513, %v252
    %v1538 = vmul.f32 %v1511, %v253
    %v1539 = vmul.f32 %v1509, %v254
    %v1540 = vpack.c.bf16 %v1532, %v1524
    %v1541 = vpack.c.bf16 %v1533, %v1525
    %v1542 = vpack.c.bf16 %v1534, %v1526
    %v1543 = vpack.c.bf16 %v1535, %v1527
    %v1544 = vpack.c.bf16 %v1536, %v1528
    %v1545 = vpack.c.bf16 %v1537, %v1529
    %v1546 = vpack.c.bf16 %v1538, %v1530
    %v1547 = vpack.c.bf16 %v1539, %v1531
    %1548 = vst [vmem:[#allocation2] sm:$0xff] %v1540
    %1549 = vst [vmem:[#allocation2 + $0x8] sm:$0xff] %v1541
    %1550 = vst [vmem:[#allocation2 + $0x10] sm:$0xff] %v1542
    %1551 = vst [vmem:[#allocation2 + $0x18] sm:$0xff] %v1543
    %1552 = vst [vmem:[#allocation2 + $0x20] sm:$0xff] %v1544
    %1553 = vst [vmem:[#allocation2 + $0x28] sm:$0xff] %v1545
    %1554 = vst [vmem:[#allocation2 + $0x30] sm:$0xff] %v1546
    %1555 = vst [vmem:[#allocation2 + $0x38] sm:$0xff] %v1547
    %1556 = vrot.lane.b32.xlu0 %v1460, 32
    %v1557 = vpop.permute.xlu0 %1556
    %1558 = vrot.lane.b32.xlu0 %v1468, 32
    %v1559 = vpop.permute.xlu0 %1558
    %1560 = vrot.lane.b32.xlu0 %v1461, 32
    %v1561 = vpop.permute.xlu0 %1560
    %1562 = vrot.lane.b32.xlu0 %v1469, 32
    %v1563 = vpop.permute.xlu0 %1562
    %1564 = vrot.lane.b32.xlu0 %v1462, 32
    %v1565 = vpop.permute.xlu0 %1564
    %1566 = vrot.lane.b32.xlu0 %v1470, 32
    %v1567 = vpop.permute.xlu0 %1566
    %1568 = vrot.lane.b32.xlu0 %v1463, 32
    %v1569 = vpop.permute.xlu0 %1568
    %1570 = vrot.lane.b32.xlu0 %v1471, 32
    %v1571 = vpop.permute.xlu0 %1570
    %1572 = vrot.lane.b32.xlu0 %v1464, 32
    %v1573 = vpop.permute.xlu0 %1572
    %1574 = vrot.lane.b32.xlu0 %v1472, 32
    %v1575 = vpop.permute.xlu0 %1574
    %1576 = vrot.lane.b32.xlu0 %v1465, 32
    %v1577 = vpop.permute.xlu0 %1576
    %1578 = vrot.lane.b32.xlu0 %v1473, 32
    %v1579 = vpop.permute.xlu0 %1578
    %1580 = vrot.lane.b32.xlu0 %v1466, 32
    %v1581 = vpop.permute.xlu0 %1580
    %1582 = vrot.lane.b32.xlu0 %v1474, 32
    %v1583 = vpop.permute.xlu0 %1582
    %1584 = vrot.lane.b32.xlu0 %v1467, 32
    %v1585 = vpop.permute.xlu0 %1584
    %1586 = vrot.lane.b32.xlu0 %v1475, 32
    %v1587 = vpop.permute.xlu0 %1586
    %v1588 = vsel %vm353, %v1581, %v1585
    %v1589 = vsel %vm353, %v1583, %v1587
    %v1590 = vsel %vm353, %v1577, %v1581
    %v1591 = vsel %vm353, %v1579, %v1583
    %v1592 = vsel %vm353, %v1573, %v1577
    %v1593 = vsel %vm353, %v1575, %v1579
    %v1594 = vsel %vm353, %v1569, %v1573
    %v1595 = vsel %vm353, %v1571, %v1575
    %v1596 = vsel %vm353, %v1565, %v1569
    %v1597 = vsel %vm353, %v1567, %v1571
    %v1598 = vsel %vm353, %v1561, %v1565
    %v1599 = vsel %vm353, %v1563, %v1567
    %v1600 = vsel %vm353, %v1557, %v1561
    %v1601 = vsel %vm353, %v1559, %v1563
    %v1602 = vsel %vm353, %v1585, %v1557
    %v1603 = vsel %vm353, %v1587, %v1559
    %v1604 = vmul.f32 %v1602, %v402
    %v1605 = vmul.f32 %v1600, %v403
    %v1606 = vmul.f32 %v1598, %v404
    %v1607 = vmul.f32 %v1596, %v405
    %v1608 = vmul.f32 %v1594, %v406
    %v1609 = vmul.f32 %v1592, %v407
    %v1610 = vmul.f32 %v1590, %v408
    %v1611 = vmul.f32 %v1588, %v409
    %v1612 = vmul.f32 %v1603, %v402
    %v1613 = vmul.f32 %v1601, %v403
    %v1614 = vmul.f32 %v1599, %v404
    %v1615 = vmul.f32 %v1597, %v405
    %v1616 = vmul.f32 %v1595, %v406
    %v1617 = vmul.f32 %v1593, %v407
    %v1618 = vmul.f32 %v1591, %v408
    %v1619 = vmul.f32 %v1589, %v409
    %v1620 = vpack.c.bf16 %v1612, %v1604
    %v1621 = vpack.c.bf16 %v1613, %v1605
    %v1622 = vpack.c.bf16 %v1614, %v1606
    %v1623 = vpack.c.bf16 %v1615, %v1607
    %v1624 = vpack.c.bf16 %v1616, %v1608
    %v1625 = vpack.c.bf16 %v1617, %v1609
    %v1626 = vpack.c.bf16 %v1618, %v1610
    %v1627 = vpack.c.bf16 %v1619, %v1611
    %1628 = vst [vmem:[#allocation2 + $0x40] sm:$0xff] %v1620
    %1629 = vst [vmem:[#allocation2 + $0x48] sm:$0xff] %v1621
    %1630 = vst [vmem:[#allocation2 + $0x50] sm:$0xff] %v1622
    %1631 = vst [vmem:[#allocation2 + $0x58] sm:$0xff] %v1623
    %1632 = vst [vmem:[#allocation2 + $0x60] sm:$0xff] %v1624
    %1633 = vst [vmem:[#allocation2 + $0x68] sm:$0xff] %v1625
    %1634 = vst [vmem:[#allocation2 + $0x70] sm:$0xff] %v1626
    %1635 = vst [vmem:[#allocation2 + $0x78] sm:$0xff] %v1627
    %1636 = vrot.lane.b32.xlu0 %v1460, 31
    %v1637 = vpop.permute.xlu0 %1636
    %1638 = vrot.lane.b32.xlu0 %v1468, 31
    %v1639 = vpop.permute.xlu0 %1638
    %1640 = vrot.lane.b32.xlu0 %v1461, 31
    %v1641 = vpop.permute.xlu0 %1640
    %1642 = vrot.lane.b32.xlu0 %v1469, 31
    %v1643 = vpop.permute.xlu0 %1642
    %1644 = vrot.lane.b32.xlu0 %v1462, 31
    %v1645 = vpop.permute.xlu0 %1644
    %1646 = vrot.lane.b32.xlu0 %v1470, 31
    %v1647 = vpop.permute.xlu0 %1646
    %1648 = vrot.lane.b32.xlu0 %v1463, 31
    %v1649 = vpop.permute.xlu0 %1648
    %1650 = vrot.lane.b32.xlu0 %v1471, 31
    %v1651 = vpop.permute.xlu0 %1650
    %1652 = vrot.lane.b32.xlu0 %v1464, 31
    %v1653 = vpop.permute.xlu0 %1652
    %1654 = vrot.lane.b32.xlu0 %v1472, 31
    %v1655 = vpop.permute.xlu0 %1654
    %1656 = vrot.lane.b32.xlu0 %v1465, 31
    %v1657 = vpop.permute.xlu0 %1656
    %1658 = vrot.lane.b32.xlu0 %v1473, 31
    %v1659 = vpop.permute.xlu0 %1658
    %1660 = vrot.lane.b32.xlu0 %v1466, 31
    %v1661 = vpop.permute.xlu0 %1660
    %1662 = vrot.lane.b32.xlu0 %v1474, 31
    %v1663 = vpop.permute.xlu0 %1662
    %1664 = vrot.lane.b32.xlu0 %v1467, 31
    %v1665 = vpop.permute.xlu0 %1664
    %1666 = vrot.lane.b32.xlu0 %v1475, 31
    %v1667 = vpop.permute.xlu0 %1666
    %v1668 = vsel %vm506, %v1661, %v1665
    %v1669 = vsel %vm506, %v1663, %v1667
    %v1670 = vsel %vm506, %v1657, %v1661
    %v1671 = vsel %vm506, %v1659, %v1663
    %v1672 = vsel %vm506, %v1653, %v1657
    %v1673 = vsel %vm506, %v1655, %v1659
    %v1674 = vsel %vm506, %v1649, %v1653
    %v1675 = vsel %vm506, %v1651, %v1655
    %v1676 = vsel %vm506, %v1645, %v1649
    %v1677 = vsel %vm506, %v1647, %v1651
    %v1678 = vsel %vm506, %v1641, %v1645
    %v1679 = vsel %vm506, %v1643, %v1647
    %v1680 = vsel %vm506, %v1637, %v1641
    %v1681 = vsel %vm506, %v1639, %v1643
    %v1682 = vsel %vm506, %v1665, %v1637
    %v1683 = vsel %vm506, %v1667, %v1639
    %v1684 = vmul.f32 %v1682, %v563
    %v1685 = vmul.f32 %v1680, %v564
    %v1686 = vmul.f32 %v1678, %v565
    %v1687 = vmul.f32 %v1676, %v566
    %v1688 = vmul.f32 %v1674, %v567
    %v1689 = vmul.f32 %v1672, %v568
    %v1690 = vmul.f32 %v1670, %v569
    %v1691 = vmul.f32 %v1668, %v570
    %v1692 = vmul.f32 %v1683, %v563
    %v1693 = vmul.f32 %v1681, %v564
    %v1694 = vmul.f32 %v1679, %v565
    %v1695 = vmul.f32 %v1677, %v566
    %v1696 = vmul.f32 %v1675, %v567
    %v1697 = vmul.f32 %v1673, %v568
    %v1698 = vmul.f32 %v1671, %v569
    %v1699 = vmul.f32 %v1669, %v570
    %v1700 = vpack.c.bf16 %v1692, %v1684
    %v1701 = vpack.c.bf16 %v1693, %v1685
    %v1702 = vpack.c.bf16 %v1694, %v1686
    %v1703 = vpack.c.bf16 %v1695, %v1687
    %v1704 = vpack.c.bf16 %v1696, %v1688
    %v1705 = vpack.c.bf16 %v1697, %v1689
    %v1706 = vpack.c.bf16 %v1698, %v1690
    %v1707 = vpack.c.bf16 %v1699, %v1691
    %1708 = vst [vmem:[#allocation2 + $0x80] sm:$0xff] %v1700
    %1709 = vst [vmem:[#allocation2 + $0x88] sm:$0xff] %v1701
    %1710 = vst [vmem:[#allocation2 + $0x90] sm:$0xff] %v1702
    %1711 = vst [vmem:[#allocation2 + $0x98] sm:$0xff] %v1703
    %1712 = vst [vmem:[#allocation2 + $0xa0] sm:$0xff] %v1704
    %1713 = vst [vmem:[#allocation2 + $0xa8] sm:$0xff] %v1705
    %1714 = vst [vmem:[#allocation2 + $0xb0] sm:$0xff] %v1706
    %1715 = vst [vmem:[#allocation2 + $0xb8] sm:$0xff] %v1707
    %1716 = vrot.lane.b32.xlu0 %v1460, 1
    %v1717 = vpop.permute.xlu0 %1716
    %1718 = vrot.lane.b32.xlu0 %v1468, 1
    %v1719 = vpop.permute.xlu0 %1718
    %1720 = vrot.lane.b32.xlu0 %v1461, 1
    %v1721 = vpop.permute.xlu0 %1720
    %1722 = vrot.lane.b32.xlu0 %v1469, 1
    %v1723 = vpop.permute.xlu0 %1722
    %1724 = vrot.lane.b32.xlu0 %v1462, 1
    %v1725 = vpop.permute.xlu0 %1724
    %1726 = vrot.lane.b32.xlu0 %v1470, 1
    %v1727 = vpop.permute.xlu0 %1726
    %1728 = vrot.lane.b32.xlu0 %v1463, 1
    %v1729 = vpop.permute.xlu0 %1728
    %1730 = vrot.lane.b32.xlu0 %v1471, 1
    %v1731 = vpop.permute.xlu0 %1730
    %1732 = vrot.lane.b32.xlu0 %v1464, 1
    %v1733 = vpop.permute.xlu0 %1732
    %1734 = vrot.lane.b32.xlu0 %v1472, 1
    %v1735 = vpop.permute.xlu0 %1734
    %1736 = vrot.lane.b32.xlu0 %v1465, 1
    %v1737 = vpop.permute.xlu0 %1736
    %1738 = vrot.lane.b32.xlu0 %v1473, 1
    %v1739 = vpop.permute.xlu0 %1738
    %1740 = vrot.lane.b32.xlu0 %v1466, 1
    %v1741 = vpop.permute.xlu0 %1740
    %1742 = vrot.lane.b32.xlu0 %v1474, 1
    %v1743 = vpop.permute.xlu0 %1742
    %1744 = vrot.lane.b32.xlu0 %v1467, 1
    %v1745 = vpop.permute.xlu0 %1744
    %1746 = vrot.lane.b32.xlu0 %v1475, 1
    %v1747 = vpop.permute.xlu0 %1746
    %v1748 = vsel %vm667, %v1741, %v1745
    %v1749 = vsel %vm667, %v1743, %v1747
    %v1750 = vsel %vm667, %v1737, %v1741
    %v1751 = vsel %vm667, %v1739, %v1743
    %v1752 = vsel %vm667, %v1733, %v1737
    %v1753 = vsel %vm667, %v1735, %v1739
    %v1754 = vsel %vm667, %v1729, %v1733
    %v1755 = vsel %vm667, %v1731, %v1735
    %v1756 = vsel %vm667, %v1725, %v1729
    %v1757 = vsel %vm667, %v1727, %v1731
    %v1758 = vsel %vm667, %v1721, %v1725
    %v1759 = vsel %vm667, %v1723, %v1727
    %v1760 = vsel %vm667, %v1717, %v1721
    %v1761 = vsel %vm667, %v1719, %v1723
    %v1762 = vsel %vm667, %v1745, %v1717
    %v1763 = vsel %vm667, %v1747, %v1719
    %v1764 = vmul.f32 %v1762, %v724
    %v1765 = vmul.f32 %v1760, %v725
    %v1766 = vmul.f32 %v1758, %v726
    %v1767 = vmul.f32 %v1756, %v727
    %v1768 = vmul.f32 %v1754, %v728
    %v1769 = vmul.f32 %v1752, %v729
    %v1770 = vmul.f32 %v1750, %v730
    %v1771 = vmul.f32 %v1748, %v731
    %v1772 = vmul.f32 %v1763, %v724
    %v1773 = vmul.f32 %v1761, %v725
    %v1774 = vmul.f32 %v1759, %v726
    %v1775 = vmul.f32 %v1757, %v727
    %v1776 = vmul.f32 %v1755, %v728
    %v1777 = vmul.f32 %v1753, %v729
    %v1778 = vmul.f32 %v1751, %v730
    %v1779 = vmul.f32 %v1749, %v731
    %v1780 = vpack.c.bf16 %v1772, %v1764
    %v1781 = vpack.c.bf16 %v1773, %v1765
    %v1782 = vpack.c.bf16 %v1774, %v1766
    %v1783 = vpack.c.bf16 %v1775, %v1767
    %v1784 = vpack.c.bf16 %v1776, %v1768
    %v1785 = vpack.c.bf16 %v1777, %v1769
    %v1786 = vpack.c.bf16 %v1778, %v1770
    %v1787 = vpack.c.bf16 %v1779, %v1771
    %1788 = vst [vmem:[#allocation2 + $0xc0] sm:$0xff] %v1780
    %1789 = vst [vmem:[#allocation2 + $0xc8] sm:$0xff] %v1781
    %1790 = vst [vmem:[#allocation2 + $0xd0] sm:$0xff] %v1782
    %1791 = vst [vmem:[#allocation2 + $0xd8] sm:$0xff] %v1783
    %1792 = vst [vmem:[#allocation2 + $0xe0] sm:$0xff] %v1784
    %1793 = vst [vmem:[#allocation2 + $0xe8] sm:$0xff] %v1785
    %1794 = vst [vmem:[#allocation2 + $0xf0] sm:$0xff] %v1786
    %1795 = vst [vmem:[#allocation2 + $0xf8] sm:$0xff] %v1787
    %v1796 = vpack.c.bf16 %v1468, %v1460
    %v1797 = vpack.c.bf16 %v1469, %v1461
    %v1798 = vpack.c.bf16 %v1470, %v1462
    %v1799 = vpack.c.bf16 %v1471, %v1463
    %v1800 = vpack.c.bf16 %v1472, %v1464
    %v1801 = vpack.c.bf16 %v1473, %v1465
    %v1802 = vpack.c.bf16 %v1474, %v1466
    %v1803 = vpack.c.bf16 %v1475, %v1467
    %1804 = vst [vmem:[#allocation2 + $0x100] sm:$0xff] %v1796
    %1805 = vst [vmem:[#allocation2 + $0x108] sm:$0xff] %v1797
    %1806 = vst [vmem:[#allocation2 + $0x110] sm:$0xff] %v1798
    %1807 = vst [vmem:[#allocation2 + $0x118] sm:$0xff] %v1799
    %1808 = vst [vmem:[#allocation2 + $0x120] sm:$0xff] %v1800
    %1809 = vst [vmem:[#allocation2 + $0x128] sm:$0xff] %v1801
    %1810 = vst [vmem:[#allocation2 + $0x130] sm:$0xff] %v1802
    %1811 = vst [vmem:[#allocation2 + $0x138] sm:$0xff] %v1803
    %1812 = vrot.lane.b32.xlu0 %v1460, 127
    %v1813 = vpop.permute.xlu0 %1812
    %1814 = vrot.lane.b32.xlu0 %v1468, 127
    %v1815 = vpop.permute.xlu0 %1814
    %1816 = vrot.lane.b32.xlu0 %v1461, 127
    %v1817 = vpop.permute.xlu0 %1816
    %1818 = vrot.lane.b32.xlu0 %v1469, 127
    %v1819 = vpop.permute.xlu0 %1818
    %1820 = vrot.lane.b32.xlu0 %v1462, 127
    %v1821 = vpop.permute.xlu0 %1820
    %1822 = vrot.lane.b32.xlu0 %v1470, 127
    %v1823 = vpop.permute.xlu0 %1822
    %1824 = vrot.lane.b32.xlu0 %v1463, 127
    %v1825 = vpop.permute.xlu0 %1824
    %1826 = vrot.lane.b32.xlu0 %v1471, 127
    %v1827 = vpop.permute.xlu0 %1826
    %1828 = vrot.lane.b32.xlu0 %v1464, 127
    %v1829 = vpop.permute.xlu0 %1828
    %1830 = vrot.lane.b32.xlu0 %v1472, 127
    %v1831 = vpop.permute.xlu0 %1830
    %1832 = vrot.lane.b32.xlu0 %v1465, 127
    %v1833 = vpop.permute.xlu0 %1832
    %1834 = vrot.lane.b32.xlu0 %v1473, 127
    %v1835 = vpop.permute.xlu0 %1834
    %1836 = vrot.lane.b32.xlu0 %v1466, 127
    %v1837 = vpop.permute.xlu0 %1836
    %1838 = vrot.lane.b32.xlu0 %v1474, 127
    %v1839 = vpop.permute.xlu0 %1838
    %1840 = vrot.lane.b32.xlu0 %v1467, 127
    %v1841 = vpop.permute.xlu0 %1840
    %1842 = vrot.lane.b32.xlu0 %v1475, 127
    %v1843 = vpop.permute.xlu0 %1842
    %v1844 = vsel %vm868, %v1837, %v1841
    %v1845 = vsel %vm868, %v1839, %v1843
    %v1846 = vsel %vm868, %v1833, %v1837
    %v1847 = vsel %vm868, %v1835, %v1839
    %v1848 = vsel %vm868, %v1829, %v1833
    %v1849 = vsel %vm868, %v1831, %v1835
    %v1850 = vsel %vm868, %v1825, %v1829
    %v1851 = vsel %vm868, %v1827, %v1831
    %v1852 = vsel %vm868, %v1821, %v1825
    %v1853 = vsel %vm868, %v1823, %v1827
    %v1854 = vsel %vm868, %v1817, %v1821
    %v1855 = vsel %vm868, %v1819, %v1823
    %v1856 = vsel %vm868, %v1813, %v1817
    %v1857 = vsel %vm868, %v1815, %v1819
    %v1858 = vsel %vm868, %v1841, %v1813
    %v1859 = vsel %vm868, %v1843, %v1815
    %v1860 = vmul.f32 %v1856, %v901
    %v1861 = vmul.f32 %v1854, %v902
    %v1862 = vmul.f32 %v1852, %v903
    %v1863 = vmul.f32 %v1850, %v904
    %v1864 = vmul.f32 %v1848, %v905
    %v1865 = vmul.f32 %v1846, %v906
    %v1866 = vmul.f32 %v1844, %v907
    %v1867 = vmul.f32 %v1858, %v908
    %v1868 = vmul.f32 %v1857, %v901
    %v1869 = vmul.f32 %v1855, %v902
    %v1870 = vmul.f32 %v1853, %v903
    %v1871 = vmul.f32 %v1851, %v904
    %v1872 = vmul.f32 %v1849, %v905
    %v1873 = vmul.f32 %v1847, %v906
    %v1874 = vmul.f32 %v1845, %v907
    %v1875 = vmul.f32 %v1859, %v908
    %v1876 = vpack.c.bf16 %v1868, %v1860
    %v1877 = vpack.c.bf16 %v1869, %v1861
    %v1878 = vpack.c.bf16 %v1870, %v1862
    %v1879 = vpack.c.bf16 %v1871, %v1863
    %v1880 = vpack.c.bf16 %v1872, %v1864
    %v1881 = vpack.c.bf16 %v1873, %v1865
    %v1882 = vpack.c.bf16 %v1874, %v1866
    %v1883 = vpack.c.bf16 %v1875, %v1867
    %1884 = vst [vmem:[#allocation2 + $0x140] sm:$0xff] %v1876
    %1885 = vst [vmem:[#allocation2 + $0x148] sm:$0xff] %v1877
    %1886 = vst [vmem:[#allocation2 + $0x150] sm:$0xff] %v1878
    %1887 = vst [vmem:[#allocation2 + $0x158] sm:$0xff] %v1879
    %1888 = vst [vmem:[#allocation2 + $0x160] sm:$0xff] %v1880
    %1889 = vst [vmem:[#allocation2 + $0x168] sm:$0xff] %v1881
    %1890 = vst [vmem:[#allocation2 + $0x170] sm:$0xff] %v1882
    %1891 = vst [vmem:[#allocation2 + $0x178] sm:$0xff] %v1883
    %1892 = vrot.lane.b32.xlu0 %v1460, 97
    %v1893 = vpop.permute.xlu0 %1892
    %1894 = vrot.lane.b32.xlu0 %v1468, 97
    %v1895 = vpop.permute.xlu0 %1894
    %1896 = vrot.lane.b32.xlu0 %v1461, 97
    %v1897 = vpop.permute.xlu0 %1896
    %1898 = vrot.lane.b32.xlu0 %v1469, 97
    %v1899 = vpop.permute.xlu0 %1898
    %1900 = vrot.lane.b32.xlu0 %v1462, 97
    %v1901 = vpop.permute.xlu0 %1900
    %1902 = vrot.lane.b32.xlu0 %v1470, 97
    %v1903 = vpop.permute.xlu0 %1902
    %1904 = vrot.lane.b32.xlu0 %v1463, 97
    %v1905 = vpop.permute.xlu0 %1904
    %1906 = vrot.lane.b32.xlu0 %v1471, 97
    %v1907 = vpop.permute.xlu0 %1906
    %1908 = vrot.lane.b32.xlu0 %v1464, 97
    %v1909 = vpop.permute.xlu0 %1908
    %1910 = vrot.lane.b32.xlu0 %v1472, 97
    %v1911 = vpop.permute.xlu0 %1910
    %1912 = vrot.lane.b32.xlu0 %v1465, 97
    %v1913 = vpop.permute.xlu0 %1912
    %1914 = vrot.lane.b32.xlu0 %v1473, 97
    %v1915 = vpop.permute.xlu0 %1914
    %1916 = vrot.lane.b32.xlu0 %v1466, 97
    %v1917 = vpop.permute.xlu0 %1916
    %1918 = vrot.lane.b32.xlu0 %v1474, 97
    %v1919 = vpop.permute.xlu0 %1918
    %1920 = vrot.lane.b32.xlu0 %v1467, 97
    %v1921 = vpop.permute.xlu0 %1920
    %1922 = vrot.lane.b32.xlu0 %v1475, 97
    %v1923 = vpop.permute.xlu0 %1922
    %v1924 = vsel %vm1005, %v1917, %v1921
    %v1925 = vsel %vm1005, %v1919, %v1923
    %v1926 = vsel %vm1005, %v1913, %v1917
    %v1927 = vsel %vm1005, %v1915, %v1919
    %v1928 = vsel %vm1005, %v1909, %v1913
    %v1929 = vsel %vm1005, %v1911, %v1915
    %v1930 = vsel %vm1005, %v1905, %v1909
    %v1931 = vsel %vm1005, %v1907, %v1911
    %v1932 = vsel %vm1005, %v1901, %v1905
    %v1933 = vsel %vm1005, %v1903, %v1907
    %v1934 = vsel %vm1005, %v1897, %v1901
    %v1935 = vsel %vm1005, %v1899, %v1903
    %v1936 = vsel %vm1005, %v1893, %v1897
    %v1937 = vsel %vm1005, %v1895, %v1899
    %v1938 = vsel %vm1005, %v1921, %v1893
    %v1939 = vsel %vm1005, %v1923, %v1895
    %v1940 = vmul.f32 %v1936, %v1070
    %v1941 = vmul.f32 %v1934, %v1071
    %v1942 = vmul.f32 %v1932, %v1072
    %v1943 = vmul.f32 %v1930, %v1073
    %v1944 = vmul.f32 %v1928, %v1074
    %v1945 = vmul.f32 %v1926, %v1075
    %v1946 = vmul.f32 %v1924, %v1076
    %v1947 = vmul.f32 %v1938, %v1077
    %v1948 = vmul.f32 %v1937, %v1070
    %v1949 = vmul.f32 %v1935, %v1071
    %v1950 = vmul.f32 %v1933, %v1072
    %v1951 = vmul.f32 %v1931, %v1073
    %v1952 = vmul.f32 %v1929, %v1074
    %v1953 = vmul.f32 %v1927, %v1075
    %v1954 = vmul.f32 %v1925, %v1076
    %v1955 = vmul.f32 %v1939, %v1077
    %v1956 = vpack.c.bf16 %v1948, %v1940
    %v1957 = vpack.c.bf16 %v1949, %v1941
    %v1958 = vpack.c.bf16 %v1950, %v1942
    %v1959 = vpack.c.bf16 %v1951, %v1943
    %v1960 = vpack.c.bf16 %v1952, %v1944
    %v1961 = vpack.c.bf16 %v1953, %v1945
    %v1962 = vpack.c.bf16 %v1954, %v1946
    %v1963 = vpack.c.bf16 %v1955, %v1947
    %1964 = vst [vmem:[#allocation2 + $0x180] sm:$0xff] %v1956
    %1965 = vst [vmem:[#allocation2 + $0x188] sm:$0xff] %v1957
    %1966 = vst [vmem:[#allocation2 + $0x190] sm:$0xff] %v1958
    %1967 = vst [vmem:[#allocation2 + $0x198] sm:$0xff] %v1959
    %1968 = vst [vmem:[#allocation2 + $0x1a0] sm:$0xff] %v1960
    %1969 = vst [vmem:[#allocation2 + $0x1a8] sm:$0xff] %v1961
    %1970 = vst [vmem:[#allocation2 + $0x1b0] sm:$0xff] %v1962
    %1971 = vst [vmem:[#allocation2 + $0x1b8] sm:$0xff] %v1963
    %1972 = vrot.lane.b32.xlu0 %v1460, 96
    %v1973 = vpop.permute.xlu0 %1972
    %1974 = vrot.lane.b32.xlu0 %v1468, 96
    %v1975 = vpop.permute.xlu0 %1974
    %1976 = vrot.lane.b32.xlu0 %v1461, 96
    %v1977 = vpop.permute.xlu0 %1976
    %1978 = vrot.lane.b32.xlu0 %v1469, 96
    %v1979 = vpop.permute.xlu0 %1978
    %1980 = vrot.lane.b32.xlu0 %v1462, 96
    %v1981 = vpop.permute.xlu0 %1980
    %1982 = vrot.lane.b32.xlu0 %v1470, 96
    %v1983 = vpop.permute.xlu0 %1982
    %1984 = vrot.lane.b32.xlu0 %v1463, 96
    %v1985 = vpop.permute.xlu0 %1984
    %1986 = vrot.lane.b32.xlu0 %v1471, 96
    %v1987 = vpop.permute.xlu0 %1986
    %1988 = vrot.lane.b32.xlu0 %v1464, 96
    %v1989 = vpop.permute.xlu0 %1988
    %1990 = vrot.lane.b32.xlu0 %v1472, 96
    %v1991 = vpop.permute.xlu0 %1990
    %1992 = vrot.lane.b32.xlu0 %v1465, 96
    %v1993 = vpop.permute.xlu0 %1992
    %1994 = vrot.lane.b32.xlu0 %v1473, 96
    %v1995 = vpop.permute.xlu0 %1994
    %1996 = vrot.lane.b32.xlu0 %v1466, 96
    %v1997 = vpop.permute.xlu0 %1996
    %1998 = vrot.lane.b32.xlu0 %v1474, 96
    %v1999 = vpop.permute.xlu0 %1998
    %2000 = vrot.lane.b32.xlu0 %v1467, 96
    %v2001 = vpop.permute.xlu0 %2000
    %2002 = vrot.lane.b32.xlu0 %v1475, 96
    %v2003 = vpop.permute.xlu0 %2002
    %v2004 = vsel %vm1174, %v1997, %v2001
    %v2005 = vsel %vm1174, %v1999, %v2003
    %v2006 = vsel %vm1174, %v1993, %v1997
    %v2007 = vsel %vm1174, %v1995, %v1999
    %v2008 = vsel %vm1174, %v1989, %v1993
    %v2009 = vsel %vm1174, %v1991, %v1995
    %v2010 = vsel %vm1174, %v1985, %v1989
    %v2011 = vsel %vm1174, %v1987, %v1991
    %v2012 = vsel %vm1174, %v1981, %v1985
    %v2013 = vsel %vm1174, %v1983, %v1987
    %v2014 = vsel %vm1174, %v1977, %v1981
    %v2015 = vsel %vm1174, %v1979, %v1983
    %v2016 = vsel %vm1174, %v1973, %v1977
    %v2017 = vsel %vm1174, %v1975, %v1979
    %v2018 = vsel %vm1174, %v2001, %v1973
    %v2019 = vsel %vm1174, %v2003, %v1975
    %v2020 = vmul.f32 %v2016, %v1207
    %v2021 = vmul.f32 %v2014, %v1208
    %v2022 = vmul.f32 %v2012, %v1209
    %v2023 = vmul.f32 %v2010, %v1210
    %v2024 = vmul.f32 %v2008, %v1211
    %v2025 = vmul.f32 %v2006, %v1212
    %v2026 = vmul.f32 %v2004, %v1213
    %v2027 = vmul.f32 %v2018, %v1214
    %v2028 = vmul.f32 %v2017, %v1207
    %v2029 = vmul.f32 %v2015, %v1208
    %v2030 = vmul.f32 %v2013, %v1209
    %v2031 = vmul.f32 %v2011, %v1210
    %v2032 = vmul.f32 %v2009, %v1211
    %v2033 = vmul.f32 %v2007, %v1212
    %v2034 = vmul.f32 %v2005, %v1213
    %v2035 = vmul.f32 %v2019, %v1214
    %v2036 = vpack.c.bf16 %v2028, %v2020
    %v2037 = vpack.c.bf16 %v2029, %v2021
    %v2038 = vpack.c.bf16 %v2030, %v2022
    %v2039 = vpack.c.bf16 %v2031, %v2023
    %v2040 = vpack.c.bf16 %v2032, %v2024
    %v2041 = vpack.c.bf16 %v2033, %v2025
    %v2042 = vpack.c.bf16 %v2034, %v2026
    %v2043 = vpack.c.bf16 %v2035, %v2027
    %2044 = vst [vmem:[#allocation2 + $0x1c0] sm:$0xff] %v2036
    %2045 = vst [vmem:[#allocation2 + $0x1c8] sm:$0xff] %v2037
    %2046 = vst [vmem:[#allocation2 + $0x1d0] sm:$0xff] %v2038
    %2047 = vst [vmem:[#allocation2 + $0x1d8] sm:$0xff] %v2039
    %2048 = vst [vmem:[#allocation2 + $0x1e0] sm:$0xff] %v2040
    %2049 = vst [vmem:[#allocation2 + $0x1e8] sm:$0xff] %v2041
    %2050 = vst [vmem:[#allocation2 + $0x1f0] sm:$0xff] %v2042
    %2051 = vst [vmem:[#allocation2 + $0x1f8] sm:$0xff] %v2043
    %2052 = vrot.lane.b32.xlu0 %v1460, 95
    %v2053 = vpop.permute.xlu0 %2052
    %2054 = vrot.lane.b32.xlu0 %v1468, 95
    %v2055 = vpop.permute.xlu0 %2054
    %2056 = vrot.lane.b32.xlu0 %v1461, 95
    %v2057 = vpop.permute.xlu0 %2056
    %2058 = vrot.lane.b32.xlu0 %v1469, 95
    %v2059 = vpop.permute.xlu0 %2058
    %2060 = vrot.lane.b32.xlu0 %v1462, 95
    %v2061 = vpop.permute.xlu0 %2060
    %2062 = vrot.lane.b32.xlu0 %v1470, 95
    %v2063 = vpop.permute.xlu0 %2062
    %2064 = vrot.lane.b32.xlu0 %v1463, 95
    %v2065 = vpop.permute.xlu0 %2064
    %2066 = vrot.lane.b32.xlu0 %v1471, 95
    %v2067 = vpop.permute.xlu0 %2066
    %2068 = vrot.lane.b32.xlu0 %v1464, 95
    %v2069 = vpop.permute.xlu0 %2068
    %2070 = vrot.lane.b32.xlu0 %v1472, 95
    %v2071 = vpop.permute.xlu0 %2070
    %2072 = vrot.lane.b32.xlu0 %v1465, 95
    %v2073 = vpop.permute.xlu0 %2072
    %2074 = vrot.lane.b32.xlu0 %v1473, 95
    %v2075 = vpop.permute.xlu0 %2074
    %2076 = vrot.lane.b32.xlu0 %v1466, 95
    %v2077 = vpop.permute.xlu0 %2076
    %2078 = vrot.lane.b32.xlu0 %v1474, 95
    %v2079 = vpop.permute.xlu0 %2078
    %2080 = vrot.lane.b32.xlu0 %v1467, 95
    %v2081 = vpop.permute.xlu0 %2080
    %2082 = vrot.lane.b32.xlu0 %v1475, 95
    %v2083 = vpop.permute.xlu0 %2082
    %v2084 = vsel %vm1311, %v2077, %v2081
    %v2085 = vsel %vm1311, %v2079, %v2083
    %v2086 = vsel %vm1311, %v2073, %v2077
    %v2087 = vsel %vm1311, %v2075, %v2079
    %v2088 = vsel %vm1311, %v2069, %v2073
    %v2089 = vsel %vm1311, %v2071, %v2075
    %v2090 = vsel %vm1311, %v2065, %v2069
    %v2091 = vsel %vm1311, %v2067, %v2071
    %v2092 = vsel %vm1311, %v2061, %v2065
    %v2093 = vsel %vm1311, %v2063, %v2067
    %v2094 = vsel %vm1311, %v2057, %v2061
    %v2095 = vsel %vm1311, %v2059, %v2063
    %v2096 = vsel %vm1311, %v2053, %v2057
    %v2097 = vsel %vm1311, %v2055, %v2059
    %v2098 = vsel %vm1311, %v2081, %v2053
    %v2099 = vsel %vm1311, %v2083, %v2055
    %v2100 = vmul.f32 %v2096, %v1344
    %v2101 = vmul.f32 %v2094, %v1345
    %v2102 = vmul.f32 %v2092, %v1346
    %v2103 = vmul.f32 %v2090, %v1347
    %v2104 = vmul.f32 %v2088, %v1348
    %v2105 = vmul.f32 %v2086, %v1349
    %v2106 = vmul.f32 %v2084, %v1350
    %v2107 = vmul.f32 %v2098, %v1351
    %v2108 = vmul.f32 %v2097, %v1344
    %v2109 = vmul.f32 %v2095, %v1345
    %v2110 = vmul.f32 %v2093, %v1346
    %v2111 = vmul.f32 %v2091, %v1347
    %v2112 = vmul.f32 %v2089, %v1348
    %v2113 = vmul.f32 %v2087, %v1349
    %v2114 = vmul.f32 %v2085, %v1350
    %v2115 = vmul.f32 %v2099, %v1351
    %v2116 = vpack.c.bf16 %v2108, %v2100
    %v2117 = vpack.c.bf16 %v2109, %v2101
    %v2118 = vpack.c.bf16 %v2110, %v2102
    %v2119 = vpack.c.bf16 %v2111, %v2103
    %v2120 = vpack.c.bf16 %v2112, %v2104
    %v2121 = vpack.c.bf16 %v2113, %v2105
    %v2122 = vpack.c.bf16 %v2114, %v2106
    %v2123 = vpack.c.bf16 %v2115, %v2107
    %2124 = vst [vmem:[#allocation2 + $0x200] sm:$0xff] %v2116
    %2125 = vst [vmem:[#allocation2 + $0x208] sm:$0xff] %v2117
    %2126 = vst [vmem:[#allocation2 + $0x210] sm:$0xff] %v2118
    %2127 = vst [vmem:[#allocation2 + $0x218] sm:$0xff] %v2119
    %2128 = vst [vmem:[#allocation2 + $0x220] sm:$0xff] %v2120
    %2129 = vst [vmem:[#allocation2 + $0x228] sm:$0xff] %v2121
    %2130 = vst [vmem:[#allocation2 + $0x230] sm:$0xff] %v2122
    %2131 = vst [vmem:[#allocation2 + $0x238] sm:$0xff] %v2123
    %v2132 = vld [vmem:[%s4] sm:$0xff]
    %v2133 = vld [vmem:[%s4 + $0x8] sm:$0xff]
    %v2134 = vld [vmem:[#allocation2] sm:$0xff]
    %v2135 = vld [vmem:[#allocation2 + $0x8] sm:$0xff]
    %v2136 = vld [vmem:[#allocation2 + $0x10] sm:$0xff]
    %v2137 = vld [vmem:[#allocation2 + $0x18] sm:$0xff]
    %v2138 = vld [vmem:[#allocation2 + $0x20] sm:$0xff]
    %v2139 = vld [vmem:[#allocation2 + $0x28] sm:$0xff]
    %v2140 = vld [vmem:[#allocation2 + $0x30] sm:$0xff]
    %v2141 = vld [vmem:[#allocation2 + $0x38] sm:$0xff]
    %v2142 = vld [vmem:[#allocation2 + $0x40] sm:$0xff]
    %v2143 = vld [vmem:[#allocation2 + $0x48] sm:$0xff]
    %v2144 = vld [vmem:[#allocation2 + $0x50] sm:$0xff]
    %v2145 = vld [vmem:[#allocation2 + $0x58] sm:$0xff]
    %v2146 = vld [vmem:[#allocation2 + $0x60] sm:$0xff]
    %v2147 = vld [vmem:[#allocation2 + $0x68] sm:$0xff]
    %v2148 = vld [vmem:[#allocation2 + $0x70] sm:$0xff]
    %v2149 = vld [vmem:[#allocation2 + $0x78] sm:$0xff]
    %v2150 = vld [vmem:[#allocation2 + $0x80] sm:$0xff]
    %v2151 = vld [vmem:[#allocation2 + $0x88] sm:$0xff]
    %v2152 = vld [vmem:[#allocation2 + $0x90] sm:$0xff]
    %v2153 = vld [vmem:[#allocation2 + $0x98] sm:$0xff]
    %v2154 = vld [vmem:[#allocation2 + $0xa0] sm:$0xff]
    %v2155 = vld [vmem:[#allocation2 + $0xa8] sm:$0xff]
    %v2156 = vld [vmem:[#allocation2 + $0xb0] sm:$0xff]
    %v2157 = vld [vmem:[#allocation2 + $0xb8] sm:$0xff]
    %v2158 = vld [vmem:[#allocation2 + $0xc0] sm:$0xff]
    %v2159 = vld [vmem:[#allocation2 + $0xc8] sm:$0xff]
    %v2160 = vld [vmem:[#allocation2 + $0xd0] sm:$0xff]
    %v2161 = vld [vmem:[#allocation2 + $0xd8] sm:$0xff]
    %v2162 = vld [vmem:[#allocation2 + $0xe0] sm:$0xff]
    %v2163 = vld [vmem:[#allocation2 + $0xe8] sm:$0xff]
    %v2164 = vld [vmem:[#allocation2 + $0xf0] sm:$0xff]
    %v2165 = vld [vmem:[#allocation2 + $0xf8] sm:$0xff]
    %v2166 = vld [vmem:[#allocation2 + $0x100] sm:$0xff]
    %v2167 = vld [vmem:[#allocation2 + $0x108] sm:$0xff]
    %v2168 = vld [vmem:[#allocation2 + $0x110] sm:$0xff]
    %v2169 = vld [vmem:[#allocation2 + $0x118] sm:$0xff]
    %v2170 = vld [vmem:[#allocation2 + $0x120] sm:$0xff]
    %v2171 = vld [vmem:[#allocation2 + $0x128] sm:$0xff]
    %v2172 = vld [vmem:[#allocation2 + $0x130] sm:$0xff]
    %v2173 = vld [vmem:[#allocation2 + $0x138] sm:$0xff]
    %v2174 = vld [vmem:[#allocation2 + $0x140] sm:$0xff]
    %v2175 = vld [vmem:[#allocation2 + $0x148] sm:$0xff]
    %v2176 = vld [vmem:[#allocation2 + $0x150] sm:$0xff]
    %v2177 = vld [vmem:[#allocation2 + $0x158] sm:$0xff]
    %v2178 = vld [vmem:[#allocation2 + $0x160] sm:$0xff]
    %v2179 = vld [vmem:[#allocation2 + $0x168] sm:$0xff]
    %v2180 = vld [vmem:[#allocation2 + $0x170] sm:$0xff]
    %v2181 = vld [vmem:[#allocation2 + $0x178] sm:$0xff]
    %v2182 = vld [vmem:[#allocation2 + $0x180] sm:$0xff]
    %v2183 = vld [vmem:[#allocation2 + $0x188] sm:$0xff]
    %v2184 = vld [vmem:[#allocation2 + $0x190] sm:$0xff]
    %v2185 = vld [vmem:[#allocation2 + $0x198] sm:$0xff]
    %v2186 = vld [vmem:[#allocation2 + $0x1a0] sm:$0xff]
    %v2187 = vld [vmem:[#allocation2 + $0x1a8] sm:$0xff]
    %v2188 = vld [vmem:[#allocation2 + $0x1b0] sm:$0xff]
    %v2189 = vld [vmem:[#allocation2 + $0x1b8] sm:$0xff]
    %v2190 = vld [vmem:[#allocation2 + $0x1c0] sm:$0xff]
    %v2191 = vld [vmem:[#allocation2 + $0x1c8] sm:$0xff]
    %v2192 = vld [vmem:[#allocation2 + $0x1d0] sm:$0xff]
    %v2193 = vld [vmem:[#allocation2 + $0x1d8] sm:$0xff]
    %v2194 = vld [vmem:[#allocation2 + $0x1e0] sm:$0xff]
    %v2195 = vld [vmem:[#allocation2 + $0x1e8] sm:$0xff]
    %v2196 = vld [vmem:[#allocation2 + $0x1f0] sm:$0xff]
    %v2197 = vld [vmem:[#allocation2 + $0x1f8] sm:$0xff]
    %v2198 = vld [vmem:[#allocation2 + $0x200] sm:$0xff]
    %v2199 = vld [vmem:[#allocation2 + $0x208] sm:$0xff]
    %v2200 = vld [vmem:[#allocation2 + $0x210] sm:$0xff]
    %v2201 = vld [vmem:[#allocation2 + $0x218] sm:$0xff]
    %v2202 = vld [vmem:[#allocation2 + $0x220] sm:$0xff]
    %v2203 = vld [vmem:[#allocation2 + $0x228] sm:$0xff]
    %v2204 = vld [vmem:[#allocation2 + $0x230] sm:$0xff]
    %v2205 = vld [vmem:[#allocation2 + $0x238] sm:$0xff]
    %v2206 = vld [vmem:[%s5] sm:$0xff]
    %v2207 = vld [vmem:[%s5 + $0x8] sm:$0xff]
    %2209 = vset.pattern.permute.xlu0 0
    %2210 = vperm.xlu0 %2209, %v2206
    %v2211 = vpop.permute.xlu0 %2210
    %2214 = vset.pattern.permute.xlu0 0
    %2215 = vperm.xlu0 %2214, %v2207
    %v2216 = vpop.permute.xlu0 %2215
    %v2220 = vunpack.c.l.b16 %v2132
    %v2221 = vunpack.c.h.b16 %v2132
    %v2222 = vunpack.c.l.b16 %v2133
    %v2223 = vunpack.c.h.b16 %v2133
    %v2224 = vpack.c.b16 %v2222, %v2220
    %v2225 = vpack.c.b16 %v2223, %v2221
    %vm2227 = vcmask 130048
    %v2229 = vsel %vm2227, %v2225, 0
    %2231 = vmatprep.subr.bf16.mxu0 %v2135
    %2232 = vmatpush1.bf16.msra.mxu0 %v2134
    %2233 = vmatprep.subr.bf16.mxu0 %v2143
    %2234 = vmatpush1.bf16.msra.mxu0 %v2142
    %2235 = vmatprep.subr.bf16.mxu0 %v2151
    %2236 = vmatpush1.bf16.msra.mxu0 %v2150
    %2237 = vmatprep.subr.bf16.mxu0 %v2159
    %2238 = vmatpush1.bf16.msra.mxu0 %v2158
    %2239 = vmatprep.subr.bf16.mxu0 %v2167
    %2240 = vmatpush1.bf16.msra.mxu0 %v2166
    %2241 = vmatprep.subr.bf16.mxu0 %v2175
    %2242 = vmatpush1.bf16.msra.mxu0 %v2174
    %2243 = vmatprep.subr.bf16.mxu0 %v2183
    %2244 = vmatpush1.bf16.msra.mxu0 %v2182
    %2245 = vmatprep.subr.bf16.mxu0 %v2191
    %2246 = vmatpush1.bf16.msra.mxu0 %v2190
    %2247 = vmatprep.subr.bf16.mxu0 %v2199
    %2248 = vmatpush1.bf16.msra.mxu0 %v2198
    %2249 = vmatprep.subr.bf16.mxu0 0
    %2250 = vmatpush1.bf16.msra.mxu0 0
    %2251 = vmatprep.subr.bf16.mxu0 0
    %2252 = vmatpush1.bf16.msra.mxu0 0
    %2253 = vmatprep.subr.bf16.mxu0 0
    %2254 = vmatpush1.bf16.msra.mxu0 0
    %2255 = vmatprep.subr.bf16.mxu0 0
    %2256 = vmatpush1.bf16.msra.mxu0 0
    %2257 = vmatprep.subr.bf16.mxu0 0
    %2258 = vmatpush1.bf16.msra.mxu0 0
    %2259 = vmatprep.subr.bf16.mxu0 0
    %2260 = vmatpush1.bf16.msra.mxu0 0
    %2261 = vmatprep.subr.bf16.mxu0 0
    %2262 = vmatpush1.bf16.msra.mxu0 0
    %2263 = vmatprep.mubr.bf16.mxu0 %v2229
    %2264 = vmatmul.mubr.bf16.gmra.mrb[0].mxu0 %v2224
    %v2265 = vpop.f32.mrb[0].mxu0
    %v2266 = vadd.f32 %v2211, %v2265
    %v2267 = vpop.f32.mrb[0].mxu0
    %v2268 = vadd.f32 %v2211, %v2267
    %v2269 = vpop.f32.mrb[0].mxu0
    %v2270 = vadd.f32 %v2216, %v2269
    %v2271 = vpop.f32.mrb[0].mxu0
    %v2272 = vadd.f32 %v2216, %v2271
    %2273 = vdwg.mxu0
    %2274 = vmatprep.subr.bf16.mxu0 %v2137
    %2275 = vmatpush1.bf16.msra.mxu0 %v2136
    %2276 = vmatprep.subr.bf16.mxu0 %v2145
    %2277 = vmatpush1.bf16.msra.mxu0 %v2144
    %2278 = vmatprep.subr.bf16.mxu0 %v2153
    %2279 = vmatpush1.bf16.msra.mxu0 %v2152
    %2280 = vmatprep.subr.bf16.mxu0 %v2161
    %2281 = vmatpush1.bf16.msra.mxu0 %v2160
    %2282 = vmatprep.subr.bf16.mxu0 %v2169
    %2283 = vmatpush1.bf16.msra.mxu0 %v2168
    %2284 = vmatprep.subr.bf16.mxu0 %v2177
    %2285 = vmatpush1.bf16.msra.mxu0 %v2176
    %2286 = vmatprep.subr.bf16.mxu0 %v2185
    %2287 = vmatpush1.bf16.msra.mxu0 %v2184
    %2288 = vmatprep.subr.bf16.mxu0 %v2193
    %2289 = vmatpush1.bf16.msra.mxu0 %v2192
    %2290 = vmatprep.subr.bf16.mxu0 %v2201
    %2291 = vmatpush1.bf16.msra.mxu0 %v2200
    %2292 = vmatprep.subr.bf16.mxu0 0
    %2293 = vmatpush1.bf16.msra.mxu0 0
    %2294 = vmatprep.subr.bf16.mxu0 0
    %2295 = vmatpush1.bf16.msra.mxu0 0
    %2296 = vmatprep.subr.bf16.mxu0 0
    %2297 = vmatpush1.bf16.msra.mxu0 0
    %2298 = vmatprep.subr.bf16.mxu0 0
    %2299 = vmatpush1.bf16.msra.mxu0 0
    %2300 = vmatprep.subr.bf16.mxu0 0
    %2301 = vmatpush1.bf16.msra.mxu0 0
    %2302 = vmatprep.subr.bf16.mxu0 0
    %2303 = vmatpush1.bf16.msra.mxu0 0
    %2304 = vmatprep.subr.bf16.mxu0 0
    %2305 = vmatpush1.bf16.msra.mxu0 0
    %2306 = vmatprep.mubr.bf16.mxu0 %v2229
    %2307 = vmatmul.mubr.bf16.gmra.mrb[0].mxu0 %v2224
    %v2308 = vpop.f32.mrb[0].mxu0
    %v2309 = vadd.f32 %v2211, %v2308
    %v2310 = vpop.f32.mrb[0].mxu0
    %v2311 = vadd.f32 %v2211, %v2310
    %v2312 = vpop.f32.mrb[0].mxu0
    %v2313 = vadd.f32 %v2216, %v2312
    %v2314 = vpop.f32.mrb[0].mxu0
    %v2315 = vadd.f32 %v2216, %v2314
    %2316 = vdwg.mxu0
    %2317 = vmatprep.subr.bf16.mxu0 %v2139
    %2318 = vmatpush1.bf16.msra.mxu0 %v2138
    %2319 = vmatprep.subr.bf16.mxu0 %v2147
    %2320 = vmatpush1.bf16.msra.mxu0 %v2146
    %2321 = vmatprep.subr.bf16.mxu0 %v2155
    %2322 = vmatpush1.bf16.msra.mxu0 %v2154
    %2323 = vmatprep.subr.bf16.mxu0 %v2163
    %2324 = vmatpush1.bf16.msra.mxu0 %v2162
    %2325 = vmatprep.subr.bf16.mxu0 %v2171
    %2326 = vmatpush1.bf16.msra.mxu0 %v2170
    %2327 = vmatprep.subr.bf16.mxu0 %v2179
    %2328 = vmatpush1.bf16.msra.mxu0 %v2178
    %2329 = vmatprep.subr.bf16.mxu0 %v2187
    %2330 = vmatpush1.bf16.msra.mxu0 %v2186
    %2331 = vmatprep.subr.bf16.mxu0 %v2195
    %2332 = vmatpush1.bf16.msra.mxu0 %v2194
    %2333 = vmatprep.subr.bf16.mxu0 %v2203
    %2334 = vmatpush1.bf16.msra.mxu0 %v2202
    %2335 = vmatprep.subr.bf16.mxu0 0
    %2336 = vmatpush1.bf16.msra.mxu0 0
    %2337 = vmatprep.subr.bf16.mxu0 0
    %2338 = vmatpush1.bf16.msra.mxu0 0
    %2339 = vmatprep.subr.bf16.mxu0 0
    %2340 = vmatpush1.bf16.msra.mxu0 0
    %2341 = vmatprep.subr.bf16.mxu0 0
    %2342 = vmatpush1.bf16.msra.mxu0 0
    %2343 = vmatprep.subr.bf16.mxu0 0
    %2344 = vmatpush1.bf16.msra.mxu0 0
    %2345 = vmatprep.subr.bf16.mxu0 0
    %2346 = vmatpush1.bf16.msra.mxu0 0
    %2347 = vmatprep.subr.bf16.mxu0 0
    %2348 = vmatpush1.bf16.msra.mxu0 0
    %2349 = vmatprep.mubr.bf16.mxu0 %v2229
    %2350 = vmatmul.mubr.bf16.gmra.mrb[0].mxu0 %v2224
    %v2351 = vpop.f32.mrb[0].mxu0
    %v2352 = vadd.f32 %v2211, %v2351
    %v2353 = vpop.f32.mrb[0].mxu0
    %v2354 = vadd.f32 %v2211, %v2353
    %v2355 = vpop.f32.mrb[0].mxu0
    %v2356 = vadd.f32 %v2216, %v2355
    %v2357 = vpop.f32.mrb[0].mxu0
    %v2358 = vadd.f32 %v2216, %v2357
    %2359 = vdwg.mxu0
    %2360 = vmatprep.subr.bf16.mxu0 %v2141
    %2361 = vmatpush1.bf16.msra.mxu0 %v2140
    %2362 = vmatprep.subr.bf16.mxu0 %v2149
    %2363 = vmatpush1.bf16.msra.mxu0 %v2148
    %2364 = vmatprep.subr.bf16.mxu0 %v2157
    %2365 = vmatpush1.bf16.msra.mxu0 %v2156
    %2366 = vmatprep.subr.bf16.mxu0 %v2165
    %2367 = vmatpush1.bf16.msra.mxu0 %v2164
    %2368 = vmatprep.subr.bf16.mxu0 %v2173
    %2369 = vmatpush1.bf16.msra.mxu0 %v2172
    %2370 = vmatprep.subr.bf16.mxu0 %v2181
    %2371 = vmatpush1.bf16.msra.mxu0 %v2180
    %2372 = vmatprep.subr.bf16.mxu0 %v2189
    %2373 = vmatpush1.bf16.msra.mxu0 %v2188
    %2374 = vmatprep.subr.bf16.mxu0 %v2197
    %2375 = vmatpush1.bf16.msra.mxu0 %v2196
    %2376 = vmatprep.subr.bf16.mxu0 %v2205
    %2377 = vmatpush1.bf16.msra.mxu0 %v2204
    %2378 = vmatprep.subr.bf16.mxu0 0
    %2379 = vmatpush1.bf16.msra.mxu0 0
    %2380 = vmatprep.subr.bf16.mxu0 0
    %2381 = vmatpush1.bf16.msra.mxu0 0
    %2382 = vmatprep.subr.bf16.mxu0 0
    %2383 = vmatpush1.bf16.msra.mxu0 0
    %2384 = vmatprep.subr.bf16.mxu0 0
    %2385 = vmatpush1.bf16.msra.mxu0 0
    %2386 = vmatprep.subr.bf16.mxu0 0
    %2387 = vmatpush1.bf16.msra.mxu0 0
    %2388 = vmatprep.subr.bf16.mxu0 0
    %2389 = vmatpush1.bf16.msra.mxu0 0
    %2390 = vmatprep.subr.bf16.mxu0 0
    %2391 = vmatpush1.bf16.msra.mxu0 0
    %2392 = vmatprep.mubr.bf16.mxu0 %v2229
    %2393 = vmatmul.mubr.bf16.gmra.mrb[0].mxu0 %v2224
    %v2394 = vpop.f32.mrb[0].mxu0
    %v2395 = vadd.f32 %v2211, %v2394
    %v2396 = vpop.f32.mrb[0].mxu0
    %v2397 = vadd.f32 %v2211, %v2396
    %v2398 = vpop.f32.mrb[0].mxu0
    %v2399 = vadd.f32 %v2216, %v2398
    %v2400 = vpop.f32.mrb[0].mxu0
    %v2401 = vadd.f32 %v2216, %v2400
    %2402 = vdwg.mxu0
    %v2403 = vmax.f32 %v2266, 0.0
    %v2404 = vmax.f32 %v2268, 0.0
    %v2405 = vmax.f32 %v2309, 0.0
    %v2406 = vmax.f32 %v2311, 0.0
    %v2407 = vmax.f32 %v2352, 0.0
    %v2408 = vmax.f32 %v2354, 0.0
    %v2409 = vmax.f32 %v2395, 0.0
    %v2410 = vmax.f32 %v2397, 0.0
    %v2411 = vmax.f32 %v2270, 0.0
    %v2412 = vmax.f32 %v2272, 0.0
    %v2413 = vmax.f32 %v2313, 0.0
    %v2414 = vmax.f32 %v2315, 0.0
    %v2415 = vmax.f32 %v2356, 0.0
    %v2416 = vmax.f32 %v2358, 0.0
    %v2417 = vmax.f32 %v2399, 0.0
    %v2418 = vmax.f32 %v2401, 0.0
    %2419 = vrot.lane.b32.xlu0 %v2403, 33
    %v2420 = vpop.permute.xlu0 %2419
    %2421 = vrot.lane.b32.xlu0 %v2411, 33
    %v2422 = vpop.permute.xlu0 %2421
    %2423 = vrot.lane.b32.xlu0 %v2404, 33
    %v2424 = vpop.permute.xlu0 %2423
    %2425 = vrot.lane.b32.xlu0 %v2412, 33
    %v2426 = vpop.permute.xlu0 %2425
    %2427 = vrot.lane.b32.xlu0 %v2405, 33
    %v2428 = vpop.permute.xlu0 %2427
    %2429 = vrot.lane.b32.xlu0 %v2413, 33
    %v2430 = vpop.permute.xlu0 %2429
    %2431 = vrot.lane.b32.xlu0 %v2406, 33
    %v2432 = vpop.permute.xlu0 %2431
    %2433 = vrot.lane.b32.xlu0 %v2414, 33
    %v2434 = vpop.permute.xlu0 %2433
    %2435 = vrot.lane.b32.xlu0 %v2407, 33
    %v2436 = vpop.permute.xlu0 %2435
    %2437 = vrot.lane.b32.xlu0 %v2415, 33
    %v2438 = vpop.permute.xlu0 %2437
    %2439 = vrot.lane.b32.xlu0 %v2408, 33
    %v2440 = vpop.permute.xlu0 %2439
    %2441 = vrot.lane.b32.xlu0 %v2416, 33
    %v2442 = vpop.permute.xlu0 %2441
    %2443 = vrot.lane.b32.xlu0 %v2409, 33
    %v2444 = vpop.permute.xlu0 %2443
    %2445 = vrot.lane.b32.xlu0 %v2417, 33
    %v2446 = vpop.permute.xlu0 %2445
    %2447 = vrot.lane.b32.xlu0 %v2410, 33
    %v2448 = vpop.permute.xlu0 %2447
    %2449 = vrot.lane.b32.xlu0 %v2418, 33
    %v2450 = vpop.permute.xlu0 %2449
    %v2451 = vsel %vm158, %v2444, %v2448
    %v2452 = vsel %vm158, %v2446, %v2450
    %v2453 = vsel %vm158, %v2440, %v2444
    %v2454 = vsel %vm158, %v2442, %v2446
    %v2455 = vsel %vm158, %v2436, %v2440
    %v2456 = vsel %vm158, %v2438, %v2442
    %v2457 = vsel %vm158, %v2432, %v2436
    %v2458 = vsel %vm158, %v2434, %v2438
    %v2459 = vsel %vm158, %v2428, %v2432
    %v2460 = vsel %vm158, %v2430, %v2434
    %v2461 = vsel %vm158, %v2424, %v2428
    %v2462 = vsel %vm158, %v2426, %v2430
    %v2463 = vsel %vm158, %v2420, %v2424
    %v2464 = vsel %vm158, %v2422, %v2426
    %v2465 = vsel %vm158, %v2448, %v2420
    %v2466 = vsel %vm158, %v2450, %v2422
    %v2467 = vmul.f32 %v2465, %v247
    %v2468 = vmul.f32 %v2463, %v248
    %v2469 = vmul.f32 %v2461, %v249
    %v2470 = vmul.f32 %v2459, %v250
    %v2471 = vmul.f32 %v2457, %v251
    %v2472 = vmul.f32 %v2455, %v252
    %v2473 = vmul.f32 %v2453, %v253
    %v2474 = vmul.f32 %v2451, %v254
    %v2475 = vmul.f32 %v2466, %v247
    %v2476 = vmul.f32 %v2464, %v248
    %v2477 = vmul.f32 %v2462, %v249
    %v2478 = vmul.f32 %v2460, %v250
    %v2479 = vmul.f32 %v2458, %v251
    %v2480 = vmul.f32 %v2456, %v252
    %v2481 = vmul.f32 %v2454, %v253
    %v2482 = vmul.f32 %v2452, %v254
    %v2483 = vpack.c.bf16 %v2475, %v2467
    %v2484 = vpack.c.bf16 %v2476, %v2468
    %v2485 = vpack.c.bf16 %v2477, %v2469
    %v2486 = vpack.c.bf16 %v2478, %v2470
    %v2487 = vpack.c.bf16 %v2479, %v2471
    %v2488 = vpack.c.bf16 %v2480, %v2472
    %v2489 = vpack.c.bf16 %v2481, %v2473
    %v2490 = vpack.c.bf16 %v2482, %v2474
    %2491 = vst [vmem:[#allocation2] sm:$0xff] %v2483
    %2492 = vst [vmem:[#allocation2 + $0x8] sm:$0xff] %v2484
    %2493 = vst [vmem:[#allocation2 + $0x10] sm:$0xff] %v2485
    %2494 = vst [vmem:[#allocation2 + $0x18] sm:$0xff] %v2486
    %2495 = vst [vmem:[#allocation2 + $0x20] sm:$0xff] %v2487
    %2496 = vst [vmem:[#allocation2 + $0x28] sm:$0xff] %v2488
    %2497 = vst [vmem:[#allocation2 + $0x30] sm:$0xff] %v2489
    %2498 = vst [vmem:[#allocation2 + $0x38] sm:$0xff] %v2490
    %2499 = vrot.lane.b32.xlu0 %v2403, 32
    %v2500 = vpop.permute.xlu0 %2499
    %2501 = vrot.lane.b32.xlu0 %v2411, 32
    %v2502 = vpop.permute.xlu0 %2501
    %2503 = vrot.lane.b32.xlu0 %v2404, 32
    %v2504 = vpop.permute.xlu0 %2503
    %2505 = vrot.lane.b32.xlu0 %v2412, 32
    %v2506 = vpop.permute.xlu0 %2505
    %2507 = vrot.lane.b32.xlu0 %v2405, 32
    %v2508 = vpop.permute.xlu0 %2507
    %2509 = vrot.lane.b32.xlu0 %v2413, 32
    %v2510 = vpop.permute.xlu0 %2509
    %2511 = vrot.lane.b32.xlu0 %v2406, 32
    %v2512 = vpop.permute.xlu0 %2511
    %2513 = vrot.lane.b32.xlu0 %v2414, 32
    %v2514 = vpop.permute.xlu0 %2513
    %2515 = vrot.lane.b32.xlu0 %v2407, 32
    %v2516 = vpop.permute.xlu0 %2515
    %2517 = vrot.lane.b32.xlu0 %v2415, 32
    %v2518 = vpop.permute.xlu0 %2517
    %2519 = vrot.lane.b32.xlu0 %v2408, 32
    %v2520 = vpop.permute.xlu0 %2519
    %2521 = vrot.lane.b32.xlu0 %v2416, 32
    %v2522 = vpop.permute.xlu0 %2521
    %2523 = vrot.lane.b32.xlu0 %v2409, 32
    %v2524 = vpop.permute.xlu0 %2523
    %2525 = vrot.lane.b32.xlu0 %v2417, 32
    %v2526 = vpop.permute.xlu0 %2525
    %2527 = vrot.lane.b32.xlu0 %v2410, 32
    %v2528 = vpop.permute.xlu0 %2527
    %2529 = vrot.lane.b32.xlu0 %v2418, 32
    %v2530 = vpop.permute.xlu0 %2529
    %v2531 = vsel %vm353, %v2524, %v2528
    %v2532 = vsel %vm353, %v2526, %v2530
    %v2533 = vsel %vm353, %v2520, %v2524
    %v2534 = vsel %vm353, %v2522, %v2526
    %v2535 = vsel %vm353, %v2516, %v2520
    %v2536 = vsel %vm353, %v2518, %v2522
    %v2537 = vsel %vm353, %v2512, %v2516
    %v2538 = vsel %vm353, %v2514, %v2518
    %v2539 = vsel %vm353, %v2508, %v2512
    %v2540 = vsel %vm353, %v2510, %v2514
    %v2541 = vsel %vm353, %v2504, %v2508
    %v2542 = vsel %vm353, %v2506, %v2510
    %v2543 = vsel %vm353, %v2500, %v2504
    %v2544 = vsel %vm353, %v2502, %v2506
    %v2545 = vsel %vm353, %v2528, %v2500
    %v2546 = vsel %vm353, %v2530, %v2502
    %v2547 = vmul.f32 %v2545, %v402
    %v2548 = vmul.f32 %v2543, %v403
    %v2549 = vmul.f32 %v2541, %v404
    %v2550 = vmul.f32 %v2539, %v405
    %v2551 = vmul.f32 %v2537, %v406
    %v2552 = vmul.f32 %v2535, %v407
    %v2553 = vmul.f32 %v2533, %v408
    %v2554 = vmul.f32 %v2531, %v409
    %v2555 = vmul.f32 %v2546, %v402
    %v2556 = vmul.f32 %v2544, %v403
    %v2557 = vmul.f32 %v2542, %v404
    %v2558 = vmul.f32 %v2540, %v405
    %v2559 = vmul.f32 %v2538, %v406
    %v2560 = vmul.f32 %v2536, %v407
    %v2561 = vmul.f32 %v2534, %v408
    %v2562 = vmul.f32 %v2532, %v409
    %v2563 = vpack.c.bf16 %v2555, %v2547
    %v2564 = vpack.c.bf16 %v2556, %v2548
    %v2565 = vpack.c.bf16 %v2557, %v2549
    %v2566 = vpack.c.bf16 %v2558, %v2550
    %v2567 = vpack.c.bf16 %v2559, %v2551
    %v2568 = vpack.c.bf16 %v2560, %v2552
    %v2569 = vpack.c.bf16 %v2561, %v2553
    %v2570 = vpack.c.bf16 %v2562, %v2554
    %2571 = vst [vmem:[#allocation2 + $0x40] sm:$0xff] %v2563
    %2572 = vst [vmem:[#allocation2 + $0x48] sm:$0xff] %v2564
    %2573 = vst [vmem:[#allocation2 + $0x50] sm:$0xff] %v2565
    %2574 = vst [vmem:[#allocation2 + $0x58] sm:$0xff] %v2566
    %2575 = vst [vmem:[#allocation2 + $0x60] sm:$0xff] %v2567
    %2576 = vst [vmem:[#allocation2 + $0x68] sm:$0xff] %v2568
    %2577 = vst [vmem:[#allocation2 + $0x70] sm:$0xff] %v2569
    %2578 = vst [vmem:[#allocation2 + $0x78] sm:$0xff] %v2570
    %2579 = vrot.lane.b32.xlu0 %v2403, 31
    %v2580 = vpop.permute.xlu0 %2579
    %2581 = vrot.lane.b32.xlu0 %v2411, 31
    %v2582 = vpop.permute.xlu0 %2581
    %2583 = vrot.lane.b32.xlu0 %v2404, 31
    %v2584 = vpop.permute.xlu0 %2583
    %2585 = vrot.lane.b32.xlu0 %v2412, 31
    %v2586 = vpop.permute.xlu0 %2585
    %2587 = vrot.lane.b32.xlu0 %v2405, 31
    %v2588 = vpop.permute.xlu0 %2587
    %2589 = vrot.lane.b32.xlu0 %v2413, 31
    %v2590 = vpop.permute.xlu0 %2589
    %2591 = vrot.lane.b32.xlu0 %v2406, 31
    %v2592 = vpop.permute.xlu0 %2591
    %2593 = vrot.lane.b32.xlu0 %v2414, 31
    %v2594 = vpop.permute.xlu0 %2593
    %2595 = vrot.lane.b32.xlu0 %v2407, 31
    %v2596 = vpop.permute.xlu0 %2595
    %2597 = vrot.lane.b32.xlu0 %v2415, 31
    %v2598 = vpop.permute.xlu0 %2597
    %2599 = vrot.lane.b32.xlu0 %v2408, 31
    %v2600 = vpop.permute.xlu0 %2599
    %2601 = vrot.lane.b32.xlu0 %v2416, 31
    %v2602 = vpop.permute.xlu0 %2601
    %2603 = vrot.lane.b32.xlu0 %v2409, 31
    %v2604 = vpop.permute.xlu0 %2603
    %2605 = vrot.lane.b32.xlu0 %v2417, 31
    %v2606 = vpop.permute.xlu0 %2605
    %2607 = vrot.lane.b32.xlu0 %v2410, 31
    %v2608 = vpop.permute.xlu0 %2607
    %2609 = vrot.lane.b32.xlu0 %v2418, 31
    %v2610 = vpop.permute.xlu0 %2609
    %v2611 = vsel %vm506, %v2604, %v2608
    %v2612 = vsel %vm506, %v2606, %v2610
    %v2613 = vsel %vm506, %v2600, %v2604
    %v2614 = vsel %vm506, %v2602, %v2606
    %v2615 = vsel %vm506, %v2596, %v2600
    %v2616 = vsel %vm506, %v2598, %v2602
    %v2617 = vsel %vm506, %v2592, %v2596
    %v2618 = vsel %vm506, %v2594, %v2598
    %v2619 = vsel %vm506, %v2588, %v2592
    %v2620 = vsel %vm506, %v2590, %v2594
    %v2621 = vsel %vm506, %v2584, %v2588
    %v2622 = vsel %vm506, %v2586, %v2590
    %v2623 = vsel %vm506, %v2580, %v2584
    %v2624 = vsel %vm506, %v2582, %v2586
    %v2625 = vsel %vm506, %v2608, %v2580
    %v2626 = vsel %vm506, %v2610, %v2582
    %v2627 = vmul.f32 %v2625, %v563
    %v2628 = vmul.f32 %v2623, %v564
    %v2629 = vmul.f32 %v2621, %v565
    %v2630 = vmul.f32 %v2619, %v566
    %v2631 = vmul.f32 %v2617, %v567
    %v2632 = vmul.f32 %v2615, %v568
    %v2633 = vmul.f32 %v2613, %v569
    %v2634 = vmul.f32 %v2611, %v570
    %v2635 = vmul.f32 %v2626, %v563
    %v2636 = vmul.f32 %v2624, %v564
    %v2637 = vmul.f32 %v2622, %v565
    %v2638 = vmul.f32 %v2620, %v566
    %v2639 = vmul.f32 %v2618, %v567
    %v2640 = vmul.f32 %v2616, %v568
    %v2641 = vmul.f32 %v2614, %v569
    %v2642 = vmul.f32 %v2612, %v570
    %v2643 = vpack.c.bf16 %v2635, %v2627
    %v2644 = vpack.c.bf16 %v2636, %v2628
    %v2645 = vpack.c.bf16 %v2637, %v2629
    %v2646 = vpack.c.bf16 %v2638, %v2630
    %v2647 = vpack.c.bf16 %v2639, %v2631
    %v2648 = vpack.c.bf16 %v2640, %v2632
    %v2649 = vpack.c.bf16 %v2641, %v2633
    %v2650 = vpack.c.bf16 %v2642, %v2634
    %2651 = vst [vmem:[#allocation2 + $0x80] sm:$0xff] %v2643
    %2652 = vst [vmem:[#allocation2 + $0x88] sm:$0xff] %v2644
    %2653 = vst [vmem:[#allocation2 + $0x90] sm:$0xff] %v2645
    %2654 = vst [vmem:[#allocation2 + $0x98] sm:$0xff] %v2646
    %2655 = vst [vmem:[#allocation2 + $0xa0] sm:$0xff] %v2647
    %2656 = vst [vmem:[#allocation2 + $0xa8] sm:$0xff] %v2648
    %2657 = vst [vmem:[#allocation2 + $0xb0] sm:$0xff] %v2649
    %2658 = vst [vmem:[#allocation2 + $0xb8] sm:$0xff] %v2650
    %2659 = vrot.lane.b32.xlu0 %v2403, 1
    %v2660 = vpop.permute.xlu0 %2659
    %2661 = vrot.lane.b32.xlu0 %v2411, 1
    %v2662 = vpop.permute.xlu0 %2661
    %2663 = vrot.lane.b32.xlu0 %v2404, 1
    %v2664 = vpop.permute.xlu0 %2663
    %2665 = vrot.lane.b32.xlu0 %v2412, 1
    %v2666 = vpop.permute.xlu0 %2665
    %2667 = vrot.lane.b32.xlu0 %v2405, 1
    %v2668 = vpop.permute.xlu0 %2667
    %2669 = vrot.lane.b32.xlu0 %v2413, 1
    %v2670 = vpop.permute.xlu0 %2669
    %2671 = vrot.lane.b32.xlu0 %v2406, 1
    %v2672 = vpop.permute.xlu0 %2671
    %2673 = vrot.lane.b32.xlu0 %v2414, 1
    %v2674 = vpop.permute.xlu0 %2673
    %2675 = vrot.lane.b32.xlu0 %v2407, 1
    %v2676 = vpop.permute.xlu0 %2675
    %2677 = vrot.lane.b32.xlu0 %v2415, 1
    %v2678 = vpop.permute.xlu0 %2677
    %2679 = vrot.lane.b32.xlu0 %v2408, 1
    %v2680 = vpop.permute.xlu0 %2679
    %2681 = vrot.lane.b32.xlu0 %v2416, 1
    %v2682 = vpop.permute.xlu0 %2681
    %2683 = vrot.lane.b32.xlu0 %v2409, 1
    %v2684 = vpop.permute.xlu0 %2683
    %2685 = vrot.lane.b32.xlu0 %v2417, 1
    %v2686 = vpop.permute.xlu0 %2685
    %2687 = vrot.lane.b32.xlu0 %v2410, 1
    %v2688 = vpop.permute.xlu0 %2687
    %2689 = vrot.lane.b32.xlu0 %v2418, 1
    %v2690 = vpop.permute.xlu0 %2689
    %v2691 = vsel %vm667, %v2684, %v2688
    %v2692 = vsel %vm667, %v2686, %v2690
    %v2693 = vsel %vm667, %v2680, %v2684
    %v2694 = vsel %vm667, %v2682, %v2686
    %v2695 = vsel %vm667, %v2676, %v2680
    %v2696 = vsel %vm667, %v2678, %v2682
    %v2697 = vsel %vm667, %v2672, %v2676
    %v2698 = vsel %vm667, %v2674, %v2678
    %v2699 = vsel %vm667, %v2668, %v2672
    %v2700 = vsel %vm667, %v2670, %v2674
    %v2701 = vsel %vm667, %v2664, %v2668
    %v2702 = vsel %vm667, %v2666, %v2670
    %v2703 = vsel %vm667, %v2660, %v2664
    %v2704 = vsel %vm667, %v2662, %v2666
    %v2705 = vsel %vm667, %v2688, %v2660
    %v2706 = vsel %vm667, %v2690, %v2662
    %v2707 = vmul.f32 %v2705, %v724
    %v2708 = vmul.f32 %v2703, %v725
    %v2709 = vmul.f32 %v2701, %v726
    %v2710 = vmul.f32 %v2699, %v727
    %v2711 = vmul.f32 %v2697, %v728
    %v2712 = vmul.f32 %v2695, %v729
    %v2713 = vmul.f32 %v2693, %v730
    %v2714 = vmul.f32 %v2691, %v731
    %v2715 = vmul.f32 %v2706, %v724
    %v2716 = vmul.f32 %v2704, %v725
    %v2717 = vmul.f32 %v2702, %v726
    %v2718 = vmul.f32 %v2700, %v727
    %v2719 = vmul.f32 %v2698, %v728
    %v2720 = vmul.f32 %v2696, %v729
    %v2721 = vmul.f32 %v2694, %v730
    %v2722 = vmul.f32 %v2692, %v731
    %v2723 = vpack.c.bf16 %v2715, %v2707
    %v2724 = vpack.c.bf16 %v2716, %v2708
    %v2725 = vpack.c.bf16 %v2717, %v2709
    %v2726 = vpack.c.bf16 %v2718, %v2710
    %v2727 = vpack.c.bf16 %v2719, %v2711
    %v2728 = vpack.c.bf16 %v2720, %v2712
    %v2729 = vpack.c.bf16 %v2721, %v2713
    %v2730 = vpack.c.bf16 %v2722, %v2714
    %2731 = vst [vmem:[#allocation2 + $0xc0] sm:$0xff] %v2723
    %2732 = vst [vmem:[#allocation2 + $0xc8] sm:$0xff] %v2724
    %2733 = vst [vmem:[#allocation2 + $0xd0] sm:$0xff] %v2725
    %2734 = vst [vmem:[#allocation2 + $0xd8] sm:$0xff] %v2726
    %2735 = vst [vmem:[#allocation2 + $0xe0] sm:$0xff] %v2727
    %2736 = vst [vmem:[#allocation2 + $0xe8] sm:$0xff] %v2728
    %2737 = vst [vmem:[#allocation2 + $0xf0] sm:$0xff] %v2729
    %2738 = vst [vmem:[#allocation2 + $0xf8] sm:$0xff] %v2730
    %v2739 = vpack.c.bf16 %v2411, %v2403
    %v2740 = vpack.c.bf16 %v2412, %v2404
    %v2741 = vpack.c.bf16 %v2413, %v2405
    %v2742 = vpack.c.bf16 %v2414, %v2406
    %v2743 = vpack.c.bf16 %v2415, %v2407
    %v2744 = vpack.c.bf16 %v2416, %v2408
    %v2745 = vpack.c.bf16 %v2417, %v2409
    %v2746 = vpack.c.bf16 %v2418, %v2410
    %2747 = vst [vmem:[#allocation2 + $0x100] sm:$0xff] %v2739
    %2748 = vst [vmem:[#allocation2 + $0x108] sm:$0xff] %v2740
    %2749 = vst [vmem:[#allocation2 + $0x110] sm:$0xff] %v2741
    %2750 = vst [vmem:[#allocation2 + $0x118] sm:$0xff] %v2742
    %2751 = vst [vmem:[#allocation2 + $0x120] sm:$0xff] %v2743
    %2752 = vst [vmem:[#allocation2 + $0x128] sm:$0xff] %v2744
    %2753 = vst [vmem:[#allocation2 + $0x130] sm:$0xff] %v2745
    %2754 = vst [vmem:[#allocation2 + $0x138] sm:$0xff] %v2746
    %2755 = vrot.lane.b32.xlu0 %v2403, 127
    %v2756 = vpop.permute.xlu0 %2755
    %2757 = vrot.lane.b32.xlu0 %v2411, 127
    %v2758 = vpop.permute.xlu0 %2757
    %2759 = vrot.lane.b32.xlu0 %v2404, 127
    %v2760 = vpop.permute.xlu0 %2759
    %2761 = vrot.lane.b32.xlu0 %v2412, 127
    %v2762 = vpop.permute.xlu0 %2761
    %2763 = vrot.lane.b32.xlu0 %v2405, 127
    %v2764 = vpop.permute.xlu0 %2763
    %2765 = vrot.lane.b32.xlu0 %v2413, 127
    %v2766 = vpop.permute.xlu0 %2765
    %2767 = vrot.lane.b32.xlu0 %v2406, 127
    %v2768 = vpop.permute.xlu0 %2767
    %2769 = vrot.lane.b32.xlu0 %v2414, 127
    %v2770 = vpop.permute.xlu0 %2769
    %2771 = vrot.lane.b32.xlu0 %v2407, 127
    %v2772 = vpop.permute.xlu0 %2771
    %2773 = vrot.lane.b32.xlu0 %v2415, 127
    %v2774 = vpop.permute.xlu0 %2773
    %2775 = vrot.lane.b32.xlu0 %v2408, 127
    %v2776 = vpop.permute.xlu0 %2775
    %2777 = vrot.lane.b32.xlu0 %v2416, 127
    %v2778 = vpop.permute.xlu0 %2777
    %2779 = vrot.lane.b32.xlu0 %v2409, 127
    %v2780 = vpop.permute.xlu0 %2779
    %2781 = vrot.lane.b32.xlu0 %v2417, 127
    %v2782 = vpop.permute.xlu0 %2781
    %2783 = vrot.lane.b32.xlu0 %v2410, 127
    %v2784 = vpop.permute.xlu0 %2783
    %2785 = vrot.lane.b32.xlu0 %v2418, 127
    %v2786 = vpop.permute.xlu0 %2785
    %v2787 = vsel %vm868, %v2780, %v2784
    %v2788 = vsel %vm868, %v2782, %v2786
    %v2789 = vsel %vm868, %v2776, %v2780
    %v2790 = vsel %vm868, %v2778, %v2782
    %v2791 = vsel %vm868, %v2772, %v2776
    %v2792 = vsel %vm868, %v2774, %v2778
    %v2793 = vsel %vm868, %v2768, %v2772
    %v2794 = vsel %vm868, %v2770, %v2774
    %v2795 = vsel %vm868, %v2764, %v2768
    %v2796 = vsel %vm868, %v2766, %v2770
    %v2797 = vsel %vm868, %v2760, %v2764
    %v2798 = vsel %vm868, %v2762, %v2766
    %v2799 = vsel %vm868, %v2756, %v2760
    %v2800 = vsel %vm868, %v2758, %v2762
    %v2801 = vsel %vm868, %v2784, %v2756
    %v2802 = vsel %vm868, %v2786, %v2758
    %v2803 = vmul.f32 %v2799, %v901
    %v2804 = vmul.f32 %v2797, %v902
    %v2805 = vmul.f32 %v2795, %v903
    %v2806 = vmul.f32 %v2793, %v904
    %v2807 = vmul.f32 %v2791, %v905
    %v2808 = vmul.f32 %v2789, %v906
    %v2809 = vmul.f32 %v2787, %v907
    %v2810 = vmul.f32 %v2801, %v908
    %v2811 = vmul.f32 %v2800, %v901
    %v2812 = vmul.f32 %v2798, %v902
    %v2813 = vmul.f32 %v2796, %v903
    %v2814 = vmul.f32 %v2794, %v904
    %v2815 = vmul.f32 %v2792, %v905
    %v2816 = vmul.f32 %v2790, %v906
    %v2817 = vmul.f32 %v2788, %v907
    %v2818 = vmul.f32 %v2802, %v908
    %v2819 = vpack.c.bf16 %v2811, %v2803
    %v2820 = vpack.c.bf16 %v2812, %v2804
    %v2821 = vpack.c.bf16 %v2813, %v2805
    %v2822 = vpack.c.bf16 %v2814, %v2806
    %v2823 = vpack.c.bf16 %v2815, %v2807
    %v2824 = vpack.c.bf16 %v2816, %v2808
    %v2825 = vpack.c.bf16 %v2817, %v2809
    %v2826 = vpack.c.bf16 %v2818, %v2810
    %2827 = vst [vmem:[#allocation2 + $0x140] sm:$0xff] %v2819
    %2828 = vst [vmem:[#allocation2 + $0x148] sm:$0xff] %v2820
    %2829 = vst [vmem:[#allocation2 + $0x150] sm:$0xff] %v2821
    %2830 = vst [vmem:[#allocation2 + $0x158] sm:$0xff] %v2822
    %2831 = vst [vmem:[#allocation2 + $0x160] sm:$0xff] %v2823
    %2832 = vst [vmem:[#allocation2 + $0x168] sm:$0xff] %v2824
    %2833 = vst [vmem:[#allocation2 + $0x170] sm:$0xff] %v2825
    %2834 = vst [vmem:[#allocation2 + $0x178] sm:$0xff] %v2826
    %2835 = vrot.lane.b32.xlu0 %v2403, 97
    %v2836 = vpop.permute.xlu0 %2835
    %2837 = vrot.lane.b32.xlu0 %v2411, 97
    %v2838 = vpop.permute.xlu0 %2837
    %2839 = vrot.lane.b32.xlu0 %v2404, 97
    %v2840 = vpop.permute.xlu0 %2839
    %2841 = vrot.lane.b32.xlu0 %v2412, 97
    %v2842 = vpop.permute.xlu0 %2841
    %2843 = vrot.lane.b32.xlu0 %v2405, 97
    %v2844 = vpop.permute.xlu0 %2843
    %2845 = vrot.lane.b32.xlu0 %v2413, 97
    %v2846 = vpop.permute.xlu0 %2845
    %2847 = vrot.lane.b32.xlu0 %v2406, 97
    %v2848 = vpop.permute.xlu0 %2847
    %2849 = vrot.lane.b32.xlu0 %v2414, 97
    %v2850 = vpop.permute.xlu0 %2849
    %2851 = vrot.lane.b32.xlu0 %v2407, 97
    %v2852 = vpop.permute.xlu0 %2851
    %2853 = vrot.lane.b32.xlu0 %v2415, 97
    %v2854 = vpop.permute.xlu0 %2853
    %2855 = vrot.lane.b32.xlu0 %v2408, 97
    %v2856 = vpop.permute.xlu0 %2855
    %2857 = vrot.lane.b32.xlu0 %v2416, 97
    %v2858 = vpop.permute.xlu0 %2857
    %2859 = vrot.lane.b32.xlu0 %v2409, 97
    %v2860 = vpop.permute.xlu0 %2859
    %2861 = vrot.lane.b32.xlu0 %v2417, 97
    %v2862 = vpop.permute.xlu0 %2861
    %2863 = vrot.lane.b32.xlu0 %v2410, 97
    %v2864 = vpop.permute.xlu0 %2863
    %2865 = vrot.lane.b32.xlu0 %v2418, 97
    %v2866 = vpop.permute.xlu0 %2865
    %v2867 = vsel %vm1005, %v2860, %v2864
    %v2868 = vsel %vm1005, %v2862, %v2866
    %v2869 = vsel %vm1005, %v2856, %v2860
    %v2870 = vsel %vm1005, %v2858, %v2862
    %v2871 = vsel %vm1005, %v2852, %v2856
    %v2872 = vsel %vm1005, %v2854, %v2858
    %v2873 = vsel %vm1005, %v2848, %v2852
    %v2874 = vsel %vm1005, %v2850, %v2854
    %v2875 = vsel %vm1005, %v2844, %v2848
    %v2876 = vsel %vm1005, %v2846, %v2850
    %v2877 = vsel %vm1005, %v2840, %v2844
    %v2878 = vsel %vm1005, %v2842, %v2846
    %v2879 = vsel %vm1005, %v2836, %v2840
    %v2880 = vsel %vm1005, %v2838, %v2842
    %v2881 = vsel %vm1005, %v2864, %v2836
    %v2882 = vsel %vm1005, %v2866, %v2838
    %v2883 = vmul.f32 %v2879, %v1070
    %v2884 = vmul.f32 %v2877, %v1071
    %v2885 = vmul.f32 %v2875, %v1072
    %v2886 = vmul.f32 %v2873, %v1073
    %v2887 = vmul.f32 %v2871, %v1074
    %v2888 = vmul.f32 %v2869, %v1075
    %v2889 = vmul.f32 %v2867, %v1076
    %v2890 = vmul.f32 %v2881, %v1077
    %v2891 = vmul.f32 %v2880, %v1070
    %v2892 = vmul.f32 %v2878, %v1071
    %v2893 = vmul.f32 %v2876, %v1072
    %v2894 = vmul.f32 %v2874, %v1073
    %v2895 = vmul.f32 %v2872, %v1074
    %v2896 = vmul.f32 %v2870, %v1075
    %v2897 = vmul.f32 %v2868, %v1076
    %v2898 = vmul.f32 %v2882, %v1077
    %v2899 = vpack.c.bf16 %v2891, %v2883
    %v2900 = vpack.c.bf16 %v2892, %v2884
    %v2901 = vpack.c.bf16 %v2893, %v2885
    %v2902 = vpack.c.bf16 %v2894, %v2886
    %v2903 = vpack.c.bf16 %v2895, %v2887
    %v2904 = vpack.c.bf16 %v2896, %v2888
    %v2905 = vpack.c.bf16 %v2897, %v2889
    %v2906 = vpack.c.bf16 %v2898, %v2890
    %2907 = vst [vmem:[#allocation2 + $0x180] sm:$0xff] %v2899
    %2908 = vst [vmem:[#allocation2 + $0x188] sm:$0xff] %v2900
    %2909 = vst [vmem:[#allocation2 + $0x190] sm:$0xff] %v2901
    %2910 = vst [vmem:[#allocation2 + $0x198] sm:$0xff] %v2902
    %2911 = vst [vmem:[#allocation2 + $0x1a0] sm:$0xff] %v2903
    %2912 = vst [vmem:[#allocation2 + $0x1a8] sm:$0xff] %v2904
    %2913 = vst [vmem:[#allocation2 + $0x1b0] sm:$0xff] %v2905
    %2914 = vst [vmem:[#allocation2 + $0x1b8] sm:$0xff] %v2906
    %2915 = vrot.lane.b32.xlu0 %v2403, 96
    %v2916 = vpop.permute.xlu0 %2915
    %2917 = vrot.lane.b32.xlu0 %v2411, 96
    %v2918 = vpop.permute.xlu0 %2917
    %2919 = vrot.lane.b32.xlu0 %v2404, 96
    %v2920 = vpop.permute.xlu0 %2919
    %2921 = vrot.lane.b32.xlu0 %v2412, 96
    %v2922 = vpop.permute.xlu0 %2921
    %2923 = vrot.lane.b32.xlu0 %v2405, 96
    %v2924 = vpop.permute.xlu0 %2923
    %2925 = vrot.lane.b32.xlu0 %v2413, 96
    %v2926 = vpop.permute.xlu0 %2925
    %2927 = vrot.lane.b32.xlu0 %v2406, 96
    %v2928 = vpop.permute.xlu0 %2927
    %2929 = vrot.lane.b32.xlu0 %v2414, 96
    %v2930 = vpop.permute.xlu0 %2929
    %2931 = vrot.lane.b32.xlu0 %v2407, 96
    %v2932 = vpop.permute.xlu0 %2931
    %2933 = vrot.lane.b32.xlu0 %v2415, 96
    %v2934 = vpop.permute.xlu0 %2933
    %2935 = vrot.lane.b32.xlu0 %v2408, 96
    %v2936 = vpop.permute.xlu0 %2935
    %2937 = vrot.lane.b32.xlu0 %v2416, 96
    %v2938 = vpop.permute.xlu0 %2937
    %2939 = vrot.lane.b32.xlu0 %v2409, 96
    %v2940 = vpop.permute.xlu0 %2939
    %2941 = vrot.lane.b32.xlu0 %v2417, 96
    %v2942 = vpop.permute.xlu0 %2941
    %2943 = vrot.lane.b32.xlu0 %v2410, 96
    %v2944 = vpop.permute.xlu0 %2943
    %2945 = vrot.lane.b32.xlu0 %v2418, 96
    %v2946 = vpop.permute.xlu0 %2945
    %v2947 = vsel %vm1174, %v2940, %v2944
    %v2948 = vsel %vm1174, %v2942, %v2946
    %v2949 = vsel %vm1174, %v2936, %v2940
    %v2950 = vsel %vm1174, %v2938, %v2942
    %v2951 = vsel %vm1174, %v2932, %v2936
    %v2952 = vsel %vm1174, %v2934, %v2938
    %v2953 = vsel %vm1174, %v2928, %v2932
    %v2954 = vsel %vm1174, %v2930, %v2934
    %v2955 = vsel %vm1174, %v2924, %v2928
    %v2956 = vsel %vm1174, %v2926, %v2930
    %v2957 = vsel %vm1174, %v2920, %v2924
    %v2958 = vsel %vm1174, %v2922, %v2926
    %v2959 = vsel %vm1174, %v2916, %v2920
    %v2960 = vsel %vm1174, %v2918, %v2922
    %v2961 = vsel %vm1174, %v2944, %v2916
    %v2962 = vsel %vm1174, %v2946, %v2918
    %v2963 = vmul.f32 %v2959, %v1207
    %v2964 = vmul.f32 %v2957, %v1208
    %v2965 = vmul.f32 %v2955, %v1209
    %v2966 = vmul.f32 %v2953, %v1210
    %v2967 = vmul.f32 %v2951, %v1211
    %v2968 = vmul.f32 %v2949, %v1212
    %v2969 = vmul.f32 %v2947, %v1213
    %v2970 = vmul.f32 %v2961, %v1214
    %v2971 = vmul.f32 %v2960, %v1207
    %v2972 = vmul.f32 %v2958, %v1208
    %v2973 = vmul.f32 %v2956, %v1209
    %v2974 = vmul.f32 %v2954, %v1210
    %v2975 = vmul.f32 %v2952, %v1211
    %v2976 = vmul.f32 %v2950, %v1212
    %v2977 = vmul.f32 %v2948, %v1213
    %v2978 = vmul.f32 %v2962, %v1214
    %v2979 = vpack.c.bf16 %v2971, %v2963
    %v2980 = vpack.c.bf16 %v2972, %v2964
    %v2981 = vpack.c.bf16 %v2973, %v2965
    %v2982 = vpack.c.bf16 %v2974, %v2966
    %v2983 = vpack.c.bf16 %v2975, %v2967
    %v2984 = vpack.c.bf16 %v2976, %v2968
    %v2985 = vpack.c.bf16 %v2977, %v2969
    %v2986 = vpack.c.bf16 %v2978, %v2970
    %2987 = vst [vmem:[#allocation2 + $0x1c0] sm:$0xff] %v2979
    %2988 = vst [vmem:[#allocation2 + $0x1c8] sm:$0xff] %v2980
    %2989 = vst [vmem:[#allocation2 + $0x1d0] sm:$0xff] %v2981
    %2990 = vst [vmem:[#allocation2 + $0x1d8] sm:$0xff] %v2982
    %2991 = vst [vmem:[#allocation2 + $0x1e0] sm:$0xff] %v2983
    %2992 = vst [vmem:[#allocation2 + $0x1e8] sm:$0xff] %v2984
    %2993 = vst [vmem:[#allocation2 + $0x1f0] sm:$0xff] %v2985
    %2994 = vst [vmem:[#allocation2 + $0x1f8] sm:$0xff] %v2986
    %2995 = vrot.lane.b32.xlu0 %v2403, 95
    %v2996 = vpop.permute.xlu0 %2995
    %2997 = vrot.lane.b32.xlu0 %v2411, 95
    %v2998 = vpop.permute.xlu0 %2997
    %2999 = vrot.lane.b32.xlu0 %v2404, 95
    %v3000 = vpop.permute.xlu0 %2999
    %3001 = vrot.lane.b32.xlu0 %v2412, 95
    %v3002 = vpop.permute.xlu0 %3001
    %3003 = vrot.lane.b32.xlu0 %v2405, 95
    %v3004 = vpop.permute.xlu0 %3003
    %3005 = vrot.lane.b32.xlu0 %v2413, 95
    %v3006 = vpop.permute.xlu0 %3005
    %3007 = vrot.lane.b32.xlu0 %v2406, 95
    %v3008 = vpop.permute.xlu0 %3007
    %3009 = vrot.lane.b32.xlu0 %v2414, 95
    %v3010 = vpop.permute.xlu0 %3009
    %3011 = vrot.lane.b32.xlu0 %v2407, 95
    %v3012 = vpop.permute.xlu0 %3011
    %3013 = vrot.lane.b32.xlu0 %v2415, 95
    %v3014 = vpop.permute.xlu0 %3013
    %3015 = vrot.lane.b32.xlu0 %v2408, 95
    %v3016 = vpop.permute.xlu0 %3015
    %3017 = vrot.lane.b32.xlu0 %v2416, 95
    %v3018 = vpop.permute.xlu0 %3017
    %3019 = vrot.lane.b32.xlu0 %v2409, 95
    %v3020 = vpop.permute.xlu0 %3019
    %3021 = vrot.lane.b32.xlu0 %v2417, 95
    %v3022 = vpop.permute.xlu0 %3021
    %3023 = vrot.lane.b32.xlu0 %v2410, 95
    %v3024 = vpop.permute.xlu0 %3023
    %3025 = vrot.lane.b32.xlu0 %v2418, 95
    %v3026 = vpop.permute.xlu0 %3025
    %v3027 = vsel %vm1311, %v3020, %v3024
    %v3028 = vsel %vm1311, %v3022, %v3026
    %v3029 = vsel %vm1311, %v3016, %v3020
    %v3030 = vsel %vm1311, %v3018, %v3022
    %v3031 = vsel %vm1311, %v3012, %v3016
    %v3032 = vsel %vm1311, %v3014, %v3018
    %v3033 = vsel %vm1311, %v3008, %v3012
    %v3034 = vsel %vm1311, %v3010, %v3014
    %v3035 = vsel %vm1311, %v3004, %v3008
    %v3036 = vsel %vm1311, %v3006, %v3010
    %v3037 = vsel %vm1311, %v3000, %v3004
    %v3038 = vsel %vm1311, %v3002, %v3006
    %v3039 = vsel %vm1311, %v2996, %v3000
    %v3040 = vsel %vm1311, %v2998, %v3002
    %v3041 = vsel %vm1311, %v3024, %v2996
    %v3042 = vsel %vm1311, %v3026, %v2998
    %v3043 = vmul.f32 %v3039, %v1344
    %v3044 = vmul.f32 %v3037, %v1345
    %v3045 = vmul.f32 %v3035, %v1346
    %v3046 = vmul.f32 %v3033, %v1347
    %v3047 = vmul.f32 %v3031, %v1348
    %v3048 = vmul.f32 %v3029, %v1349
    %v3049 = vmul.f32 %v3027, %v1350
    %v3050 = vmul.f32 %v3041, %v1351
    %v3051 = vmul.f32 %v3040, %v1344
    %v3052 = vmul.f32 %v3038, %v1345
    %v3053 = vmul.f32 %v3036, %v1346
    %v3054 = vmul.f32 %v3034, %v1347
    %v3055 = vmul.f32 %v3032, %v1348
    %v3056 = vmul.f32 %v3030, %v1349
    %v3057 = vmul.f32 %v3028, %v1350
    %v3058 = vmul.f32 %v3042, %v1351
    %v3059 = vpack.c.bf16 %v3051, %v3043
    %v3060 = vpack.c.bf16 %v3052, %v3044
    %v3061 = vpack.c.bf16 %v3053, %v3045
    %v3062 = vpack.c.bf16 %v3054, %v3046
    %v3063 = vpack.c.bf16 %v3055, %v3047
    %v3064 = vpack.c.bf16 %v3056, %v3048
    %v3065 = vpack.c.bf16 %v3057, %v3049
    %v3066 = vpack.c.bf16 %v3058, %v3050
    %3067 = vst [vmem:[#allocation2 + $0x200] sm:$0xff] %v3059
    %3068 = vst [vmem:[#allocation2 + $0x208] sm:$0xff] %v3060
    %3069 = vst [vmem:[#allocation2 + $0x210] sm:$0xff] %v3061
    %3070 = vst [vmem:[#allocation2 + $0x218] sm:$0xff] %v3062
    %3071 = vst [vmem:[#allocation2 + $0x220] sm:$0xff] %v3063
    %3072 = vst [vmem:[#allocation2 + $0x228] sm:$0xff] %v3064
    %3073 = vst [vmem:[#allocation2 + $0x230] sm:$0xff] %v3065
    %3074 = vst [vmem:[#allocation2 + $0x238] sm:$0xff] %v3066
    %v3075 = vld [vmem:[%s6] sm:$0xff]
    %v3076 = vld [vmem:[%s6 + $0x8] sm:$0xff]
    %v3077 = vld [vmem:[#allocation2] sm:$0xff]
    %v3078 = vld [vmem:[#allocation2 + $0x8] sm:$0xff]
    %v3079 = vld [vmem:[#allocation2 + $0x10] sm:$0xff]
    %v3080 = vld [vmem:[#allocation2 + $0x18] sm:$0xff]
    %v3081 = vld [vmem:[#allocation2 + $0x20] sm:$0xff]
    %v3082 = vld [vmem:[#allocation2 + $0x28] sm:$0xff]
    %v3083 = vld [vmem:[#allocation2 + $0x30] sm:$0xff]
    %v3084 = vld [vmem:[#allocation2 + $0x38] sm:$0xff]
    %v3085 = vld [vmem:[#allocation2 + $0x40] sm:$0xff]
    %v3086 = vld [vmem:[#allocation2 + $0x48] sm:$0xff]
    %v3087 = vld [vmem:[#allocation2 + $0x50] sm:$0xff]
    %v3088 = vld [vmem:[#allocation2 + $0x58] sm:$0xff]
    %v3089 = vld [vmem:[#allocation2 + $0x60] sm:$0xff]
    %v3090 = vld [vmem:[#allocation2 + $0x68] sm:$0xff]
    %v3091 = vld [vmem:[#allocation2 + $0x70] sm:$0xff]
    %v3092 = vld [vmem:[#allocation2 + $0x78] sm:$0xff]
    %v3093 = vld [vmem:[#allocation2 + $0x80] sm:$0xff]
    %v3094 = vld [vmem:[#allocation2 + $0x88] sm:$0xff]
    %v3095 = vld [vmem:[#allocation2 + $0x90] sm:$0xff]
    %v3096 = vld [vmem:[#allocation2 + $0x98] sm:$0xff]
    %v3097 = vld [vmem:[#allocation2 + $0xa0] sm:$0xff]
    %v3098 = vld [vmem:[#allocation2 + $0xa8] sm:$0xff]
    %v3099 = vld [vmem:[#allocation2 + $0xb0] sm:$0xff]
    %v3100 = vld [vmem:[#allocation2 + $0xb8] sm:$0xff]
    %v3101 = vld [vmem:[#allocation2 + $0xc0] sm:$0xff]
    %v3102 = vld [vmem:[#allocation2 + $0xc8] sm:$0xff]
    %v3103 = vld [vmem:[#allocation2 + $0xd0] sm:$0xff]
    %v3104 = vld [vmem:[#allocation2 + $0xd8] sm:$0xff]
    %v3105 = vld [vmem:[#allocation2 + $0xe0] sm:$0xff]
    %v3106 = vld [vmem:[#allocation2 + $0xe8] sm:$0xff]
    %v3107 = vld [vmem:[#allocation2 + $0xf0] sm:$0xff]
    %v3108 = vld [vmem:[#allocation2 + $0xf8] sm:$0xff]
    %v3109 = vld [vmem:[#allocation2 + $0x100] sm:$0xff]
    %v3110 = vld [vmem:[#allocation2 + $0x108] sm:$0xff]
    %v3111 = vld [vmem:[#allocation2 + $0x110] sm:$0xff]
    %v3112 = vld [vmem:[#allocation2 + $0x118] sm:$0xff]
    %v3113 = vld [vmem:[#allocation2 + $0x120] sm:$0xff]
    %v3114 = vld [vmem:[#allocation2 + $0x128] sm:$0xff]
    %v3115 = vld [vmem:[#allocation2 + $0x130] sm:$0xff]
    %v3116 = vld [vmem:[#allocation2 + $0x138] sm:$0xff]
    %v3117 = vld [vmem:[#allocation2 + $0x140] sm:$0xff]
    %v3118 = vld [vmem:[#allocation2 + $0x148] sm:$0xff]
    %v3119 = vld [vmem:[#allocation2 + $0x150] sm:$0xff]
    %v3120 = vld [vmem:[#allocation2 + $0x158] sm:$0xff]
    %v3121 = vld [vmem:[#allocation2 + $0x160] sm:$0xff]
    %v3122 = vld [vmem:[#allocation2 + $0x168] sm:$0xff]
    %v3123 = vld [vmem:[#allocation2 + $0x170] sm:$0xff]
    %v3124 = vld [vmem:[#allocation2 + $0x178] sm:$0xff]
    %v3125 = vld [vmem:[#allocation2 + $0x180] sm:$0xff]
    %v3126 = vld [vmem:[#allocation2 + $0x188] sm:$0xff]
    %v3127 = vld [vmem:[#allocation2 + $0x190] sm:$0xff]
    %v3128 = vld [vmem:[#allocation2 + $0x198] sm:$0xff]
    %v3129 = vld [vmem:[#allocation2 + $0x1a0] sm:$0xff]
    %v3130 = vld [vmem:[#allocation2 + $0x1a8] sm:$0xff]
    %v3131 = vld [vmem:[#allocation2 + $0x1b0] sm:$0xff]
    %v3132 = vld [vmem:[#allocation2 + $0x1b8] sm:$0xff]
    %v3133 = vld [vmem:[#allocation2 + $0x1c0] sm:$0xff]
    %v3134 = vld [vmem:[#allocation2 + $0x1c8] sm:$0xff]
    %v3135 = vld [vmem:[#allocation2 + $0x1d0] sm:$0xff]
    %v3136 = vld [vmem:[#allocation2 + $0x1d8] sm:$0xff]
    %v3137 = vld [vmem:[#allocation2 + $0x1e0] sm:$0xff]
    %v3138 = vld [vmem:[#allocation2 + $0x1e8] sm:$0xff]
    %v3139 = vld [vmem:[#allocation2 + $0x1f0] sm:$0xff]
    %v3140 = vld [vmem:[#allocation2 + $0x1f8] sm:$0xff]
    %v3141 = vld [vmem:[#allocation2 + $0x200] sm:$0xff]
    %v3142 = vld [vmem:[#allocation2 + $0x208] sm:$0xff]
    %v3143 = vld [vmem:[#allocation2 + $0x210] sm:$0xff]
    %v3144 = vld [vmem:[#allocation2 + $0x218] sm:$0xff]
    %v3145 = vld [vmem:[#allocation2 + $0x220] sm:$0xff]
    %v3146 = vld [vmem:[#allocation2 + $0x228] sm:$0xff]
    %v3147 = vld [vmem:[#allocation2 + $0x230] sm:$0xff]
    %v3148 = vld [vmem:[#allocation2 + $0x238] sm:$0xff]
    %v3149 = vld [vmem:[%s7] sm:$0xff]
    %v3150 = vld [vmem:[%s7 + $0x8] sm:$0xff]
    %3152 = vset.pattern.permute.xlu0 0
    %3153 = vperm.xlu0 %3152, %v3149
    %v3154 = vpop.permute.xlu0 %3153
    %3157 = vset.pattern.permute.xlu0 0
    %3158 = vperm.xlu0 %3157, %v3150
    %v3159 = vpop.permute.xlu0 %3158
    %v3163 = vunpack.c.l.b16 %v3075
    %v3164 = vunpack.c.h.b16 %v3075
    %v3165 = vunpack.c.l.b16 %v3076
    %v3166 = vunpack.c.h.b16 %v3076
    %v3167 = vpack.c.b16 %v3165, %v3163
    %v3168 = vpack.c.b16 %v3166, %v3164
    %v3171 = vsel %vm2227, %v3168, 0
    %3173 = vmatprep.subr.bf16.mxu0 %v3078
    %3174 = vmatpush1.bf16.msra.mxu0 %v3077
    %3175 = vmatprep.subr.bf16.mxu0 %v3086
    %3176 = vmatpush1.bf16.msra.mxu0 %v3085
    %3177 = vmatprep.subr.bf16.mxu0 %v3094
    %3178 = vmatpush1.bf16.msra.mxu0 %v3093
    %3179 = vmatprep.subr.bf16.mxu0 %v3102
    %3180 = vmatpush1.bf16.msra.mxu0 %v3101
    %3181 = vmatprep.subr.bf16.mxu0 %v3110
    %3182 = vmatpush1.bf16.msra.mxu0 %v3109
    %3183 = vmatprep.subr.bf16.mxu0 %v3118
    %3184 = vmatpush1.bf16.msra.mxu0 %v3117
    %3185 = vmatprep.subr.bf16.mxu0 %v3126
    %3186 = vmatpush1.bf16.msra.mxu0 %v3125
    %3187 = vmatprep.subr.bf16.mxu0 %v3134
    %3188 = vmatpush1.bf16.msra.mxu0 %v3133
    %3189 = vmatprep.subr.bf16.mxu0 %v3142
    %3190 = vmatpush1.bf16.msra.mxu0 %v3141
    %3191 = vmatprep.subr.bf16.mxu0 0
    %3192 = vmatpush1.bf16.msra.mxu0 0
    %3193 = vmatprep.subr.bf16.mxu0 0
    %3194 = vmatpush1.bf16.msra.mxu0 0
    %3195 = vmatprep.subr.bf16.mxu0 0
    %3196 = vmatpush1.bf16.msra.mxu0 0
    %3197 = vmatprep.subr.bf16.mxu0 0
    %3198 = vmatpush1.bf16.msra.mxu0 0
    %3199 = vmatprep.subr.bf16.mxu0 0
    %3200 = vmatpush1.bf16.msra.mxu0 0
    %3201 = vmatprep.subr.bf16.mxu0 0
    %3202 = vmatpush1.bf16.msra.mxu0 0
    %3203 = vmatprep.subr.bf16.mxu0 0
    %3204 = vmatpush1.bf16.msra.mxu0 0
    %3205 = vmatprep.mubr.bf16.mxu0 %v3171
    %3206 = vmatmul.mubr.bf16.gmra.mrb[0].mxu0 %v3167
    %v3207 = vpop.f32.mrb[0].mxu0
    %v3208 = vadd.f32 %v3154, %v3207
    %v3209 = vpop.f32.mrb[0].mxu0
    %v3210 = vadd.f32 %v3154, %v3209
    %v3211 = vpop.f32.mrb[0].mxu0
    %v3212 = vadd.f32 %v3159, %v3211
    %v3213 = vpop.f32.mrb[0].mxu0
    %v3214 = vadd.f32 %v3159, %v3213
    %3215 = vdwg.mxu0
    %3216 = vmatprep.subr.bf16.mxu0 %v3080
    %3217 = vmatpush1.bf16.msra.mxu0 %v3079
    %3218 = vmatprep.subr.bf16.mxu0 %v3088
    %3219 = vmatpush1.bf16.msra.mxu0 %v3087
    %3220 = vmatprep.subr.bf16.mxu0 %v3096
    %3221 = vmatpush1.bf16.msra.mxu0 %v3095
    %3222 = vmatprep.subr.bf16.mxu0 %v3104
    %3223 = vmatpush1.bf16.msra.mxu0 %v3103
    %3224 = vmatprep.subr.bf16.mxu0 %v3112
    %3225 = vmatpush1.bf16.msra.mxu0 %v3111
    %3226 = vmatprep.subr.bf16.mxu0 %v3120
    %3227 = vmatpush1.bf16.msra.mxu0 %v3119
    %3228 = vmatprep.subr.bf16.mxu0 %v3128
    %3229 = vmatpush1.bf16.msra.mxu0 %v3127
    %3230 = vmatprep.subr.bf16.mxu0 %v3136
    %3231 = vmatpush1.bf16.msra.mxu0 %v3135
    %3232 = vmatprep.subr.bf16.mxu0 %v3144
    %3233 = vmatpush1.bf16.msra.mxu0 %v3143
    %3234 = vmatprep.subr.bf16.mxu0 0
    %3235 = vmatpush1.bf16.msra.mxu0 0
    %3236 = vmatprep.subr.bf16.mxu0 0
    %3237 = vmatpush1.bf16.msra.mxu0 0
    %3238 = vmatprep.subr.bf16.mxu0 0
    %3239 = vmatpush1.bf16.msra.mxu0 0
    %3240 = vmatprep.subr.bf16.mxu0 0
    %3241 = vmatpush1.bf16.msra.mxu0 0
    %3242 = vmatprep.subr.bf16.mxu0 0
    %3243 = vmatpush1.bf16.msra.mxu0 0
    %3244 = vmatprep.subr.bf16.mxu0 0
    %3245 = vmatpush1.bf16.msra.mxu0 0
    %3246 = vmatprep.subr.bf16.mxu0 0
    %3247 = vmatpush1.bf16.msra.mxu0 0
    %3248 = vmatprep.mubr.bf16.mxu0 %v3171
    %3249 = vmatmul.mubr.bf16.gmra.mrb[0].mxu0 %v3167
    %v3250 = vpop.f32.mrb[0].mxu0
    %v3251 = vadd.f32 %v3154, %v3250
    %v3252 = vpop.f32.mrb[0].mxu0
    %v3253 = vadd.f32 %v3154, %v3252
    %v3254 = vpop.f32.mrb[0].mxu0
    %v3255 = vadd.f32 %v3159, %v3254
    %v3256 = vpop.f32.mrb[0].mxu0
    %v3257 = vadd.f32 %v3159, %v3256
    %3258 = vdwg.mxu0
    %3259 = vmatprep.subr.bf16.mxu0 %v3082
    %3260 = vmatpush1.bf16.msra.mxu0 %v3081
    %3261 = vmatprep.subr.bf16.mxu0 %v3090
    %3262 = vmatpush1.bf16.msra.mxu0 %v3089
    %3263 = vmatprep.subr.bf16.mxu0 %v3098
    %3264 = vmatpush1.bf16.msra.mxu0 %v3097
    %3265 = vmatprep.subr.bf16.mxu0 %v3106
    %3266 = vmatpush1.bf16.msra.mxu0 %v3105
    %3267 = vmatprep.subr.bf16.mxu0 %v3114
    %3268 = vmatpush1.bf16.msra.mxu0 %v3113
    %3269 = vmatprep.subr.bf16.mxu0 %v3122
    %3270 = vmatpush1.bf16.msra.mxu0 %v3121
    %3271 = vmatprep.subr.bf16.mxu0 %v3130
    %3272 = vmatpush1.bf16.msra.mxu0 %v3129
    %3273 = vmatprep.subr.bf16.mxu0 %v3138
    %3274 = vmatpush1.bf16.msra.mxu0 %v3137
    %3275 = vmatprep.subr.bf16.mxu0 %v3146
    %3276 = vmatpush1.bf16.msra.mxu0 %v3145
    %3277 = vmatprep.subr.bf16.mxu0 0
    %3278 = vmatpush1.bf16.msra.mxu0 0
    %3279 = vmatprep.subr.bf16.mxu0 0
    %3280 = vmatpush1.bf16.msra.mxu0 0
    %3281 = vmatprep.subr.bf16.mxu0 0
    %3282 = vmatpush1.bf16.msra.mxu0 0
    %3283 = vmatprep.subr.bf16.mxu0 0
    %3284 = vmatpush1.bf16.msra.mxu0 0
    %3285 = vmatprep.subr.bf16.mxu0 0
    %3286 = vmatpush1.bf16.msra.mxu0 0
    %3287 = vmatprep.subr.bf16.mxu0 0
    %3288 = vmatpush1.bf16.msra.mxu0 0
    %3289 = vmatprep.subr.bf16.mxu0 0
    %3290 = vmatpush1.bf16.msra.mxu0 0
    %3291 = vmatprep.mubr.bf16.mxu0 %v3171
    %3292 = vmatmul.mubr.bf16.gmra.mrb[0].mxu0 %v3167
    %v3293 = vpop.f32.mrb[0].mxu0
    %v3294 = vadd.f32 %v3154, %v3293
    %v3295 = vpop.f32.mrb[0].mxu0
    %v3296 = vadd.f32 %v3154, %v3295
    %v3297 = vpop.f32.mrb[0].mxu0
    %v3298 = vadd.f32 %v3159, %v3297
    %v3299 = vpop.f32.mrb[0].mxu0
    %v3300 = vadd.f32 %v3159, %v3299
    %3301 = vdwg.mxu0
    %3302 = vmatprep.subr.bf16.mxu0 %v3084
    %3303 = vmatpush1.bf16.msra.mxu0 %v3083
    %3304 = vmatprep.subr.bf16.mxu0 %v3092
    %3305 = vmatpush1.bf16.msra.mxu0 %v3091
    %3306 = vmatprep.subr.bf16.mxu0 %v3100
    %3307 = vmatpush1.bf16.msra.mxu0 %v3099
    %3308 = vmatprep.subr.bf16.mxu0 %v3108
    %3309 = vmatpush1.bf16.msra.mxu0 %v3107
    %3310 = vmatprep.subr.bf16.mxu0 %v3116
    %3311 = vmatpush1.bf16.msra.mxu0 %v3115
    %3312 = vmatprep.subr.bf16.mxu0 %v3124
    %3313 = vmatpush1.bf16.msra.mxu0 %v3123
    %3314 = vmatprep.subr.bf16.mxu0 %v3132
    %3315 = vmatpush1.bf16.msra.mxu0 %v3131
    %3316 = vmatprep.subr.bf16.mxu0 %v3140
    %3317 = vmatpush1.bf16.msra.mxu0 %v3139
    %3318 = vmatprep.subr.bf16.mxu0 %v3148
    %3319 = vmatpush1.bf16.msra.mxu0 %v3147
    %3320 = vmatprep.subr.bf16.mxu0 0
    %3321 = vmatpush1.bf16.msra.mxu0 0
    %3322 = vmatprep.subr.bf16.mxu0 0
    %3323 = vmatpush1.bf16.msra.mxu0 0
    %3324 = vmatprep.subr.bf16.mxu0 0
    %3325 = vmatpush1.bf16.msra.mxu0 0
    %3326 = vmatprep.subr.bf16.mxu0 0
    %3327 = vmatpush1.bf16.msra.mxu0 0
    %3328 = vmatprep.subr.bf16.mxu0 0
    %3329 = vmatpush1.bf16.msra.mxu0 0
    %3330 = vmatprep.subr.bf16.mxu0 0
    %3331 = vmatpush1.bf16.msra.mxu0 0
    %3332 = vmatprep.subr.bf16.mxu0 0
    %3333 = vmatpush1.bf16.msra.mxu0 0
    %3334 = vmatprep.mubr.bf16.mxu0 %v3171
    %3335 = vmatmul.mubr.bf16.gmra.mrb[0].mxu0 %v3167
    %v3336 = vpop.f32.mrb[0].mxu0
    %v3337 = vadd.f32 %v3154, %v3336
    %v3338 = vpop.f32.mrb[0].mxu0
    %v3339 = vadd.f32 %v3154, %v3338
    %v3340 = vpop.f32.mrb[0].mxu0
    %v3341 = vadd.f32 %v3159, %v3340
    %v3342 = vpop.f32.mrb[0].mxu0
    %v3343 = vadd.f32 %v3159, %v3342
    %3344 = vdwg.mxu0
    %v3345 = vadd.f32 %v3208, %v1460
    %v3346 = vadd.f32 %v3210, %v1461
    %v3347 = vadd.f32 %v3251, %v1462
    %v3348 = vadd.f32 %v3253, %v1463
    %v3349 = vadd.f32 %v3294, %v1464
    %v3350 = vadd.f32 %v3296, %v1465
    %v3351 = vadd.f32 %v3337, %v1466
    %v3352 = vadd.f32 %v3339, %v1467
    %v3353 = vadd.f32 %v3212, %v1468
    %v3354 = vadd.f32 %v3214, %v1469
    %v3355 = vadd.f32 %v3255, %v1470
    %v3356 = vadd.f32 %v3257, %v1471
    %v3357 = vadd.f32 %v3298, %v1472
    %v3358 = vadd.f32 %v3300, %v1473
    %v3359 = vadd.f32 %v3341, %v1474
    %v3360 = vadd.f32 %v3343, %v1475
    %v3361 = vmax.f32 %v3345, 0.0
    %v3362 = vmax.f32 %v3346, 0.0
    %v3363 = vmax.f32 %v3347, 0.0
    %v3364 = vmax.f32 %v3348, 0.0
    %v3365 = vmax.f32 %v3349, 0.0
    %v3366 = vmax.f32 %v3350, 0.0
    %v3367 = vmax.f32 %v3351, 0.0
    %v3368 = vmax.f32 %v3352, 0.0
    %v3369 = vmax.f32 %v3353, 0.0
    %v3370 = vmax.f32 %v3354, 0.0
    %v3371 = vmax.f32 %v3355, 0.0
    %v3372 = vmax.f32 %v3356, 0.0
    %v3373 = vmax.f32 %v3357, 0.0
    %v3374 = vmax.f32 %v3358, 0.0
    %v3375 = vmax.f32 %v3359, 0.0
    %v3376 = vmax.f32 %v3360, 0.0
    %v3377 = vld [vmem:[%s8] sm:$0xf]
    %v3378 = vld [vmem:[%s8 + $0x4] sm:$0xf]
    %v3379 = vld [vmem:[%s8 + $0x8] sm:$0xf]
    %v3380 = vld [vmem:[%s8 + $0xc] sm:$0xf]
    %v3381 = vld [vmem:[%s8 + $0x10] sm:$0xf]
    %v3382 = vld [vmem:[%s8 + $0x14] sm:$0xf]
    %v3383 = vld [vmem:[%s8 + $0x18] sm:$0xf]
    %v3384 = vpack.c.bf16 %v3369, %v3361
    %v3385 = vpack.c.bf16 %v3370, %v3362
    %v3386 = vpack.c.bf16 %v3371, %v3363
    %v3387 = vpack.c.bf16 %v3372, %v3364
    %v3388 = vpack.c.bf16 %v3373, %v3365
    %v3389 = vpack.c.bf16 %v3374, %v3366
    %v3390 = vpack.c.bf16 %v3375, %v3367
    %v3391 = vpack.c.bf16 %v3376, %v3368
    %v3392 = vld [vmem:[%s9] sm:$0xff]
    %v3393 = vld [vmem:[%s9 + $0x8] sm:$0xff]
    %v3394 = vld [vmem:[%s9 + $0x10] sm:$0xff]
    %v3395 = vld [vmem:[%s9 + $0x18] sm:$0xff]
    %v3396 = vld [vmem:[%s9 + $0x20] sm:$0xff]
    %v3397 = vld [vmem:[%s9 + $0x28] sm:$0xff]
    %v3398 = vld [vmem:[%s9 + $0x30] sm:$0xff]
    %3400 = vset.pattern.permute.xlu0 0
    %3401 = vperm.xlu0 %3400, %v3392
    %v3402 = vpop.permute.xlu0 %3401
    %3405 = vset.pattern.permute.xlu0 0
    %3406 = vperm.xlu0 %3405, %v3393
    %v3407 = vpop.permute.xlu0 %3406
    %3410 = vset.pattern.permute.xlu0 0
    %3411 = vperm.xlu0 %3410, %v3394
    %v3412 = vpop.permute.xlu0 %3411
    %3415 = vset.pattern.permute.xlu0 0
    %3416 = vperm.xlu0 %3415, %v3395
    %v3417 = vpop.permute.xlu0 %3416
    %3420 = vset.pattern.permute.xlu0 0
    %3421 = vperm.xlu0 %3420, %v3396
    %v3422 = vpop.permute.xlu0 %3421
    %3425 = vset.pattern.permute.xlu0 0
    %3426 = vperm.xlu0 %3425, %v3397
    %v3427 = vpop.permute.xlu0 %3426
    %3430 = vset.pattern.permute.xlu0 0
    %3431 = vperm.xlu0 %3430, %v3398
    %v3432 = vpop.permute.xlu0 %3431
    %v3441 = vunpack.c.l.b16 %v3377
    %v3442 = vunpack.c.l.b16 %v3378
    %v3443 = vunpack.c.l.b16 %v3379
    %v3444 = vunpack.c.l.b16 %v3380
    %v3445 = vunpack.c.l.b16 %v3381
    %v3446 = vunpack.c.l.b16 %v3382
    %v3447 = vunpack.c.l.b16 %v3383
    %v3448 = vpack.c.b16 %v3442, %v3441
    %v3449 = vpack.c.b16 %v3444, %v3443
    %v3450 = vpack.c.b16 %v3446, %v3445
    %v3451 = vpack.c.b16 %v3447, %v3447
    %v3453 = vsel %vm2227, %v3448, 0
    %v3456 = vsel %vm2227, %v3449, 0
    %v3459 = vsel %vm2227, %v3450, 0
    %v3462 = vsel %vm2227, %v3451, 0
    %3464 = vmatprep.subr.bf16.mxu0 %v3385
    %3465 = vmatpush1.bf16.msra.mxu0 %v3384
    %3466 = vmatprep.subr.bf16.mxu0 0
    %3467 = vmatpush1.bf16.msra.mxu0 0
    %3468 = vmatprep.subr.bf16.mxu0 0
    %3469 = vmatpush1.bf16.msra.mxu0 0
    %3470 = vmatprep.subr.bf16.mxu0 0
    %3471 = vmatpush1.bf16.msra.mxu0 0
    %3472 = vmatprep.subr.bf16.mxu0 0
    %3473 = vmatpush1.bf16.msra.mxu0 0
    %3474 = vmatprep.subr.bf16.mxu0 0
    %3475 = vmatpush1.bf16.msra.mxu0 0
    %3476 = vmatprep.subr.bf16.mxu0 0
    %3477 = vmatpush1.bf16.msra.mxu0 0
    %3478 = vmatprep.subr.bf16.mxu0 0
    %3479 = vmatpush1.bf16.msra.mxu0 0
    %3480 = vmatprep.subr.bf16.mxu0 0
    %3481 = vmatpush1.bf16.msra.mxu0 0
    %3482 = vmatprep.subr.bf16.mxu0 0
    %3483 = vmatpush1.bf16.msra.mxu0 0
    %3484 = vmatprep.subr.bf16.mxu0 0
    %3485 = vmatpush1.bf16.msra.mxu0 0
    %3486 = vmatprep.subr.bf16.mxu0 0
    %3487 = vmatpush1.bf16.msra.mxu0 0
    %3488 = vmatprep.subr.bf16.mxu0 0
    %3489 = vmatpush1.bf16.msra.mxu0 0
    %3490 = vmatprep.subr.bf16.mxu0 0
    %3491 = vmatpush1.bf16.msra.mxu0 0
    %3492 = vmatprep.subr.bf16.mxu0 0
    %3493 = vmatpush1.bf16.msra.mxu0 0
    %3494 = vmatprep.subr.bf16.mxu0 0
    %3495 = vmatpush1.bf16.msra.mxu0 0
    %3496 = vmatprep.mubr.bf16.mxu0 0
    %3497 = vmatmul.mubr.bf16.gmra.mrb[0].mxu0 %v3453
    %v3498 = vpop.f32.mrb[0].mxu0
    %v3499 = vadd.f32 %v3402, %v3498
    %v3500 = vpop.f32.mrb[0].mxu0
    %v3501 = vadd.f32 %v3402, %v3500
    %v3502 = vpop.f32.mrb[0].mxu0
    %v3503 = vadd.f32 %v3407, %v3502
    %v3504 = vpop.f32.mrb[0].mxu0
    %v3505 = vadd.f32 %v3407, %v3504
    %3506 = vmatprep.mubr.bf16.mxu0 0
    %3507 = vmatmul.mubr.bf16.gmra.mrb[0].mxu0 %v3456
    %v3508 = vpop.f32.mrb[0].mxu0
    %v3509 = vadd.f32 %v3412, %v3508
    %v3510 = vpop.f32.mrb[0].mxu0
    %v3511 = vadd.f32 %v3412, %v3510
    %v3512 = vpop.f32.mrb[0].mxu0
    %v3513 = vadd.f32 %v3417, %v3512
    %v3514 = vpop.f32.mrb[0].mxu0
    %v3515 = vadd.f32 %v3417, %v3514
    %3516 = vmatprep.mubr.bf16.mxu0 0
    %3517 = vmatmul.mubr.bf16.gmra.mrb[0].mxu0 %v3459
    %v3518 = vpop.f32.mrb[0].mxu0
    %v3519 = vadd.f32 %v3422, %v3518
    %v3520 = vpop.f32.mrb[0].mxu0
    %v3521 = vadd.f32 %v3422, %v3520
    %v3522 = vpop.f32.mrb[0].mxu0
    %v3523 = vadd.f32 %v3427, %v3522
    %v3524 = vpop.f32.mrb[0].mxu0
    %v3525 = vadd.f32 %v3427, %v3524
    %3526 = vmatprep.mubr.bf16.mxu0 0
    %3527 = vmatmul.mubr.bf16.gmra.mrb[0].mxu0 %v3462
    %v3528 = vpop.f32.mrb[0].mxu0
    %v3529 = vadd.f32 %v3432, %v3528
    %v3530 = vpop.f32.mrb[0].mxu0
    %v3531 = vadd.f32 %v3432, %v3530
    %v3532 = vpop.f32.mrb[0].mxu0
    %v3533 = vpop.f32.mrb[0].mxu0
    %3534 = vdwg.mxu0
    %3535 = vmatprep.subr.bf16.mxu0 %v3387
    %3536 = vmatpush1.bf16.msra.mxu0 %v3386
    %3537 = vmatprep.subr.bf16.mxu0 0
    %3538 = vmatpush1.bf16.msra.mxu0 0
    %3539 = vmatprep.subr.bf16.mxu0 0
    %3540 = vmatpush1.bf16.msra.mxu0 0
    %3541 = vmatprep.subr.bf16.mxu0 0
    %3542 = vmatpush1.bf16.msra.mxu0 0
    %3543 = vmatprep.subr.bf16.mxu0 0
    %3544 = vmatpush1.bf16.msra.mxu0 0
    %3545 = vmatprep.subr.bf16.mxu0 0
    %3546 = vmatpush1.bf16.msra.mxu0 0
    %3547 = vmatprep.subr.bf16.mxu0 0
    %3548 = vmatpush1.bf16.msra.mxu0 0
    %3549 = vmatprep.subr.bf16.mxu0 0
    %3550 = vmatpush1.bf16.msra.mxu0 0
    %3551 = vmatprep.subr.bf16.mxu0 0
    %3552 = vmatpush1.bf16.msra.mxu0 0
    %3553 = vmatprep.subr.bf16.mxu0 0
    %3554 = vmatpush1.bf16.msra.mxu0 0
    %3555 = vmatprep.subr.bf16.mxu0 0
    %3556 = vmatpush1.bf16.msra.mxu0 0
    %3557 = vmatprep.subr.bf16.mxu0 0
    %3558 = vmatpush1.bf16.msra.mxu0 0
    %3559 = vmatprep.subr.bf16.mxu0 0
    %3560 = vmatpush1.bf16.msra.mxu0 0
    %3561 = vmatprep.subr.bf16.mxu0 0
    %3562 = vmatpush1.bf16.msra.mxu0 0
    %3563 = vmatprep.subr.bf16.mxu0 0
    %3564 = vmatpush1.bf16.msra.mxu0 0
    %3565 = vmatprep.subr.bf16.mxu0 0
    %3566 = vmatpush1.bf16.msra.mxu0 0
    %3567 = vmatprep.mubr.bf16.mxu0 0
    %3568 = vmatmul.mubr.bf16.gmra.mrb[0].mxu0 %v3453
    %v3569 = vpop.f32.mrb[0].mxu0
    %v3570 = vadd.f32 %v3402, %v3569
    %v3571 = vpop.f32.mrb[0].mxu0
    %v3572 = vadd.f32 %v3402, %v3571
    %v3573 = vpop.f32.mrb[0].mxu0
    %v3574 = vadd.f32 %v3407, %v3573
    %v3575 = vpop.f32.mrb[0].mxu0
    %v3576 = vadd.f32 %v3407, %v3575
    %3577 = vmatprep.mubr.bf16.mxu0 0
    %3578 = vmatmul.mubr.bf16.gmra.mrb[0].mxu0 %v3456
    %v3579 = vpop.f32.mrb[0].mxu0
    %v3580 = vadd.f32 %v3412, %v3579
    %v3581 = vpop.f32.mrb[0].mxu0
    %v3582 = vadd.f32 %v3412, %v3581
    %v3583 = vpop.f32.mrb[0].mxu0
    %v3584 = vadd.f32 %v3417, %v3583
    %v3585 = vpop.f32.mrb[0].mxu0
    %v3586 = vadd.f32 %v3417, %v3585
    %3587 = vmatprep.mubr.bf16.mxu0 0
    %3588 = vmatmul.mubr.bf16.gmra.mrb[0].mxu0 %v3459
    %v3589 = vpop.f32.mrb[0].mxu0
    %v3590 = vadd.f32 %v3422, %v3589
    %v3591 = vpop.f32.mrb[0].mxu0
    %v3592 = vadd.f32 %v3422, %v3591
    %v3593 = vpop.f32.mrb[0].mxu0
    %v3594 = vadd.f32 %v3427, %v3593
    %v3595 = vpop.f32.mrb[0].mxu0
    %v3596 = vadd.f32 %v3427, %v3595
    %3597 = vmatprep.mubr.bf16.mxu0 0
    %3598 = vmatmul.mubr.bf16.gmra.mrb[0].mxu0 %v3462
    %v3599 = vpop.f32.mrb[0].mxu0
    %v3600 = vadd.f32 %v3432, %v3599
    %v3601 = vpop.f32.mrb[0].mxu0
    %v3602 = vadd.f32 %v3432, %v3601
    %v3603 = vpop.f32.mrb[0].mxu0
    %v3604 = vpop.f32.mrb[0].mxu0
    %3605 = vdwg.mxu0
    %3606 = vmatprep.subr.bf16.mxu0 %v3389
    %3607 = vmatpush1.bf16.msra.mxu0 %v3388
    %3608 = vmatprep.subr.bf16.mxu0 0
    %3609 = vmatpush1.bf16.msra.mxu0 0
    %3610 = vmatprep.subr.bf16.mxu0 0
    %3611 = vmatpush1.bf16.msra.mxu0 0
    %3612 = vmatprep.subr.bf16.mxu0 0
    %3613 = vmatpush1.bf16.msra.mxu0 0
    %3614 = vmatprep.subr.bf16.mxu0 0
    %3615 = vmatpush1.bf16.msra.mxu0 0
    %3616 = vmatprep.subr.bf16.mxu0 0
    %3617 = vmatpush1.bf16.msra.mxu0 0
    %3618 = vmatprep.subr.bf16.mxu0 0
    %3619 = vmatpush1.bf16.msra.mxu0 0
    %3620 = vmatprep.subr.bf16.mxu0 0
    %3621 = vmatpush1.bf16.msra.mxu0 0
    %3622 = vmatprep.subr.bf16.mxu0 0
    %3623 = vmatpush1.bf16.msra.mxu0 0
    %3624 = vmatprep.subr.bf16.mxu0 0
    %3625 = vmatpush1.bf16.msra.mxu0 0
    %3626 = vmatprep.subr.bf16.mxu0 0
    %3627 = vmatpush1.bf16.msra.mxu0 0
    %3628 = vmatprep.subr.bf16.mxu0 0
    %3629 = vmatpush1.bf16.msra.mxu0 0
    %3630 = vmatprep.subr.bf16.mxu0 0
    %3631 = vmatpush1.bf16.msra.mxu0 0
    %3632 = vmatprep.subr.bf16.mxu0 0
    %3633 = vmatpush1.bf16.msra.mxu0 0
    %3634 = vmatprep.subr.bf16.mxu0 0
    %3635 = vmatpush1.bf16.msra.mxu0 0
    %3636 = vmatprep.subr.bf16.mxu0 0
    %3637 = vmatpush1.bf16.msra.mxu0 0
    %3638 = vmatprep.mubr.bf16.mxu0 0
    %3639 = vmatmul.mubr.bf16.gmra.mrb[0].mxu0 %v3453
    %v3640 = vpop.f32.mrb[0].mxu0
    %v3641 = vadd.f32 %v3402, %v3640
    %v3642 = vpop.f32.mrb[0].mxu0
    %v3643 = vadd.f32 %v3402, %v3642
    %v3644 = vpop.f32.mrb[0].mxu0
    %v3645 = vadd.f32 %v3407, %v3644
    %v3646 = vpop.f32.mrb[0].mxu0
    %v3647 = vadd.f32 %v3407, %v3646
    %3648 = vmatprep.mubr.bf16.mxu0 0
    %3649 = vmatmul.mubr.bf16.gmra.mrb[0].mxu0 %v3456
    %v3650 = vpop.f32.mrb[0].mxu0
    %v3651 = vadd.f32 %v3412, %v3650
    %v3652 = vpop.f32.mrb[0].mxu0
    %v3653 = vadd.f32 %v3412, %v3652
    %v3654 = vpop.f32.mrb[0].mxu0
    %v3655 = vadd.f32 %v3417, %v3654
    %v3656 = vpop.f32.mrb[0].mxu0
    %v3657 = vadd.f32 %v3417, %v3656
    %3658 = vmatprep.mubr.bf16.mxu0 0
    %3659 = vmatmul.mubr.bf16.gmra.mrb[0].mxu0 %v3459
    %v3660 = vpop.f32.mrb[0].mxu0
    %v3661 = vadd.f32 %v3422, %v3660
    %v3662 = vpop.f32.mrb[0].mxu0
    %v3663 = vadd.f32 %v3422, %v3662
    %v3664 = vpop.f32.mrb[0].mxu0
    %v3665 = vadd.f32 %v3427, %v3664
    %v3666 = vpop.f32.mrb[0].mxu0
    %v3667 = vadd.f32 %v3427, %v3666
    %3668 = vmatprep.mubr.bf16.mxu0 0
    %3669 = vmatmul.mubr.bf16.gmra.mrb[0].mxu0 %v3462
    %v3670 = vpop.f32.mrb[0].mxu0
    %v3671 = vadd.f32 %v3432, %v3670
    %v3672 = vpop.f32.mrb[0].mxu0
    %v3673 = vadd.f32 %v3432, %v3672
    %v3674 = vpop.f32.mrb[0].mxu0
    %v3675 = vpop.f32.mrb[0].mxu0
    %3676 = vdwg.mxu0
    %3677 = vmatprep.subr.bf16.mxu0 %v3391
    %3678 = vmatpush1.bf16.msra.mxu0 %v3390
    %3679 = vmatprep.subr.bf16.mxu0 0
    %3680 = vmatpush1.bf16.msra.mxu0 0
    %3681 = vmatprep.subr.bf16.mxu0 0
    %3682 = vmatpush1.bf16.msra.mxu0 0
    %3683 = vmatprep.subr.bf16.mxu0 0
    %3684 = vmatpush1.bf16.msra.mxu0 0
    %3685 = vmatprep.subr.bf16.mxu0 0
    %3686 = vmatpush1.bf16.msra.mxu0 0
    %3687 = vmatprep.subr.bf16.mxu0 0
    %3688 = vmatpush1.bf16.msra.mxu0 0
    %3689 = vmatprep.subr.bf16.mxu0 0
    %3690 = vmatpush1.bf16.msra.mxu0 0
    %3691 = vmatprep.subr.bf16.mxu0 0
    %3692 = vmatpush1.bf16.msra.mxu0 0
    %3693 = vmatprep.subr.bf16.mxu0 0
    %3694 = vmatpush1.bf16.msra.mxu0 0
    %3695 = vmatprep.subr.bf16.mxu0 0
    %3696 = vmatpush1.bf16.msra.mxu0 0
    %3697 = vmatprep.subr.bf16.mxu0 0
    %3698 = vmatpush1.bf16.msra.mxu0 0
    %3699 = vmatprep.subr.bf16.mxu0 0
    %3700 = vmatpush1.bf16.msra.mxu0 0
    %3701 = vmatprep.subr.bf16.mxu0 0
    %3702 = vmatpush1.bf16.msra.mxu0 0
    %3703 = vmatprep.subr.bf16.mxu0 0
    %3704 = vmatpush1.bf16.msra.mxu0 0
    %3705 = vmatprep.subr.bf16.mxu0 0
    %3706 = vmatpush1.bf16.msra.mxu0 0
    %3707 = vmatprep.subr.bf16.mxu0 0
    %3708 = vmatpush1.bf16.msra.mxu0 0
    %3709 = vmatprep.mubr.bf16.mxu0 0
    %3710 = vmatmul.mubr.bf16.gmra.mrb[0].mxu0 %v3453
    %v3711 = vpop.f32.mrb[0].mxu0
    %v3712 = vadd.f32 %v3402, %v3711
    %v3713 = vpop.f32.mrb[0].mxu0
    %v3714 = vadd.f32 %v3402, %v3713
    %v3715 = vpop.f32.mrb[0].mxu0
    %v3716 = vadd.f32 %v3407, %v3715
    %v3717 = vpop.f32.mrb[0].mxu0
    %v3718 = vadd.f32 %v3407, %v3717
    %3719 = vmatprep.mubr.bf16.mxu0 0
    %3720 = vmatmul.mubr.bf16.gmra.mrb[0].mxu0 %v3456
    %v3721 = vpop.f32.mrb[0].mxu0
    %v3722 = vadd.f32 %v3412, %v3721
    %v3723 = vpop.f32.mrb[0].mxu0
    %v3724 = vadd.f32 %v3412, %v3723
    %v3725 = vpop.f32.mrb[0].mxu0
    %v3726 = vadd.f32 %v3417, %v3725
    %v3727 = vpop.f32.mrb[0].mxu0
    %v3728 = vadd.f32 %v3417, %v3727
    %3729 = vmatprep.mubr.bf16.mxu0 0
    %3730 = vmatmul.mubr.bf16.gmra.mrb[0].mxu0 %v3459
    %v3731 = vpop.f32.mrb[0].mxu0
    %v3732 = vadd.f32 %v3422, %v3731
    %v3733 = vpop.f32.mrb[0].mxu0
    %v3734 = vadd.f32 %v3422, %v3733
    %v3735 = vpop.f32.mrb[0].mxu0
    %v3736 = vadd.f32 %v3427, %v3735
    %v3737 = vpop.f32.mrb[0].mxu0
    %v3738 = vadd.f32 %v3427, %v3737
    %3739 = vmatprep.mubr.bf16.mxu0 0
    %3740 = vmatmul.mubr.bf16.gmra.mrb[0].mxu0 %v3462
    %v3741 = vpop.f32.mrb[0].mxu0
    %v3742 = vadd.f32 %v3432, %v3741
    %v3743 = vpop.f32.mrb[0].mxu0
    %v3744 = vadd.f32 %v3432, %v3743
    %v3745 = vpop.f32.mrb[0].mxu0
    %v3746 = vpop.f32.mrb[0].mxu0
    %3747 = vdwg.mxu0
    %3748 = vst [vmem:[%s20] sm:$0xff] %v3499
    %3749 = vst [vmem:[%s20 + $0x8] sm:$0xff] %v3501
    %3750 = vst [vmem:[%s20 + $0x10] sm:$0xff] %v3570
    %3751 = vst [vmem:[%s20 + $0x18] sm:$0xff] %v3572
    %3752 = vst [vmem:[%s20 + $0x20] sm:$0xff] %v3641
    %3753 = vst [vmem:[%s20 + $0x28] sm:$0xff] %v3643
    %3754 = vst [vmem:[%s20 + $0x30] sm:$0xff] %v3712
    %3755 = vst [vmem:[%s20 + $0x38] sm:$0xff] %v3714
    %3756 = vst [vmem:[%s20 + $0x40] sm:$0xff] %v3503
    %3757 = vst [vmem:[%s20 + $0x48] sm:$0xff] %v3505
    %3758 = vst [vmem:[%s20 + $0x50] sm:$0xff] %v3574
    %3759 = vst [vmem:[%s20 + $0x58] sm:$0xff] %v3576
    %3760 = vst [vmem:[%s20 + $0x60] sm:$0xff] %v3645
    %3761 = vst [vmem:[%s20 + $0x68] sm:$0xff] %v3647
    %3762 = vst [vmem:[%s20 + $0x70] sm:$0xff] %v3716
    %3763 = vst [vmem:[%s20 + $0x78] sm:$0xff] %v3718
    %3764 = vst [vmem:[%s20 + $0x80] sm:$0xff] %v3509
    %3765 = vst [vmem:[%s20 + $0x88] sm:$0xff] %v3511
    %3766 = vst [vmem:[%s20 + $0x90] sm:$0xff] %v3580
    %3767 = vst [vmem:[%s20 + $0x98] sm:$0xff] %v3582
    %3768 = vst [vmem:[%s20 + $0xa0] sm:$0xff] %v3651
    %3769 = vst [vmem:[%s20 + $0xa8] sm:$0xff] %v3653
    %3770 = vst [vmem:[%s20 + $0xb0] sm:$0xff] %v3722
    %3771 = vst [vmem:[%s20 + $0xb8] sm:$0xff] %v3724
    %3772 = vst [vmem:[%s20 + $0xc0] sm:$0xff] %v3513
    %3773 = vst [vmem:[%s20 + $0xc8] sm:$0xff] %v3515
    %3774 = vst [vmem:[%s20 + $0xd0] sm:$0xff] %v3584
    %3775 = vst [vmem:[%s20 + $0xd8] sm:$0xff] %v3586
    %3776 = vst [vmem:[%s20 + $0xe0] sm:$0xff] %v3655
    %3777 = vst [vmem:[%s20 + $0xe8] sm:$0xff] %v3657
    %3778 = vst [vmem:[%s20 + $0xf0] sm:$0xff] %v3726
    %3779 = vst [vmem:[%s20 + $0xf8] sm:$0xff] %v3728
    %3780 = vst [vmem:[%s20 + $0x100] sm:$0xff] %v3519
    %3781 = vst [vmem:[%s20 + $0x108] sm:$0xff] %v3521
    %3782 = vst [vmem:[%s20 + $0x110] sm:$0xff] %v3590
    %3783 = vst [vmem:[%s20 + $0x118] sm:$0xff] %v3592
    %3784 = vst [vmem:[%s20 + $0x120] sm:$0xff] %v3661
    %3785 = vst [vmem:[%s20 + $0x128] sm:$0xff] %v3663
    %3786 = vst [vmem:[%s20 + $0x130] sm:$0xff] %v3732
    %3787 = vst [vmem:[%s20 + $0x138] sm:$0xff] %v3734
    %3788 = vst [vmem:[%s20 + $0x140] sm:$0xff] %v3523
    %3789 = vst [vmem:[%s20 + $0x148] sm:$0xff] %v3525
    %3790 = vst [vmem:[%s20 + $0x150] sm:$0xff] %v3594
    %3791 = vst [vmem:[%s20 + $0x158] sm:$0xff] %v3596
    %3792 = vst [vmem:[%s20 + $0x160] sm:$0xff] %v3665
    %3793 = vst [vmem:[%s20 + $0x168] sm:$0xff] %v3667
    %3794 = vst [vmem:[%s20 + $0x170] sm:$0xff] %v3736
    %3795 = vst [vmem:[%s20 + $0x178] sm:$0xff] %v3738
    %3796 = vst [vmem:[%s20 + $0x180] sm:$0xff] %v3529
    %3797 = vst [vmem:[%s20 + $0x188] sm:$0xff] %v3531
    %3798 = vst [vmem:[%s20 + $0x190] sm:$0xff] %v3600
    %3799 = vst [vmem:[%s20 + $0x198] sm:$0xff] %v3602
    %3800 = vst [vmem:[%s20 + $0x1a0] sm:$0xff] %v3671
    %3801 = vst [vmem:[%s20 + $0x1a8] sm:$0xff] %v3673
    %3802 = vst [vmem:[%s20 + $0x1b0] sm:$0xff] %v3742
    %3803 = vst [vmem:[%s20 + $0x1b8] sm:$0xff] %v3744
    %v3804 = vxor.u32 %v3499, 2147483648
    %v3805 = vxor.u32 %v3501, 2147483648
    %v3806 = vxor.u32 %v3570, 2147483648
    %v3807 = vxor.u32 %v3572, 2147483648
    %v3808 = vxor.u32 %v3641, 2147483648
    %v3809 = vxor.u32 %v3643, 2147483648
    %v3810 = vxor.u32 %v3712, 2147483648
    %v3811 = vxor.u32 %v3714, 2147483648
    %v3812 = vmul.f32 %v3804, 1.442695
    %v3813 = vpow.pop %v3812
    %v3814 = vmul.f32 %v3805, 1.442695
    %v3815 = vpow.pop %v3814
    %v3816 = vmul.f32 %v3806, 1.442695
    %v3817 = vpow.pop %v3816
    %v3818 = vmul.f32 %v3807, 1.442695
    %v3819 = vpow.pop %v3818
    %v3820 = vmul.f32 %v3808, 1.442695
    %v3821 = vpow.pop %v3820
    %v3822 = vmul.f32 %v3809, 1.442695
    %v3823 = vpow.pop %v3822
    %v3824 = vmul.f32 %v3810, 1.442695
    %v3825 = vpow.pop %v3824
    %v3826 = vmul.f32 %v3811, 1.442695
    %v3827 = vpow.pop %v3826
    %v3828 = vadd.f32 %v3813, 1.0
    %v3829 = vadd.f32 %v3815, 1.0
    %v3830 = vadd.f32 %v3817, 1.0
    %v3831 = vadd.f32 %v3819, 1.0
    %v3832 = vadd.f32 %v3821, 1.0
    %v3833 = vadd.f32 %v3823, 1.0
    %v3834 = vadd.f32 %v3825, 1.0
    %v3835 = vadd.f32 %v3827, 1.0
    %v3836 = vrcp.pop %v3828
    %v3837 = vmul.f32 1.0, %v3836
    %v3838 = vrcp.pop %v3829
    %v3839 = vmul.f32 1.0, %v3838
    %v3840 = vrcp.pop %v3830
    %v3841 = vmul.f32 1.0, %v3840
    %v3842 = vrcp.pop %v3831
    %v3843 = vmul.f32 1.0, %v3842
    %v3844 = vrcp.pop %v3832
    %v3845 = vmul.f32 1.0, %v3844
    %v3846 = vrcp.pop %v3833
    %v3847 = vmul.f32 1.0, %v3846
    %v3848 = vrcp.pop %v3834
    %v3849 = vmul.f32 1.0, %v3848
    %v3850 = vrcp.pop %v3835
    %v3851 = vmul.f32 1.0, %v3850
    %v3860 = vrot.slane %v3837, 1
    %v3861 = vrot.slane %v3839, 1
    %v3862 = vrot.slane %v3841, 1
    %v3863 = vrot.slane %v3843, 1
    %v3864 = vrot.slane %v3845, 1
    %v3865 = vrot.slane %v3847, 1
    %v3866 = vrot.slane %v3849, 1
    %v3867 = vrot.slane %v3851, 1
    %v3876 = vadd.f32 %v3837, %v3860
    %v3877 = vadd.f32 %v3839, %v3861
    %v3878 = vadd.f32 %v3841, %v3862
    %v3879 = vadd.f32 %v3843, %v3863
    %v3880 = vadd.f32 %v3845, %v3864
    %v3881 = vadd.f32 %v3847, %v3865
    %v3882 = vadd.f32 %v3849, %v3866
    %v3883 = vadd.f32 %v3851, %v3867
    %v3884 = vmul.f32 %v3876, 0.5
    %v3885 = vmul.f32 %v3877, 0.5
    %v3886 = vmul.f32 %v3878, 0.5
    %v3887 = vmul.f32 %v3879, 0.5
    %v3888 = vmul.f32 %v3880, 0.5
    %v3889 = vmul.f32 %v3881, 0.5
    %v3890 = vmul.f32 %v3882, 0.5
    %v3891 = vmul.f32 %v3883, 0.5
    %v3892 = vsub.f32 1.0, %v3884
    %v3893 = vsub.f32 1.0, %v3885
    %v3894 = vsub.f32 1.0, %v3886
    %v3895 = vsub.f32 1.0, %v3887
    %v3896 = vsub.f32 1.0, %v3888
    %v3897 = vsub.f32 1.0, %v3889
    %v3898 = vsub.f32 1.0, %v3890
    %v3899 = vsub.f32 1.0, %v3891
    %v3900 = vld [vmem:[%s1] sm:$0xff]
    %v3901 = vshra.s32 %v82, 3
    %v3902 = vshra.s32 %v83, 3
    %v3903 = vshra.s32 %v84, 3
    %v3904 = vshra.s32 %v85, 3
    %v3905 = vshra.s32 %v86, 3
    %v3906 = vshra.s32 %v87, 3
    %v3907 = vshra.s32 %v88, 3
    %v3908 = vshra.s32 %v89, 3
    %v3909 = vshll.u32 %v3901, 2
    %v3910 = vshll.u32 %v3902, 2
    %v3911 = vshll.u32 %v3903, 2
    %v3912 = vshll.u32 %v3904, 2
    %v3913 = vshll.u32 %v3905, 2
    %v3914 = vshll.u32 %v3906, 2
    %v3915 = vshll.u32 %v3907, 2
    %v3916 = vshll.u32 %v3908, 2
    %v3917 = vshra.s32 %v90, 3
    %v3918 = vshra.s32 %v91, 3
    %v3919 = vshra.s32 %v92, 3
    %v3920 = vshra.s32 %v93, 3
    %v3921 = vshra.s32 %v94, 3
    %v3922 = vshra.s32 %v95, 3
    %v3923 = vshra.s32 %v96, 3
    %v3924 = vshra.s32 %v97, 3
    %v3925 = vadd.s32 %v3909, %v3917
    %v3926 = vadd.s32 %v3910, %v3918
    %v3927 = vadd.s32 %v3911, %v3919
    %v3928 = vadd.s32 %v3912, %v3920
    %v3929 = vadd.s32 %v3913, %v3921
    %v3930 = vadd.s32 %v3914, %v3922
    %v3931 = vadd.s32 %v3915, %v3923
    %v3932 = vadd.s32 %v3916, %v3924
    %vm3933 = vcmp.gt.f32.partialorder %v3900, 0.5
    %v3934 = vcombine.low %v3925, %v3926
    %v3935 = vcombine.low %v3927, %v3928
    %v3936 = vcombine.low %v3929, %v3930
    %v3937 = vcombine.low %v3931, %v3932
    %v3939 = vunpack.c.l.s4 1966171168
    %v3940 = vunpack.c.0.s8 %v3939
    %v3941 = vlaneseq
    %v3942 = vshrl.u32 %v3941, 7
    %v3943 = vsub.s32 %v3940, %v3942
    %v3944 = vrot.slane %v3934, %v3943
    %v3946 = vunpack.c.l.s4 1966171168
    %v3947 = vunpack.c.0.s8 %v3946
    %v3948 = vlaneseq
    %v3949 = vshrl.u32 %v3948, 7
    %v3950 = vsub.s32 %v3947, %v3949
    %v3951 = vrot.slane %v3935, %v3950
    %v3953 = vunpack.c.l.s4 1966171168
    %v3954 = vunpack.c.0.s8 %v3953
    %v3955 = vlaneseq
    %v3956 = vshrl.u32 %v3955, 7
    %v3957 = vsub.s32 %v3954, %v3956
    %v3958 = vrot.slane %v3936, %v3957
    %v3960 = vunpack.c.l.s4 1966171168
    %v3961 = vunpack.c.0.s8 %v3960
    %v3962 = vlaneseq
    %v3963 = vshrl.u32 %v3962, 7
    %v3964 = vsub.s32 %v3961, %v3963
    %v3965 = vrot.slane %v3937, %v3964
    %v3966 = vcombine.low %v3944, %v3951
    %v3967 = vcombine.low %v3958, %v3965
    %v3969 = vunpack.c.l.s4 1966171168
    %v3970 = vunpack.c.0.s8 %v3969
    %v3971 = vlaneseq
    %v3972 = vshrl.u32 %v3971, 7
    %v3973 = vsub.s32 %v3970, %v3972
    %v3974 = vrot.slane %v3966, %v3973
    %v3976 = vunpack.c.l.s4 1966171168
    %v3977 = vunpack.c.0.s8 %v3976
    %v3978 = vlaneseq
    %v3979 = vshrl.u32 %v3978, 7
    %v3980 = vsub.s32 %v3977, %v3979
    %v3981 = vrot.slane %v3967, %v3980
    %v3982 = vcombine.low %v3974, %v3981
    %v3983 = vsel %vm3933, %v3982, 0
    %3984 = vst [vmem:[%s21] sm:$0xff] %v3983
    %v3986 = vlaneseq
    %v3987 = vshrl.u32 %v3986, 7
    %v3988 = vsub.s32 0, %v3987
    %v3989 = vrot.slane %v3900, %v3988
    %v3990 = vlaneseq
    %v3991 = vshrl.u32 %v3990, 7
    %v3992 = vsub.s32 1, %v3991
    %v3993 = vrot.slane %v3900, %v3992
    %v3994 = vlaneseq
    %v3995 = vshrl.u32 %v3994, 7
    %v3996 = vsub.s32 2, %v3995
    %v3997 = vrot.slane %v3900, %v3996
    %v3998 = vlaneseq
    %v3999 = vshrl.u32 %v3998, 7
    %v4000 = vsub.s32 3, %v3999
    %v4001 = vrot.slane %v3900, %v4000
    %v4002 = vlaneseq
    %v4003 = vshrl.u32 %v4002, 7
    %v4004 = vsub.s32 4, %v4003
    %v4005 = vrot.slane %v3900, %v4004
    %v4006 = vlaneseq
    %v4007 = vshrl.u32 %v4006, 7
    %v4008 = vsub.s32 5, %v4007
    %v4009 = vrot.slane %v3900, %v4008
    %v4010 = vlaneseq
    %v4011 = vshrl.u32 %v4010, 7
    %v4012 = vsub.s32 6, %v4011
    %v4013 = vrot.slane %v3900, %v4012
    %v4014 = vlaneseq
    %v4015 = vshrl.u32 %v4014, 7
    %v4016 = vsub.s32 7, %v4015
    %v4017 = vrot.slane %v3900, %v4016
    %4026 = vrot.lane.b32.xlu0 %v3989, 127
    %v4027 = vpop.permute.xlu0 %4026
    %4028 = vrot.lane.b32.xlu0 %v3993, 127
    %v4029 = vpop.permute.xlu0 %4028
    %4030 = vrot.lane.b32.xlu0 %v3997, 127
    %v4031 = vpop.permute.xlu0 %4030
    %4032 = vrot.lane.b32.xlu0 %v4001, 127
    %v4033 = vpop.permute.xlu0 %4032
    %4034 = vrot.lane.b32.xlu0 %v4005, 127
    %v4035 = vpop.permute.xlu0 %4034
    %4036 = vrot.lane.b32.xlu0 %v4009, 127
    %v4037 = vpop.permute.xlu0 %4036
    %4038 = vrot.lane.b32.xlu0 %v4013, 127
    %v4039 = vpop.permute.xlu0 %4038
    %4040 = vrot.lane.b32.xlu0 %v4017, 127
    %v4041 = vpop.permute.xlu0 %4040
    %v4042 = vsel %vm868, %v4039, %v4041
    %v4043 = vsel %vm868, %v4037, %v4039
    %v4044 = vsel %vm868, %v4035, %v4037
    %v4045 = vsel %vm868, %v4033, %v4035
    %v4046 = vsel %vm868, %v4031, %v4033
    %v4047 = vsel %vm868, %v4029, %v4031
    %v4048 = vsel %vm868, %v4027, %v4029
    %v4049 = vsel %vm868, %v4041, %v4027
    %4050 = vrot.lane.b32.xlu0 %v3989, 96
    %v4051 = vpop.permute.xlu0 %4050
    %4052 = vrot.lane.b32.xlu0 %v3993, 96
    %v4053 = vpop.permute.xlu0 %4052
    %4054 = vrot.lane.b32.xlu0 %v3997, 96
    %v4055 = vpop.permute.xlu0 %4054
    %4056 = vrot.lane.b32.xlu0 %v4001, 96
    %v4057 = vpop.permute.xlu0 %4056
    %4058 = vrot.lane.b32.xlu0 %v4005, 96
    %v4059 = vpop.permute.xlu0 %4058
    %4060 = vrot.lane.b32.xlu0 %v4009, 96
    %v4061 = vpop.permute.xlu0 %4060
    %4062 = vrot.lane.b32.xlu0 %v4013, 96
    %v4063 = vpop.permute.xlu0 %4062
    %4064 = vrot.lane.b32.xlu0 %v4017, 96
    %v4065 = vpop.permute.xlu0 %4064
    %v4066 = vsel %vm1174, %v4063, %v4065
    %v4067 = vsel %vm1174, %v4061, %v4063
    %v4068 = vsel %vm1174, %v4059, %v4061
    %v4069 = vsel %vm1174, %v4057, %v4059
    %v4070 = vsel %vm1174, %v4055, %v4057
    %v4071 = vsel %vm1174, %v4053, %v4055
    %v4072 = vsel %vm1174, %v4051, %v4053
    %v4073 = vsel %vm1174, %v4065, %v4051
    %4074 = vrot.lane.b32.xlu0 %v3892, 127
    %v4075 = vpop.permute.xlu0 %4074
    %4076 = vrot.lane.b32.xlu0 %v3893, 127
    %v4077 = vpop.permute.xlu0 %4076
    %4078 = vrot.lane.b32.xlu0 %v3894, 127
    %v4079 = vpop.permute.xlu0 %4078
    %4080 = vrot.lane.b32.xlu0 %v3895, 127
    %v4081 = vpop.permute.xlu0 %4080
    %4082 = vrot.lane.b32.xlu0 %v3896, 127
    %v4083 = vpop.permute.xlu0 %4082
    %4084 = vrot.lane.b32.xlu0 %v3897, 127
    %v4085 = vpop.permute.xlu0 %4084
    %4086 = vrot.lane.b32.xlu0 %v3898, 127
    %v4087 = vpop.permute.xlu0 %4086
    %4088 = vrot.lane.b32.xlu0 %v3899, 127
    %v4089 = vpop.permute.xlu0 %4088
    %v4090 = vsel %vm868, %v4087, %v4089
    %v4091 = vsel %vm868, %v4085, %v4087
    %v4092 = vsel %vm868, %v4083, %v4085
    %v4093 = vsel %vm868, %v4081, %v4083
    %v4094 = vsel %vm868, %v4079, %v4081
    %v4095 = vsel %vm868, %v4077, %v4079
    %v4096 = vsel %vm868, %v4075, %v4077
    %v4097 = vsel %vm868, %v4089, %v4075
    %4098 = vrot.lane.b32.xlu0 %v3892, 96
    %v4099 = vpop.permute.xlu0 %4098
    %4100 = vrot.lane.b32.xlu0 %v3893, 96
    %v4101 = vpop.permute.xlu0 %4100
    %4102 = vrot.lane.b32.xlu0 %v3894, 96
    %v4103 = vpop.permute.xlu0 %4102
    %4104 = vrot.lane.b32.xlu0 %v3895, 96
    %v4105 = vpop.permute.xlu0 %4104
    %4106 = vrot.lane.b32.xlu0 %v3896, 96
    %v4107 = vpop.permute.xlu0 %4106
    %4108 = vrot.lane.b32.xlu0 %v3897, 96
    %v4109 = vpop.permute.xlu0 %4108
    %4110 = vrot.lane.b32.xlu0 %v3898, 96
    %v4111 = vpop.permute.xlu0 %4110
    %4112 = vrot.lane.b32.xlu0 %v3899, 96
    %v4113 = vpop.permute.xlu0 %4112
    %v4114 = vsel %vm1174, %v4111, %v4113
    %v4115 = vsel %vm1174, %v4109, %v4111
    %v4116 = vsel %vm1174, %v4107, %v4109
    %v4117 = vsel %vm1174, %v4105, %v4107
    %v4118 = vsel %vm1174, %v4103, %v4105
    %v4119 = vsel %vm1174, %v4101, %v4103
    %v4120 = vsel %vm1174, %v4099, %v4101
    %v4121 = vsel %vm1174, %v4113, %v4099
    %v4122 = vshra.s32 %v515, 3
    %v4123 = vshra.s32 %v516, 3
    %v4124 = vshra.s32 %v517, 3
    %v4125 = vshra.s32 %v518, 3
    %v4126 = vshra.s32 %v519, 3
    %v4127 = vshra.s32 %v520, 3
    %v4128 = vshra.s32 %v521, 3
    %v4129 = vshra.s32 %v522, 3
    %v4130 = vadd.s32 %v3909, %v4122
    %v4131 = vadd.s32 %v3910, %v4123
    %v4132 = vadd.s32 %v3911, %v4124
    %v4133 = vadd.s32 %v3912, %v4125
    %v4134 = vadd.s32 %v3913, %v4126
    %v4135 = vadd.s32 %v3914, %v4127
    %v4136 = vadd.s32 %v3915, %v4128
    %v4137 = vadd.s32 %v3916, %v4129
    %v4138 = vshra.s32 %v1014, 3
    %v4139 = vshra.s32 %v1015, 3
    %v4140 = vshra.s32 %v1016, 3
    %v4141 = vshra.s32 %v1017, 3
    %v4142 = vshra.s32 %v1018, 3
    %v4143 = vshra.s32 %v1019, 3
    %v4144 = vshra.s32 %v1020, 3
    %v4145 = vshra.s32 %v1021, 3
    %v4146 = vshll.u32 %v4138, 2
    %v4147 = vshll.u32 %v4139, 2
    %v4148 = vshll.u32 %v4140, 2
    %v4149 = vshll.u32 %v4141, 2
    %v4150 = vshll.u32 %v4142, 2
    %v4151 = vshll.u32 %v4143, 2
    %v4152 = vshll.u32 %v4144, 2
    %v4153 = vshll.u32 %v4145, 2
    %v4154 = vadd.s32 %v4146, %v3917
    %v4155 = vadd.s32 %v4147, %v3918
    %v4156 = vadd.s32 %v4148, %v3919
    %v4157 = vadd.s32 %v4149, %v3920
    %v4158 = vadd.s32 %v4150, %v3921
    %v4159 = vadd.s32 %v4151, %v3922
    %v4160 = vadd.s32 %v4152, %v3923
    %v4161 = vadd.s32 %v4153, %v3924
    %vm4162 = vcmp.gt.f32.partialorder %v4048, 0.5
    %vm4163 = vcmp.gt.f32.partialorder %v4047, 0.5
    %vm4164 = vcmp.gt.f32.partialorder %v4046, 0.5
    %vm4165 = vcmp.gt.f32.partialorder %v4045, 0.5
    %vm4166 = vcmp.gt.f32.partialorder %v4044, 0.5
    %vm4167 = vcmp.gt.f32.partialorder %v4043, 0.5
    %vm4168 = vcmp.gt.f32.partialorder %v4042, 0.5
    %vm4169 = vcmp.gt.f32.partialorder %v4049, 0.5
    %v4170 = vsel %vm4162, %v4130, 0
    %v4171 = vsel %vm4163, %v4131, 0
    %v4172 = vsel %vm4164, %v4132, 0
    %v4173 = vsel %vm4165, %v4133, 0
    %v4174 = vsel %vm4166, %v4134, 0
    %v4175 = vsel %vm4167, %v4135, 0
    %v4176 = vsel %vm4168, %v4136, 0
    %v4177 = vsel %vm4169, %v4137, 0
    %vm4178 = vcmp.gt.f32.partialorder %v4072, 0.5
    %vm4179 = vcmp.gt.f32.partialorder %v4071, 0.5
    %vm4180 = vcmp.gt.f32.partialorder %v4070, 0.5
    %vm4181 = vcmp.gt.f32.partialorder %v4069, 0.5
    %vm4182 = vcmp.gt.f32.partialorder %v4068, 0.5
    %vm4183 = vcmp.gt.f32.partialorder %v4067, 0.5
    %vm4184 = vcmp.gt.f32.partialorder %v4066, 0.5
    %vm4185 = vcmp.gt.f32.partialorder %v4073, 0.5
    %v4186 = vsel %vm4178, %v4154, 0
    %v4187 = vsel %vm4179, %v4155, 0
    %v4188 = vsel %vm4180, %v4156, 0
    %v4189 = vsel %vm4181, %v4157, 0
    %v4190 = vsel %vm4182, %v4158, 0
    %v4191 = vsel %vm4183, %v4159, 0
    %v4192 = vsel %vm4184, %v4160, 0
    %v4193 = vsel %vm4185, %v4161, 0
    %vm4194 = vcmp.lt.s32.totalorder %v90, 31
    %vm4195 = vcmp.lt.s32.totalorder %v91, 31
    %vm4196 = vcmp.lt.s32.totalorder %v92, 31
    %vm4197 = vcmp.lt.s32.totalorder %v93, 31
    %vm4198 = vcmp.lt.s32.totalorder %v94, 31
    %vm4199 = vcmp.lt.s32.totalorder %v95, 31
    %vm4200 = vcmp.lt.s32.totalorder %v96, 31
    %vm4201 = vcmp.lt.s32.totalorder %v97, 31
    %v4202 = vsel %vm4194, 1, 0
    %v4203 = vsel %vm4195, 1, 0
    %v4204 = vsel %vm4196, 1, 0
    %v4205 = vsel %vm4197, 1, 0
    %v4206 = vsel %vm4198, 1, 0
    %v4207 = vsel %vm4199, 1, 0
    %v4208 = vsel %vm4200, 1, 0
    %v4209 = vsel %vm4201, 1, 0
    %v4210 = vcvt.s32.f32 %v4202
    %v4211 = vcvt.s32.f32 %v4203
    %v4212 = vcvt.s32.f32 %v4204
    %v4213 = vcvt.s32.f32 %v4205
    %v4214 = vcvt.s32.f32 %v4206
    %v4215 = vcvt.s32.f32 %v4207
    %v4216 = vcvt.s32.f32 %v4208
    %v4217 = vcvt.s32.f32 %v4209
    %vm4218 = vcmp.lt.s32.totalorder %v82, 31
    %vm4219 = vcmp.lt.s32.totalorder %v83, 31
    %vm4220 = vcmp.lt.s32.totalorder %v84, 31
    %vm4221 = vcmp.lt.s32.totalorder %v85, 31
    %vm4222 = vcmp.lt.s32.totalorder %v86, 31
    %vm4223 = vcmp.lt.s32.totalorder %v87, 31
    %vm4224 = vcmp.lt.s32.totalorder %v88, 31
    %vm4225 = vcmp.lt.s32.totalorder %v89, 31
    %v4226 = vsel %vm4218, 1, 0
    %v4227 = vsel %vm4219, 1, 0
    %v4228 = vsel %vm4220, 1, 0
    %v4229 = vsel %vm4221, 1, 0
    %v4230 = vsel %vm4222, 1, 0
    %v4231 = vsel %vm4223, 1, 0
    %v4232 = vsel %vm4224, 1, 0
    %v4233 = vsel %vm4225, 1, 0
    %v4234 = vcvt.s32.f32 %v4226
    %v4235 = vcvt.s32.f32 %v4227
    %v4236 = vcvt.s32.f32 %v4228
    %v4237 = vcvt.s32.f32 %v4229
    %v4238 = vcvt.s32.f32 %v4230
    %v4239 = vcvt.s32.f32 %v4231
    %v4240 = vcvt.s32.f32 %v4232
    %v4241 = vcvt.s32.f32 %v4233
    %v4242 = vadd.f32 %v3892, %v4096
    %v4243 = vadd.f32 %v3893, %v4095
    %v4244 = vadd.f32 %v3894, %v4094
    %v4245 = vadd.f32 %v3895, %v4093
    %v4246 = vadd.f32 %v3896, %v4092
    %v4247 = vadd.f32 %v3897, %v4091
    %v4248 = vadd.f32 %v3898, %v4090
    %v4249 = vadd.f32 %v3899, %v4097
    %v4250 = vmul.f32 %v4242, 0.5
    %v4251 = vmul.f32 %v4243, 0.5
    %v4252 = vmul.f32 %v4244, 0.5
    %v4253 = vmul.f32 %v4245, 0.5
    %v4254 = vmul.f32 %v4246, 0.5
    %v4255 = vmul.f32 %v4247, 0.5
    %v4256 = vmul.f32 %v4248, 0.5
    %v4257 = vmul.f32 %v4249, 0.5
    %v4258 = vmul.f32 %v4250, %v4210
    %v4259 = vmul.f32 %v4251, %v4211
    %v4260 = vmul.f32 %v4252, %v4212
    %v4261 = vmul.f32 %v4253, %v4213
    %v4262 = vmul.f32 %v4254, %v4214
    %v4263 = vmul.f32 %v4255, %v4215
    %v4264 = vmul.f32 %v4256, %v4216
    %v4265 = vmul.f32 %v4257, %v4217
    %v4266 = vpack.c.bf16 %v4258, %v4258
    %v4267 = vpack.c.bf16 %v4259, %v4259
    %v4268 = vpack.c.bf16 %v4260, %v4260
    %v4269 = vpack.c.bf16 %v4261, %v4261
    %v4270 = vpack.c.bf16 %v4262, %v4262
    %v4271 = vpack.c.bf16 %v4263, %v4263
    %v4272 = vpack.c.bf16 %v4264, %v4264
    %v4273 = vpack.c.bf16 %v4265, %v4265
    %v4274 = vadd.f32 %v3892, %v4120
    %v4275 = vadd.f32 %v3893, %v4119
    %v4276 = vadd.f32 %v3894, %v4118
    %v4277 = vadd.f32 %v3895, %v4117
    %v4278 = vadd.f32 %v3896, %v4116
    %v4279 = vadd.f32 %v3897, %v4115
    %v4280 = vadd.f32 %v3898, %v4114
    %v4281 = vadd.f32 %v3899, %v4121
    %v4282 = vmul.f32 %v4274, 0.5
    %v4283 = vmul.f32 %v4275, 0.5
    %v4284 = vmul.f32 %v4276, 0.5
    %v4285 = vmul.f32 %v4277, 0.5
    %v4286 = vmul.f32 %v4278, 0.5
    %v4287 = vmul.f32 %v4279, 0.5
    %v4288 = vmul.f32 %v4280, 0.5
    %v4289 = vmul.f32 %v4281, 0.5
    %v4290 = vmul.f32 %v4282, %v4234
    %v4291 = vmul.f32 %v4283, %v4235
    %v4292 = vmul.f32 %v4284, %v4236
    %v4293 = vmul.f32 %v4285, %v4237
    %v4294 = vmul.f32 %v4286, %v4238
    %v4295 = vmul.f32 %v4287, %v4239
    %v4296 = vmul.f32 %v4288, %v4240
    %v4297 = vmul.f32 %v4289, %v4241
    %v4298 = vpack.c.bf16 %v4290, %v4290
    %v4299 = vpack.c.bf16 %v4291, %v4291
    %v4300 = vpack.c.bf16 %v4292, %v4292
    %v4301 = vpack.c.bf16 %v4293, %v4293
    %v4302 = vpack.c.bf16 %v4294, %v4294
    %v4303 = vpack.c.bf16 %v4295, %v4295
    %v4304 = vpack.c.bf16 %v4296, %v4296
    %v4305 = vpack.c.bf16 %v4297, %v4297
    %v4306 = vlaneseq
    %v4307 = vshrl.u32 %v4306, 7
    %v4308 = vadd.s32 %v4307, 8
    %v4309 = vlaneseq
    %v4310 = vshrl.u32 %v4309, 7
    %v4311 = vsub.s32 0, %v4310
    %v4312 = vrot.slane %v3983, %v4311
    %v4313 = vlaneseq
    %v4314 = vshrl.u32 %v4313, 7
    %v4315 = vsub.s32 1, %v4314
    %v4316 = vrot.slane %v3983, %v4315
    %v4317 = vlaneseq
    %v4318 = vshrl.u32 %v4317, 7
    %v4319 = vsub.s32 2, %v4318
    %v4320 = vrot.slane %v3983, %v4319
    %v4321 = vlaneseq
    %v4322 = vshrl.u32 %v4321, 7
    %v4323 = vsub.s32 3, %v4322
    %v4324 = vrot.slane %v3983, %v4323
    %v4325 = vlaneseq
    %v4326 = vshrl.u32 %v4325, 7
    %v4327 = vsub.s32 4, %v4326
    %v4328 = vrot.slane %v3983, %v4327
    %v4329 = vlaneseq
    %v4330 = vshrl.u32 %v4329, 7
    %v4331 = vsub.s32 5, %v4330
    %v4332 = vrot.slane %v3983, %v4331
    %v4333 = vlaneseq
    %v4334 = vshrl.u32 %v4333, 7
    %v4335 = vsub.s32 6, %v4334
    %v4336 = vrot.slane %v3983, %v4335
    %v4337 = vlaneseq
    %v4338 = vshrl.u32 %v4337, 7
    %v4339 = vsub.s32 7, %v4338
    %v4340 = vrot.slane %v3983, %v4339
    %vm4341 = vcmp.eq.s32.totalorder %v4307, %v4312
    %vm4342 = vcmp.eq.s32.totalorder %v4307, %v4316
    %vm4343 = vcmp.eq.s32.totalorder %v4307, %v4320
    %vm4344 = vcmp.eq.s32.totalorder %v4307, %v4324
    %vm4345 = vcmp.eq.s32.totalorder %v4307, %v4328
    %vm4346 = vcmp.eq.s32.totalorder %v4307, %v4332
    %vm4347 = vcmp.eq.s32.totalorder %v4307, %v4336
    %vm4348 = vcmp.eq.s32.totalorder %v4307, %v4340
    %vm4349 = vcmp.eq.s32.totalorder %v4308, %v4312
    %vm4350 = vcmp.eq.s32.totalorder %v4308, %v4316
    %vm4351 = vcmp.eq.s32.totalorder %v4308, %v4320
    %vm4352 = vcmp.eq.s32.totalorder %v4308, %v4324
    %vm4353 = vcmp.eq.s32.totalorder %v4308, %v4328
    %vm4354 = vcmp.eq.s32.totalorder %v4308, %v4332
    %vm4355 = vcmp.eq.s32.totalorder %v4308, %v4336
    %vm4356 = vcmp.eq.s32.totalorder %v4308, %v4340
    %v4357 = vsel %vm4341, 1, 0
    %v4358 = vsel %vm4342, 1, 0
    %v4359 = vsel %vm4343, 1, 0
    %v4360 = vsel %vm4344, 1, 0
    %v4361 = vsel %vm4345, 1, 0
    %v4362 = vsel %vm4346, 1, 0
    %v4363 = vsel %vm4347, 1, 0
    %v4364 = vsel %vm4348, 1, 0
    %v4365 = vsel %vm4349, 1, 0
    %v4366 = vsel %vm4350, 1, 0
    %v4367 = vsel %vm4351, 1, 0
    %v4368 = vsel %vm4352, 1, 0
    %v4369 = vsel %vm4353, 1, 0
    %v4370 = vsel %vm4354, 1, 0
    %v4371 = vsel %vm4355, 1, 0
    %v4372 = vsel %vm4356, 1, 0
    %v4373 = vcvt.s32.f32 %v4357
    %v4374 = vcvt.s32.f32 %v4358
    %v4375 = vcvt.s32.f32 %v4359
    %v4376 = vcvt.s32.f32 %v4360
    %v4377 = vcvt.s32.f32 %v4361
    %v4378 = vcvt.s32.f32 %v4362
    %v4379 = vcvt.s32.f32 %v4363
    %v4380 = vcvt.s32.f32 %v4364
    %v4381 = vcvt.s32.f32 %v4365
    %v4382 = vcvt.s32.f32 %v4366
    %v4383 = vcvt.s32.f32 %v4367
    %v4384 = vcvt.s32.f32 %v4368
    %v4385 = vcvt.s32.f32 %v4369
    %v4386 = vcvt.s32.f32 %v4370
    %v4387 = vcvt.s32.f32 %v4371
    %v4388 = vcvt.s32.f32 %v4372
    %v4389 = vpack.c.bf16 %v4381, %v4373
    %v4390 = vpack.c.bf16 %v4382, %v4374
    %v4391 = vpack.c.bf16 %v4383, %v4375
    %v4392 = vpack.c.bf16 %v4384, %v4376
    %v4393 = vpack.c.bf16 %v4385, %v4377
    %v4394 = vpack.c.bf16 %v4386, %v4378
    %v4395 = vpack.c.bf16 %v4387, %v4379
    %v4396 = vpack.c.bf16 %v4388, %v4380
    %v4397 = vlaneseq
    %v4398 = vshrl.u32 %v4397, 7
    %v4399 = vsub.s32 0, %v4398
    %v4400 = vrot.slane %v4170, %v4399
    %v4401 = vlaneseq
    %v4402 = vshrl.u32 %v4401, 7
    %v4403 = vsub.s32 0, %v4402
    %v4404 = vrot.slane %v4171, %v4403
    %v4405 = vlaneseq
    %v4406 = vshrl.u32 %v4405, 7
    %v4407 = vsub.s32 0, %v4406
    %v4408 = vrot.slane %v4172, %v4407
    %v4409 = vlaneseq
    %v4410 = vshrl.u32 %v4409, 7
    %v4411 = vsub.s32 0, %v4410
    %v4412 = vrot.slane %v4173, %v4411
    %v4413 = vlaneseq
    %v4414 = vshrl.u32 %v4413, 7
    %v4415 = vsub.s32 0, %v4414
    %v4416 = vrot.slane %v4174, %v4415
    %v4417 = vlaneseq
    %v4418 = vshrl.u32 %v4417, 7
    %v4419 = vsub.s32 0, %v4418
    %v4420 = vrot.slane %v4175, %v4419
    %v4421 = vlaneseq
    %v4422 = vshrl.u32 %v4421, 7
    %v4423 = vsub.s32 0, %v4422
    %v4424 = vrot.slane %v4176, %v4423
    %v4425 = vlaneseq
    %v4426 = vshrl.u32 %v4425, 7
    %v4427 = vsub.s32 0, %v4426
    %v4428 = vrot.slane %v4177, %v4427
    %vm4429 = vcmp.eq.s32.totalorder %v4307, %v4400
    %vm4430 = vcmp.eq.s32.totalorder %v4307, %v4404
    %vm4431 = vcmp.eq.s32.totalorder %v4307, %v4408
    %vm4432 = vcmp.eq.s32.totalorder %v4307, %v4412
    %vm4433 = vcmp.eq.s32.totalorder %v4307, %v4416
    %vm4434 = vcmp.eq.s32.totalorder %v4307, %v4420
    %vm4435 = vcmp.eq.s32.totalorder %v4307, %v4424
    %vm4436 = vcmp.eq.s32.totalorder %v4307, %v4428
    %vm4437 = vcmp.eq.s32.totalorder %v4308, %v4400
    %vm4438 = vcmp.eq.s32.totalorder %v4308, %v4404
    %vm4439 = vcmp.eq.s32.totalorder %v4308, %v4408
    %vm4440 = vcmp.eq.s32.totalorder %v4308, %v4412
    %vm4441 = vcmp.eq.s32.totalorder %v4308, %v4416
    %vm4442 = vcmp.eq.s32.totalorder %v4308, %v4420
    %vm4443 = vcmp.eq.s32.totalorder %v4308, %v4424
    %vm4444 = vcmp.eq.s32.totalorder %v4308, %v4428
    %v4445 = vsel %vm4429, 1, 0
    %v4446 = vsel %vm4430, 1, 0
    %v4447 = vsel %vm4431, 1, 0
    %v4448 = vsel %vm4432, 1, 0
    %v4449 = vsel %vm4433, 1, 0
    %v4450 = vsel %vm4434, 1, 0
    %v4451 = vsel %vm4435, 1, 0
    %v4452 = vsel %vm4436, 1, 0
    %v4453 = vsel %vm4437, 1, 0
    %v4454 = vsel %vm4438, 1, 0
    %v4455 = vsel %vm4439, 1, 0
    %v4456 = vsel %vm4440, 1, 0
    %v4457 = vsel %vm4441, 1, 0
    %v4458 = vsel %vm4442, 1, 0
    %v4459 = vsel %vm4443, 1, 0
    %v4460 = vsel %vm4444, 1, 0
    %v4461 = vcvt.s32.f32 %v4445
    %v4462 = vcvt.s32.f32 %v4446
    %v4463 = vcvt.s32.f32 %v4447
    %v4464 = vcvt.s32.f32 %v4448
    %v4465 = vcvt.s32.f32 %v4449
    %v4466 = vcvt.s32.f32 %v4450
    %v4467 = vcvt.s32.f32 %v4451
    %v4468 = vcvt.s32.f32 %v4452
    %v4469 = vcvt.s32.f32 %v4453
    %v4470 = vcvt.s32.f32 %v4454
    %v4471 = vcvt.s32.f32 %v4455
    %v4472 = vcvt.s32.f32 %v4456
    %v4473 = vcvt.s32.f32 %v4457
    %v4474 = vcvt.s32.f32 %v4458
    %v4475 = vcvt.s32.f32 %v4459
    %v4476 = vcvt.s32.f32 %v4460
    %v4477 = vpack.c.bf16 %v4469, %v4461
    %v4478 = vpack.c.bf16 %v4470, %v4462
    %v4479 = vpack.c.bf16 %v4471, %v4463
    %v4480 = vpack.c.bf16 %v4472, %v4464
    %v4481 = vpack.c.bf16 %v4473, %v4465
    %v4482 = vpack.c.bf16 %v4474, %v4466
    %v4483 = vpack.c.bf16 %v4475, %v4467
    %v4484 = vpack.c.bf16 %v4476, %v4468
    %v4485 = vlaneseq
    %v4486 = vshrl.u32 %v4485, 7
    %v4487 = vsub.s32 0, %v4486
    %v4488 = vrot.slane %v4186, %v4487
    %v4489 = vlaneseq
    %v4490 = vshrl.u32 %v4489, 7
    %v4491 = vsub.s32 0, %v4490
    %v4492 = vrot.slane %v4187, %v4491
    %v4493 = vlaneseq
    %v4494 = vshrl.u32 %v4493, 7
    %v4495 = vsub.s32 0, %v4494
    %v4496 = vrot.slane %v4188, %v4495
    %v4497 = vlaneseq
    %v4498 = vshrl.u32 %v4497, 7
    %v4499 = vsub.s32 0, %v4498
    %v4500 = vrot.slane %v4189, %v4499
    %v4501 = vlaneseq
    %v4502 = vshrl.u32 %v4501, 7
    %v4503 = vsub.s32 0, %v4502
    %v4504 = vrot.slane %v4190, %v4503
    %v4505 = vlaneseq
    %v4506 = vshrl.u32 %v4505, 7
    %v4507 = vsub.s32 0, %v4506
    %v4508 = vrot.slane %v4191, %v4507
    %v4509 = vlaneseq
    %v4510 = vshrl.u32 %v4509, 7
    %v4511 = vsub.s32 0, %v4510
    %v4512 = vrot.slane %v4192, %v4511
    %v4513 = vlaneseq
    %v4514 = vshrl.u32 %v4513, 7
    %v4515 = vsub.s32 0, %v4514
    %v4516 = vrot.slane %v4193, %v4515
    %vm4517 = vcmp.eq.s32.totalorder %v4307, %v4488
    %vm4518 = vcmp.eq.s32.totalorder %v4307, %v4492
    %vm4519 = vcmp.eq.s32.totalorder %v4307, %v4496
    %vm4520 = vcmp.eq.s32.totalorder %v4307, %v4500
    %vm4521 = vcmp.eq.s32.totalorder %v4307, %v4504
    %vm4522 = vcmp.eq.s32.totalorder %v4307, %v4508
    %vm4523 = vcmp.eq.s32.totalorder %v4307, %v4512
    %vm4524 = vcmp.eq.s32.totalorder %v4307, %v4516
    %vm4525 = vcmp.eq.s32.totalorder %v4308, %v4488
    %vm4526 = vcmp.eq.s32.totalorder %v4308, %v4492
    %vm4527 = vcmp.eq.s32.totalorder %v4308, %v4496
    %vm4528 = vcmp.eq.s32.totalorder %v4308, %v4500
    %vm4529 = vcmp.eq.s32.totalorder %v4308, %v4504
    %vm4530 = vcmp.eq.s32.totalorder %v4308, %v4508
    %vm4531 = vcmp.eq.s32.totalorder %v4308, %v4512
    %vm4532 = vcmp.eq.s32.totalorder %v4308, %v4516
    %v4533 = vsel %vm4517, 1, 0
    %v4534 = vsel %vm4518, 1, 0
    %v4535 = vsel %vm4519, 1, 0
    %v4536 = vsel %vm4520, 1, 0
    %v4537 = vsel %vm4521, 1, 0
    %v4538 = vsel %vm4522, 1, 0
    %v4539 = vsel %vm4523, 1, 0
    %v4540 = vsel %vm4524, 1, 0
    %v4541 = vsel %vm4525, 1, 0
    %v4542 = vsel %vm4526, 1, 0
    %v4543 = vsel %vm4527, 1, 0
    %v4544 = vsel %vm4528, 1, 0
    %v4545 = vsel %vm4529, 1, 0
    %v4546 = vsel %vm4530, 1, 0
    %v4547 = vsel %vm4531, 1, 0
    %v4548 = vsel %vm4532, 1, 0
    %v4549 = vcvt.s32.f32 %v4533
    %v4550 = vcvt.s32.f32 %v4534
    %v4551 = vcvt.s32.f32 %v4535
    %v4552 = vcvt.s32.f32 %v4536
    %v4553 = vcvt.s32.f32 %v4537
    %v4554 = vcvt.s32.f32 %v4538
    %v4555 = vcvt.s32.f32 %v4539
    %v4556 = vcvt.s32.f32 %v4540
    %v4557 = vcvt.s32.f32 %v4541
    %v4558 = vcvt.s32.f32 %v4542
    %v4559 = vcvt.s32.f32 %v4543
    %v4560 = vcvt.s32.f32 %v4544
    %v4561 = vcvt.s32.f32 %v4545
    %v4562 = vcvt.s32.f32 %v4546
    %v4563 = vcvt.s32.f32 %v4547
    %v4564 = vcvt.s32.f32 %v4548
    %v4565 = vpack.c.bf16 %v4557, %v4549
    %v4566 = vpack.c.bf16 %v4558, %v4550
    %v4567 = vpack.c.bf16 %v4559, %v4551
    %v4568 = vpack.c.bf16 %v4560, %v4552
    %v4569 = vpack.c.bf16 %v4561, %v4553
    %v4570 = vpack.c.bf16 %v4562, %v4554
    %v4571 = vpack.c.bf16 %v4563, %v4555
    %v4572 = vpack.c.bf16 %v4564, %v4556
    %v4573 = vadd.f32 %v4373, %v4374
    %v4574 = vadd.f32 %v4573, %v4375
    %v4575 = vadd.f32 %v4574, %v4376
    %v4576 = vadd.f32 %v4575, %v4377
    %v4577 = vadd.f32 %v4576, %v4378
    %v4578 = vadd.f32 %v4577, %v4379
    %v4579 = vadd.f32 %v4578, %v4380
    %4580 = vadd.xlane.f32.xlu0 %v4579
    %v4581 = vpop.xlane.xlu0 %4580
    %v4582 = vadd.f32 %v4381, %v4382
    %v4583 = vadd.f32 %v4582, %v4383
    %v4584 = vadd.f32 %v4583, %v4384
    %v4585 = vadd.f32 %v4584, %v4385
    %v4586 = vadd.f32 %v4585, %v4386
    %v4587 = vadd.f32 %v4586, %v4387
    %v4588 = vadd.f32 %v4587, %v4388
    %4589 = vadd.xlane.f32.xlu0 %v4588
    %v4590 = vpop.xlane.xlu0 %4589
    %v4591 = vpack.c.bf16 %v3503, %v3499
    %v4592 = vpack.c.bf16 %v3505, %v3501
    %v4593 = vpack.c.bf16 %v3574, %v3570
    %v4594 = vpack.c.bf16 %v3576, %v3572
    %v4595 = vpack.c.bf16 %v3645, %v3641
    %v4596 = vpack.c.bf16 %v3647, %v3643
    %v4597 = vpack.c.bf16 %v3716, %v3712
    %v4598 = vpack.c.bf16 %v3718, %v3714
    %v4599 = vpack.c.bf16 %v3513, %v3509
    %v4600 = vpack.c.bf16 %v3515, %v3511
    %v4601 = vpack.c.bf16 %v3584, %v3580
    %v4602 = vpack.c.bf16 %v3586, %v3582
    %v4603 = vpack.c.bf16 %v3655, %v3651
    %v4604 = vpack.c.bf16 %v3657, %v3653
    %v4605 = vpack.c.bf16 %v3726, %v3722
    %v4606 = vpack.c.bf16 %v3728, %v3724
    %v4607 = vpack.c.bf16 %v3523, %v3519
    %v4608 = vpack.c.bf16 %v3525, %v3521
    %v4609 = vpack.c.bf16 %v3594, %v3590
    %v4610 = vpack.c.bf16 %v3596, %v3592
    %v4611 = vpack.c.bf16 %v3665, %v3661
    %v4612 = vpack.c.bf16 %v3667, %v3663
    %v4613 = vpack.c.bf16 %v3736, %v3732
    %v4614 = vpack.c.bf16 %v3738, %v3734
    %v4615 = vpack.c.bf16 %v3529, %v3529
    %v4616 = vpack.c.bf16 %v3531, %v3531
    %v4617 = vpack.c.bf16 %v3600, %v3600
    %v4618 = vpack.c.bf16 %v3602, %v3602
    %v4619 = vpack.c.bf16 %v3671, %v3671
    %v4620 = vpack.c.bf16 %v3673, %v3673
    %v4621 = vpack.c.bf16 %v3742, %v3742
    %v4622 = vpack.c.bf16 %v3744, %v3744
    %vm4655 = vcmask 1045504
    %v4656 = vrot.slane %v4591, 2
    %v4657 = vrot.slane %v4599, 2
    %v4658 = vsel %vm4655, %v4656, %v4657
    %v4659 = vrot.slane %v4592, 2
    %v4660 = vrot.slane %v4600, 2
    %v4661 = vsel %vm4655, %v4659, %v4660
    %v4662 = vrot.slane %v4593, 2
    %v4663 = vrot.slane %v4601, 2
    %v4664 = vsel %vm4655, %v4662, %v4663
    %v4665 = vrot.slane %v4594, 2
    %v4666 = vrot.slane %v4602, 2
    %v4667 = vsel %vm4655, %v4665, %v4666
    %v4668 = vrot.slane %v4595, 2
    %v4669 = vrot.slane %v4603, 2
    %v4670 = vsel %vm4655, %v4668, %v4669
    %v4671 = vrot.slane %v4596, 2
    %v4672 = vrot.slane %v4604, 2
    %v4673 = vsel %vm4655, %v4671, %v4672
    %v4674 = vrot.slane %v4597, 2
    %v4675 = vrot.slane %v4605, 2
    %v4676 = vsel %vm4655, %v4674, %v4675
    %v4677 = vrot.slane %v4598, 2
    %v4678 = vrot.slane %v4606, 2
    %v4679 = vsel %vm4655, %v4677, %v4678
    %v4680 = vrot.slane %v4607, 2
    %v4681 = vsel %vm4655, %v4657, %v4680
    %v4682 = vrot.slane %v4608, 2
    %v4683 = vsel %vm4655, %v4660, %v4682
    %v4684 = vrot.slane %v4609, 2
    %v4685 = vsel %vm4655, %v4663, %v4684
    %v4686 = vrot.slane %v4610, 2
    %v4687 = vsel %vm4655, %v4666, %v4686
    %v4688 = vrot.slane %v4611, 2
    %v4689 = vsel %vm4655, %v4669, %v4688
    %v4690 = vrot.slane %v4612, 2
    %v4691 = vsel %vm4655, %v4672, %v4690
    %v4692 = vrot.slane %v4613, 2
    %v4693 = vsel %vm4655, %v4675, %v4692
    %v4694 = vrot.slane %v4614, 2
    %v4695 = vsel %vm4655, %v4678, %v4694
    %v4696 = vrot.slane %v4615, 2
    %v4697 = vsel %vm4655, %v4680, %v4696
    %v4698 = vrot.slane %v4616, 2
    %v4699 = vsel %vm4655, %v4682, %v4698
    %v4700 = vrot.slane %v4617, 2
    %v4701 = vsel %vm4655, %v4684, %v4700
    %v4702 = vrot.slane %v4618, 2
    %v4703 = vsel %vm4655, %v4686, %v4702
    %v4704 = vrot.slane %v4619, 2
    %v4705 = vsel %vm4655, %v4688, %v4704
    %v4706 = vrot.slane %v4620, 2
    %v4707 = vsel %vm4655, %v4690, %v4706
    %v4708 = vrot.slane %v4621, 2
    %v4709 = vsel %vm4655, %v4692, %v4708
    %v4710 = vrot.slane %v4622, 2
    %v4711 = vsel %vm4655, %v4694, %v4710
    %4736 = vmatprep.subr.bf16.mxu0 %v4661
    %4737 = vmatpush1.bf16.xpose.msra.mxu0 %v4658
    %4738 = vmatprep.subr.bf16.mxu0 %v4683
    %4739 = vmatpush1.bf16.xpose.msra.mxu0 %v4681
    %4740 = vmatprep.subr.bf16.mxu0 %v4699
    %4741 = vmatpush1.bf16.xpose.msra.mxu0 %v4697
    %4742 = vmatprep.subr.bf16.mxu0 0
    %4743 = vmatpush1.bf16.xpose.msra.mxu0 0
    %4744 = vmatprep.subr.bf16.mxu0 0
    %4745 = vmatpush1.bf16.xpose.msra.mxu0 0
    %4746 = vmatprep.subr.bf16.mxu0 0
    %4747 = vmatpush1.bf16.xpose.msra.mxu0 0
    %4748 = vmatprep.subr.bf16.mxu0 0
    %4749 = vmatpush1.bf16.xpose.msra.mxu0 0
    %4750 = vmatprep.subr.bf16.mxu0 0
    %4751 = vmatpush1.bf16.xpose.msra.mxu0 0
    %4752 = vmatprep.subr.bf16.mxu0 0
    %4753 = vmatpush1.bf16.xpose.msra.mxu0 0
    %4754 = vmatprep.subr.bf16.mxu0 0
    %4755 = vmatpush1.bf16.xpose.msra.mxu0 0
    %4756 = vmatprep.subr.bf16.mxu0 0
    %4757 = vmatpush1.bf16.xpose.msra.mxu0 0
    %4758 = vmatprep.subr.bf16.mxu0 0
    %4759 = vmatpush1.bf16.xpose.msra.mxu0 0
    %4760 = vmatprep.subr.bf16.mxu0 0
    %4761 = vmatpush1.bf16.xpose.msra.mxu0 0
    %4762 = vmatprep.subr.bf16.mxu0 0
    %4763 = vmatpush1.bf16.xpose.msra.mxu0 0
    %4764 = vmatprep.subr.bf16.mxu0 0
    %4765 = vmatpush1.bf16.xpose.msra.mxu0 0
    %4766 = vmatprep.subr.bf16.mxu0 0
    %4767 = vmatpush1.bf16.xpose.msra.mxu0 0
    %4768 = vmatprep.mubr.bf16.mxu0 %v4390
    %4769 = vmatmul.mubr.bf16.gmra.mrb[0].mxu0 %v4389
    %v4770 = vpop.f32.mrb[0].mxu0
    %v4771 = vadd.f32 0.0, %v4770
    %v4772 = vpop.f32.mrb[0].mxu0
    %v4773 = vpop.f32.mrb[0].mxu0
    %v4774 = vadd.f32 0.0, %v4773
    %v4775 = vpop.f32.mrb[0].mxu0
    %4776 = vdwg.mxu0
    %4777 = vmatprep.subr.bf16.mxu0 %v4667
    %4778 = vmatpush1.bf16.xpose.msra.mxu0 %v4664
    %4779 = vmatprep.subr.bf16.mxu0 %v4687
    %4780 = vmatpush1.bf16.xpose.msra.mxu0 %v4685
    %4781 = vmatprep.subr.bf16.mxu0 %v4703
    %4782 = vmatpush1.bf16.xpose.msra.mxu0 %v4701
    %4783 = vmatprep.subr.bf16.mxu0 0
    %4784 = vmatpush1.bf16.xpose.msra.mxu0 0
    %4785 = vmatprep.subr.bf16.mxu0 0
    %4786 = vmatpush1.bf16.xpose.msra.mxu0 0
    %4787 = vmatprep.subr.bf16.mxu0 0
    %4788 = vmatpush1.bf16.xpose.msra.mxu0 0
    %4789 = vmatprep.subr.bf16.mxu0 0
    %4790 = vmatpush1.bf16.xpose.msra.mxu0 0
    %4791 = vmatprep.subr.bf16.mxu0 0
    %4792 = vmatpush1.bf16.xpose.msra.mxu0 0
    %4793 = vmatprep.subr.bf16.mxu0 0
    %4794 = vmatpush1.bf16.xpose.msra.mxu0 0
    %4795 = vmatprep.subr.bf16.mxu0 0
    %4796 = vmatpush1.bf16.xpose.msra.mxu0 0
    %4797 = vmatprep.subr.bf16.mxu0 0
    %4798 = vmatpush1.bf16.xpose.msra.mxu0 0
    %4799 = vmatprep.subr.bf16.mxu0 0
    %4800 = vmatpush1.bf16.xpose.msra.mxu0 0
    %4801 = vmatprep.subr.bf16.mxu0 0
    %4802 = vmatpush1.bf16.xpose.msra.mxu0 0
    %4803 = vmatprep.subr.bf16.mxu0 0
    %4804 = vmatpush1.bf16.xpose.msra.mxu0 0
    %4805 = vmatprep.subr.bf16.mxu0 0
    %4806 = vmatpush1.bf16.xpose.msra.mxu0 0
    %4807 = vmatprep.subr.bf16.mxu0 0
    %4808 = vmatpush1.bf16.xpose.msra.mxu0 0
    %4809 = vmatprep.mubr.bf16.mxu0 %v4392
    %4810 = vmatmul.mubr.bf16.gmra.mrb[0].mxu0 %v4391
    %v4811 = vpop.f32.mrb[0].mxu0
    %v4812 = vadd.f32 %v4771, %v4811
    %v4813 = vpop.f32.mrb[0].mxu0
    %v4814 = vpop.f32.mrb[0].mxu0
    %v4815 = vadd.f32 %v4774, %v4814
    %v4816 = vpop.f32.mrb[0].mxu0
    %4817 = vdwg.mxu0
    %4818 = vmatprep.subr.bf16.mxu0 %v4673
    %4819 = vmatpush1.bf16.xpose.msra.mxu0 %v4670
    %4820 = vmatprep.subr.bf16.mxu0 %v4691
    %4821 = vmatpush1.bf16.xpose.msra.mxu0 %v4689
    %4822 = vmatprep.subr.bf16.mxu0 %v4707
    %4823 = vmatpush1.bf16.xpose.msra.mxu0 %v4705
    %4824 = vmatprep.subr.bf16.mxu0 0
    %4825 = vmatpush1.bf16.xpose.msra.mxu0 0
    %4826 = vmatprep.subr.bf16.mxu0 0
    %4827 = vmatpush1.bf16.xpose.msra.mxu0 0
    %4828 = vmatprep.subr.bf16.mxu0 0
    %4829 = vmatpush1.bf16.xpose.msra.mxu0 0
    %4830 = vmatprep.subr.bf16.mxu0 0
    %4831 = vmatpush1.bf16.xpose.msra.mxu0 0
    %4832 = vmatprep.subr.bf16.mxu0 0
    %4833 = vmatpush1.bf16.xpose.msra.mxu0 0
    %4834 = vmatprep.subr.bf16.mxu0 0
    %4835 = vmatpush1.bf16.xpose.msra.mxu0 0
    %4836 = vmatprep.subr.bf16.mxu0 0
    %4837 = vmatpush1.bf16.xpose.msra.mxu0 0
    %4838 = vmatprep.subr.bf16.mxu0 0
    %4839 = vmatpush1.bf16.xpose.msra.mxu0 0
    %4840 = vmatprep.subr.bf16.mxu0 0
    %4841 = vmatpush1.bf16.xpose.msra.mxu0 0
    %4842 = vmatprep.subr.bf16.mxu0 0
    %4843 = vmatpush1.bf16.xpose.msra.mxu0 0
    %4844 = vmatprep.subr.bf16.mxu0 0
    %4845 = vmatpush1.bf16.xpose.msra.mxu0 0
    %4846 = vmatprep.subr.bf16.mxu0 0
    %4847 = vmatpush1.bf16.xpose.msra.mxu0 0
    %4848 = vmatprep.subr.bf16.mxu0 0
    %4849 = vmatpush1.bf16.xpose.msra.mxu0 0
    %4850 = vmatprep.mubr.bf16.mxu0 %v4394
    %4851 = vmatmul.mubr.bf16.gmra.mrb[0].mxu0 %v4393
    %v4852 = vpop.f32.mrb[0].mxu0
    %v4853 = vadd.f32 %v4812, %v4852
    %v4854 = vpop.f32.mrb[0].mxu0
    %v4855 = vpop.f32.mrb[0].mxu0
    %v4856 = vadd.f32 %v4815, %v4855
    %v4857 = vpop.f32.mrb[0].mxu0
    %4858 = vdwg.mxu0
    %4859 = vmatprep.subr.bf16.mxu0 %v4679
    %4860 = vmatpush1.bf16.xpose.msra.mxu0 %v4676
    %4861 = vmatprep.subr.bf16.mxu0 %v4695
    %4862 = vmatpush1.bf16.xpose.msra.mxu0 %v4693
    %4863 = vmatprep.subr.bf16.mxu0 %v4711
    %4864 = vmatpush1.bf16.xpose.msra.mxu0 %v4709
    %4865 = vmatprep.subr.bf16.mxu0 0
    %4866 = vmatpush1.bf16.xpose.msra.mxu0 0
    %4867 = vmatprep.subr.bf16.mxu0 0
    %4868 = vmatpush1.bf16.xpose.msra.mxu0 0
    %4869 = vmatprep.subr.bf16.mxu0 0
    %4870 = vmatpush1.bf16.xpose.msra.mxu0 0
    %4871 = vmatprep.subr.bf16.mxu0 0
    %4872 = vmatpush1.bf16.xpose.msra.mxu0 0
    %4873 = vmatprep.subr.bf16.mxu0 0
    %4874 = vmatpush1.bf16.xpose.msra.mxu0 0
    %4875 = vmatprep.subr.bf16.mxu0 0
    %4876 = vmatpush1.bf16.xpose.msra.mxu0 0
    %4877 = vmatprep.subr.bf16.mxu0 0
    %4878 = vmatpush1.bf16.xpose.msra.mxu0 0
    %4879 = vmatprep.subr.bf16.mxu0 0
    %4880 = vmatpush1.bf16.xpose.msra.mxu0 0
    %4881 = vmatprep.subr.bf16.mxu0 0
    %4882 = vmatpush1.bf16.xpose.msra.mxu0 0
    %4883 = vmatprep.subr.bf16.mxu0 0
    %4884 = vmatpush1.bf16.xpose.msra.mxu0 0
    %4885 = vmatprep.subr.bf16.mxu0 0
    %4886 = vmatpush1.bf16.xpose.msra.mxu0 0
    %4887 = vmatprep.subr.bf16.mxu0 0
    %4888 = vmatpush1.bf16.xpose.msra.mxu0 0
    %4889 = vmatprep.subr.bf16.mxu0 0
    %4890 = vmatpush1.bf16.xpose.msra.mxu0 0
    %4891 = vmatprep.mubr.bf16.mxu0 %v4396
    %4892 = vmatmul.mubr.bf16.gmra.mrb[0].mxu0 %v4395
    %v4893 = vpop.f32.mrb[0].mxu0
    %v4894 = vadd.f32 %v4853, %v4893
    %v4895 = vpop.f32.mrb[0].mxu0
    %v4896 = vpop.f32.mrb[0].mxu0
    %v4897 = vadd.f32 %v4856, %v4896
    %v4898 = vpop.f32.mrb[0].mxu0
    %4899 = vdwg.mxu0
    %v4900 = vmax.f32 %v4581, 1.0
    %v4901 = vmax.f32 %v4590, 1.0
    %v4902 = vrcp.pop %v4900
    %v4903 = vmul.f32 %v4894, %v4902
    %v4904 = vrcp.pop %v4901
    %v4905 = vmul.f32 %v4897, %v4904
    %v4906 = vpack.c.bf16 %v4210, %v4210
    %v4907 = vpack.c.bf16 %v4211, %v4211
    %v4908 = vpack.c.bf16 %v4212, %v4212
    %v4909 = vpack.c.bf16 %v4213, %v4213
    %v4910 = vpack.c.bf16 %v4214, %v4214
    %v4911 = vpack.c.bf16 %v4215, %v4215
    %v4912 = vpack.c.bf16 %v4216, %v4216
    %v4913 = vpack.c.bf16 %v4217, %v4217
    %v4914 = vpack.c.bf16 %v4234, %v4234
    %v4915 = vpack.c.bf16 %v4235, %v4235
    %v4916 = vpack.c.bf16 %v4236, %v4236
    %v4917 = vpack.c.bf16 %v4237, %v4237
    %v4918 = vpack.c.bf16 %v4238, %v4238
    %v4919 = vpack.c.bf16 %v4239, %v4239
    %v4920 = vpack.c.bf16 %v4240, %v4240
    %v4921 = vpack.c.bf16 %v4241, %v4241
    %v4922 = vmul.bf16 %v4389, %v4906
    %v4923 = vmul.bf16 %v4390, %v4907
    %v4924 = vmul.bf16 %v4391, %v4908
    %v4925 = vmul.bf16 %v4392, %v4909
    %v4926 = vmul.bf16 %v4393, %v4910
    %v4927 = vmul.bf16 %v4394, %v4911
    %v4928 = vmul.bf16 %v4395, %v4912
    %v4929 = vmul.bf16 %v4396, %v4913
    %v4930 = vmul.bf16 %v4477, %v4906
    %v4931 = vmul.bf16 %v4478, %v4907
    %v4932 = vmul.bf16 %v4479, %v4908
    %v4933 = vmul.bf16 %v4480, %v4909
    %v4934 = vmul.bf16 %v4481, %v4910
    %v4935 = vmul.bf16 %v4482, %v4911
    %v4936 = vmul.bf16 %v4483, %v4912
    %v4937 = vmul.bf16 %v4484, %v4913
    %4938 = vmatprep.subr.bf16.mxu0 %v4390
    %4939 = vmatpush1.bf16.xpose.msra.mxu0 %v4389
    %4940 = vmatprep.subr.bf16.mxu0 0
    %4941 = vmatpush1.bf16.xpose.msra.mxu0 0
    %4942 = vmatprep.subr.bf16.mxu0 0
    %4943 = vmatpush1.bf16.xpose.msra.mxu0 0
    %4944 = vmatprep.subr.bf16.mxu0 0
    %4945 = vmatpush1.bf16.xpose.msra.mxu0 0
    %4946 = vmatprep.subr.bf16.mxu0 0
    %4947 = vmatpush1.bf16.xpose.msra.mxu0 0
    %4948 = vmatprep.subr.bf16.mxu0 0
    %4949 = vmatpush1.bf16.xpose.msra.mxu0 0
    %4950 = vmatprep.subr.bf16.mxu0 0
    %4951 = vmatpush1.bf16.xpose.msra.mxu0 0
    %4952 = vmatprep.subr.bf16.mxu0 0
    %4953 = vmatpush1.bf16.xpose.msra.mxu0 0
    %4954 = vmatprep.subr.bf16.mxu0 0
    %4955 = vmatpush1.bf16.xpose.msra.mxu0 0
    %4956 = vmatprep.subr.bf16.mxu0 0
    %4957 = vmatpush1.bf16.xpose.msra.mxu0 0
    %4958 = vmatprep.subr.bf16.mxu0 0
    %4959 = vmatpush1.bf16.xpose.msra.mxu0 0
    %4960 = vmatprep.subr.bf16.mxu0 0
    %4961 = vmatpush1.bf16.xpose.msra.mxu0 0
    %4962 = vmatprep.subr.bf16.mxu0 0
    %4963 = vmatpush1.bf16.xpose.msra.mxu0 0
    %4964 = vmatprep.subr.bf16.mxu0 0
    %4965 = vmatpush1.bf16.xpose.msra.mxu0 0
    %4966 = vmatprep.subr.bf16.mxu0 0
    %4967 = vmatpush1.bf16.xpose.msra.mxu0 0
    %4968 = vmatprep.subr.bf16.mxu0 0
    %4969 = vmatpush1.bf16.xpose.msra.mxu0 0
    %4970 = vmatprep.mubr.bf16.mxu0 %v4931
    %4971 = vmatmul.mubr.bf16.gmra.mrb[0].mxu0 %v4930
    %v4972 = vpop.f32.mrb[0].mxu0
    %v4973 = vadd.f32 0.0, %v4972
    %v4974 = vpop.f32.mrb[0].mxu0
    %v4975 = vpop.f32.mrb[0].mxu0
    %v4976 = vadd.f32 0.0, %v4975
    %v4977 = vpop.f32.mrb[0].mxu0
    %4978 = vdwg.mxu0
    %4979 = vmatprep.subr.bf16.mxu0 %v4392
    %4980 = vmatpush1.bf16.xpose.msra.mxu0 %v4391
    %4981 = vmatprep.subr.bf16.mxu0 0
    %4982 = vmatpush1.bf16.xpose.msra.mxu0 0
    %4983 = vmatprep.subr.bf16.mxu0 0
    %4984 = vmatpush1.bf16.xpose.msra.mxu0 0
    %4985 = vmatprep.subr.bf16.mxu0 0
    %4986 = vmatpush1.bf16.xpose.msra.mxu0 0
    %4987 = vmatprep.subr.bf16.mxu0 0
    %4988 = vmatpush1.bf16.xpose.msra.mxu0 0
    %4989 = vmatprep.subr.bf16.mxu0 0
    %4990 = vmatpush1.bf16.xpose.msra.mxu0 0
    %4991 = vmatprep.subr.bf16.mxu0 0
    %4992 = vmatpush1.bf16.xpose.msra.mxu0 0
    %4993 = vmatprep.subr.bf16.mxu0 0
    %4994 = vmatpush1.bf16.xpose.msra.mxu0 0
    %4995 = vmatprep.subr.bf16.mxu0 0
    %4996 = vmatpush1.bf16.xpose.msra.mxu0 0
    %4997 = vmatprep.subr.bf16.mxu0 0
    %4998 = vmatpush1.bf16.xpose.msra.mxu0 0
    %4999 = vmatprep.subr.bf16.mxu0 0
    %5000 = vmatpush1.bf16.xpose.msra.mxu0 0
    %5001 = vmatprep.subr.bf16.mxu0 0
    %5002 = vmatpush1.bf16.xpose.msra.mxu0 0
    %5003 = vmatprep.subr.bf16.mxu0 0
    %5004 = vmatpush1.bf16.xpose.msra.mxu0 0
    %5005 = vmatprep.subr.bf16.mxu0 0
    %5006 = vmatpush1.bf16.xpose.msra.mxu0 0
    %5007 = vmatprep.subr.bf16.mxu0 0
    %5008 = vmatpush1.bf16.xpose.msra.mxu0 0
    %5009 = vmatprep.subr.bf16.mxu0 0
    %5010 = vmatpush1.bf16.xpose.msra.mxu0 0
    %5011 = vmatprep.mubr.bf16.mxu0 %v4933
    %5012 = vmatmul.mubr.bf16.gmra.mrb[0].mxu0 %v4932
    %v5013 = vpop.f32.mrb[0].mxu0
    %v5014 = vadd.f32 %v4973, %v5013
    %v5015 = vpop.f32.mrb[0].mxu0
    %v5016 = vpop.f32.mrb[0].mxu0
    %v5017 = vadd.f32 %v4976, %v5016
    %v5018 = vpop.f32.mrb[0].mxu0
    %5019 = vdwg.mxu0
    %5020 = vmatprep.subr.bf16.mxu0 %v4394
    %5021 = vmatpush1.bf16.xpose.msra.mxu0 %v4393
    %5022 = vmatprep.subr.bf16.mxu0 0
    %5023 = vmatpush1.bf16.xpose.msra.mxu0 0
    %5024 = vmatprep.subr.bf16.mxu0 0
    %5025 = vmatpush1.bf16.xpose.msra.mxu0 0
    %5026 = vmatprep.subr.bf16.mxu0 0
    %5027 = vmatpush1.bf16.xpose.msra.mxu0 0
    %5028 = vmatprep.subr.bf16.mxu0 0
    %5029 = vmatpush1.bf16.xpose.msra.mxu0 0
    %5030 = vmatprep.subr.bf16.mxu0 0
    %5031 = vmatpush1.bf16.xpose.msra.mxu0 0
    %5032 = vmatprep.subr.bf16.mxu0 0
    %5033 = vmatpush1.bf16.xpose.msra.mxu0 0
    %5034 = vmatprep.subr.bf16.mxu0 0
    %5035 = vmatpush1.bf16.xpose.msra.mxu0 0
    %5036 = vmatprep.subr.bf16.mxu0 0
    %5037 = vmatpush1.bf16.xpose.msra.mxu0 0
    %5038 = vmatprep.subr.bf16.mxu0 0
    %5039 = vmatpush1.bf16.xpose.msra.mxu0 0
    %5040 = vmatprep.subr.bf16.mxu0 0
    %5041 = vmatpush1.bf16.xpose.msra.mxu0 0
    %5042 = vmatprep.subr.bf16.mxu0 0
    %5043 = vmatpush1.bf16.xpose.msra.mxu0 0
    %5044 = vmatprep.subr.bf16.mxu0 0
    %5045 = vmatpush1.bf16.xpose.msra.mxu0 0
    %5046 = vmatprep.subr.bf16.mxu0 0
    %5047 = vmatpush1.bf16.xpose.msra.mxu0 0
    %5048 = vmatprep.subr.bf16.mxu0 0
    %5049 = vmatpush1.bf16.xpose.msra.mxu0 0
    %5050 = vmatprep.subr.bf16.mxu0 0
    %5051 = vmatpush1.bf16.xpose.msra.mxu0 0
    %5052 = vmatprep.mubr.bf16.mxu0 %v4935
    %5053 = vmatmul.mubr.bf16.gmra.mrb[0].mxu0 %v4934
    %v5054 = vpop.f32.mrb[0].mxu0
    %v5055 = vadd.f32 %v5014, %v5054
    %v5056 = vpop.f32.mrb[0].mxu0
    %v5057 = vpop.f32.mrb[0].mxu0
    %v5058 = vadd.f32 %v5017, %v5057
    %v5059 = vpop.f32.mrb[0].mxu0
    %5060 = vdwg.mxu0
    %5061 = vmatprep.subr.bf16.mxu0 %v4396
    %5062 = vmatpush1.bf16.xpose.msra.mxu0 %v4395
    %5063 = vmatprep.subr.bf16.mxu0 0
    %5064 = vmatpush1.bf16.xpose.msra.mxu0 0
    %5065 = vmatprep.subr.bf16.mxu0 0
    %5066 = vmatpush1.bf16.xpose.msra.mxu0 0
    %5067 = vmatprep.subr.bf16.mxu0 0
    %5068 = vmatpush1.bf16.xpose.msra.mxu0 0
    %5069 = vmatprep.subr.bf16.mxu0 0
    %5070 = vmatpush1.bf16.xpose.msra.mxu0 0
    %5071 = vmatprep.subr.bf16.mxu0 0
    %5072 = vmatpush1.bf16.xpose.msra.mxu0 0
    %5073 = vmatprep.subr.bf16.mxu0 0
    %5074 = vmatpush1.bf16.xpose.msra.mxu0 0
    %5075 = vmatprep.subr.bf16.mxu0 0
    %5076 = vmatpush1.bf16.xpose.msra.mxu0 0
    %5077 = vmatprep.subr.bf16.mxu0 0
    %5078 = vmatpush1.bf16.xpose.msra.mxu0 0
    %5079 = vmatprep.subr.bf16.mxu0 0
    %5080 = vmatpush1.bf16.xpose.msra.mxu0 0
    %5081 = vmatprep.subr.bf16.mxu0 0
    %5082 = vmatpush1.bf16.xpose.msra.mxu0 0
    %5083 = vmatprep.subr.bf16.mxu0 0
    %5084 = vmatpush1.bf16.xpose.msra.mxu0 0
    %5085 = vmatprep.subr.bf16.mxu0 0
    %5086 = vmatpush1.bf16.xpose.msra.mxu0 0
    %5087 = vmatprep.subr.bf16.mxu0 0
    %5088 = vmatpush1.bf16.xpose.msra.mxu0 0
    %5089 = vmatprep.subr.bf16.mxu0 0
    %5090 = vmatpush1.bf16.xpose.msra.mxu0 0
    %5091 = vmatprep.subr.bf16.mxu0 0
    %5092 = vmatpush1.bf16.xpose.msra.mxu0 0
    %5093 = vmatprep.mubr.bf16.mxu0 %v4937
    %5094 = vmatmul.mubr.bf16.gmra.mrb[0].mxu0 %v4936
    %v5095 = vpop.f32.mrb[0].mxu0
    %v5096 = vadd.f32 %v5055, %v5095
    %v5097 = vpop.f32.mrb[0].mxu0
    %v5098 = vpop.f32.mrb[0].mxu0
    %v5099 = vadd.f32 %v5058, %v5098
    %v5100 = vpop.f32.mrb[0].mxu0
    %5101 = vdwg.mxu0
    %5102 = vmatprep.subr.bf16.mxu0 %v4478
    %5103 = vmatpush1.bf16.xpose.msra.mxu0 %v4477
    %5104 = vmatprep.subr.bf16.mxu0 0
    %5105 = vmatpush1.bf16.xpose.msra.mxu0 0
    %5106 = vmatprep.subr.bf16.mxu0 0
    %5107 = vmatpush1.bf16.xpose.msra.mxu0 0
    %5108 = vmatprep.subr.bf16.mxu0 0
    %5109 = vmatpush1.bf16.xpose.msra.mxu0 0
    %5110 = vmatprep.subr.bf16.mxu0 0
    %5111 = vmatpush1.bf16.xpose.msra.mxu0 0
    %5112 = vmatprep.subr.bf16.mxu0 0
    %5113 = vmatpush1.bf16.xpose.msra.mxu0 0
    %5114 = vmatprep.subr.bf16.mxu0 0
    %5115 = vmatpush1.bf16.xpose.msra.mxu0 0
    %5116 = vmatprep.subr.bf16.mxu0 0
    %5117 = vmatpush1.bf16.xpose.msra.mxu0 0
    %5118 = vmatprep.subr.bf16.mxu0 0
    %5119 = vmatpush1.bf16.xpose.msra.mxu0 0
    %5120 = vmatprep.subr.bf16.mxu0 0
    %5121 = vmatpush1.bf16.xpose.msra.mxu0 0
    %5122 = vmatprep.subr.bf16.mxu0 0
    %5123 = vmatpush1.bf16.xpose.msra.mxu0 0
    %5124 = vmatprep.subr.bf16.mxu0 0
    %5125 = vmatpush1.bf16.xpose.msra.mxu0 0
    %5126 = vmatprep.subr.bf16.mxu0 0
    %5127 = vmatpush1.bf16.xpose.msra.mxu0 0
    %5128 = vmatprep.subr.bf16.mxu0 0
    %5129 = vmatpush1.bf16.xpose.msra.mxu0 0
    %5130 = vmatprep.subr.bf16.mxu0 0
    %5131 = vmatpush1.bf16.xpose.msra.mxu0 0
    %5132 = vmatprep.subr.bf16.mxu0 0
    %5133 = vmatpush1.bf16.xpose.msra.mxu0 0
    %5134 = vmatprep.mubr.bf16.mxu0 %v4923
    %5135 = vmatmul.mubr.bf16.gmra.mrb[0].mxu0 %v4922
    %v5136 = vpop.f32.mrb[0].mxu0
    %v5137 = vadd.f32 %v5096, %v5136
    %v5138 = vpop.f32.mrb[0].mxu0
    %v5139 = vpop.f32.mrb[0].mxu0
    %v5140 = vadd.f32 %v5099, %v5139
    %v5141 = vpop.f32.mrb[0].mxu0
    %5142 = vdwg.mxu0
    %5143 = vmatprep.subr.bf16.mxu0 %v4480
    %5144 = vmatpush1.bf16.xpose.msra.mxu0 %v4479
    %5145 = vmatprep.subr.bf16.mxu0 0
    %5146 = vmatpush1.bf16.xpose.msra.mxu0 0
    %5147 = vmatprep.subr.bf16.mxu0 0
    %5148 = vmatpush1.bf16.xpose.msra.mxu0 0
    %5149 = vmatprep.subr.bf16.mxu0 0
    %5150 = vmatpush1.bf16.xpose.msra.mxu0 0
    %5151 = vmatprep.subr.bf16.mxu0 0
    %5152 = vmatpush1.bf16.xpose.msra.mxu0 0
    %5153 = vmatprep.subr.bf16.mxu0 0
    %5154 = vmatpush1.bf16.xpose.msra.mxu0 0
    %5155 = vmatprep.subr.bf16.mxu0 0
    %5156 = vmatpush1.bf16.xpose.msra.mxu0 0
    %5157 = vmatprep.subr.bf16.mxu0 0
    %5158 = vmatpush1.bf16.xpose.msra.mxu0 0
    %5159 = vmatprep.subr.bf16.mxu0 0
    %5160 = vmatpush1.bf16.xpose.msra.mxu0 0
    %5161 = vmatprep.subr.bf16.mxu0 0
    %5162 = vmatpush1.bf16.xpose.msra.mxu0 0
    %5163 = vmatprep.subr.bf16.mxu0 0
    %5164 = vmatpush1.bf16.xpose.msra.mxu0 0
    %5165 = vmatprep.subr.bf16.mxu0 0
    %5166 = vmatpush1.bf16.xpose.msra.mxu0 0
    %5167 = vmatprep.subr.bf16.mxu0 0
    %5168 = vmatpush1.bf16.xpose.msra.mxu0 0
    %5169 = vmatprep.subr.bf16.mxu0 0
    %5170 = vmatpush1.bf16.xpose.msra.mxu0 0
    %5171 = vmatprep.subr.bf16.mxu0 0
    %5172 = vmatpush1.bf16.xpose.msra.mxu0 0
    %5173 = vmatprep.subr.bf16.mxu0 0
    %5174 = vmatpush1.bf16.xpose.msra.mxu0 0
    %5175 = vmatprep.mubr.bf16.mxu0 %v4925
    %5176 = vmatmul.mubr.bf16.gmra.mrb[0].mxu0 %v4924
    %v5177 = vpop.f32.mrb[0].mxu0
    %v5178 = vadd.f32 %v5137, %v5177
    %v5179 = vpop.f32.mrb[0].mxu0
    %v5180 = vpop.f32.mrb[0].mxu0
    %v5181 = vadd.f32 %v5140, %v5180
    %v5182 = vpop.f32.mrb[0].mxu0
    %5183 = vdwg.mxu0
    %5184 = vmatprep.subr.bf16.mxu0 %v4482
    %5185 = vmatpush1.bf16.xpose.msra.mxu0 %v4481
    %5186 = vmatprep.subr.bf16.mxu0 0
    %5187 = vmatpush1.bf16.xpose.msra.mxu0 0
    %5188 = vmatprep.subr.bf16.mxu0 0
    %5189 = vmatpush1.bf16.xpose.msra.mxu0 0
    %5190 = vmatprep.subr.bf16.mxu0 0
    %5191 = vmatpush1.bf16.xpose.msra.mxu0 0
    %5192 = vmatprep.subr.bf16.mxu0 0
    %5193 = vmatpush1.bf16.xpose.msra.mxu0 0
    %5194 = vmatprep.subr.bf16.mxu0 0
    %5195 = vmatpush1.bf16.xpose.msra.mxu0 0
    %5196 = vmatprep.subr.bf16.mxu0 0
    %5197 = vmatpush1.bf16.xpose.msra.mxu0 0
    %5198 = vmatprep.subr.bf16.mxu0 0
    %5199 = vmatpush1.bf16.xpose.msra.mxu0 0
    %5200 = vmatprep.subr.bf16.mxu0 0
    %5201 = vmatpush1.bf16.xpose.msra.mxu0 0
    %5202 = vmatprep.subr.bf16.mxu0 0
    %5203 = vmatpush1.bf16.xpose.msra.mxu0 0
    %5204 = vmatprep.subr.bf16.mxu0 0
    %5205 = vmatpush1.bf16.xpose.msra.mxu0 0
    %5206 = vmatprep.subr.bf16.mxu0 0
    %5207 = vmatpush1.bf16.xpose.msra.mxu0 0
    %5208 = vmatprep.subr.bf16.mxu0 0
    %5209 = vmatpush1.bf16.xpose.msra.mxu0 0
    %5210 = vmatprep.subr.bf16.mxu0 0
    %5211 = vmatpush1.bf16.xpose.msra.mxu0 0
    %5212 = vmatprep.subr.bf16.mxu0 0
    %5213 = vmatpush1.bf16.xpose.msra.mxu0 0
    %5214 = vmatprep.subr.bf16.mxu0 0
    %5215 = vmatpush1.bf16.xpose.msra.mxu0 0
    %5216 = vmatprep.mubr.bf16.mxu0 %v4927
    %5217 = vmatmul.mubr.bf16.gmra.mrb[0].mxu0 %v4926
    %v5218 = vpop.f32.mrb[0].mxu0
    %v5219 = vadd.f32 %v5178, %v5218
    %v5220 = vpop.f32.mrb[0].mxu0
    %v5221 = vpop.f32.mrb[0].mxu0
    %v5222 = vadd.f32 %v5181, %v5221
    %v5223 = vpop.f32.mrb[0].mxu0
    %5224 = vdwg.mxu0
    %5225 = vmatprep.subr.bf16.mxu0 %v4484
    %5226 = vmatpush1.bf16.xpose.msra.mxu0 %v4483
    %5227 = vmatprep.subr.bf16.mxu0 0
    %5228 = vmatpush1.bf16.xpose.msra.mxu0 0
    %5229 = vmatprep.subr.bf16.mxu0 0
    %5230 = vmatpush1.bf16.xpose.msra.mxu0 0
    %5231 = vmatprep.subr.bf16.mxu0 0
    %5232 = vmatpush1.bf16.xpose.msra.mxu0 0
    %5233 = vmatprep.subr.bf16.mxu0 0
    %5234 = vmatpush1.bf16.xpose.msra.mxu0 0
    %5235 = vmatprep.subr.bf16.mxu0 0
    %5236 = vmatpush1.bf16.xpose.msra.mxu0 0
    %5237 = vmatprep.subr.bf16.mxu0 0
    %5238 = vmatpush1.bf16.xpose.msra.mxu0 0
    %5239 = vmatprep.subr.bf16.mxu0 0
    %5240 = vmatpush1.bf16.xpose.msra.mxu0 0
    %5241 = vmatprep.subr.bf16.mxu0 0
    %5242 = vmatpush1.bf16.xpose.msra.mxu0 0
    %5243 = vmatprep.subr.bf16.mxu0 0
    %5244 = vmatpush1.bf16.xpose.msra.mxu0 0
    %5245 = vmatprep.subr.bf16.mxu0 0
    %5246 = vmatpush1.bf16.xpose.msra.mxu0 0
    %5247 = vmatprep.subr.bf16.mxu0 0
    %5248 = vmatpush1.bf16.xpose.msra.mxu0 0
    %5249 = vmatprep.subr.bf16.mxu0 0
    %5250 = vmatpush1.bf16.xpose.msra.mxu0 0
    %5251 = vmatprep.subr.bf16.mxu0 0
    %5252 = vmatpush1.bf16.xpose.msra.mxu0 0
    %5253 = vmatprep.subr.bf16.mxu0 0
    %5254 = vmatpush1.bf16.xpose.msra.mxu0 0
    %5255 = vmatprep.subr.bf16.mxu0 0
    %5256 = vmatpush1.bf16.xpose.msra.mxu0 0
    %5257 = vmatprep.mubr.bf16.mxu0 %v4929
    %5258 = vmatmul.mubr.bf16.gmra.mrb[0].mxu0 %v4928
    %v5259 = vpop.f32.mrb[0].mxu0
    %v5260 = vadd.f32 %v5219, %v5259
    %v5261 = vpop.f32.mrb[0].mxu0
    %v5262 = vpop.f32.mrb[0].mxu0
    %v5263 = vadd.f32 %v5222, %v5262
    %v5264 = vpop.f32.mrb[0].mxu0
    %5265 = vdwg.mxu0
    %v5266 = vmul.bf16 %v4389, %v4914
    %v5267 = vmul.bf16 %v4390, %v4915
    %v5268 = vmul.bf16 %v4391, %v4916
    %v5269 = vmul.bf16 %v4392, %v4917
    %v5270 = vmul.bf16 %v4393, %v4918
    %v5271 = vmul.bf16 %v4394, %v4919
    %v5272 = vmul.bf16 %v4395, %v4920
    %v5273 = vmul.bf16 %v4396, %v4921
    %5274 = vmatprep.subr.bf16.mxu0 %v4566
    %5275 = vmatpush1.bf16.xpose.msra.mxu0 %v4565
    %5276 = vmatprep.subr.bf16.mxu0 0
    %5277 = vmatpush1.bf16.xpose.msra.mxu0 0
    %5278 = vmatprep.subr.bf16.mxu0 0
    %5279 = vmatpush1.bf16.xpose.msra.mxu0 0
    %5280 = vmatprep.subr.bf16.mxu0 0
    %5281 = vmatpush1.bf16.xpose.msra.mxu0 0
    %5282 = vmatprep.subr.bf16.mxu0 0
    %5283 = vmatpush1.bf16.xpose.msra.mxu0 0
    %5284 = vmatprep.subr.bf16.mxu0 0
    %5285 = vmatpush1.bf16.xpose.msra.mxu0 0
    %5286 = vmatprep.subr.bf16.mxu0 0
    %5287 = vmatpush1.bf16.xpose.msra.mxu0 0
    %5288 = vmatprep.subr.bf16.mxu0 0
    %5289 = vmatpush1.bf16.xpose.msra.mxu0 0
    %5290 = vmatprep.subr.bf16.mxu0 0
    %5291 = vmatpush1.bf16.xpose.msra.mxu0 0
    %5292 = vmatprep.subr.bf16.mxu0 0
    %5293 = vmatpush1.bf16.xpose.msra.mxu0 0
    %5294 = vmatprep.subr.bf16.mxu0 0
    %5295 = vmatpush1.bf16.xpose.msra.mxu0 0
    %5296 = vmatprep.subr.bf16.mxu0 0
    %5297 = vmatpush1.bf16.xpose.msra.mxu0 0
    %5298 = vmatprep.subr.bf16.mxu0 0
    %5299 = vmatpush1.bf16.xpose.msra.mxu0 0
    %5300 = vmatprep.subr.bf16.mxu0 0
    %5301 = vmatpush1.bf16.xpose.msra.mxu0 0
    %5302 = vmatprep.subr.bf16.mxu0 0
    %5303 = vmatpush1.bf16.xpose.msra.mxu0 0
    %5304 = vmatprep.subr.bf16.mxu0 0
    %5305 = vmatpush1.bf16.xpose.msra.mxu0 0
    %5306 = vmatprep.mubr.bf16.mxu0 %v5267
    %5307 = vmatmul.mubr.bf16.gmra.mrb[0].mxu0 %v5266
    %v5308 = vpop.f32.mrb[0].mxu0
    %v5309 = vadd.f32 0.0, %v5308
    %v5310 = vpop.f32.mrb[0].mxu0
    %v5311 = vpop.f32.mrb[0].mxu0
    %v5312 = vadd.f32 0.0, %v5311
    %v5313 = vpop.f32.mrb[0].mxu0
    %5314 = vdwg.mxu0
    %5315 = vmatprep.subr.bf16.mxu0 %v4568
    %5316 = vmatpush1.bf16.xpose.msra.mxu0 %v4567
    %5317 = vmatprep.subr.bf16.mxu0 0
    %5318 = vmatpush1.bf16.xpose.msra.mxu0 0
    %5319 = vmatprep.subr.bf16.mxu0 0
    %5320 = vmatpush1.bf16.xpose.msra.mxu0 0
    %5321 = vmatprep.subr.bf16.mxu0 0
    %5322 = vmatpush1.bf16.xpose.msra.mxu0 0
    %5323 = vmatprep.subr.bf16.mxu0 0
    %5324 = vmatpush1.bf16.xpose.msra.mxu0 0
    %5325 = vmatprep.subr.bf16.mxu0 0
    %5326 = vmatpush1.bf16.xpose.msra.mxu0 0
    %5327 = vmatprep.subr.bf16.mxu0 0
    %5328 = vmatpush1.bf16.xpose.msra.mxu0 0
    %5329 = vmatprep.subr.bf16.mxu0 0
    %5330 = vmatpush1.bf16.xpose.msra.mxu0 0
    %5331 = vmatprep.subr.bf16.mxu0 0
    %5332 = vmatpush1.bf16.xpose.msra.mxu0 0
    %5333 = vmatprep.subr.bf16.mxu0 0
    %5334 = vmatpush1.bf16.xpose.msra.mxu0 0
    %5335 = vmatprep.subr.bf16.mxu0 0
    %5336 = vmatpush1.bf16.xpose.msra.mxu0 0
    %5337 = vmatprep.subr.bf16.mxu0 0
    %5338 = vmatpush1.bf16.xpose.msra.mxu0 0
    %5339 = vmatprep.subr.bf16.mxu0 0
    %5340 = vmatpush1.bf16.xpose.msra.mxu0 0
    %5341 = vmatprep.subr.bf16.mxu0 0
    %5342 = vmatpush1.bf16.xpose.msra.mxu0 0
    %5343 = vmatprep.subr.bf16.mxu0 0
    %5344 = vmatpush1.bf16.xpose.msra.mxu0 0
    %5345 = vmatprep.subr.bf16.mxu0 0
    %5346 = vmatpush1.bf16.xpose.msra.mxu0 0
    %5347 = vmatprep.mubr.bf16.mxu0 %v5269
    %5348 = vmatmul.mubr.bf16.gmra.mrb[0].mxu0 %v5268
    %v5349 = vpop.f32.mrb[0].mxu0
    %v5350 = vadd.f32 %v5309, %v5349
    %v5351 = vpop.f32.mrb[0].mxu0
    %v5352 = vpop.f32.mrb[0].mxu0
    %v5353 = vadd.f32 %v5312, %v5352
    %v5354 = vpop.f32.mrb[0].mxu0
    %5355 = vdwg.mxu0
    %5356 = vmatprep.subr.bf16.mxu0 %v4570
    %5357 = vmatpush1.bf16.xpose.msra.mxu0 %v4569
    %5358 = vmatprep.subr.bf16.mxu0 0
    %5359 = vmatpush1.bf16.xpose.msra.mxu0 0
    %5360 = vmatprep.subr.bf16.mxu0 0
    %5361 = vmatpush1.bf16.xpose.msra.mxu0 0
    %5362 = vmatprep.subr.bf16.mxu0 0
    %5363 = vmatpush1.bf16.xpose.msra.mxu0 0
    %5364 = vmatprep.subr.bf16.mxu0 0
    %5365 = vmatpush1.bf16.xpose.msra.mxu0 0
    %5366 = vmatprep.subr.bf16.mxu0 0
    %5367 = vmatpush1.bf16.xpose.msra.mxu0 0
    %5368 = vmatprep.subr.bf16.mxu0 0
    %5369 = vmatpush1.bf16.xpose.msra.mxu0 0
    %5370 = vmatprep.subr.bf16.mxu0 0
    %5371 = vmatpush1.bf16.xpose.msra.mxu0 0
    %5372 = vmatprep.subr.bf16.mxu0 0
    %5373 = vmatpush1.bf16.xpose.msra.mxu0 0
    %5374 = vmatprep.subr.bf16.mxu0 0
    %5375 = vmatpush1.bf16.xpose.msra.mxu0 0
    %5376 = vmatprep.subr.bf16.mxu0 0
    %5377 = vmatpush1.bf16.xpose.msra.mxu0 0
    %5378 = vmatprep.subr.bf16.mxu0 0
    %5379 = vmatpush1.bf16.xpose.msra.mxu0 0
    %5380 = vmatprep.subr.bf16.mxu0 0
    %5381 = vmatpush1.bf16.xpose.msra.mxu0 0
    %5382 = vmatprep.subr.bf16.mxu0 0
    %5383 = vmatpush1.bf16.xpose.msra.mxu0 0
    %5384 = vmatprep.subr.bf16.mxu0 0
    %5385 = vmatpush1.bf16.xpose.msra.mxu0 0
    %5386 = vmatprep.subr.bf16.mxu0 0
    %5387 = vmatpush1.bf16.xpose.msra.mxu0 0
    %5388 = vmatprep.mubr.bf16.mxu0 %v5271
    %5389 = vmatmul.mubr.bf16.gmra.mrb[0].mxu0 %v5270
    %v5390 = vpop.f32.mrb[0].mxu0
    %v5391 = vadd.f32 %v5350, %v5390
    %v5392 = vpop.f32.mrb[0].mxu0
    %v5393 = vpop.f32.mrb[0].mxu0
    %v5394 = vadd.f32 %v5353, %v5393
    %v5395 = vpop.f32.mrb[0].mxu0
    %5396 = vdwg.mxu0
    %5397 = vmatprep.subr.bf16.mxu0 %v4572
    %5398 = vmatpush1.bf16.xpose.msra.mxu0 %v4571
    %5399 = vmatprep.subr.bf16.mxu0 0
    %5400 = vmatpush1.bf16.xpose.msra.mxu0 0
    %5401 = vmatprep.subr.bf16.mxu0 0
    %5402 = vmatpush1.bf16.xpose.msra.mxu0 0
    %5403 = vmatprep.subr.bf16.mxu0 0
    %5404 = vmatpush1.bf16.xpose.msra.mxu0 0
    %5405 = vmatprep.subr.bf16.mxu0 0
    %5406 = vmatpush1.bf16.xpose.msra.mxu0 0
    %5407 = vmatprep.subr.bf16.mxu0 0
    %5408 = vmatpush1.bf16.xpose.msra.mxu0 0
    %5409 = vmatprep.subr.bf16.mxu0 0
    %5410 = vmatpush1.bf16.xpose.msra.mxu0 0
    %5411 = vmatprep.subr.bf16.mxu0 0
    %5412 = vmatpush1.bf16.xpose.msra.mxu0 0
    %5413 = vmatprep.subr.bf16.mxu0 0
    %5414 = vmatpush1.bf16.xpose.msra.mxu0 0
    %5415 = vmatprep.subr.bf16.mxu0 0
    %5416 = vmatpush1.bf16.xpose.msra.mxu0 0
    %5417 = vmatprep.subr.bf16.mxu0 0
    %5418 = vmatpush1.bf16.xpose.msra.mxu0 0
    %5419 = vmatprep.subr.bf16.mxu0 0
    %5420 = vmatpush1.bf16.xpose.msra.mxu0 0
    %5421 = vmatprep.subr.bf16.mxu0 0
    %5422 = vmatpush1.bf16.xpose.msra.mxu0 0
    %5423 = vmatprep.subr.bf16.mxu0 0
    %5424 = vmatpush1.bf16.xpose.msra.mxu0 0
    %5425 = vmatprep.subr.bf16.mxu0 0
    %5426 = vmatpush1.bf16.xpose.msra.mxu0 0
    %5427 = vmatprep.subr.bf16.mxu0 0
    %5428 = vmatpush1.bf16.xpose.msra.mxu0 0
    %5429 = vmatprep.mubr.bf16.mxu0 %v5273
    %5430 = vmatmul.mubr.bf16.gmra.mrb[0].mxu0 %v5272
    %v5431 = vpop.f32.mrb[0].mxu0
    %v5432 = vadd.f32 %v5391, %v5431
    %v5433 = vpop.f32.mrb[0].mxu0
    %v5434 = vpop.f32.mrb[0].mxu0
    %v5435 = vadd.f32 %v5394, %v5434
    %v5436 = vpop.f32.mrb[0].mxu0
    %5437 = vdwg.mxu0
    %v5438 = vadd.f32 %v5260, %v5432
    %v5439 = vadd.f32 %v5263, %v5435
    %v5440 = vmul.bf16 %v4565, %v4914
    %v5441 = vmul.bf16 %v4566, %v4915
    %v5442 = vmul.bf16 %v4567, %v4916
    %v5443 = vmul.bf16 %v4568, %v4917
    %v5444 = vmul.bf16 %v4569, %v4918
    %v5445 = vmul.bf16 %v4570, %v4919
    %v5446 = vmul.bf16 %v4571, %v4920
    %v5447 = vmul.bf16 %v4572, %v4921
    %5448 = vmatprep.subr.bf16.mxu0 %v4390
    %5449 = vmatpush1.bf16.xpose.msra.mxu0 %v4389
    %5450 = vmatprep.subr.bf16.mxu0 0
    %5451 = vmatpush1.bf16.xpose.msra.mxu0 0
    %5452 = vmatprep.subr.bf16.mxu0 0
    %5453 = vmatpush1.bf16.xpose.msra.mxu0 0
    %5454 = vmatprep.subr.bf16.mxu0 0
    %5455 = vmatpush1.bf16.xpose.msra.mxu0 0
    %5456 = vmatprep.subr.bf16.mxu0 0
    %5457 = vmatpush1.bf16.xpose.msra.mxu0 0
    %5458 = vmatprep.subr.bf16.mxu0 0
    %5459 = vmatpush1.bf16.xpose.msra.mxu0 0
    %5460 = vmatprep.subr.bf16.mxu0 0
    %5461 = vmatpush1.bf16.xpose.msra.mxu0 0
    %5462 = vmatprep.subr.bf16.mxu0 0
    %5463 = vmatpush1.bf16.xpose.msra.mxu0 0
    %5464 = vmatprep.subr.bf16.mxu0 0
    %5465 = vmatpush1.bf16.xpose.msra.mxu0 0
    %5466 = vmatprep.subr.bf16.mxu0 0
    %5467 = vmatpush1.bf16.xpose.msra.mxu0 0
    %5468 = vmatprep.subr.bf16.mxu0 0
    %5469 = vmatpush1.bf16.xpose.msra.mxu0 0
    %5470 = vmatprep.subr.bf16.mxu0 0
    %5471 = vmatpush1.bf16.xpose.msra.mxu0 0
    %5472 = vmatprep.subr.bf16.mxu0 0
    %5473 = vmatpush1.bf16.xpose.msra.mxu0 0
    %5474 = vmatprep.subr.bf16.mxu0 0
    %5475 = vmatpush1.bf16.xpose.msra.mxu0 0
    %5476 = vmatprep.subr.bf16.mxu0 0
    %5477 = vmatpush1.bf16.xpose.msra.mxu0 0
    %5478 = vmatprep.subr.bf16.mxu0 0
    %5479 = vmatpush1.bf16.xpose.msra.mxu0 0
    %5480 = vmatprep.mubr.bf16.mxu0 %v5441
    %5481 = vmatmul.mubr.bf16.gmra.mrb[0].mxu0 %v5440
    %v5482 = vpop.f32.mrb[0].mxu0
    %v5483 = vadd.f32 0.0, %v5482
    %v5484 = vpop.f32.mrb[0].mxu0
    %v5485 = vpop.f32.mrb[0].mxu0
    %v5486 = vadd.f32 0.0, %v5485
    %v5487 = vpop.f32.mrb[0].mxu0
    %5488 = vdwg.mxu0
    %5489 = vmatprep.subr.bf16.mxu0 %v4392
    %5490 = vmatpush1.bf16.xpose.msra.mxu0 %v4391
    %5491 = vmatprep.subr.bf16.mxu0 0
    %5492 = vmatpush1.bf16.xpose.msra.mxu0 0
    %5493 = vmatprep.subr.bf16.mxu0 0
    %5494 = vmatpush1.bf16.xpose.msra.mxu0 0
    %5495 = vmatprep.subr.bf16.mxu0 0
    %5496 = vmatpush1.bf16.xpose.msra.mxu0 0
    %5497 = vmatprep.subr.bf16.mxu0 0
    %5498 = vmatpush1.bf16.xpose.msra.mxu0 0
    %5499 = vmatprep.subr.bf16.mxu0 0
    %5500 = vmatpush1.bf16.xpose.msra.mxu0 0
    %5501 = vmatprep.subr.bf16.mxu0 0
    %5502 = vmatpush1.bf16.xpose.msra.mxu0 0
    %5503 = vmatprep.subr.bf16.mxu0 0
    %5504 = vmatpush1.bf16.xpose.msra.mxu0 0
    %5505 = vmatprep.subr.bf16.mxu0 0
    %5506 = vmatpush1.bf16.xpose.msra.mxu0 0
    %5507 = vmatprep.subr.bf16.mxu0 0
    %5508 = vmatpush1.bf16.xpose.msra.mxu0 0
    %5509 = vmatprep.subr.bf16.mxu0 0
    %5510 = vmatpush1.bf16.xpose.msra.mxu0 0
    %5511 = vmatprep.subr.bf16.mxu0 0
    %5512 = vmatpush1.bf16.xpose.msra.mxu0 0
    %5513 = vmatprep.subr.bf16.mxu0 0
    %5514 = vmatpush1.bf16.xpose.msra.mxu0 0
    %5515 = vmatprep.subr.bf16.mxu0 0
    %5516 = vmatpush1.bf16.xpose.msra.mxu0 0
    %5517 = vmatprep.subr.bf16.mxu0 0
    %5518 = vmatpush1.bf16.xpose.msra.mxu0 0
    %5519 = vmatprep.subr.bf16.mxu0 0
    %5520 = vmatpush1.bf16.xpose.msra.mxu0 0
    %5521 = vmatprep.mubr.bf16.mxu0 %v5443
    %5522 = vmatmul.mubr.bf16.gmra.mrb[0].mxu0 %v5442
    %v5523 = vpop.f32.mrb[0].mxu0
    %v5524 = vadd.f32 %v5483, %v5523
    %v5525 = vpop.f32.mrb[0].mxu0
    %v5526 = vpop.f32.mrb[0].mxu0
    %v5527 = vadd.f32 %v5486, %v5526
    %v5528 = vpop.f32.mrb[0].mxu0
    %5529 = vdwg.mxu0
    %5530 = vmatprep.subr.bf16.mxu0 %v4394
    %5531 = vmatpush1.bf16.xpose.msra.mxu0 %v4393
    %5532 = vmatprep.subr.bf16.mxu0 0
    %5533 = vmatpush1.bf16.xpose.msra.mxu0 0
    %5534 = vmatprep.subr.bf16.mxu0 0
    %5535 = vmatpush1.bf16.xpose.msra.mxu0 0
    %5536 = vmatprep.subr.bf16.mxu0 0
    %5537 = vmatpush1.bf16.xpose.msra.mxu0 0
    %5538 = vmatprep.subr.bf16.mxu0 0
    %5539 = vmatpush1.bf16.xpose.msra.mxu0 0
    %5540 = vmatprep.subr.bf16.mxu0 0
    %5541 = vmatpush1.bf16.xpose.msra.mxu0 0
    %5542 = vmatprep.subr.bf16.mxu0 0
    %5543 = vmatpush1.bf16.xpose.msra.mxu0 0
    %5544 = vmatprep.subr.bf16.mxu0 0
    %5545 = vmatpush1.bf16.xpose.msra.mxu0 0
    %5546 = vmatprep.subr.bf16.mxu0 0
    %5547 = vmatpush1.bf16.xpose.msra.mxu0 0
    %5548 = vmatprep.subr.bf16.mxu0 0
    %5549 = vmatpush1.bf16.xpose.msra.mxu0 0
    %5550 = vmatprep.subr.bf16.mxu0 0
    %5551 = vmatpush1.bf16.xpose.msra.mxu0 0
    %5552 = vmatprep.subr.bf16.mxu0 0
    %5553 = vmatpush1.bf16.xpose.msra.mxu0 0
    %5554 = vmatprep.subr.bf16.mxu0 0
    %5555 = vmatpush1.bf16.xpose.msra.mxu0 0
    %5556 = vmatprep.subr.bf16.mxu0 0
    %5557 = vmatpush1.bf16.xpose.msra.mxu0 0
    %5558 = vmatprep.subr.bf16.mxu0 0
    %5559 = vmatpush1.bf16.xpose.msra.mxu0 0
    %5560 = vmatprep.subr.bf16.mxu0 0
    %5561 = vmatpush1.bf16.xpose.msra.mxu0 0
    %5562 = vmatprep.mubr.bf16.mxu0 %v5445
    %5563 = vmatmul.mubr.bf16.gmra.mrb[0].mxu0 %v5444
    %v5564 = vpop.f32.mrb[0].mxu0
    %v5565 = vadd.f32 %v5524, %v5564
    %v5566 = vpop.f32.mrb[0].mxu0
    %v5567 = vpop.f32.mrb[0].mxu0
    %v5568 = vadd.f32 %v5527, %v5567
    %v5569 = vpop.f32.mrb[0].mxu0
    %5570 = vdwg.mxu0
    %5571 = vmatprep.subr.bf16.mxu0 %v4396
    %5572 = vmatpush1.bf16.xpose.msra.mxu0 %v4395
    %5573 = vmatprep.subr.bf16.mxu0 0
    %5574 = vmatpush1.bf16.xpose.msra.mxu0 0
    %5575 = vmatprep.subr.bf16.mxu0 0
    %5576 = vmatpush1.bf16.xpose.msra.mxu0 0
    %5577 = vmatprep.subr.bf16.mxu0 0
    %5578 = vmatpush1.bf16.xpose.msra.mxu0 0
    %5579 = vmatprep.subr.bf16.mxu0 0
    %5580 = vmatpush1.bf16.xpose.msra.mxu0 0
    %5581 = vmatprep.subr.bf16.mxu0 0
    %5582 = vmatpush1.bf16.xpose.msra.mxu0 0
    %5583 = vmatprep.subr.bf16.mxu0 0
    %5584 = vmatpush1.bf16.xpose.msra.mxu0 0
    %5585 = vmatprep.subr.bf16.mxu0 0
    %5586 = vmatpush1.bf16.xpose.msra.mxu0 0
    %5587 = vmatprep.subr.bf16.mxu0 0
    %5588 = vmatpush1.bf16.xpose.msra.mxu0 0
    %5589 = vmatprep.subr.bf16.mxu0 0
    %5590 = vmatpush1.bf16.xpose.msra.mxu0 0
    %5591 = vmatprep.subr.bf16.mxu0 0
    %5592 = vmatpush1.bf16.xpose.msra.mxu0 0
    %5593 = vmatprep.subr.bf16.mxu0 0
    %5594 = vmatpush1.bf16.xpose.msra.mxu0 0
    %5595 = vmatprep.subr.bf16.mxu0 0
    %5596 = vmatpush1.bf16.xpose.msra.mxu0 0
    %5597 = vmatprep.subr.bf16.mxu0 0
    %5598 = vmatpush1.bf16.xpose.msra.mxu0 0
    %5599 = vmatprep.subr.bf16.mxu0 0
    %5600 = vmatpush1.bf16.xpose.msra.mxu0 0
    %5601 = vmatprep.subr.bf16.mxu0 0
    %5602 = vmatpush1.bf16.xpose.msra.mxu0 0
    %5603 = vmatprep.mubr.bf16.mxu0 %v5447
    %5604 = vmatmul.mubr.bf16.gmra.mrb[0].mxu0 %v5446
    %v5605 = vpop.f32.mrb[0].mxu0
    %v5606 = vadd.f32 %v5565, %v5605
    %v5607 = vpop.f32.mrb[0].mxu0
    %v5608 = vpop.f32.mrb[0].mxu0
    %v5609 = vadd.f32 %v5568, %v5608
    %v5610 = vpop.f32.mrb[0].mxu0
    %5611 = vdwg.mxu0
    %v5612 = vadd.f32 %v5438, %v5606
    %v5613 = vadd.f32 %v5439, %v5609
    %v5615 = vpack.i.b16 %v4266, %v4266
    %v5617 = vlaneseq
    %v5618 = vshrl.u32 %v5617, 7
    %v5619 = vsub.s32 0, %v5618
    %v5620 = vrot.slane %v5615, %v5619
    %v5622 = vpack.i.b16 %v4267, %v4267
    %v5624 = vlaneseq
    %v5625 = vshrl.u32 %v5624, 7
    %v5626 = vsub.s32 0, %v5625
    %v5627 = vrot.slane %v5622, %v5626
    %v5629 = vpack.i.b16 %v4268, %v4268
    %v5631 = vlaneseq
    %v5632 = vshrl.u32 %v5631, 7
    %v5633 = vsub.s32 0, %v5632
    %v5634 = vrot.slane %v5629, %v5633
    %v5636 = vpack.i.b16 %v4269, %v4269
    %v5638 = vlaneseq
    %v5639 = vshrl.u32 %v5638, 7
    %v5640 = vsub.s32 0, %v5639
    %v5641 = vrot.slane %v5636, %v5640
    %v5643 = vpack.i.b16 %v4270, %v4270
    %v5645 = vlaneseq
    %v5646 = vshrl.u32 %v5645, 7
    %v5647 = vsub.s32 0, %v5646
    %v5648 = vrot.slane %v5643, %v5647
    %v5650 = vpack.i.b16 %v4271, %v4271
    %v5652 = vlaneseq
    %v5653 = vshrl.u32 %v5652, 7
    %v5654 = vsub.s32 0, %v5653
    %v5655 = vrot.slane %v5650, %v5654
    %v5657 = vpack.i.b16 %v4272, %v4272
    %v5659 = vlaneseq
    %v5660 = vshrl.u32 %v5659, 7
    %v5661 = vsub.s32 0, %v5660
    %v5662 = vrot.slane %v5657, %v5661
    %v5664 = vpack.i.b16 %v4273, %v4273
    %v5666 = vlaneseq
    %v5667 = vshrl.u32 %v5666, 7
    %v5668 = vsub.s32 0, %v5667
    %v5669 = vrot.slane %v5664, %v5668
    %v5670 = vmul.bf16 %v4389, %v5620
    %v5671 = vmul.bf16 %v4390, %v5627
    %v5672 = vmul.bf16 %v4391, %v5634
    %v5673 = vmul.bf16 %v4392, %v5641
    %v5674 = vmul.bf16 %v4393, %v5648
    %v5675 = vmul.bf16 %v4394, %v5655
    %v5676 = vmul.bf16 %v4395, %v5662
    %v5677 = vmul.bf16 %v4396, %v5669
    %v5678 = vmul.bf16 %v4477, %v5620
    %v5679 = vmul.bf16 %v4478, %v5627
    %v5680 = vmul.bf16 %v4479, %v5634
    %v5681 = vmul.bf16 %v4480, %v5641
    %v5682 = vmul.bf16 %v4481, %v5648
    %v5683 = vmul.bf16 %v4482, %v5655
    %v5684 = vmul.bf16 %v4483, %v5662
    %v5685 = vmul.bf16 %v4484, %v5669
    %5686 = vmatprep.subr.bf16.mxu0 %v4390
    %5687 = vmatpush1.bf16.xpose.msra.mxu0 %v4389
    %5688 = vmatprep.subr.bf16.mxu0 0
    %5689 = vmatpush1.bf16.xpose.msra.mxu0 0
    %5690 = vmatprep.subr.bf16.mxu0 0
    %5691 = vmatpush1.bf16.xpose.msra.mxu0 0
    %5692 = vmatprep.subr.bf16.mxu0 0
    %5693 = vmatpush1.bf16.xpose.msra.mxu0 0
    %5694 = vmatprep.subr.bf16.mxu0 0
    %5695 = vmatpush1.bf16.xpose.msra.mxu0 0
    %5696 = vmatprep.subr.bf16.mxu0 0
    %5697 = vmatpush1.bf16.xpose.msra.mxu0 0
    %5698 = vmatprep.subr.bf16.mxu0 0
    %5699 = vmatpush1.bf16.xpose.msra.mxu0 0
    %5700 = vmatprep.subr.bf16.mxu0 0
    %5701 = vmatpush1.bf16.xpose.msra.mxu0 0
    %5702 = vmatprep.subr.bf16.mxu0 0
    %5703 = vmatpush1.bf16.xpose.msra.mxu0 0
    %5704 = vmatprep.subr.bf16.mxu0 0
    %5705 = vmatpush1.bf16.xpose.msra.mxu0 0
    %5706 = vmatprep.subr.bf16.mxu0 0
    %5707 = vmatpush1.bf16.xpose.msra.mxu0 0
    %5708 = vmatprep.subr.bf16.mxu0 0
    %5709 = vmatpush1.bf16.xpose.msra.mxu0 0
    %5710 = vmatprep.subr.bf16.mxu0 0
    %5711 = vmatpush1.bf16.xpose.msra.mxu0 0
    %5712 = vmatprep.subr.bf16.mxu0 0
    %5713 = vmatpush1.bf16.xpose.msra.mxu0 0
    %5714 = vmatprep.subr.bf16.mxu0 0
    %5715 = vmatpush1.bf16.xpose.msra.mxu0 0
    %5716 = vmatprep.subr.bf16.mxu0 0
    %5717 = vmatpush1.bf16.xpose.msra.mxu0 0
    %5718 = vmatprep.mubr.bf16.mxu0 %v5679
    %5719 = vmatmul.mubr.bf16.gmra.mrb[0].mxu0 %v5678
    %v5720 = vpop.f32.mrb[0].mxu0
    %v5721 = vadd.f32 0.0, %v5720
    %v5722 = vpop.f32.mrb[0].mxu0
    %v5723 = vpop.f32.mrb[0].mxu0
    %v5724 = vadd.f32 0.0, %v5723
    %v5725 = vpop.f32.mrb[0].mxu0
    %5726 = vdwg.mxu0
    %5727 = vmatprep.subr.bf16.mxu0 %v4392
    %5728 = vmatpush1.bf16.xpose.msra.mxu0 %v4391
    %5729 = vmatprep.subr.bf16.mxu0 0
    %5730 = vmatpush1.bf16.xpose.msra.mxu0 0
    %5731 = vmatprep.subr.bf16.mxu0 0
    %5732 = vmatpush1.bf16.xpose.msra.mxu0 0
    %5733 = vmatprep.subr.bf16.mxu0 0
    %5734 = vmatpush1.bf16.xpose.msra.mxu0 0
    %5735 = vmatprep.subr.bf16.mxu0 0
    %5736 = vmatpush1.bf16.xpose.msra.mxu0 0
    %5737 = vmatprep.subr.bf16.mxu0 0
    %5738 = vmatpush1.bf16.xpose.msra.mxu0 0
    %5739 = vmatprep.subr.bf16.mxu0 0
    %5740 = vmatpush1.bf16.xpose.msra.mxu0 0
    %5741 = vmatprep.subr.bf16.mxu0 0
    %5742 = vmatpush1.bf16.xpose.msra.mxu0 0
    %5743 = vmatprep.subr.bf16.mxu0 0
    %5744 = vmatpush1.bf16.xpose.msra.mxu0 0
    %5745 = vmatprep.subr.bf16.mxu0 0
    %5746 = vmatpush1.bf16.xpose.msra.mxu0 0
    %5747 = vmatprep.subr.bf16.mxu0 0
    %5748 = vmatpush1.bf16.xpose.msra.mxu0 0
    %5749 = vmatprep.subr.bf16.mxu0 0
    %5750 = vmatpush1.bf16.xpose.msra.mxu0 0
    %5751 = vmatprep.subr.bf16.mxu0 0
    %5752 = vmatpush1.bf16.xpose.msra.mxu0 0
    %5753 = vmatprep.subr.bf16.mxu0 0
    %5754 = vmatpush1.bf16.xpose.msra.mxu0 0
    %5755 = vmatprep.subr.bf16.mxu0 0
    %5756 = vmatpush1.bf16.xpose.msra.mxu0 0
    %5757 = vmatprep.subr.bf16.mxu0 0
    %5758 = vmatpush1.bf16.xpose.msra.mxu0 0
    %5759 = vmatprep.mubr.bf16.mxu0 %v5681
    %5760 = vmatmul.mubr.bf16.gmra.mrb[0].mxu0 %v5680
    %v5761 = vpop.f32.mrb[0].mxu0
    %v5762 = vadd.f32 %v5721, %v5761
    %v5763 = vpop.f32.mrb[0].mxu0
    %v5764 = vpop.f32.mrb[0].mxu0
    %v5765 = vadd.f32 %v5724, %v5764
    %v5766 = vpop.f32.mrb[0].mxu0
    %5767 = vdwg.mxu0
    %5768 = vmatprep.subr.bf16.mxu0 %v4394
    %5769 = vmatpush1.bf16.xpose.msra.mxu0 %v4393
    %5770 = vmatprep.subr.bf16.mxu0 0
    %5771 = vmatpush1.bf16.xpose.msra.mxu0 0
    %5772 = vmatprep.subr.bf16.mxu0 0
    %5773 = vmatpush1.bf16.xpose.msra.mxu0 0
    %5774 = vmatprep.subr.bf16.mxu0 0
    %5775 = vmatpush1.bf16.xpose.msra.mxu0 0
    %5776 = vmatprep.subr.bf16.mxu0 0
    %5777 = vmatpush1.bf16.xpose.msra.mxu0 0
    %5778 = vmatprep.subr.bf16.mxu0 0
    %5779 = vmatpush1.bf16.xpose.msra.mxu0 0
    %5780 = vmatprep.subr.bf16.mxu0 0
    %5781 = vmatpush1.bf16.xpose.msra.mxu0 0
    %5782 = vmatprep.subr.bf16.mxu0 0
    %5783 = vmatpush1.bf16.xpose.msra.mxu0 0
    %5784 = vmatprep.subr.bf16.mxu0 0
    %5785 = vmatpush1.bf16.xpose.msra.mxu0 0
    %5786 = vmatprep.subr.bf16.mxu0 0
    %5787 = vmatpush1.bf16.xpose.msra.mxu0 0
    %5788 = vmatprep.subr.bf16.mxu0 0
    %5789 = vmatpush1.bf16.xpose.msra.mxu0 0
    %5790 = vmatprep.subr.bf16.mxu0 0
    %5791 = vmatpush1.bf16.xpose.msra.mxu0 0
    %5792 = vmatprep.subr.bf16.mxu0 0
    %5793 = vmatpush1.bf16.xpose.msra.mxu0 0
    %5794 = vmatprep.subr.bf16.mxu0 0
    %5795 = vmatpush1.bf16.xpose.msra.mxu0 0
    %5796 = vmatprep.subr.bf16.mxu0 0
    %5797 = vmatpush1.bf16.xpose.msra.mxu0 0
    %5798 = vmatprep.subr.bf16.mxu0 0
    %5799 = vmatpush1.bf16.xpose.msra.mxu0 0
    %5800 = vmatprep.mubr.bf16.mxu0 %v5683
    %5801 = vmatmul.mubr.bf16.gmra.mrb[0].mxu0 %v5682
    %v5802 = vpop.f32.mrb[0].mxu0
    %v5803 = vadd.f32 %v5762, %v5802
    %v5804 = vpop.f32.mrb[0].mxu0
    %v5805 = vpop.f32.mrb[0].mxu0
    %v5806 = vadd.f32 %v5765, %v5805
    %v5807 = vpop.f32.mrb[0].mxu0
    %5808 = vdwg.mxu0
    %5809 = vmatprep.subr.bf16.mxu0 %v4396
    %5810 = vmatpush1.bf16.xpose.msra.mxu0 %v4395
    %5811 = vmatprep.subr.bf16.mxu0 0
    %5812 = vmatpush1.bf16.xpose.msra.mxu0 0
    %5813 = vmatprep.subr.bf16.mxu0 0
    %5814 = vmatpush1.bf16.xpose.msra.mxu0 0
    %5815 = vmatprep.subr.bf16.mxu0 0
    %5816 = vmatpush1.bf16.xpose.msra.mxu0 0
    %5817 = vmatprep.subr.bf16.mxu0 0
    %5818 = vmatpush1.bf16.xpose.msra.mxu0 0
    %5819 = vmatprep.subr.bf16.mxu0 0
    %5820 = vmatpush1.bf16.xpose.msra.mxu0 0
    %5821 = vmatprep.subr.bf16.mxu0 0
    %5822 = vmatpush1.bf16.xpose.msra.mxu0 0
    %5823 = vmatprep.subr.bf16.mxu0 0
    %5824 = vmatpush1.bf16.xpose.msra.mxu0 0
    %5825 = vmatprep.subr.bf16.mxu0 0
    %5826 = vmatpush1.bf16.xpose.msra.mxu0 0
    %5827 = vmatprep.subr.bf16.mxu0 0
    %5828 = vmatpush1.bf16.xpose.msra.mxu0 0
    %5829 = vmatprep.subr.bf16.mxu0 0
    %5830 = vmatpush1.bf16.xpose.msra.mxu0 0
    %5831 = vmatprep.subr.bf16.mxu0 0
    %5832 = vmatpush1.bf16.xpose.msra.mxu0 0
    %5833 = vmatprep.subr.bf16.mxu0 0
    %5834 = vmatpush1.bf16.xpose.msra.mxu0 0
    %5835 = vmatprep.subr.bf16.mxu0 0
    %5836 = vmatpush1.bf16.xpose.msra.mxu0 0
    %5837 = vmatprep.subr.bf16.mxu0 0
    %5838 = vmatpush1.bf16.xpose.msra.mxu0 0
    %5839 = vmatprep.subr.bf16.mxu0 0
    %5840 = vmatpush1.bf16.xpose.msra.mxu0 0
    %5841 = vmatprep.mubr.bf16.mxu0 %v5685
    %5842 = vmatmul.mubr.bf16.gmra.mrb[0].mxu0 %v5684
    %v5843 = vpop.f32.mrb[0].mxu0
    %v5844 = vadd.f32 %v5803, %v5843
    %v5845 = vpop.f32.mrb[0].mxu0
    %v5846 = vpop.f32.mrb[0].mxu0
    %v5847 = vadd.f32 %v5806, %v5846
    %v5848 = vpop.f32.mrb[0].mxu0
    %5849 = vdwg.mxu0
    %5850 = vmatprep.subr.bf16.mxu0 %v4478
    %5851 = vmatpush1.bf16.xpose.msra.mxu0 %v4477
    %5852 = vmatprep.subr.bf16.mxu0 0
    %5853 = vmatpush1.bf16.xpose.msra.mxu0 0
    %5854 = vmatprep.subr.bf16.mxu0 0
    %5855 = vmatpush1.bf16.xpose.msra.mxu0 0
    %5856 = vmatprep.subr.bf16.mxu0 0
    %5857 = vmatpush1.bf16.xpose.msra.mxu0 0
    %5858 = vmatprep.subr.bf16.mxu0 0
    %5859 = vmatpush1.bf16.xpose.msra.mxu0 0
    %5860 = vmatprep.subr.bf16.mxu0 0
    %5861 = vmatpush1.bf16.xpose.msra.mxu0 0
    %5862 = vmatprep.subr.bf16.mxu0 0
    %5863 = vmatpush1.bf16.xpose.msra.mxu0 0
    %5864 = vmatprep.subr.bf16.mxu0 0
    %5865 = vmatpush1.bf16.xpose.msra.mxu0 0
    %5866 = vmatprep.subr.bf16.mxu0 0
    %5867 = vmatpush1.bf16.xpose.msra.mxu0 0
    %5868 = vmatprep.subr.bf16.mxu0 0
    %5869 = vmatpush1.bf16.xpose.msra.mxu0 0
    %5870 = vmatprep.subr.bf16.mxu0 0
    %5871 = vmatpush1.bf16.xpose.msra.mxu0 0
    %5872 = vmatprep.subr.bf16.mxu0 0
    %5873 = vmatpush1.bf16.xpose.msra.mxu0 0
    %5874 = vmatprep.subr.bf16.mxu0 0
    %5875 = vmatpush1.bf16.xpose.msra.mxu0 0
    %5876 = vmatprep.subr.bf16.mxu0 0
    %5877 = vmatpush1.bf16.xpose.msra.mxu0 0
    %5878 = vmatprep.subr.bf16.mxu0 0
    %5879 = vmatpush1.bf16.xpose.msra.mxu0 0
    %5880 = vmatprep.subr.bf16.mxu0 0
    %5881 = vmatpush1.bf16.xpose.msra.mxu0 0
    %5882 = vmatprep.mubr.bf16.mxu0 %v5671
    %5883 = vmatmul.mubr.bf16.gmra.mrb[0].mxu0 %v5670
    %v5884 = vpop.f32.mrb[0].mxu0
    %v5885 = vadd.f32 %v5844, %v5884
    %v5886 = vpop.f32.mrb[0].mxu0
    %v5887 = vpop.f32.mrb[0].mxu0
    %v5888 = vadd.f32 %v5847, %v5887
    %v5889 = vpop.f32.mrb[0].mxu0
    %5890 = vdwg.mxu0
    %5891 = vmatprep.subr.bf16.mxu0 %v4480
    %5892 = vmatpush1.bf16.xpose.msra.mxu0 %v4479
    %5893 = vmatprep.subr.bf16.mxu0 0
    %5894 = vmatpush1.bf16.xpose.msra.mxu0 0
    %5895 = vmatprep.subr.bf16.mxu0 0
    %5896 = vmatpush1.bf16.xpose.msra.mxu0 0
    %5897 = vmatprep.subr.bf16.mxu0 0
    %5898 = vmatpush1.bf16.xpose.msra.mxu0 0
    %5899 = vmatprep.subr.bf16.mxu0 0
    %5900 = vmatpush1.bf16.xpose.msra.mxu0 0
    %5901 = vmatprep.subr.bf16.mxu0 0
    %5902 = vmatpush1.bf16.xpose.msra.mxu0 0
    %5903 = vmatprep.subr.bf16.mxu0 0
    %5904 = vmatpush1.bf16.xpose.msra.mxu0 0
    %5905 = vmatprep.subr.bf16.mxu0 0
    %5906 = vmatpush1.bf16.xpose.msra.mxu0 0
    %5907 = vmatprep.subr.bf16.mxu0 0
    %5908 = vmatpush1.bf16.xpose.msra.mxu0 0
    %5909 = vmatprep.subr.bf16.mxu0 0
    %5910 = vmatpush1.bf16.xpose.msra.mxu0 0
    %5911 = vmatprep.subr.bf16.mxu0 0
    %5912 = vmatpush1.bf16.xpose.msra.mxu0 0
    %5913 = vmatprep.subr.bf16.mxu0 0
    %5914 = vmatpush1.bf16.xpose.msra.mxu0 0
    %5915 = vmatprep.subr.bf16.mxu0 0
    %5916 = vmatpush1.bf16.xpose.msra.mxu0 0
    %5917 = vmatprep.subr.bf16.mxu0 0
    %5918 = vmatpush1.bf16.xpose.msra.mxu0 0
    %5919 = vmatprep.subr.bf16.mxu0 0
    %5920 = vmatpush1.bf16.xpose.msra.mxu0 0
    %5921 = vmatprep.subr.bf16.mxu0 0
    %5922 = vmatpush1.bf16.xpose.msra.mxu0 0
    %5923 = vmatprep.mubr.bf16.mxu0 %v5673
    %5924 = vmatmul.mubr.bf16.gmra.mrb[0].mxu0 %v5672
    %v5925 = vpop.f32.mrb[0].mxu0
    %v5926 = vadd.f32 %v5885, %v5925
    %v5927 = vpop.f32.mrb[0].mxu0
    %v5928 = vpop.f32.mrb[0].mxu0
    %v5929 = vadd.f32 %v5888, %v5928
    %v5930 = vpop.f32.mrb[0].mxu0
    %5931 = vdwg.mxu0
    %5932 = vmatprep.subr.bf16.mxu0 %v4482
    %5933 = vmatpush1.bf16.xpose.msra.mxu0 %v4481
    %5934 = vmatprep.subr.bf16.mxu0 0
    %5935 = vmatpush1.bf16.xpose.msra.mxu0 0
    %5936 = vmatprep.subr.bf16.mxu0 0
    %5937 = vmatpush1.bf16.xpose.msra.mxu0 0
    %5938 = vmatprep.subr.bf16.mxu0 0
    %5939 = vmatpush1.bf16.xpose.msra.mxu0 0
    %5940 = vmatprep.subr.bf16.mxu0 0
    %5941 = vmatpush1.bf16.xpose.msra.mxu0 0
    %5942 = vmatprep.subr.bf16.mxu0 0
    %5943 = vmatpush1.bf16.xpose.msra.mxu0 0
    %5944 = vmatprep.subr.bf16.mxu0 0
    %5945 = vmatpush1.bf16.xpose.msra.mxu0 0
    %5946 = vmatprep.subr.bf16.mxu0 0
    %5947 = vmatpush1.bf16.xpose.msra.mxu0 0
    %5948 = vmatprep.subr.bf16.mxu0 0
    %5949 = vmatpush1.bf16.xpose.msra.mxu0 0
    %5950 = vmatprep.subr.bf16.mxu0 0
    %5951 = vmatpush1.bf16.xpose.msra.mxu0 0
    %5952 = vmatprep.subr.bf16.mxu0 0
    %5953 = vmatpush1.bf16.xpose.msra.mxu0 0
    %5954 = vmatprep.subr.bf16.mxu0 0
    %5955 = vmatpush1.bf16.xpose.msra.mxu0 0
    %5956 = vmatprep.subr.bf16.mxu0 0
    %5957 = vmatpush1.bf16.xpose.msra.mxu0 0
    %5958 = vmatprep.subr.bf16.mxu0 0
    %5959 = vmatpush1.bf16.xpose.msra.mxu0 0
    %5960 = vmatprep.subr.bf16.mxu0 0
    %5961 = vmatpush1.bf16.xpose.msra.mxu0 0
    %5962 = vmatprep.subr.bf16.mxu0 0
    %5963 = vmatpush1.bf16.xpose.msra.mxu0 0
    %5964 = vmatprep.mubr.bf16.mxu0 %v5675
    %5965 = vmatmul.mubr.bf16.gmra.mrb[0].mxu0 %v5674
    %v5966 = vpop.f32.mrb[0].mxu0
    %v5967 = vadd.f32 %v5926, %v5966
    %v5968 = vpop.f32.mrb[0].mxu0
    %v5969 = vpop.f32.mrb[0].mxu0
    %v5970 = vadd.f32 %v5929, %v5969
    %v5971 = vpop.f32.mrb[0].mxu0
    %5972 = vdwg.mxu0
    %5973 = vmatprep.subr.bf16.mxu0 %v4484
    %5974 = vmatpush1.bf16.xpose.msra.mxu0 %v4483
    %5975 = vmatprep.subr.bf16.mxu0 0
    %5976 = vmatpush1.bf16.xpose.msra.mxu0 0
    %5977 = vmatprep.subr.bf16.mxu0 0
    %5978 = vmatpush1.bf16.xpose.msra.mxu0 0
    %5979 = vmatprep.subr.bf16.mxu0 0
    %5980 = vmatpush1.bf16.xpose.msra.mxu0 0
    %5981 = vmatprep.subr.bf16.mxu0 0
    %5982 = vmatpush1.bf16.xpose.msra.mxu0 0
    %5983 = vmatprep.subr.bf16.mxu0 0
    %5984 = vmatpush1.bf16.xpose.msra.mxu0 0
    %5985 = vmatprep.subr.bf16.mxu0 0
    %5986 = vmatpush1.bf16.xpose.msra.mxu0 0
    %5987 = vmatprep.subr.bf16.mxu0 0
    %5988 = vmatpush1.bf16.xpose.msra.mxu0 0
    %5989 = vmatprep.subr.bf16.mxu0 0
    %5990 = vmatpush1.bf16.xpose.msra.mxu0 0
    %5991 = vmatprep.subr.bf16.mxu0 0
    %5992 = vmatpush1.bf16.xpose.msra.mxu0 0
    %5993 = vmatprep.subr.bf16.mxu0 0
    %5994 = vmatpush1.bf16.xpose.msra.mxu0 0
    %5995 = vmatprep.subr.bf16.mxu0 0
    %5996 = vmatpush1.bf16.xpose.msra.mxu0 0
    %5997 = vmatprep.subr.bf16.mxu0 0
    %5998 = vmatpush1.bf16.xpose.msra.mxu0 0
    %5999 = vmatprep.subr.bf16.mxu0 0
    %6000 = vmatpush1.bf16.xpose.msra.mxu0 0
    %6001 = vmatprep.subr.bf16.mxu0 0
    %6002 = vmatpush1.bf16.xpose.msra.mxu0 0
    %6003 = vmatprep.subr.bf16.mxu0 0
    %6004 = vmatpush1.bf16.xpose.msra.mxu0 0
    %6005 = vmatprep.mubr.bf16.mxu0 %v5677
    %6006 = vmatmul.mubr.bf16.gmra.mrb[0].mxu0 %v5676
    %v6007 = vpop.f32.mrb[0].mxu0
    %v6008 = vadd.f32 %v5967, %v6007
    %v6009 = vpop.f32.mrb[0].mxu0
    %v6010 = vpop.f32.mrb[0].mxu0
    %v6011 = vadd.f32 %v5970, %v6010
    %v6012 = vpop.f32.mrb[0].mxu0
    %6013 = vdwg.mxu0
    %v6015 = vpack.i.b16 %v4298, %v4298
    %v6017 = vlaneseq
    %v6018 = vshrl.u32 %v6017, 7
    %v6019 = vsub.s32 0, %v6018
    %v6020 = vrot.slane %v6015, %v6019
    %v6022 = vpack.i.b16 %v4299, %v4299
    %v6024 = vlaneseq
    %v6025 = vshrl.u32 %v6024, 7
    %v6026 = vsub.s32 0, %v6025
    %v6027 = vrot.slane %v6022, %v6026
    %v6029 = vpack.i.b16 %v4300, %v4300
    %v6031 = vlaneseq
    %v6032 = vshrl.u32 %v6031, 7
    %v6033 = vsub.s32 0, %v6032
    %v6034 = vrot.slane %v6029, %v6033
    %v6036 = vpack.i.b16 %v4301, %v4301
    %v6038 = vlaneseq
    %v6039 = vshrl.u32 %v6038, 7
    %v6040 = vsub.s32 0, %v6039
    %v6041 = vrot.slane %v6036, %v6040
    %v6043 = vpack.i.b16 %v4302, %v4302
    %v6045 = vlaneseq
    %v6046 = vshrl.u32 %v6045, 7
    %v6047 = vsub.s32 0, %v6046
    %v6048 = vrot.slane %v6043, %v6047
    %v6050 = vpack.i.b16 %v4303, %v4303
    %v6052 = vlaneseq
    %v6053 = vshrl.u32 %v6052, 7
    %v6054 = vsub.s32 0, %v6053
    %v6055 = vrot.slane %v6050, %v6054
    %v6057 = vpack.i.b16 %v4304, %v4304
    %v6059 = vlaneseq
    %v6060 = vshrl.u32 %v6059, 7
    %v6061 = vsub.s32 0, %v6060
    %v6062 = vrot.slane %v6057, %v6061
    %v6064 = vpack.i.b16 %v4305, %v4305
    %v6066 = vlaneseq
    %v6067 = vshrl.u32 %v6066, 7
    %v6068 = vsub.s32 0, %v6067
    %v6069 = vrot.slane %v6064, %v6068
    %v6070 = vmul.bf16 %v4389, %v6020
    %v6071 = vmul.bf16 %v4390, %v6027
    %v6072 = vmul.bf16 %v4391, %v6034
    %v6073 = vmul.bf16 %v4392, %v6041
    %v6074 = vmul.bf16 %v4393, %v6048
    %v6075 = vmul.bf16 %v4394, %v6055
    %v6076 = vmul.bf16 %v4395, %v6062
    %v6077 = vmul.bf16 %v4396, %v6069
    %6078 = vmatprep.subr.bf16.mxu0 %v4566
    %6079 = vmatpush1.bf16.xpose.msra.mxu0 %v4565
    %6080 = vmatprep.subr.bf16.mxu0 0
    %6081 = vmatpush1.bf16.xpose.msra.mxu0 0
    %6082 = vmatprep.subr.bf16.mxu0 0
    %6083 = vmatpush1.bf16.xpose.msra.mxu0 0
    %6084 = vmatprep.subr.bf16.mxu0 0
    %6085 = vmatpush1.bf16.xpose.msra.mxu0 0
    %6086 = vmatprep.subr.bf16.mxu0 0
    %6087 = vmatpush1.bf16.xpose.msra.mxu0 0
    %6088 = vmatprep.subr.bf16.mxu0 0
    %6089 = vmatpush1.bf16.xpose.msra.mxu0 0
    %6090 = vmatprep.subr.bf16.mxu0 0
    %6091 = vmatpush1.bf16.xpose.msra.mxu0 0
    %6092 = vmatprep.subr.bf16.mxu0 0
    %6093 = vmatpush1.bf16.xpose.msra.mxu0 0
    %6094 = vmatprep.subr.bf16.mxu0 0
    %6095 = vmatpush1.bf16.xpose.msra.mxu0 0
    %6096 = vmatprep.subr.bf16.mxu0 0
    %6097 = vmatpush1.bf16.xpose.msra.mxu0 0
    %6098 = vmatprep.subr.bf16.mxu0 0
    %6099 = vmatpush1.bf16.xpose.msra.mxu0 0
    %6100 = vmatprep.subr.bf16.mxu0 0
    %6101 = vmatpush1.bf16.xpose.msra.mxu0 0
    %6102 = vmatprep.subr.bf16.mxu0 0
    %6103 = vmatpush1.bf16.xpose.msra.mxu0 0
    %6104 = vmatprep.subr.bf16.mxu0 0
    %6105 = vmatpush1.bf16.xpose.msra.mxu0 0
    %6106 = vmatprep.subr.bf16.mxu0 0
    %6107 = vmatpush1.bf16.xpose.msra.mxu0 0
    %6108 = vmatprep.subr.bf16.mxu0 0
    %6109 = vmatpush1.bf16.xpose.msra.mxu0 0
    %6110 = vmatprep.mubr.bf16.mxu0 %v6071
    %6111 = vmatmul.mubr.bf16.gmra.mrb[0].mxu0 %v6070
    %v6112 = vpop.f32.mrb[0].mxu0
    %v6113 = vadd.f32 0.0, %v6112
    %v6114 = vpop.f32.mrb[0].mxu0
    %v6115 = vpop.f32.mrb[0].mxu0
    %v6116 = vadd.f32 0.0, %v6115
    %v6117 = vpop.f32.mrb[0].mxu0
    %6118 = vdwg.mxu0
    %6119 = vmatprep.subr.bf16.mxu0 %v4568
    %6120 = vmatpush1.bf16.xpose.msra.mxu0 %v4567
    %6121 = vmatprep.subr.bf16.mxu0 0
    %6122 = vmatpush1.bf16.xpose.msra.mxu0 0
    %6123 = vmatprep.subr.bf16.mxu0 0
    %6124 = vmatpush1.bf16.xpose.msra.mxu0 0
    %6125 = vmatprep.subr.bf16.mxu0 0
    %6126 = vmatpush1.bf16.xpose.msra.mxu0 0
    %6127 = vmatprep.subr.bf16.mxu0 0
    %6128 = vmatpush1.bf16.xpose.msra.mxu0 0
    %6129 = vmatprep.subr.bf16.mxu0 0
    %6130 = vmatpush1.bf16.xpose.msra.mxu0 0
    %6131 = vmatprep.subr.bf16.mxu0 0
    %6132 = vmatpush1.bf16.xpose.msra.mxu0 0
    %6133 = vmatprep.subr.bf16.mxu0 0
    %6134 = vmatpush1.bf16.xpose.msra.mxu0 0
    %6135 = vmatprep.subr.bf16.mxu0 0
    %6136 = vmatpush1.bf16.xpose.msra.mxu0 0
    %6137 = vmatprep.subr.bf16.mxu0 0
    %6138 = vmatpush1.bf16.xpose.msra.mxu0 0
    %6139 = vmatprep.subr.bf16.mxu0 0
    %6140 = vmatpush1.bf16.xpose.msra.mxu0 0
    %6141 = vmatprep.subr.bf16.mxu0 0
    %6142 = vmatpush1.bf16.xpose.msra.mxu0 0
    %6143 = vmatprep.subr.bf16.mxu0 0
    %6144 = vmatpush1.bf16.xpose.msra.mxu0 0
    %6145 = vmatprep.subr.bf16.mxu0 0
    %6146 = vmatpush1.bf16.xpose.msra.mxu0 0
    %6147 = vmatprep.subr.bf16.mxu0 0
    %6148 = vmatpush1.bf16.xpose.msra.mxu0 0
    %6149 = vmatprep.subr.bf16.mxu0 0
    %6150 = vmatpush1.bf16.xpose.msra.mxu0 0
    %6151 = vmatprep.mubr.bf16.mxu0 %v6073
    %6152 = vmatmul.mubr.bf16.gmra.mrb[0].mxu0 %v6072
    %v6153 = vpop.f32.mrb[0].mxu0
    %v6154 = vadd.f32 %v6113, %v6153
    %v6155 = vpop.f32.mrb[0].mxu0
    %v6156 = vpop.f32.mrb[0].mxu0
    %v6157 = vadd.f32 %v6116, %v6156
    %v6158 = vpop.f32.mrb[0].mxu0
    %6159 = vdwg.mxu0
    %6160 = vmatprep.subr.bf16.mxu0 %v4570
    %6161 = vmatpush1.bf16.xpose.msra.mxu0 %v4569
    %6162 = vmatprep.subr.bf16.mxu0 0
    %6163 = vmatpush1.bf16.xpose.msra.mxu0 0
    %6164 = vmatprep.subr.bf16.mxu0 0
    %6165 = vmatpush1.bf16.xpose.msra.mxu0 0
    %6166 = vmatprep.subr.bf16.mxu0 0
    %6167 = vmatpush1.bf16.xpose.msra.mxu0 0
    %6168 = vmatprep.subr.bf16.mxu0 0
    %6169 = vmatpush1.bf16.xpose.msra.mxu0 0
    %6170 = vmatprep.subr.bf16.mxu0 0
    %6171 = vmatpush1.bf16.xpose.msra.mxu0 0
    %6172 = vmatprep.subr.bf16.mxu0 0
    %6173 = vmatpush1.bf16.xpose.msra.mxu0 0
    %6174 = vmatprep.subr.bf16.mxu0 0
    %6175 = vmatpush1.bf16.xpose.msra.mxu0 0
    %6176 = vmatprep.subr.bf16.mxu0 0
    %6177 = vmatpush1.bf16.xpose.msra.mxu0 0
    %6178 = vmatprep.subr.bf16.mxu0 0
    %6179 = vmatpush1.bf16.xpose.msra.mxu0 0
    %6180 = vmatprep.subr.bf16.mxu0 0
    %6181 = vmatpush1.bf16.xpose.msra.mxu0 0
    %6182 = vmatprep.subr.bf16.mxu0 0
    %6183 = vmatpush1.bf16.xpose.msra.mxu0 0
    %6184 = vmatprep.subr.bf16.mxu0 0
    %6185 = vmatpush1.bf16.xpose.msra.mxu0 0
    %6186 = vmatprep.subr.bf16.mxu0 0
    %6187 = vmatpush1.bf16.xpose.msra.mxu0 0
    %6188 = vmatprep.subr.bf16.mxu0 0
    %6189 = vmatpush1.bf16.xpose.msra.mxu0 0
    %6190 = vmatprep.subr.bf16.mxu0 0
    %6191 = vmatpush1.bf16.xpose.msra.mxu0 0
    %6192 = vmatprep.mubr.bf16.mxu0 %v6075
    %6193 = vmatmul.mubr.bf16.gmra.mrb[0].mxu0 %v6074
    %v6194 = vpop.f32.mrb[0].mxu0
    %v6195 = vadd.f32 %v6154, %v6194
    %v6196 = vpop.f32.mrb[0].mxu0
    %v6197 = vpop.f32.mrb[0].mxu0
    %v6198 = vadd.f32 %v6157, %v6197
    %v6199 = vpop.f32.mrb[0].mxu0
    %6200 = vdwg.mxu0
    %6201 = vmatprep.subr.bf16.mxu0 %v4572
    %6202 = vmatpush1.bf16.xpose.msra.mxu0 %v4571
    %6203 = vmatprep.subr.bf16.mxu0 0
    %6204 = vmatpush1.bf16.xpose.msra.mxu0 0
    %6205 = vmatprep.subr.bf16.mxu0 0
    %6206 = vmatpush1.bf16.xpose.msra.mxu0 0
    %6207 = vmatprep.subr.bf16.mxu0 0
    %6208 = vmatpush1.bf16.xpose.msra.mxu0 0
    %6209 = vmatprep.subr.bf16.mxu0 0
    %6210 = vmatpush1.bf16.xpose.msra.mxu0 0
    %6211 = vmatprep.subr.bf16.mxu0 0
    %6212 = vmatpush1.bf16.xpose.msra.mxu0 0
    %6213 = vmatprep.subr.bf16.mxu0 0
    %6214 = vmatpush1.bf16.xpose.msra.mxu0 0
    %6215 = vmatprep.subr.bf16.mxu0 0
    %6216 = vmatpush1.bf16.xpose.msra.mxu0 0
    %6217 = vmatprep.subr.bf16.mxu0 0
    %6218 = vmatpush1.bf16.xpose.msra.mxu0 0
    %6219 = vmatprep.subr.bf16.mxu0 0
    %6220 = vmatpush1.bf16.xpose.msra.mxu0 0
    %6221 = vmatprep.subr.bf16.mxu0 0
    %6222 = vmatpush1.bf16.xpose.msra.mxu0 0
    %6223 = vmatprep.subr.bf16.mxu0 0
    %6224 = vmatpush1.bf16.xpose.msra.mxu0 0
    %6225 = vmatprep.subr.bf16.mxu0 0
    %6226 = vmatpush1.bf16.xpose.msra.mxu0 0
    %6227 = vmatprep.subr.bf16.mxu0 0
    %6228 = vmatpush1.bf16.xpose.msra.mxu0 0
    %6229 = vmatprep.subr.bf16.mxu0 0
    %6230 = vmatpush1.bf16.xpose.msra.mxu0 0
    %6231 = vmatprep.subr.bf16.mxu0 0
    %6232 = vmatpush1.bf16.xpose.msra.mxu0 0
    %6233 = vmatprep.mubr.bf16.mxu0 %v6077
    %6234 = vmatmul.mubr.bf16.gmra.mrb[0].mxu0 %v6076
    %v6235 = vpop.f32.mrb[0].mxu0
    %v6236 = vadd.f32 %v6195, %v6235
    %v6237 = vpop.f32.mrb[0].mxu0
    %v6238 = vpop.f32.mrb[0].mxu0
    %v6239 = vadd.f32 %v6198, %v6238
    %v6240 = vpop.f32.mrb[0].mxu0
    %6241 = vdwg.mxu0
    %v6242 = vadd.f32 %v6008, %v6236
    %v6243 = vadd.f32 %v6011, %v6239
    %v6244 = vmul.bf16 %v4565, %v6020
    %v6245 = vmul.bf16 %v4566, %v6027
    %v6246 = vmul.bf16 %v4567, %v6034
    %v6247 = vmul.bf16 %v4568, %v6041
    %v6248 = vmul.bf16 %v4569, %v6048
    %v6249 = vmul.bf16 %v4570, %v6055
    %v6250 = vmul.bf16 %v4571, %v6062
    %v6251 = vmul.bf16 %v4572, %v6069
    %6252 = vmatprep.subr.bf16.mxu0 %v4390
    %6253 = vmatpush1.bf16.xpose.msra.mxu0 %v4389
    %6254 = vmatprep.subr.bf16.mxu0 0
    %6255 = vmatpush1.bf16.xpose.msra.mxu0 0
    %6256 = vmatprep.subr.bf16.mxu0 0
    %6257 = vmatpush1.bf16.xpose.msra.mxu0 0
    %6258 = vmatprep.subr.bf16.mxu0 0
    %6259 = vmatpush1.bf16.xpose.msra.mxu0 0
    %6260 = vmatprep.subr.bf16.mxu0 0
    %6261 = vmatpush1.bf16.xpose.msra.mxu0 0
    %6262 = vmatprep.subr.bf16.mxu0 0
    %6263 = vmatpush1.bf16.xpose.msra.mxu0 0
    %6264 = vmatprep.subr.bf16.mxu0 0
    %6265 = vmatpush1.bf16.xpose.msra.mxu0 0
    %6266 = vmatprep.subr.bf16.mxu0 0
    %6267 = vmatpush1.bf16.xpose.msra.mxu0 0
    %6268 = vmatprep.subr.bf16.mxu0 0
    %6269 = vmatpush1.bf16.xpose.msra.mxu0 0
    %6270 = vmatprep.subr.bf16.mxu0 0
    %6271 = vmatpush1.bf16.xpose.msra.mxu0 0
    %6272 = vmatprep.subr.bf16.mxu0 0
    %6273 = vmatpush1.bf16.xpose.msra.mxu0 0
    %6274 = vmatprep.subr.bf16.mxu0 0
    %6275 = vmatpush1.bf16.xpose.msra.mxu0 0
    %6276 = vmatprep.subr.bf16.mxu0 0
    %6277 = vmatpush1.bf16.xpose.msra.mxu0 0
    %6278 = vmatprep.subr.bf16.mxu0 0
    %6279 = vmatpush1.bf16.xpose.msra.mxu0 0
    %6280 = vmatprep.subr.bf16.mxu0 0
    %6281 = vmatpush1.bf16.xpose.msra.mxu0 0
    %6282 = vmatprep.subr.bf16.mxu0 0
    %6283 = vmatpush1.bf16.xpose.msra.mxu0 0
    %6284 = vmatprep.mubr.bf16.mxu0 %v6245
    %6285 = vmatmul.mubr.bf16.gmra.mrb[0].mxu0 %v6244
    %v6286 = vpop.f32.mrb[0].mxu0
    %v6287 = vadd.f32 0.0, %v6286
    %v6288 = vpop.f32.mrb[0].mxu0
    %v6289 = vpop.f32.mrb[0].mxu0
    %v6290 = vadd.f32 0.0, %v6289
    %v6291 = vpop.f32.mrb[0].mxu0
    %6292 = vdwg.mxu0
    %6293 = vmatprep.subr.bf16.mxu0 %v4392
    %6294 = vmatpush1.bf16.xpose.msra.mxu0 %v4391
    %6295 = vmatprep.subr.bf16.mxu0 0
    %6296 = vmatpush1.bf16.xpose.msra.mxu0 0
    %6297 = vmatprep.subr.bf16.mxu0 0
    %6298 = vmatpush1.bf16.xpose.msra.mxu0 0
    %6299 = vmatprep.subr.bf16.mxu0 0
    %6300 = vmatpush1.bf16.xpose.msra.mxu0 0
    %6301 = vmatprep.subr.bf16.mxu0 0
    %6302 = vmatpush1.bf16.xpose.msra.mxu0 0
    %6303 = vmatprep.subr.bf16.mxu0 0
    %6304 = vmatpush1.bf16.xpose.msra.mxu0 0
    %6305 = vmatprep.subr.bf16.mxu0 0
    %6306 = vmatpush1.bf16.xpose.msra.mxu0 0
    %6307 = vmatprep.subr.bf16.mxu0 0
    %6308 = vmatpush1.bf16.xpose.msra.mxu0 0
    %6309 = vmatprep.subr.bf16.mxu0 0
    %6310 = vmatpush1.bf16.xpose.msra.mxu0 0
    %6311 = vmatprep.subr.bf16.mxu0 0
    %6312 = vmatpush1.bf16.xpose.msra.mxu0 0
    %6313 = vmatprep.subr.bf16.mxu0 0
    %6314 = vmatpush1.bf16.xpose.msra.mxu0 0
    %6315 = vmatprep.subr.bf16.mxu0 0
    %6316 = vmatpush1.bf16.xpose.msra.mxu0 0
    %6317 = vmatprep.subr.bf16.mxu0 0
    %6318 = vmatpush1.bf16.xpose.msra.mxu0 0
    %6319 = vmatprep.subr.bf16.mxu0 0
    %6320 = vmatpush1.bf16.xpose.msra.mxu0 0
    %6321 = vmatprep.subr.bf16.mxu0 0
    %6322 = vmatpush1.bf16.xpose.msra.mxu0 0
    %6323 = vmatprep.subr.bf16.mxu0 0
    %6324 = vmatpush1.bf16.xpose.msra.mxu0 0
    %6325 = vmatprep.mubr.bf16.mxu0 %v6247
    %6326 = vmatmul.mubr.bf16.gmra.mrb[0].mxu0 %v6246
    %v6327 = vpop.f32.mrb[0].mxu0
    %v6328 = vadd.f32 %v6287, %v6327
    %v6329 = vpop.f32.mrb[0].mxu0
    %v6330 = vpop.f32.mrb[0].mxu0
    %v6331 = vadd.f32 %v6290, %v6330
    %v6332 = vpop.f32.mrb[0].mxu0
    %6333 = vdwg.mxu0
    %6334 = vmatprep.subr.bf16.mxu0 %v4394
    %6335 = vmatpush1.bf16.xpose.msra.mxu0 %v4393
    %6336 = vmatprep.subr.bf16.mxu0 0
    %6337 = vmatpush1.bf16.xpose.msra.mxu0 0
    %6338 = vmatprep.subr.bf16.mxu0 0
    %6339 = vmatpush1.bf16.xpose.msra.mxu0 0
    %6340 = vmatprep.subr.bf16.mxu0 0
    %6341 = vmatpush1.bf16.xpose.msra.mxu0 0
    %6342 = vmatprep.subr.bf16.mxu0 0
    %6343 = vmatpush1.bf16.xpose.msra.mxu0 0
    %6344 = vmatprep.subr.bf16.mxu0 0
    %6345 = vmatpush1.bf16.xpose.msra.mxu0 0
    %6346 = vmatprep.subr.bf16.mxu0 0
    %6347 = vmatpush1.bf16.xpose.msra.mxu0 0
    %6348 = vmatprep.subr.bf16.mxu0 0
    %6349 = vmatpush1.bf16.xpose.msra.mxu0 0
    %6350 = vmatprep.subr.bf16.mxu0 0
    %6351 = vmatpush1.bf16.xpose.msra.mxu0 0
    %6352 = vmatprep.subr.bf16.mxu0 0
    %6353 = vmatpush1.bf16.xpose.msra.mxu0 0
    %6354 = vmatprep.subr.bf16.mxu0 0
    %6355 = vmatpush1.bf16.xpose.msra.mxu0 0
    %6356 = vmatprep.subr.bf16.mxu0 0
    %6357 = vmatpush1.bf16.xpose.msra.mxu0 0
    %6358 = vmatprep.subr.bf16.mxu0 0
    %6359 = vmatpush1.bf16.xpose.msra.mxu0 0
    %6360 = vmatprep.subr.bf16.mxu0 0
    %6361 = vmatpush1.bf16.xpose.msra.mxu0 0
    %6362 = vmatprep.subr.bf16.mxu0 0
    %6363 = vmatpush1.bf16.xpose.msra.mxu0 0
    %6364 = vmatprep.subr.bf16.mxu0 0
    %6365 = vmatpush1.bf16.xpose.msra.mxu0 0
    %6366 = vmatprep.mubr.bf16.mxu0 %v6249
    %6367 = vmatmul.mubr.bf16.gmra.mrb[0].mxu0 %v6248
    %v6368 = vpop.f32.mrb[0].mxu0
    %v6369 = vadd.f32 %v6328, %v6368
    %v6370 = vpop.f32.mrb[0].mxu0
    %v6371 = vpop.f32.mrb[0].mxu0
    %v6372 = vadd.f32 %v6331, %v6371
    %v6373 = vpop.f32.mrb[0].mxu0
    %6374 = vdwg.mxu0
    %6375 = vmatprep.subr.bf16.mxu0 %v4396
    %6376 = vmatpush1.bf16.xpose.msra.mxu0 %v4395
    %6377 = vmatprep.subr.bf16.mxu0 0
    %6378 = vmatpush1.bf16.xpose.msra.mxu0 0
    %6379 = vmatprep.subr.bf16.mxu0 0
    %6380 = vmatpush1.bf16.xpose.msra.mxu0 0
    %6381 = vmatprep.subr.bf16.mxu0 0
    %6382 = vmatpush1.bf16.xpose.msra.mxu0 0
    %6383 = vmatprep.subr.bf16.mxu0 0
    %6384 = vmatpush1.bf16.xpose.msra.mxu0 0
    %6385 = vmatprep.subr.bf16.mxu0 0
    %6386 = vmatpush1.bf16.xpose.msra.mxu0 0
    %6387 = vmatprep.subr.bf16.mxu0 0
    %6388 = vmatpush1.bf16.xpose.msra.mxu0 0
    %6389 = vmatprep.subr.bf16.mxu0 0
    %6390 = vmatpush1.bf16.xpose.msra.mxu0 0
    %6391 = vmatprep.subr.bf16.mxu0 0
    %6392 = vmatpush1.bf16.xpose.msra.mxu0 0
    %6393 = vmatprep.subr.bf16.mxu0 0
    %6394 = vmatpush1.bf16.xpose.msra.mxu0 0
    %6395 = vmatprep.subr.bf16.mxu0 0
    %6396 = vmatpush1.bf16.xpose.msra.mxu0 0
    %6397 = vmatprep.subr.bf16.mxu0 0
    %6398 = vmatpush1.bf16.xpose.msra.mxu0 0
    %6399 = vmatprep.subr.bf16.mxu0 0
    %6400 = vmatpush1.bf16.xpose.msra.mxu0 0
    %6401 = vmatprep.subr.bf16.mxu0 0
    %6402 = vmatpush1.bf16.xpose.msra.mxu0 0
    %6403 = vmatprep.subr.bf16.mxu0 0
    %6404 = vmatpush1.bf16.xpose.msra.mxu0 0
    %6405 = vmatprep.subr.bf16.mxu0 0
    %6406 = vmatpush1.bf16.xpose.msra.mxu0 0
    %6407 = vmatprep.mubr.bf16.mxu0 %v6251
    %6408 = vmatmul.mubr.bf16.gmra.mrb[0].mxu0 %v6250
    %v6409 = vpop.f32.mrb[0].mxu0
    %v6410 = vadd.f32 %v6369, %v6409
    %v6411 = vpop.f32.mrb[0].mxu0
    %v6412 = vpop.f32.mrb[0].mxu0
    %v6413 = vadd.f32 %v6372, %v6412
    %v6414 = vpop.f32.mrb[0].mxu0
    %6415 = vdwg.mxu0
    %v6416 = vadd.f32 %v6242, %v6410
    %v6417 = vadd.f32 %v6243, %v6413
    %vm6418 = vcmp.ne.s32.totalorder %v4307, %v74
    %vm6419 = vcmp.ne.s32.totalorder %v4308, %v74
    %v6420 = vsel %vm6418, 1, 0
    %v6421 = vsel %vm6419, 1, 0
    %v6422 = vcvt.s32.f32 %v6420
    %v6423 = vcvt.s32.f32 %v6421
    %v6424 = vmul.f32 %v5612, %v6422
    %v6425 = vmul.f32 %v5613, %v6423
    %v6426 = vmul.f32 %v6416, %v6422
    %v6427 = vmul.f32 %v6417, %v6423
    %v6428 = vsel %vm2227, %v6424, -inf
    %6429 = vmax.xlane.f32.xlu0 %v6428
    %v6430 = vpop.xlane.xlu0 %6429
    %v6431 = vsel %vm2227, %v6425, -inf
    %6432 = vmax.xlane.f32.xlu0 %v6431
    %v6433 = vpop.xlane.xlu0 %6432
    %v6434 = vmax.f32 %v6430, %v6433
    %v6435 = vrot.slane %v6434, 4
    %v6436 = vmax.f32 %v6434, %v6435
    %v6437 = vrot.slane %v6436, 2
    %v6438 = vmax.f32 %v6436, %v6437
    %v6439 = vrot.slane %v6438, 1
    %v6440 = vmax.f32 %v6438, %v6439
    %vm6441 = vcmp.gt.f32.partialorder %v6424, 0.0
    %vm6442 = vcmp.gt.f32.partialorder %v6425, 0.0
    %v6443 = vsel %vm6441, 1, 0
    %v6444 = vsel %vm6442, 1, 0
    %v6445 = vcvt.s32.f32 %v6443
    %v6446 = vcvt.s32.f32 %v6444
    %v6447 = vmax.f32 %v6440, 1.0
    %v6448 = vrcp.pop %v6447
    %v6449 = vmul.f32 %v6424, %v6448
    %v6450 = vmul.f32 %v6425, %v6448
    %v6451 = vmax.f32 %v6424, 1.0
    %v6452 = vmax.f32 %v6425, 1.0
    %v6453 = vrcp.pop %v6451
    %v6454 = vmul.f32 %v6426, %v6453
    %v6455 = vrcp.pop %v6452
    %v6456 = vmul.f32 %v6427, %v6455
    %6457 = vst.msk [vmem:[#allocation3] sm:$0xff] %vm2227, %v6445
    %6458 = vst.msk [vmem:[#allocation3 + $0x8] sm:$0xff] %vm2227, %v6446
    %v6459 = vsel %vm2227, %v6445, 0.0
    %6460 = vadd.xlane.f32.xlu0 %v6459
    %v6461 = vpop.xlane.xlu0 %6460
    %v6462 = vsel %vm2227, %v6446, 0.0
    %6463 = vadd.xlane.f32.xlu0 %v6462
    %v6464 = vpop.xlane.xlu0 %6463
    %v6465 = vmax.f32 %v6461, 1.0
    %v6466 = vmax.f32 %v6464, 1.0
    %v6467 = vsel %vm2227, %v6454, 0.0
    %6468 = vadd.xlane.f32.xlu0 %v6467
    %v6469 = vpop.xlane.xlu0 %6468
    %v6470 = vsel %vm2227, %v6456, 0.0
    %6471 = vadd.xlane.f32.xlu0 %v6470
    %v6472 = vpop.xlane.xlu0 %6471
    %v6473 = vrcp.pop %v6465
    %v6474 = vmul.f32 %v6469, %v6473
    %v6475 = vrcp.pop %v6466
    %v6476 = vmul.f32 %v6472, %v6475
    %v6477 = vsel %vm2227, %v6449, 0.0
    %6478 = vadd.xlane.f32.xlu0 %v6477
    %v6479 = vpop.xlane.xlu0 %6478
    %v6480 = vsel %vm2227, %v6450, 0.0
    %6481 = vadd.xlane.f32.xlu0 %v6480
    %v6482 = vpop.xlane.xlu0 %6481
    %v6483 = vmul.f32 %v6479, %v6473
    %v6484 = vmul.f32 %v6482, %v6475
    %v6485 = vsub.f32 1.0, %v6454
    %v6486 = vsub.f32 1.0, %v6456
    %v6487 = vmul.f32 %v6445, %v6485
    %v6488 = vmul.f32 %v6446, %v6486
    %v6489 = vmul.f32 %v6487, %v6473
    %v6490 = vmul.f32 %v6488, %v6475
    %v6491 = vpack.c.bf16 %v6490, %v6489
    %v6492 = vpack.c.bf16 %v4905, %v4903
    %v6493 = vld [vmem:[%s11] sm:$0x3]
    %v6494 = vld [vmem:[%s13] sm:$0x3]
    %v6495 = vld [vmem:[%s10] sm:$0xf]
    %v6496 = vld [vmem:[%s10 + $0x4] sm:$0xf]
    %v6497 = vld [vmem:[%s10 + $0x8] sm:$0xf]
    %v6498 = vld [vmem:[%s10 + $0xc] sm:$0xf]
    %v6499 = vld [vmem:[%s10 + $0x10] sm:$0xf]
    %v6500 = vld [vmem:[%s10 + $0x14] sm:$0xf]
    %v6501 = vlaneseq
    %v6502 = vshrl.u32 %v6501, 7
    %v6503 = vsub.s32 0, %v6502
    %v6504 = vrot.slane %v6493, %v6503
    %v6505 = vmul.f32 %v6474, %v6504
    %v6506 = vmul.f32 %v6476, %v6504
    %v6513 = vunpack.c.l.b16 %v6495
    %v6514 = vunpack.c.l.b16 %v6496
    %v6515 = vunpack.c.l.b16 %v6497
    %v6516 = vunpack.c.l.b16 %v6498
    %v6517 = vunpack.c.l.b16 %v6499
    %v6518 = vunpack.c.l.b16 %v6500
    %v6519 = vpack.c.b16 %v6514, %v6513
    %v6520 = vpack.c.b16 %v6516, %v6515
    %v6521 = vpack.c.b16 %v6518, %v6517
    %vm6525 = vcmask 392192
    %v6527 = vsel %vm6525, %v6492, 0
    %6529 = vmatprep.subr.bf16.mxu0 0
    %6530 = vmatpush1.bf16.msra.mxu0 %v6519
    %6531 = vmatprep.subr.bf16.mxu0 0
    %6532 = vmatpush1.bf16.msra.mxu0 %v6520
    %6533 = vmatprep.subr.bf16.mxu0 0
    %6534 = vmatpush1.bf16.msra.mxu0 %v6521
    %6535 = vmatprep.subr.bf16.mxu0 0
    %6536 = vmatpush1.bf16.msra.mxu0 0
    %6537 = vmatprep.subr.bf16.mxu0 0
    %6538 = vmatpush1.bf16.msra.mxu0 0
    %6539 = vmatprep.subr.bf16.mxu0 0
    %6540 = vmatpush1.bf16.msra.mxu0 0
    %6541 = vmatprep.subr.bf16.mxu0 0
    %6542 = vmatpush1.bf16.msra.mxu0 0
    %6543 = vmatprep.subr.bf16.mxu0 0
    %6544 = vmatpush1.bf16.msra.mxu0 0
    %6545 = vmatprep.subr.bf16.mxu0 0
    %6546 = vmatpush1.bf16.msra.mxu0 0
    %6547 = vmatprep.subr.bf16.mxu0 0
    %6548 = vmatpush1.bf16.msra.mxu0 0
    %6549 = vmatprep.subr.bf16.mxu0 0
    %6550 = vmatpush1.bf16.msra.mxu0 0
    %6551 = vmatprep.subr.bf16.mxu0 0
    %6552 = vmatpush1.bf16.msra.mxu0 0
    %6553 = vmatprep.subr.bf16.mxu0 0
    %6554 = vmatpush1.bf16.msra.mxu0 0
    %6555 = vmatprep.subr.bf16.mxu0 0
    %6556 = vmatpush1.bf16.msra.mxu0 0
    %6557 = vmatprep.subr.bf16.mxu0 0
    %6558 = vmatpush1.bf16.msra.mxu0 0
    %6559 = vmatprep.subr.bf16.mxu0 0
    %6560 = vmatpush1.bf16.msra.mxu0 0
    %6561 = vmatprep.mubr.bf16.mxu0 0
    %6562 = vmatmul.mubr.bf16.gmra.mrb[0].mxu0 %v6527
    %v6563 = vpop.f32.mrb[0].mxu0
    %v6564 = vadd.f32 %v6505, %v6563
    %v6565 = vpop.f32.mrb[0].mxu0
    %v6566 = vpop.f32.mrb[0].mxu0
    %v6567 = vadd.f32 %v6506, %v6566
    %v6568 = vpop.f32.mrb[0].mxu0
    %6569 = vdwg.mxu0
    %v6570 = vlaneseq
    %v6571 = vshrl.u32 %v6570, 7
    %v6572 = vsub.s32 1, %v6571
    %v6573 = vrot.slane %v6493, %v6572
    %v6574 = vmul.f32 %v6483, %v6573
    %v6575 = vmul.f32 %v6484, %v6573
    %v6576 = vadd.f32 %v6564, %v6574
    %v6577 = vadd.f32 %v6567, %v6575
    %v6578 = vld [vmem:[%s12] sm:$0xf]
    %v6579 = vld [vmem:[%s12 + $0x4] sm:$0xf]
    %v6580 = vld [vmem:[%s12 + $0x8] sm:$0xf]
    %v6581 = vld [vmem:[%s12 + $0xc] sm:$0xf]
    %v6582 = vld [vmem:[%s12 + $0x10] sm:$0xf]
    %v6583 = vld [vmem:[%s12 + $0x14] sm:$0xf]
    %v6584 = vlaneseq
    %v6585 = vshrl.u32 %v6584, 7
    %v6586 = vsub.s32 0, %v6585
    %v6587 = vrot.slane %v6494, %v6586
    %v6588 = vmul.f32 %v6474, %v6587
    %v6589 = vmul.f32 %v6476, %v6587
    %v6596 = vunpack.c.l.b16 %v6578
    %v6597 = vunpack.c.l.b16 %v6579
    %v6598 = vunpack.c.l.b16 %v6580
    %v6599 = vunpack.c.l.b16 %v6581
    %v6600 = vunpack.c.l.b16 %v6582
    %v6601 = vunpack.c.l.b16 %v6583
    %v6602 = vpack.c.b16 %v6597, %v6596
    %v6603 = vpack.c.b16 %v6599, %v6598
    %v6604 = vpack.c.b16 %v6601, %v6600
    %6608 = vmatprep.subr.bf16.mxu0 0
    %6609 = vmatpush1.bf16.msra.mxu0 %v6602
    %6610 = vmatprep.subr.bf16.mxu0 0
    %6611 = vmatpush1.bf16.msra.mxu0 %v6603
    %6612 = vmatprep.subr.bf16.mxu0 0
    %6613 = vmatpush1.bf16.msra.mxu0 %v6604
    %6614 = vmatprep.subr.bf16.mxu0 0
    %6615 = vmatpush1.bf16.msra.mxu0 0
    %6616 = vmatprep.subr.bf16.mxu0 0
    %6617 = vmatpush1.bf16.msra.mxu0 0
    %6618 = vmatprep.subr.bf16.mxu0 0
    %6619 = vmatpush1.bf16.msra.mxu0 0
    %6620 = vmatprep.subr.bf16.mxu0 0
    %6621 = vmatpush1.bf16.msra.mxu0 0
    %6622 = vmatprep.subr.bf16.mxu0 0
    %6623 = vmatpush1.bf16.msra.mxu0 0
    %6624 = vmatprep.subr.bf16.mxu0 0
    %6625 = vmatpush1.bf16.msra.mxu0 0
    %6626 = vmatprep.subr.bf16.mxu0 0
    %6627 = vmatpush1.bf16.msra.mxu0 0
    %6628 = vmatprep.subr.bf16.mxu0 0
    %6629 = vmatpush1.bf16.msra.mxu0 0
    %6630 = vmatprep.subr.bf16.mxu0 0
    %6631 = vmatpush1.bf16.msra.mxu0 0
    %6632 = vmatprep.subr.bf16.mxu0 0
    %6633 = vmatpush1.bf16.msra.mxu0 0
    %6634 = vmatprep.subr.bf16.mxu0 0
    %6635 = vmatpush1.bf16.msra.mxu0 0
    %6636 = vmatprep.subr.bf16.mxu0 0
    %6637 = vmatpush1.bf16.msra.mxu0 0
    %6638 = vmatprep.subr.bf16.mxu0 0
    %6639 = vmatpush1.bf16.msra.mxu0 0
    %6640 = vmatprep.mubr.bf16.mxu0 0
    %6641 = vmatmul.mubr.bf16.gmra.mrb[0].mxu0 %v6527
    %v6642 = vpop.f32.mrb[0].mxu0
    %v6643 = vadd.f32 %v6588, %v6642
    %v6644 = vpop.f32.mrb[0].mxu0
    %v6645 = vpop.f32.mrb[0].mxu0
    %v6646 = vadd.f32 %v6589, %v6645
    %v6647 = vpop.f32.mrb[0].mxu0
    %6648 = vdwg.mxu0
    %v6649 = vlaneseq
    %v6650 = vshrl.u32 %v6649, 7
    %v6651 = vsub.s32 1, %v6650
    %v6652 = vrot.slane %v6494, %v6651
    %v6653 = vmul.f32 %v6483, %v6652
    %v6654 = vmul.f32 %v6484, %v6652
    %v6655 = vadd.f32 %v6643, %v6653
    %v6656 = vadd.f32 %v6646, %v6654
    %v6657 = vpack.c.bf16 %v6656, %v6655
    %v6659 = vsel %vm2227, %v6491, 0
    %6661 = vmatprep.subr.bf16.mxu0 0
    %6662 = vmatpush1.bf16.msra.mxu0 %v6657
    %6663 = vmatprep.subr.bf16.mxu0 0
    %6664 = vmatpush1.bf16.msra.mxu0 0
    %6665 = vmatprep.subr.bf16.mxu0 0
    %6666 = vmatpush1.bf16.msra.mxu0 0
    %6667 = vmatprep.subr.bf16.mxu0 0
    %6668 = vmatpush1.bf16.msra.mxu0 0
    %6669 = vmatprep.subr.bf16.mxu0 0
    %6670 = vmatpush1.bf16.msra.mxu0 0
    %6671 = vmatprep.subr.bf16.mxu0 0
    %6672 = vmatpush1.bf16.msra.mxu0 0
    %6673 = vmatprep.subr.bf16.mxu0 0
    %6674 = vmatpush1.bf16.msra.mxu0 0
    %6675 = vmatprep.subr.bf16.mxu0 0
    %6676 = vmatpush1.bf16.msra.mxu0 0
    %6677 = vmatprep.subr.bf16.mxu0 0
    %6678 = vmatpush1.bf16.msra.mxu0 0
    %6679 = vmatprep.subr.bf16.mxu0 0
    %6680 = vmatpush1.bf16.msra.mxu0 0
    %6681 = vmatprep.subr.bf16.mxu0 0
    %6682 = vmatpush1.bf16.msra.mxu0 0
    %6683 = vmatprep.subr.bf16.mxu0 0
    %6684 = vmatpush1.bf16.msra.mxu0 0
    %6685 = vmatprep.subr.bf16.mxu0 0
    %6686 = vmatpush1.bf16.msra.mxu0 0
    %6687 = vmatprep.subr.bf16.mxu0 0
    %6688 = vmatpush1.bf16.msra.mxu0 0
    %6689 = vmatprep.subr.bf16.mxu0 0
    %6690 = vmatpush1.bf16.msra.mxu0 0
    %6691 = vmatprep.subr.bf16.mxu0 0
    %6692 = vmatpush1.bf16.msra.mxu0 0
    %6693 = vmatprep.mubr.bf16.mxu0 0
    %6694 = vmatmul.mubr.bf16.gmra.mrb[0].mxu0 %v6659
    %v6695 = vpop.f32.mrb[0].mxu0
    %v6696 = vadd.f32 0.0, %v6695
    %v6697 = vpop.f32.mrb[0].mxu0
    %v6698 = vpop.f32.mrb[0].mxu0
    %v6699 = vadd.f32 0.0, %v6698
    %v6700 = vpop.f32.mrb[0].mxu0
    %6701 = vdwg.mxu0
    %v6702 = vadd.f32 %v6576, %v6696
    %v6703 = vadd.f32 %v6577, %v6699
    %v6704 = vld [vmem:[%s14] sm:$0x1]
    %v6706 = vlaneseq
    %v6707 = vshrl.u32 %v6706, 7
    %v6708 = vsub.s32 0, %v6707
    %v6709 = vrot.slane %v6704, %v6708
    %v6711 = vadd.f32 %v6702, %v6709
    %v6712 = vadd.f32 %v6703, %v6709
    %v6713 = vmax.f32 %v6711, 0.0
    %v6714 = vmax.f32 %v6712, 0.0
    %v6715 = vpack.c.bf16 %v6714, %v6713
    %v6716 = vld [vmem:[%s15] sm:$0xf]
    %v6717 = vld [vmem:[%s15 + $0x4] sm:$0xf]
    %v6718 = vld [vmem:[%s15 + $0x8] sm:$0xf]
    %v6719 = vld [vmem:[%s15 + $0xc] sm:$0xf]
    %v6720 = vld [vmem:[%s15 + $0x10] sm:$0x1]
    %v6726 = vunpack.c.l.b16 %v6716
    %v6727 = vunpack.c.l.b16 %v6717
    %v6728 = vunpack.c.l.b16 %v6718
    %v6729 = vunpack.c.l.b16 %v6719
    %v6730 = vunpack.c.l.b16 %v6720
    %v6731 = vpack.c.b16 %v6727, %v6726
    %v6732 = vpack.c.b16 %v6729, %v6728
    %v6733 = vpack.c.b16 %v6730, %v6730
    %vm6736 = vcmask 277504
    %v6738 = vsel %vm6736, %v6715, 0
    %vm6740 = vcmask 1040384
    %v6742 = vsel %vm6740, %v6733, 0
    %6744 = vmatprep.subr.bf16.mxu0 0
    %6745 = vmatpush1.bf16.msra.mxu0 %v6731
    %6746 = vmatprep.subr.bf16.mxu0 0
    %6747 = vmatpush1.bf16.msra.mxu0 %v6732
    %6748 = vmatprep.subr.bf16.mxu0 0
    %6749 = vmatpush1.bf16.msra.mxu0 %v6742
    %6750 = vmatprep.subr.bf16.mxu0 0
    %6751 = vmatpush1.bf16.msra.mxu0 0
    %6752 = vmatprep.subr.bf16.mxu0 0
    %6753 = vmatpush1.bf16.msra.mxu0 0
    %6754 = vmatprep.subr.bf16.mxu0 0
    %6755 = vmatpush1.bf16.msra.mxu0 0
    %6756 = vmatprep.subr.bf16.mxu0 0
    %6757 = vmatpush1.bf16.msra.mxu0 0
    %6758 = vmatprep.subr.bf16.mxu0 0
    %6759 = vmatpush1.bf16.msra.mxu0 0
    %6760 = vmatprep.subr.bf16.mxu0 0
    %6761 = vmatpush1.bf16.msra.mxu0 0
    %6762 = vmatprep.subr.bf16.mxu0 0
    %6763 = vmatpush1.bf16.msra.mxu0 0
    %6764 = vmatprep.subr.bf16.mxu0 0
    %6765 = vmatpush1.bf16.msra.mxu0 0
    %6766 = vmatprep.subr.bf16.mxu0 0
    %6767 = vmatpush1.bf16.msra.mxu0 0
    %6768 = vmatprep.subr.bf16.mxu0 0
    %6769 = vmatpush1.bf16.msra.mxu0 0
    %6770 = vmatprep.subr.bf16.mxu0 0
    %6771 = vmatpush1.bf16.msra.mxu0 0
    %6772 = vmatprep.subr.bf16.mxu0 0
    %6773 = vmatpush1.bf16.msra.mxu0 0
    %6774 = vmatprep.subr.bf16.mxu0 0
    %6775 = vmatpush1.bf16.msra.mxu0 0
    %6776 = vmatprep.mubr.bf16.mxu0 0
    %6777 = vmatmul.mubr.bf16.gmra.mrb[0].mxu0 %v6738
    %v6778 = vpop.f32.mrb[0].mxu0
    %v6779 = vadd.f32 0.0, %v6778
    %v6780 = vpop.f32.mrb[0].mxu0
    %v6781 = vpop.f32.mrb[0].mxu0
    %v6782 = vadd.f32 0.0, %v6781
    %v6783 = vpop.f32.mrb[0].mxu0
    %6784 = vdwg.mxu0
    %v6786 = vsel %vm2227, %v6779, 0
    %v6789 = vsel %vm2227, %v6782, 0
    %6791 = vmatprep.subr.mxu0 0.0
    %6792 = vmatpush1.xpose.msra.mxu0 %v6786
    %6793 = vmatprep.subr.mxu0 0.0
    %6794 = vmatpush1.xpose.msra.mxu0 %v6789
    %6795 = vmatprep.subr.mxu0 0.0
    %6796 = vmatpush1.xpose.msra.mxu0 0.0
    %6797 = vmatprep.subr.mxu0 0.0
    %6798 = vmatpush1.xpose.msra.mxu0 0.0
    %6799 = vmatprep.subr.mxu0 0.0
    %6800 = vmatpush1.xpose.msra.mxu0 0.0
    %6801 = vmatprep.subr.mxu0 0.0
    %6802 = vmatpush1.xpose.msra.mxu0 0.0
    %6803 = vmatprep.subr.mxu0 0.0
    %6804 = vmatpush1.xpose.msra.mxu0 0.0
    %6805 = vmatprep.subr.mxu0 0.0
    %6806 = vmatpush1.xpose.msra.mxu0 0.0
    %6807 = vmatprep.subr.mxu0 0.0
    %6808 = vmatpush1.xpose.msra.mxu0 0.0
    %6809 = vmatprep.subr.mxu0 0.0
    %6810 = vmatpush1.xpose.msra.mxu0 0.0
    %6811 = vmatprep.subr.mxu0 0.0
    %6812 = vmatpush1.xpose.msra.mxu0 0.0
    %6813 = vmatprep.subr.mxu0 0.0
    %6814 = vmatpush1.xpose.msra.mxu0 0.0
    %6815 = vmatprep.subr.mxu0 0.0
    %6816 = vmatpush1.xpose.msra.mxu0 0.0
    %6817 = vmatprep.subr.mxu0 0.0
    %6818 = vmatpush1.xpose.msra.mxu0 0.0
    %6819 = vmatprep.subr.mxu0 0.0
    %6820 = vmatpush1.xpose.msra.mxu0 0.0
    %6821 = vmatprep.subr.mxu0 0.0
    %6822 = vmatpush1.xpose.msra.mxu0 0.0
    %6823 = vmatprep.subr.mxu0 0.0
    %6824 = vmatpush1.xpose.msra.mxu0 0.0
    %6825 = vmatprep.subr.mxu0 0.0
    %6826 = vmatpush1.xpose.msra.mxu0 0.0
    %6827 = vmatprep.subr.mxu0 0.0
    %6828 = vmatpush1.xpose.msra.mxu0 0.0
    %6829 = vmatprep.subr.mxu0 0.0
    %6830 = vmatpush1.xpose.msra.mxu0 0.0
    %6831 = vmatprep.subr.mxu0 0.0
    %6832 = vmatpush1.xpose.msra.mxu0 0.0
    %6833 = vmatprep.subr.mxu0 0.0
    %6834 = vmatpush1.xpose.msra.mxu0 0.0
    %6835 = vmatprep.subr.mxu0 0.0
    %6836 = vmatpush1.xpose.msra.mxu0 0.0
    %6837 = vmatprep.subr.mxu0 0.0
    %6838 = vmatpush1.xpose.msra.mxu0 0.0
    %6839 = vmatprep.subr.mxu0 0.0
    %6840 = vmatpush1.xpose.msra.mxu0 0.0
    %6841 = vmatprep.subr.mxu0 0.0
    %6842 = vmatpush1.xpose.msra.mxu0 0.0
    %6843 = vmatprep.subr.mxu0 0.0
    %6844 = vmatpush1.xpose.msra.mxu0 0.0
    %6845 = vmatprep.subr.mxu0 0.0
    %6846 = vmatpush1.xpose.msra.mxu0 0.0
    %6847 = vmatprep.subr.mxu0 0.0
    %6848 = vmatpush1.xpose.msra.mxu0 0.0
    %6849 = vmatprep.subr.mxu0 0.0
    %6850 = vmatpush1.xpose.msra.mxu0 0.0
    %6851 = vmatprep.subr.mxu0 0.0
    %6852 = vmatpush1.xpose.msra.mxu0 0.0
    %6853 = vmatprep.subr.mxu0 0.0
    %6854 = vmatpush1.xpose.msra.mxu0 0.0
    %6855 = vmatprep.mubr.f32.mxu0 0.0
    %6856 = vmatmul.mubr.f32.gmra.mrb[0].mxu0 %v6786
    %v6857 = vpop.f32.mrb[0].mxu0
    %v6858 = vadd.f32 0.0, %v6857
    %v6859 = vpop.f32.mrb[0].mxu0
    %6860 = vmatprep.mubr.f32.mxu0 0.0
    %6861 = vmatmul.mubr.f32.gmra.mrb[0].mxu0 %v6789
    %v6862 = vpop.f32.mrb[0].mxu0
    %v6863 = vadd.f32 0.0, %v6862
    %v6864 = vpop.f32.mrb[0].mxu0
    %6865 = vdwg.mxu0
    %v6866 = vxor.u32 %v6858, 2147483648
    %v6867 = vxor.u32 %v6863, 2147483648
    %v6868 = vmul.f32 %v6866, 1.442695
    %v6869 = vpow.pop %v6868
    %v6870 = vmul.f32 %v6867, 1.442695
    %v6871 = vpow.pop %v6870
    %v6872 = vadd.f32 %v6869, 1.0
    %v6873 = vadd.f32 %v6871, 1.0
    %v6874 = vrcp.pop %v6872
    %v6875 = vmul.f32 1.0, %v6874
    %v6876 = vrcp.pop %v6873
    %v6877 = vmul.f32 1.0, %v6876
    %v6878 = vmul.f32 %v6875, %v6445
    %v6879 = vmul.f32 %v6877, %v6446
    %6880 = vst.msk [vmem:[#allocation5] sm:$0xff] %vm2227, %v6878
    %6881 = vst.msk [vmem:[#allocation5 + $0x8] sm:$0xff] %vm2227, %v6879
    %6882 = vst.msk [vmem:[#allocation7] sm:$0xff] %vm6736, %v6713
    %6883 = vst.msk [vmem:[#allocation7 + $0x8] sm:$0xff] %vm6736, %v6714
    %6884 = vmatprep.subr.bf16.mxu0 0
    %6885 = vmatpush1.bf16.msra.mxu0 %v6715
    %6886 = vmatprep.subr.bf16.mxu0 0
    %6887 = vmatpush1.bf16.msra.mxu0 0
    %6888 = vmatprep.subr.bf16.mxu0 0
    %6889 = vmatpush1.bf16.msra.mxu0 0
    %6890 = vmatprep.subr.bf16.mxu0 0
    %6891 = vmatpush1.bf16.msra.mxu0 0
    %6892 = vmatprep.subr.bf16.mxu0 0
    %6893 = vmatpush1.bf16.msra.mxu0 0
    %6894 = vmatprep.subr.bf16.mxu0 0
    %6895 = vmatpush1.bf16.msra.mxu0 0
    %6896 = vmatprep.subr.bf16.mxu0 0
    %6897 = vmatpush1.bf16.msra.mxu0 0
    %6898 = vmatprep.subr.bf16.mxu0 0
    %6899 = vmatpush1.bf16.msra.mxu0 0
    %6900 = vmatprep.subr.bf16.mxu0 0
    %6901 = vmatpush1.bf16.msra.mxu0 0
    %6902 = vmatprep.subr.bf16.mxu0 0
    %6903 = vmatpush1.bf16.msra.mxu0 0
    %6904 = vmatprep.subr.bf16.mxu0 0
    %6905 = vmatpush1.bf16.msra.mxu0 0
    %6906 = vmatprep.subr.bf16.mxu0 0
    %6907 = vmatpush1.bf16.msra.mxu0 0
    %6908 = vmatprep.subr.bf16.mxu0 0
    %6909 = vmatpush1.bf16.msra.mxu0 0
    %6910 = vmatprep.subr.bf16.mxu0 0
    %6911 = vmatpush1.bf16.msra.mxu0 0
    %6912 = vmatprep.subr.bf16.mxu0 0
    %6913 = vmatpush1.bf16.msra.mxu0 0
    %6914 = vmatprep.subr.bf16.mxu0 0
    %6915 = vmatpush1.bf16.msra.mxu0 0
    %6916 = vmatprep.mubr.bf16.mxu0 0
    %6917 = vmatmul.mubr.bf16.gmra.mrb[0].mxu0 %v6659
    %v6918 = vpop.f32.mrb[0].mxu0
    %v6919 = vadd.f32 0.0, %v6918
    %v6920 = vpop.f32.mrb[0].mxu0
    %v6921 = vpop.f32.mrb[0].mxu0
    %v6922 = vadd.f32 0.0, %v6921
    %v6923 = vpop.f32.mrb[0].mxu0
    %6924 = vdwg.mxu0
    %v6925 = vld [vmem:[%s16] sm:$0xf]
    %v6926 = vld [vmem:[%s16 + $0x4] sm:$0xf]
    %v6927 = vld [vmem:[%s16 + $0x8] sm:$0xf]
    %v6928 = vld [vmem:[%s16 + $0xc] sm:$0xf]
    %v6929 = vld [vmem:[%s16 + $0x10] sm:$0x1]
    %v6930 = vpack.c.bf16 %v6922, %v6919
    %v6931 = vld [vmem:[%s17] sm:$0xf]
    %v6932 = vld [vmem:[%s17 + $0x4] sm:$0xf]
    %v6933 = vld [vmem:[%s17 + $0x8] sm:$0xf]
    %v6934 = vld [vmem:[%s17 + $0xc] sm:$0xf]
    %v6935 = vld [vmem:[%s17 + $0x10] sm:$0x1]
    %v6941 = vunpack.c.l.b16 %v6931
    %v6942 = vunpack.c.l.b16 %v6932
    %v6943 = vunpack.c.l.b16 %v6933
    %v6944 = vunpack.c.l.b16 %v6934
    %v6945 = vunpack.c.l.b16 %v6935
    %v6946 = vpack.c.b16 %v6942, %v6941
    %v6947 = vpack.c.b16 %v6944, %v6943
    %v6948 = vpack.c.b16 %v6945, %v6945
    %v6952 = vsel %vm6736, %v6930, 0
    %v6955 = vsel %vm6740, %v6948, 0
    %6957 = vmatprep.subr.bf16.mxu0 0
    %6958 = vmatpush1.bf16.msra.mxu0 %v6946
    %6959 = vmatprep.subr.bf16.mxu0 0
    %6960 = vmatpush1.bf16.msra.mxu0 %v6947
    %6961 = vmatprep.subr.bf16.mxu0 0
    %6962 = vmatpush1.bf16.msra.mxu0 %v6955
    %6963 = vmatprep.subr.bf16.mxu0 0
    %6964 = vmatpush1.bf16.msra.mxu0 0
    %6965 = vmatprep.subr.bf16.mxu0 0
    %6966 = vmatpush1.bf16.msra.mxu0 0
    %6967 = vmatprep.subr.bf16.mxu0 0
    %6968 = vmatpush1.bf16.msra.mxu0 0
    %6969 = vmatprep.subr.bf16.mxu0 0
    %6970 = vmatpush1.bf16.msra.mxu0 0
    %6971 = vmatprep.subr.bf16.mxu0 0
    %6972 = vmatpush1.bf16.msra.mxu0 0
    %6973 = vmatprep.subr.bf16.mxu0 0
    %6974 = vmatpush1.bf16.msra.mxu0 0
    %6975 = vmatprep.subr.bf16.mxu0 0
    %6976 = vmatpush1.bf16.msra.mxu0 0
    %6977 = vmatprep.subr.bf16.mxu0 0
    %6978 = vmatpush1.bf16.msra.mxu0 0
    %6979 = vmatprep.subr.bf16.mxu0 0
    %6980 = vmatpush1.bf16.msra.mxu0 0
    %6981 = vmatprep.subr.bf16.mxu0 0
    %6982 = vmatpush1.bf16.msra.mxu0 0
    %6983 = vmatprep.subr.bf16.mxu0 0
    %6984 = vmatpush1.bf16.msra.mxu0 0
    %6985 = vmatprep.subr.bf16.mxu0 0
    %6986 = vmatpush1.bf16.msra.mxu0 0
    %6987 = vmatprep.subr.bf16.mxu0 0
    %6988 = vmatpush1.bf16.msra.mxu0 0
    %6989 = vmatprep.mubr.bf16.mxu0 0
    %6990 = vmatmul.mubr.bf16.gmra.mrb[0].mxu0 %v6952
    %v6991 = vpop.f32.mrb[0].mxu0
    %v6992 = vadd.f32 0.0, %v6991
    %v6993 = vpop.f32.mrb[0].mxu0
    %v6994 = vpop.f32.mrb[0].mxu0
    %v6995 = vadd.f32 0.0, %v6994
    %v6996 = vpop.f32.mrb[0].mxu0
    %6997 = vdwg.mxu0
    %v7003 = vunpack.c.l.b16 %v6925
    %v7004 = vunpack.c.l.b16 %v6926
    %v7005 = vunpack.c.l.b16 %v6927
    %v7006 = vunpack.c.l.b16 %v6928
    %v7007 = vunpack.c.l.b16 %v6929
    %v7008 = vpack.c.b16 %v7004, %v7003
    %v7009 = vpack.c.b16 %v7006, %v7005
    %v7010 = vpack.c.b16 %v7007, %v7007
    %v7014 = vsel %vm6740, %v7010, 0
    %7016 = vmatprep.subr.bf16.mxu0 0
    %7017 = vmatpush1.bf16.msra.mxu0 %v7008
    %7018 = vmatprep.subr.bf16.mxu0 0
    %7019 = vmatpush1.bf16.msra.mxu0 %v7009
    %7020 = vmatprep.subr.bf16.mxu0 0
    %7021 = vmatpush1.bf16.msra.mxu0 %v7014
    %7022 = vmatprep.subr.bf16.mxu0 0
    %7023 = vmatpush1.bf16.msra.mxu0 0
    %7024 = vmatprep.subr.bf16.mxu0 0
    %7025 = vmatpush1.bf16.msra.mxu0 0
    %7026 = vmatprep.subr.bf16.mxu0 0
    %7027 = vmatpush1.bf16.msra.mxu0 0
    %7028 = vmatprep.subr.bf16.mxu0 0
    %7029 = vmatpush1.bf16.msra.mxu0 0
    %7030 = vmatprep.subr.bf16.mxu0 0
    %7031 = vmatpush1.bf16.msra.mxu0 0
    %7032 = vmatprep.subr.bf16.mxu0 0
    %7033 = vmatpush1.bf16.msra.mxu0 0
    %7034 = vmatprep.subr.bf16.mxu0 0
    %7035 = vmatpush1.bf16.msra.mxu0 0
    %7036 = vmatprep.subr.bf16.mxu0 0
    %7037 = vmatpush1.bf16.msra.mxu0 0
    %7038 = vmatprep.subr.bf16.mxu0 0
    %7039 = vmatpush1.bf16.msra.mxu0 0
    %7040 = vmatprep.subr.bf16.mxu0 0
    %7041 = vmatpush1.bf16.msra.mxu0 0
    %7042 = vmatprep.subr.bf16.mxu0 0
    %7043 = vmatpush1.bf16.msra.mxu0 0
    %7044 = vmatprep.subr.bf16.mxu0 0
    %7045 = vmatpush1.bf16.msra.mxu0 0
    %7046 = vmatprep.subr.bf16.mxu0 0
    %7047 = vmatpush1.bf16.msra.mxu0 0
    %7048 = vmatprep.mubr.bf16.mxu0 0
    %7049 = vmatmul.mubr.bf16.gmra.mrb[0].mxu0 %v6738
    %v7050 = vpop.f32.mrb[0].mxu0
    %v7051 = vadd.f32 %v6992, %v7050
    %v7052 = vpop.f32.mrb[0].mxu0
    %v7053 = vpop.f32.mrb[0].mxu0
    %v7054 = vadd.f32 %v6995, %v7053
    %v7055 = vpop.f32.mrb[0].mxu0
    %7056 = vdwg.mxu0
    %v7057 = vld [vmem:[%s18] sm:$0x1]
    %v7059 = vlaneseq
    %v7060 = vshrl.u32 %v7059, 7
    %v7061 = vsub.s32 0, %v7060
    %v7062 = vrot.slane %v7057, %v7061
    %v7064 = vadd.f32 %v7051, %v7062
    %v7065 = vadd.f32 %v7054, %v7062
    %v7066 = vmax.f32 %v7064, 0.0
    %v7067 = vmax.f32 %v7065, 0.0
    %v7068 = vpack.c.bf16 %v7067, %v7066
    %v7069 = vld [vmem:[%s19] sm:$0xf]
    %v7070 = vld [vmem:[%s19 + $0x4] sm:$0xf]
    %v7071 = vld [vmem:[%s19 + $0x8] sm:$0xf]
    %v7072 = vld [vmem:[%s19 + $0xc] sm:$0xf]
    %v7073 = vld [vmem:[%s19 + $0x10] sm:$0x1]
    %v7079 = vunpack.c.l.b16 %v7069
    %v7080 = vunpack.c.l.b16 %v7070
    %v7081 = vunpack.c.l.b16 %v7071
    %v7082 = vunpack.c.l.b16 %v7072
    %v7083 = vunpack.c.l.b16 %v7073
    %v7084 = vpack.c.b16 %v7080, %v7079
    %v7085 = vpack.c.b16 %v7082, %v7081
    %v7086 = vpack.c.b16 %v7083, %v7083
    %v7090 = vsel %vm6736, %v7068, 0
    %v7093 = vsel %vm6740, %v7086, 0
    %7095 = vmatprep.subr.bf16.mxu0 0
    %7096 = vmatpush1.bf16.msra.mxu0 %v7084
    %7097 = vmatprep.subr.bf16.mxu0 0
    %7098 = vmatpush1.bf16.msra.mxu0 %v7085
    %7099 = vmatprep.subr.bf16.mxu0 0
    %7100 = vmatpush1.bf16.msra.mxu0 %v7093
    %7101 = vmatprep.subr.bf16.mxu0 0
    %7102 = vmatpush1.bf16.msra.mxu0 0
    %7103 = vmatprep.subr.bf16.mxu0 0
    %7104 = vmatpush1.bf16.msra.mxu0 0
    %7105 = vmatprep.subr.bf16.mxu0 0
    %7106 = vmatpush1.bf16.msra.mxu0 0
    %7107 = vmatprep.subr.bf16.mxu0 0
    %7108 = vmatpush1.bf16.msra.mxu0 0
    %7109 = vmatprep.subr.bf16.mxu0 0
    %7110 = vmatpush1.bf16.msra.mxu0 0
    %7111 = vmatprep.subr.bf16.mxu0 0
    %7112 = vmatpush1.bf16.msra.mxu0 0
    %7113 = vmatprep.subr.bf16.mxu0 0
    %7114 = vmatpush1.bf16.msra.mxu0 0
    %7115 = vmatprep.subr.bf16.mxu0 0
    %7116 = vmatpush1.bf16.msra.mxu0 0
    %7117 = vmatprep.subr.bf16.mxu0 0
    %7118 = vmatpush1.bf16.msra.mxu0 0
    %7119 = vmatprep.subr.bf16.mxu0 0
    %7120 = vmatpush1.bf16.msra.mxu0 0
    %7121 = vmatprep.subr.bf16.mxu0 0
    %7122 = vmatpush1.bf16.msra.mxu0 0
    %7123 = vmatprep.subr.bf16.mxu0 0
    %7124 = vmatpush1.bf16.msra.mxu0 0
    %7125 = vmatprep.subr.bf16.mxu0 0
    %7126 = vmatpush1.bf16.msra.mxu0 0
    %7127 = vmatprep.mubr.bf16.mxu0 0
    %7128 = vmatmul.mubr.bf16.gmra.mrb[0].mxu0 %v7090
    %v7129 = vpop.f32.mrb[0].mxu0
    %v7130 = vadd.f32 0.0, %v7129
    %v7131 = vpop.f32.mrb[0].mxu0
    %v7132 = vpop.f32.mrb[0].mxu0
    %v7133 = vadd.f32 0.0, %v7132
    %v7134 = vpop.f32.mrb[0].mxu0
    %7135 = vdwg.mxu0
    %v7137 = vsel %vm2227, %v7130, 0
    %v7140 = vsel %vm2227, %v7133, 0
    %7142 = vmatprep.subr.mxu0 0.0
    %7143 = vmatpush1.xpose.msra.mxu0 %v7137
    %7144 = vmatprep.subr.mxu0 0.0
    %7145 = vmatpush1.xpose.msra.mxu0 %v7140
    %7146 = vmatprep.subr.mxu0 0.0
    %7147 = vmatpush1.xpose.msra.mxu0 0.0
    %7148 = vmatprep.subr.mxu0 0.0
    %7149 = vmatpush1.xpose.msra.mxu0 0.0
    %7150 = vmatprep.subr.mxu0 0.0
    %7151 = vmatpush1.xpose.msra.mxu0 0.0
    %7152 = vmatprep.subr.mxu0 0.0
    %7153 = vmatpush1.xpose.msra.mxu0 0.0
    %7154 = vmatprep.subr.mxu0 0.0
    %7155 = vmatpush1.xpose.msra.mxu0 0.0
    %7156 = vmatprep.subr.mxu0 0.0
    %7157 = vmatpush1.xpose.msra.mxu0 0.0
    %7158 = vmatprep.subr.mxu0 0.0
    %7159 = vmatpush1.xpose.msra.mxu0 0.0
    %7160 = vmatprep.subr.mxu0 0.0
    %7161 = vmatpush1.xpose.msra.mxu0 0.0
    %7162 = vmatprep.subr.mxu0 0.0
    %7163 = vmatpush1.xpose.msra.mxu0 0.0
    %7164 = vmatprep.subr.mxu0 0.0
    %7165 = vmatpush1.xpose.msra.mxu0 0.0
    %7166 = vmatprep.subr.mxu0 0.0
    %7167 = vmatpush1.xpose.msra.mxu0 0.0
    %7168 = vmatprep.subr.mxu0 0.0
    %7169 = vmatpush1.xpose.msra.mxu0 0.0
    %7170 = vmatprep.subr.mxu0 0.0
    %7171 = vmatpush1.xpose.msra.mxu0 0.0
    %7172 = vmatprep.subr.mxu0 0.0
    %7173 = vmatpush1.xpose.msra.mxu0 0.0
    %7174 = vmatprep.subr.mxu0 0.0
    %7175 = vmatpush1.xpose.msra.mxu0 0.0
    %7176 = vmatprep.subr.mxu0 0.0
    %7177 = vmatpush1.xpose.msra.mxu0 0.0
    %7178 = vmatprep.subr.mxu0 0.0
    %7179 = vmatpush1.xpose.msra.mxu0 0.0
    %7180 = vmatprep.subr.mxu0 0.0
    %7181 = vmatpush1.xpose.msra.mxu0 0.0
    %7182 = vmatprep.subr.mxu0 0.0
    %7183 = vmatpush1.xpose.msra.mxu0 0.0
    %7184 = vmatprep.subr.mxu0 0.0
    %7185 = vmatpush1.xpose.msra.mxu0 0.0
    %7186 = vmatprep.subr.mxu0 0.0
    %7187 = vmatpush1.xpose.msra.mxu0 0.0
    %7188 = vmatprep.subr.mxu0 0.0
    %7189 = vmatpush1.xpose.msra.mxu0 0.0
    %7190 = vmatprep.subr.mxu0 0.0
    %7191 = vmatpush1.xpose.msra.mxu0 0.0
    %7192 = vmatprep.subr.mxu0 0.0
    %7193 = vmatpush1.xpose.msra.mxu0 0.0
    %7194 = vmatprep.subr.mxu0 0.0
    %7195 = vmatpush1.xpose.msra.mxu0 0.0
    %7196 = vmatprep.subr.mxu0 0.0
    %7197 = vmatpush1.xpose.msra.mxu0 0.0
    %7198 = vmatprep.subr.mxu0 0.0
    %7199 = vmatpush1.xpose.msra.mxu0 0.0
    %7200 = vmatprep.subr.mxu0 0.0
    %7201 = vmatpush1.xpose.msra.mxu0 0.0
    %7202 = vmatprep.subr.mxu0 0.0
    %7203 = vmatpush1.xpose.msra.mxu0 0.0
    %7204 = vmatprep.subr.mxu0 0.0
    %7205 = vmatpush1.xpose.msra.mxu0 0.0
    %7206 = vmatprep.mubr.f32.mxu0 0.0
    %7207 = vmatmul.mubr.f32.gmra.mrb[0].mxu0 %v7137
    %v7208 = vpop.f32.mrb[0].mxu0
    %v7209 = vadd.f32 0.0, %v7208
    %v7210 = vpop.f32.mrb[0].mxu0
    %7211 = vmatprep.mubr.f32.mxu0 0.0
    %7212 = vmatmul.mubr.f32.gmra.mrb[0].mxu0 %v7140
    %v7213 = vpop.f32.mrb[0].mxu0
    %v7214 = vadd.f32 0.0, %v7213
    %v7215 = vpop.f32.mrb[0].mxu0
    %7216 = vdwg.mxu0
    %v7217 = vxor.u32 %v7209, 2147483648
    %v7218 = vxor.u32 %v7214, 2147483648
    %v7219 = vmul.f32 %v7217, 1.442695
    %v7220 = vpow.pop %v7219
    %v7221 = vmul.f32 %v7218, 1.442695
    %v7222 = vpow.pop %v7221
    %v7223 = vadd.f32 %v7220, 1.0
    %v7224 = vadd.f32 %v7222, 1.0
    %v7225 = vrcp.pop %v7223
    %v7226 = vmul.f32 1.0, %v7225
    %v7227 = vrcp.pop %v7224
    %v7228 = vmul.f32 1.0, %v7227
    %v7229 = vmul.f32 %v7226, %v6445
    %v7230 = vmul.f32 %v7228, %v6446
    %s7231 = scalar_lea.vmem [#allocation5], 16
    %7232 = vst.msk [vmem:[%s7231] sm:$0xff] %vm2227, %v7229
    %7233 = vst.msk [vmem:[%s7231 + $0x8] sm:$0xff] %vm2227, %v7230
    %s7234 = scalar_lea.vmem [#allocation7], 16
    %7235 = vst.msk [vmem:[%s7234] sm:$0xff] %vm6736, %v7066
    %7236 = vst.msk [vmem:[%s7234 + $0x8] sm:$0xff] %vm6736, %v7067
    // Predicated region
    $region82: #{unet_egnn_forward.1} parent=1 // pred_check
      _
    $region83: #{unet_egnn_forward.1} parent=1 // pred_check_branch
      %7238 = sbr.rel (0) target = $region85
    $region84: #{unet_egnn_forward.1} parent=1 // pred_region
      _
    $region85: #{unet_egnn_forward.1} parent=1 // pred_fallthru
      _
    // Predicated region
    $region86: #{unet_egnn_forward.1} parent=1 // pred_check
      _
    $region87: #{unet_egnn_forward.1} parent=1 // pred_check_branch
      %7240 = sbr.rel (0) target = $region89
    $region88: #{unet_egnn_forward.1} parent=1 // pred_region
      _
    $region89: #{unet_egnn_forward.1} parent=1 // pred_fallthru
      _
    // Predicated region
    $region90: #{unet_egnn_forward.1} parent=1 // pred_check
      _
    $region91: #{unet_egnn_forward.1} parent=1 // pred_check_branch
      %7242 = sbr.rel (0) target = $region93
    $region92: #{unet_egnn_forward.1} parent=1 // pred_region
      %s7244 = ssub.s32 256, 256
      %7245 = vsyncadd [#allocation4], %s7244
      %s7246 = sshll.u32 [#allocation3], 4
      %s7247 = int_to_ptr.vmem [resolvable:$true] %s7246
      %7252 = dma.vmem_to_hbm [thread:$0]  %s7247, 256, %s22, [#allocation4], 128, 128, 8
    $region93: #{unet_egnn_forward.1} parent=1 // pred_fallthru
      _
    // Predicated region
    $region94: #{unet_egnn_forward.1} parent=1 // pred_check
      _
    $region95: #{unet_egnn_forward.1} parent=1 // pred_check_branch
      %7254 = sbr.rel (0) target = $region97
    $region96: #{unet_egnn_forward.1} parent=1 // pred_region
      %s7256 = ssub.s32 512, 512
      %7257 = vsyncadd [#allocation6], %s7256
      %s7258 = sshll.u32 [#allocation5], 4
      %s7259 = int_to_ptr.vmem [resolvable:$true] %s7258
      %7264 = dma.vmem_to_hbm [thread:$0]  %s7259, 512, %s23, [#allocation6], 128, 128, 8
    $region97: #{unet_egnn_forward.1} parent=1 // pred_fallthru
      _
    // Predicated region
    $region98: #{unet_egnn_forward.1} parent=1 // pred_check
      _
    $region99: #{unet_egnn_forward.1} parent=1 // pred_check_branch
      %7266 = sbr.rel (0) target = $region101
    $region100: #{unet_egnn_forward.1} parent=1 // pred_region
      %s7268 = ssub.s32 512, 512
      %7269 = vsyncadd [#allocation6], %s7268
      %s7270 = sshll.u32 [#allocation7], 4
      %s7271 = int_to_ptr.vmem [resolvable:$true] %s7270
      %7276 = dma.vmem_to_hbm [thread:$0]  %s7271, 512, %s24, [#allocation6], 128, 128, 8
    $region101: #{unet_egnn_forward.1} parent=1 // pred_fallthru
      _
    // Predicated region
    $region102: #{unet_egnn_forward.1} parent=1 // pred_check
      _
    $region103: #{unet_egnn_forward.1} parent=1 // pred_check_branch
      %7278 = sbr.rel (0) target = $region105
    $region104: #{unet_egnn_forward.1} parent=1 // pred_region
      _
    $region105: #{unet_egnn_forward.1} parent=1 // pred_fallthru
      _
    // Predicated region
    $region106: #{unet_egnn_forward.1} parent=1 // pred_check
      _
    $region107: #{unet_egnn_forward.1} parent=1 // pred_check_branch
      %7280 = sbr.rel (0) target = $region109
    $region108: #{unet_egnn_forward.1} parent=1 // pred_region
      _
    $region109: #{unet_egnn_forward.1} parent=1 // pred_fallthru
      _
    // Predicated region
    $region110: #{unet_egnn_forward.1} parent=1 // pred_check
      _
    $region111: #{unet_egnn_forward.1} parent=1 // pred_check_branch
      %7282 = sbr.rel (0) target = $region113
    $region112: #{unet_egnn_forward.1} parent=1 // pred_region
      %7283 = dma.done [#allocation4], 256
    $region113: #{unet_egnn_forward.1} parent=1 // pred_fallthru
      _
    // Predicated region
    $region114: #{unet_egnn_forward.1} parent=1 // pred_check
      _
    $region115: #{unet_egnn_forward.1} parent=1 // pred_check_branch
      %7285 = sbr.rel (0) target = $region117
    $region116: #{unet_egnn_forward.1} parent=1 // pred_region
      %7286 = dma.done [#allocation6], 512
    $region117: #{unet_egnn_forward.1} parent=1 // pred_fallthru
      _
    // Predicated region
    $region118: #{unet_egnn_forward.1} parent=1 // pred_check
      _
    $region119: #{unet_egnn_forward.1} parent=1 // pred_check_branch
      %7288 = sbr.rel (0) target = $region121
    $region120: #{unet_egnn_forward.1} parent=1 // pred_region
      %7289 = dma.done [#allocation6], 512
    $region121: #{unet_egnn_forward.1} parent=1 // pred_fallthru
      _
    %7290 = vsyncpa [#allocation4], 1
    %7291 = vsyncpa [#allocation6], 1

</llo_original>
